<compile_context>
chip_gen: v7x
topology: tpu7x:2x2x1
jax: 0.10.0
libtpu: 0.0.40
codegen_flags: <defaults>
</compile_context>

<pallas_src>
import math
import numpy as np
import jax
import jax.numpy as jnp
from jax.experimental import pallas as pl
from jax.experimental.pallas import tpu as pltpu

# ---------------- small, module-consistent hyperparameters ----------------
K   = 4            # nr_time_scales
N   = 4            # nr_frequency_bands
NB  = N - 1        # bands actually processed (loops run over nr_frequency_bands - 1)
H   = 32           # embedding_dim
D   = 128          # input_dim == window_length
HOP = D // 2
L   = 2            # nr_layers_per_timescale (GRU layers)
P   = 24           # pose feature dim fed to the spiralnet stand-in
K1  = K - 1        # number of head/scale outputs
KG  = K - 2        # GRU scale-steps whose outputs are actually consumed
F32 = jnp.float32


# ---------------- in-kernel helpers ----------------
def _layernorm(x, gamma, beta, eps=1e-5):
    mu = jnp.mean(x, axis=-1, keepdims=True)
    var = jnp.mean((x - mu) ** 2, axis=-1, keepdims=True)
    return (x - mu) * jax.lax.rsqrt(var + eps) * gamma + beta


def _elu(x):
    return jnp.where(x > 0, x, jnp.exp(jnp.minimum(x, 0.0)) - 1.0)


def _gelu(x):
    # TODO(synk): PyTorch nn.GELU default is erf-exact; tanh approximation used here.
    c = 0.7978845608028654  # sqrt(2/pi)
    return 0.5 * x * (1.0 + jnp.tanh(c * (x + 0.044715 * x * x * x)))


def _bmm(x, w):
    # band-batched matmul: x (NB, 2, in) @ w (NB, in, out) -> (NB, 2, out)
    return jnp.einsum('npi,nij->npj', x, w, preferred_element_type=jnp.float32)


def _vmem():
    return pl.BlockSpec(memory_space=pltpu.MemorySpace.VMEM)


# ---------------- the single fused Pallas kernel ----------------
def _fused_kernel(bands_ref, spiral_ref, ln_g_ref, ln_b_ref,
                  w1_ref, b1_ref, w2_ref, b2_ref, w3_ref, b3_ref,
                  gln_g_ref, gln_b_ref,
                  wih0_ref, wih1_ref, whh_ref, bih_ref, bhh_ref,
                  hw_ref, hb_ref,
                  score_ref, mine_ref):
    """Full compute_statistics (joint & marg batched on the size-2 'pass' axis) + MINE.

    bands_ref : (NB, 2, D)   pass 0 = joint bands, pass 1 = marginal bands
    spiral_ref: (2, 2H)      spiralnet embedding per pass
    Outputs   : score (1,1), mine (NB, K1)  (transposed to (K1, NB) in the wrapper)
    """
    # --- shared first LayerNorm + per-band MineFF (fc1-elu, fc2-elu, fc3) ---
    x = bands_ref[...]                                             # (NB, 2, D)
    xn = _layernorm(x, ln_g_ref[...], ln_b_ref[...])
    h = _elu(_bmm(xn, w1_ref[...]) + b1_ref[...])
    h = _elu(_bmm(h, w2_ref[...]) + b2_ref[...])
    out0 = _bmm(h, w3_ref[...]) + b3_ref[...]                      # (NB, 2, 2H)

    spiral = spiral_ref[...]                                       # (2, 2H)
    spiral_b = jnp.broadcast_to(spiral[None, :, :], (NB, 2, 2 * H))

    # state_buffers[0] holds None in the reference -> zero initial hidden states.
    state = {(l, d): jnp.zeros((NB, 2, H), F32)
             for l in range(L) for d in range(2)}

    outs = [out0]
    for k in range(KG):                 # GRU scale-steps whose outputs feed the heads
        xin = jnp.concatenate([outs[-1], spiral_b], axis=-1)       # (NB, 2, 4H)
        xin = _layernorm(xin, gln_g_ref[k], gln_b_ref[k])
        layer_in = xin
        new_state = {}
        for l in range(L):
            hs = []
            for d in range(2):          # bidirectional, seq_len == 1
                wih = wih0_ref[2 * k + d] if l == 0 else wih1_ref[2 * k + d]
                idx = (k * L + l) * 2 + d
                gi = _bmm(layer_in, wih) + bih_ref[idx]            # (NB, 2, 3H)
                hp = state[(l, d)]                                 # (NB, 2, H)
                gh = _bmm(hp, whh_ref[idx]) + bhh_ref[idx]         # (NB, 2, 3H)
                r = jax.nn.sigmoid(gi[..., :H] + gh[..., :H])
                z = jax.nn.sigmoid(gi[..., H:2 * H] + gh[..., H:2 * H])
                c = jnp.tanh(gi[..., 2 * H:] + r * gh[..., 2 * H:])
                hnew = (1.0 - z) * c + z * hp
                hs.append(hnew)
                new_state[(l, d)] = hnew
            layer_in = jnp.concatenate(hs, axis=-1)                # (NB, 2, 2H)
        state = new_state
        outs.append(_gelu(layer_in))

    # --- per-(scale, band) Linear(2H -> 1) + ELU heads, then MINE ---
    cols = []
    for k in range(K1):
        s = jnp.sum(outs[k] * hw_ref[k], axis=-1) + hb_ref[k]      # (NB, 2)
        s = _elu(s)
        # pass 0 = joint, pass 1 = marginal. The buffered-timestep axis (reference
        # dim 2) is a singleton for one forward of a fresh module, so mean(joint, 2)
        # and log(mean(exp(marg), 2)) reduce exactly to the values themselves.
        cols.append(jnp.maximum(s[:, 0:1] - s[:, 1:2], 0.0))       # (NB, 1)
    mine = jnp.concatenate(cols, axis=-1)                          # (NB, K1)
    mine_ref[...] = mine
    score_ref[...] = -jnp.sum(mine, keepdims=True)


def fused_forward_call(bands, spiral, p):
    args = (bands, spiral, p["ln_g"], p["ln_b"],
            p["ff_w1"], p["ff_b1"], p["ff_w2"], p["ff_b2"], p["ff_w3"], p["ff_b3"],
            p["gru_ln_g"], p["gru_ln_b"],
            p["gru_wih0"], p["gru_wih1"], p["gru_whh"], p["gru_bih"], p["gru_bhh"],
            p["head_w"], p["head_b"])
    return pl.pallas_call(
        _fused_kernel,
        out_shape=(jax.ShapeDtypeStruct((1, 1), F32),
                   jax.ShapeDtypeStruct((NB, K1), F32)),
        in_specs=[_vmem() for _ in args],
        out_specs=(_vmem(), _vmem()),
    )(*args)


# ---------------- plain-JAX glue: band splitting (FFT has no Pallas equivalent) ----------------
def _hz_to_mel(hz):
    return 2595.0 * np.log10(1.0 + hz / 700.0)


def _mel_to_hz(mel):
    return 700.0 * (10.0 ** (mel / 2595.0) - 1.0)


def _make_masks_and_window():
    low, high = 0.0, 44100 // 2
    mel_pts = np.linspace(_hz_to_mel(low), _hz_to_mel(high), N)
    hz_pts = _mel_to_hz(mel_pts)
    # Map Hz band limits to FFT-bin indices of the length-D window (sensible reading of
    # the reference mask construction, which indexes bins of the length-D spectrum).
    bins = np.round(hz_pts / high * (D // 2)).astype(int)
    masks = []
    for i in range(N - 1):
        s, e = int(bins[i]), int(bins[i + 1])
        m = np.zeros((1, D), dtype=np.float32)
        m[:, s:e] = 1.0
        if e < D - s and s > 0:
            m[:, D - e:D - s] = 1.0          # mirror bins (conjugate half)
        masks.append(m)
    n = np.arange(D)
    win = (0.54 - 0.46 * np.cos(2.0 * np.pi * n / D)).astype(np.float32)[None, :]
    return jnp.asarray(np.stack(masks, 0)), jnp.asarray(win)   # (NB,1,D), (1,D)


MASKS, WIN = _make_masks_and_window()


def band_split(x):
    # TODO(synk): torch.fft band splitting kept in plain JAX (no Pallas FFT primitive).
    xw = (WIN * x).astype(jnp.complex64)                           # (1, D)
    X = jnp.fft.fft(xw)
    bands = jnp.real(jnp.fft.ifft(X[None, :, :] * MASKS.astype(jnp.complex64))) * WIN
    return bands[:, 0, :].astype(F32)                              # (NB, D)


def spiralnet_apply(p, pose):
    # TODO(synk): instantiate_spiralnet / CachedPQMF definitions are not provided;
    # deterministic stand-in MLP producing the (pass, 2H) embedding the graph expects.
    h = jnp.tanh(pose @ p["sp_w1"] + p["sp_b1"])
    return h @ p["sp_w2"] + p["sp_b2"]


# ---------------- parameters ----------------
def init_params(key):
    ks = jax.random.split(key, 14)
    p = {}
    # shared first_layer_norm
    p["ln_g"] = jnp.ones((1, D), F32)
    p["ln_b"] = jnp.zeros((1, D), F32)
    # MineFF per band: fc1 (D->2H), fc2/fc3 (2H->2H); normal(0.02), zero bias
    p["ff_w1"] = 0.02 * jax.random.normal(ks[0], (NB, D, 2 * H), F32)
    p["ff_b1"] = jnp.zeros((NB, 1, 2 * H), F32)
    p["ff_w2"] = 0.02 * jax.random.normal(ks[1], (NB, 2 * H, 2 * H), F32)
    p["ff_b2"] = jnp.zeros((NB, 1, 2 * H), F32)
    p["ff_w3"] = 0.02 * jax.random.normal(ks[2], (NB, 2 * H, 2 * H), F32)
    p["ff_b3"] = jnp.zeros((NB, 1, 2 * H), F32)
    # GRUCell per used scale-step & band: LayerNorm(4H) + bi-GRU(L layers).
    # Weights stored transposed (in, 3H); layer 0 input is 4H, layers > 0 input is 2H
    # (standard PyTorch multi-layer bi-GRU); gate order [r, z, n].
    # Leading dims are pre-flattened so the kernel indexes them with a single static int:
    #   wih0/wih1: (KG*2, ...)   index 2*k + d
    #   whh/bih/bhh: (KG*L*2, ...) index (k*L + l)*2 + d
    p["gru_ln_g"] = jnp.ones((KG, NB, 1, 4 * H), F32)
    p["gru_ln_b"] = jnp.zeros((KG, NB, 1, 4 * H), F32)
    xav0 = math.sqrt(6.0 / (4 * H + 3 * H))
    xav1 = math.sqrt(6.0 / (2 * H + 3 * H))
    xavh = math.sqrt(6.0 / (H + 3 * H))
    bstd = 1.0 / math.sqrt(H)
    p["gru_wih0"] = jax.random.uniform(ks[3], (KG * 2, NB, 4 * H, 3 * H), F32, -xav0, xav0)
    p["gru_wih1"] = jax.random.uniform(ks[4], (KG * 2, NB, 2 * H, 3 * H), F32, -xav1, xav1)
    p["gru_whh"] = jax.random.uniform(ks[5], (KG * L * 2, NB, H, 3 * H), F32, -xavh, xavh)
    p["gru_bih"] = jax.random.uniform(ks[6], (KG * L * 2, NB, 1, 3 * H), F32, -bstd, bstd)
    p["gru_bhh"] = jax.random.uniform(ks[7], (KG * L * 2, NB, 1, 3 * H), F32, -bstd, bstd)
    # ffn_last heads
    hb = 1.0 / math.sqrt(2 * H)
    p["head_w"] = jax.random.uniform(ks[8], (K1, NB, 1, 2 * H), F32, -hb, hb)
    p["head_b"] = jax.random.uniform(ks[9], (K1, NB, 1), F32, -hb, hb)
    # spiralnet stand-in
    p["sp_w1"] = 0.02 * jax.random.normal(ks[10], (P, 2 * H), F32)
    p["sp_b1"] = jnp.zeros((1, 2 * H), F32)
    p["sp_w2"] = 0.02 * jax.random.normal(ks[11], (2 * H, 2 * H), F32)
    p["sp_b2"] = jnp.zeros((1, 2 * H), F32)
    return p


# ---------------- forward ----------------
@jax.jit
def forward(audio, pose_joint, pose_marg, p):
    curr = band_split(audio)                                            # (NB, D)
    # fresh fft_buffers are zero -> the joint call sees curr; the joint call pushes curr
    # into the fft buffers, so the marginal call sees curr + right-padded last-hop of curr.
    shifted = jnp.concatenate([curr[:, HOP:], jnp.zeros((NB, HOP), F32)], axis=-1)
    bands = jnp.stack([curr, curr + shifted], axis=1)                   # (NB, 2, D)
    pose = jnp.concatenate([pose_joint, pose_marg], axis=0)             # (2, P)
    spiral = spiralnet_apply(p, pose)                                   # (2, 2H)
    score, mine_nb = fused_forward_call(bands, spiral, p)
    return score[0, 0], mine_nb.T                                       # scalar, (K-1, N-1)


if __name__ == "__main__":
    key = jax.random.PRNGKey(0)
    k_p, k_a, k_j, k_m = jax.random.split(key, 4)
    params = init_params(k_p)
    audio_buffer = jax.random.normal(k_a, (1, D), F32)
    pose_joint = jax.random.normal(k_j, (1, P), F32)
    pose_marg = jax.random.normal(k_m, (1, P), F32)

    mine_score, mine_matrix = forward(audio_buffer, pose_joint, pose_marg, params)
    jax.block_until_ready((mine_score, mine_matrix))
    assert mine_matrix.shape == (K1, NB)
    assert jnp.isfinite(mine_score)
    print("KERNEL_OK")
</pallas_src>

<mosaic_0001>
module attributes {stable_mosaic.version = 11 : i64} {
  func.func @_fused_kernel(%arg0: memref<3x2x128xf32, #tpu.memory_space<vmem>>, %arg1: memref<2x64xf32, #tpu.memory_space<vmem>>, %arg2: memref<1x128xf32, #tpu.memory_space<vmem>>, %arg3: memref<1x128xf32, #tpu.memory_space<vmem>>, %arg4: memref<3x128x64xf32, #tpu.memory_space<vmem>>, %arg5: memref<3x1x64xf32, #tpu.memory_space<vmem>>, %arg6: memref<3x64x64xf32, #tpu.memory_space<vmem>>, %arg7: memref<3x1x64xf32, #tpu.memory_space<vmem>>, %arg8: memref<3x64x64xf32, #tpu.memory_space<vmem>>, %arg9: memref<3x1x64xf32, #tpu.memory_space<vmem>>, %arg10: memref<2x3x1x128xf32, #tpu.memory_space<vmem>>, %arg11: memref<2x3x1x128xf32, #tpu.memory_space<vmem>>, %arg12: memref<4x3x128x96xf32, #tpu.memory_space<vmem>>, %arg13: memref<4x3x64x96xf32, #tpu.memory_space<vmem>>, %arg14: memref<8x3x32x96xf32, #tpu.memory_space<vmem>>, %arg15: memref<8x3x1x96xf32, #tpu.memory_space<vmem>>, %arg16: memref<8x3x1x96xf32, #tpu.memory_space<vmem>>, %arg17: memref<3x3x1x64xf32, #tpu.memory_space<vmem>>, %arg18: memref<3x3x1xf32, #tpu.memory_space<vmem>>, %arg19: memref<1x1xf32, #tpu.memory_space<vmem>>, %arg20: memref<3x3xf32, #tpu.memory_space<vmem>>) attributes {dimension_semantics = [], scalar_prefetch = 0 : i64, scratch_operands = 0 : i64, tpu.core_type = #tpu.core_type<tc>} {
    %c0 = arith.constant 0 : index
    %c0_0 = arith.constant 0 : index
    %c0_1 = arith.constant 0 : index
    %0 = vector.load %arg0[%c0, %c0_0, %c0_1] : memref<3x2x128xf32, #tpu.memory_space<vmem>>, vector<3x2x128xf32>
    %c0_2 = arith.constant 0 : index
    %c0_3 = arith.constant 0 : index
    %1 = vector.load %arg2[%c0_2, %c0_3] : memref<1x128xf32, #tpu.memory_space<vmem>>, vector<1x128xf32>
    %c0_4 = arith.constant 0 : index
    %c0_5 = arith.constant 0 : index
    %2 = vector.load %arg3[%c0_4, %c0_5] : memref<1x128xf32, #tpu.memory_space<vmem>>, vector<1x128xf32>
    %cst = arith.constant dense<0.000000e+00> : vector<3x2xf32>
    %3 = vector.multi_reduction <add>, %0, %cst [2] : vector<3x2x128xf32> to vector<3x2xf32>
    %4 = vector.shape_cast %3 : vector<3x2xf32> to vector<3x2x1xf32>
    %cst_6 = arith.constant 1.280000e+02 : f32
    %5 = vector.broadcast %cst_6 : f32 to vector<3x2x1xf32>
    %6 = arith.divf %4, %5 : vector<3x2x1xf32>
    %7 = vector.broadcast %6 : vector<3x2x1xf32> to vector<3x2x128xf32>
    %8 = arith.subf %0, %7 : vector<3x2x128xf32>
    %9 = arith.mulf %8, %8 : vector<3x2x128xf32>
    %cst_7 = arith.constant dense<0.000000e+00> : vector<3x2xf32>
    %10 = vector.multi_reduction <add>, %9, %cst_7 [2] : vector<3x2x128xf32> to vector<3x2xf32>
    %11 = vector.shape_cast %10 : vector<3x2xf32> to vector<3x2x1xf32>
    %cst_8 = arith.constant 1.280000e+02 : f32
    %12 = vector.broadcast %cst_8 : f32 to vector<3x2x1xf32>
    %13 = arith.divf %11, %12 : vector<3x2x1xf32>
    %14 = vector.broadcast %6 : vector<3x2x1xf32> to vector<3x2x128xf32>
    %15 = arith.subf %0, %14 : vector<3x2x128xf32>
    %cst_9 = arith.constant 9.99999974E-6 : f32
    %16 = vector.broadcast %cst_9 : f32 to vector<3x2x1xf32>
    %17 = arith.addf %13, %16 : vector<3x2x1xf32>
    %18 = math.rsqrt %17 : vector<3x2x1xf32>
    %19 = vector.broadcast %18 : vector<3x2x1xf32> to vector<3x2x128xf32>
    %20 = arith.mulf %15, %19 : vector<3x2x128xf32>
    %21 = vector.shape_cast %1 : vector<1x128xf32> to vector<1x1x128xf32>
    %22 = vector.broadcast %21 : vector<1x1x128xf32> to vector<3x2x128xf32>
    %23 = arith.mulf %20, %22 : vector<3x2x128xf32>
    %24 = vector.shape_cast %2 : vector<1x128xf32> to vector<1x1x128xf32>
    %25 = vector.broadcast %24 : vector<1x1x128xf32> to vector<3x2x128xf32>
    %26 = arith.addf %23, %25 : vector<3x2x128xf32>
    %c0_10 = arith.constant 0 : index
    %c0_11 = arith.constant 0 : index
    %c0_12 = arith.constant 0 : index
    %27 = vector.load %arg4[%c0_10, %c0_11, %c0_12] : memref<3x128x64xf32, #tpu.memory_space<vmem>>, vector<3x128x64xf32>
    "tpu.trace_start"() <{level = 10 : i32, message = "npi,nij->npj"}> : () -> ()
    %cst_13 = arith.constant dense<0.000000e+00> : vector<3x2x64xf32>
    %28 = tpu.matmul %26, %27, %cst_13 {dimension_numbers = #tpu.dot_dimension_numbers<[2], [1], [1], [2], [0, 0, 0, 1, 1, 2], [0], [0]>} : vector<3x2x128xf32>, vector<3x128x64xf32>, vector<3x2x64xf32> -> vector<3x2x64xf32>
    "tpu.trace_stop"() : () -> ()
    %c0_14 = arith.constant 0 : index
    %c0_15 = arith.constant 0 : index
    %c0_16 = arith.constant 0 : index
    %29 = vector.load %arg5[%c0_14, %c0_15, %c0_16] : memref<3x1x64xf32, #tpu.memory_space<vmem>>, vector<3x1x64xf32>
    %30 = vector.broadcast %29 : vector<3x1x64xf32> to vector<3x2x64xf32>
    %31 = arith.addf %28, %30 : vector<3x2x64xf32>
    %cst_17 = arith.constant 0.000000e+00 : f32
    %32 = vector.broadcast %cst_17 : f32 to vector<3x2x64xf32>
    %33 = arith.cmpf ogt, %31, %32 : vector<3x2x64xf32>
    %cst_18 = arith.constant 0.000000e+00 : f32
    %34 = vector.broadcast %cst_18 : f32 to vector<3x2x64xf32>
    %35 = arith.minimumf %31, %34 : vector<3x2x64xf32>
    %36 = math.exp %35 : vector<3x2x64xf32>
    %cst_19 = arith.constant 1.000000e+00 : f32
    %37 = vector.broadcast %cst_19 : f32 to vector<3x2x64xf32>
    %38 = arith.subf %36, %37 : vector<3x2x64xf32>
    %39 = arith.select %33, %31, %38 : vector<3x2x64xi1>, vector<3x2x64xf32>
    %c0_20 = arith.constant 0 : index
    %c0_21 = arith.constant 0 : index
    %c0_22 = arith.constant 0 : index
    %40 = vector.load %arg6[%c0_20, %c0_21, %c0_22] : memref<3x64x64xf32, #tpu.memory_space<vmem>>, vector<3x64x64xf32>
    "tpu.trace_start"() <{level = 10 : i32, message = "npi,nij->npj"}> : () -> ()
    %cst_23 = arith.constant dense<0.000000e+00> : vector<3x2x64xf32>
    %41 = tpu.matmul %39, %40, %cst_23 {dimension_numbers = #tpu.dot_dimension_numbers<[2], [1], [1], [2], [0, 0, 0, 1, 1, 2], [0], [0]>} : vector<3x2x64xf32>, vector<3x64x64xf32>, vector<3x2x64xf32> -> vector<3x2x64xf32>
    "tpu.trace_stop"() : () -> ()
    %c0_24 = arith.constant 0 : index
    %c0_25 = arith.constant 0 : index
    %c0_26 = arith.constant 0 : index
    %42 = vector.load %arg7[%c0_24, %c0_25, %c0_26] : memref<3x1x64xf32, #tpu.memory_space<vmem>>, vector<3x1x64xf32>
    %43 = vector.broadcast %42 : vector<3x1x64xf32> to vector<3x2x64xf32>
    %44 = arith.addf %41, %43 : vector<3x2x64xf32>
    %cst_27 = arith.constant 0.000000e+00 : f32
    %45 = vector.broadcast %cst_27 : f32 to vector<3x2x64xf32>
    %46 = arith.cmpf ogt, %44, %45 : vector<3x2x64xf32>
    %cst_28 = arith.constant 0.000000e+00 : f32
    %47 = vector.broadcast %cst_28 : f32 to vector<3x2x64xf32>
    %48 = arith.minimumf %44, %47 : vector<3x2x64xf32>
    %49 = math.exp %48 : vector<3x2x64xf32>
    %cst_29 = arith.constant 1.000000e+00 : f32
    %50 = vector.broadcast %cst_29 : f32 to vector<3x2x64xf32>
    %51 = arith.subf %49, %50 : vector<3x2x64xf32>
    %52 = arith.select %46, %44, %51 : vector<3x2x64xi1>, vector<3x2x64xf32>
    %c0_30 = arith.constant 0 : index
    %c0_31 = arith.constant 0 : index
    %c0_32 = arith.constant 0 : index
    %53 = vector.load %arg8[%c0_30, %c0_31, %c0_32] : memref<3x64x64xf32, #tpu.memory_space<vmem>>, vector<3x64x64xf32>
    "tpu.trace_start"() <{level = 10 : i32, message = "npi,nij->npj"}> : () -> ()
    %cst_33 = arith.constant dense<0.000000e+00> : vector<3x2x64xf32>
    %54 = tpu.matmul %52, %53, %cst_33 {dimension_numbers = #tpu.dot_dimension_numbers<[2], [1], [1], [2], [0, 0, 0, 1, 1, 2], [0], [0]>} : vector<3x2x64xf32>, vector<3x64x64xf32>, vector<3x2x64xf32> -> vector<3x2x64xf32>
    "tpu.trace_stop"() : () -> ()
    %c0_34 = arith.constant 0 : index
    %c0_35 = arith.constant 0 : index
    %c0_36 = arith.constant 0 : index
    %55 = vector.load %arg9[%c0_34, %c0_35, %c0_36] : memref<3x1x64xf32, #tpu.memory_space<vmem>>, vector<3x1x64xf32>
    %56 = vector.broadcast %55 : vector<3x1x64xf32> to vector<3x2x64xf32>
    %57 = arith.addf %54, %56 : vector<3x2x64xf32>
    %c0_37 = arith.constant 0 : index
    %c0_38 = arith.constant 0 : index
    %58 = vector.load %arg1[%c0_37, %c0_38] : memref<2x64xf32, #tpu.memory_space<vmem>>, vector<2x64xf32>
    %59 = vector.shape_cast %58 : vector<2x64xf32> to vector<1x2x64xf32>
    %60 = vector.shape_cast %59 : vector<1x2x64xf32> to vector<1x2x64xf32>
    %61 = vector.broadcast %60 : vector<1x2x64xf32> to vector<3x2x64xf32>
    %cst_39 = arith.constant 0.000000e+00 : f32
    %62 = vector.broadcast %cst_39 : f32 to vector<3x2x32xf32>
    %cst_40 = arith.constant 0.000000e+00 : f32
    %63 = vector.broadcast %cst_40 : f32 to vector<3x2x32xf32>
    %cst_41 = arith.constant 0.000000e+00 : f32
    %64 = vector.broadcast %cst_41 : f32 to vector<3x2x32xf32>
    %cst_42 = arith.constant 0.000000e+00 : f32
    %65 = vector.broadcast %cst_42 : f32 to vector<3x2x32xf32>
    %66 = tpu.concatenate %57, %61 in 2 : vector<3x2x64xf32>, vector<3x2x64xf32> -> vector<3x2x128xf32>
    %c0_43 = arith.constant 0 : index
    %c0_44 = arith.constant 0 : index
    %c0_45 = arith.constant 0 : index
    %c0_46 = arith.constant 0 : index
    %67 = vector.load %arg10[%c0_43, %c0_44, %c0_45, %c0_46] : memref<2x3x1x128xf32, #tpu.memory_space<vmem>>, vector<1x3x1x128xf32>
    %68 = vector.shape_cast %67 : vector<1x3x1x128xf32> to vector<3x1x128xf32>
    %c0_47 = arith.constant 0 : index
    %c0_48 = arith.constant 0 : index
    %c0_49 = arith.constant 0 : index
    %c0_50 = arith.constant 0 : index
    %69 = vector.load %arg11[%c0_47, %c0_48, %c0_49, %c0_50] : memref<2x3x1x128xf32, #tpu.memory_space<vmem>>, vector<1x3x1x128xf32>
    %70 = vector.shape_cast %69 : vector<1x3x1x128xf32> to vector<3x1x128xf32>
    %cst_51 = arith.constant dense<0.000000e+00> : vector<3x2xf32>
    %71 = vector.multi_reduction <add>, %66, %cst_51 [2] : vector<3x2x128xf32> to vector<3x2xf32>
    %72 = vector.shape_cast %71 : vector<3x2xf32> to vector<3x2x1xf32>
    %cst_52 = arith.constant 1.280000e+02 : f32
    %73 = vector.broadcast %cst_52 : f32 to vector<3x2x1xf32>
    %74 = arith.divf %72, %73 : vector<3x2x1xf32>
    %75 = vector.broadcast %74 : vector<3x2x1xf32> to vector<3x2x128xf32>
    %76 = arith.subf %66, %75 : vector<3x2x128xf32>
    %77 = arith.mulf %76, %76 : vector<3x2x128xf32>
    %cst_53 = arith.constant dense<0.000000e+00> : vector<3x2xf32>
    %78 = vector.multi_reduction <add>, %77, %cst_53 [2] : vector<3x2x128xf32> to vector<3x2xf32>
    %79 = vector.shape_cast %78 : vector<3x2xf32> to vector<3x2x1xf32>
    %cst_54 = arith.constant 1.280000e+02 : f32
    %80 = vector.broadcast %cst_54 : f32 to vector<3x2x1xf32>
    %81 = arith.divf %79, %80 : vector<3x2x1xf32>
    %82 = vector.broadcast %74 : vector<3x2x1xf32> to vector<3x2x128xf32>
    %83 = arith.subf %66, %82 : vector<3x2x128xf32>
    %cst_55 = arith.constant 9.99999974E-6 : f32
    %84 = vector.broadcast %cst_55 : f32 to vector<3x2x1xf32>
    %85 = arith.addf %81, %84 : vector<3x2x1xf32>
    %86 = math.rsqrt %85 : vector<3x2x1xf32>
    %87 = vector.broadcast %86 : vector<3x2x1xf32> to vector<3x2x128xf32>
    %88 = arith.mulf %83, %87 : vector<3x2x128xf32>
    %89 = vector.broadcast %68 : vector<3x1x128xf32> to vector<3x2x128xf32>
    %90 = arith.mulf %88, %89 : vector<3x2x128xf32>
    %91 = vector.broadcast %70 : vector<3x1x128xf32> to vector<3x2x128xf32>
    %92 = arith.addf %90, %91 : vector<3x2x128xf32>
    %c0_56 = arith.constant 0 : index
    %c0_57 = arith.constant 0 : index
    %c0_58 = arith.constant 0 : index
    %c0_59 = arith.constant 0 : index
    %93 = vector.load %arg12[%c0_56, %c0_57, %c0_58, %c0_59] : memref<4x3x128x96xf32, #tpu.memory_space<vmem>>, vector<1x3x128x96xf32>
    %94 = vector.shape_cast %93 : vector<1x3x128x96xf32> to vector<3x128x96xf32>
    "tpu.trace_start"() <{level = 10 : i32, message = "npi,nij->npj"}> : () -> ()
    %cst_60 = arith.constant dense<0.000000e+00> : vector<3x2x96xf32>
    %95 = tpu.matmul %92, %94, %cst_60 {dimension_numbers = #tpu.dot_dimension_numbers<[2], [1], [1], [2], [0, 0, 0, 1, 1, 2], [0], [0]>} : vector<3x2x128xf32>, vector<3x128x96xf32>, vector<3x2x96xf32> -> vector<3x2x96xf32>
    "tpu.trace_stop"() : () -> ()
    %c0_61 = arith.constant 0 : index
    %c0_62 = arith.constant 0 : index
    %c0_63 = arith.constant 0 : index
    %c0_64 = arith.constant 0 : index
    %96 = vector.load %arg15[%c0_61, %c0_62, %c0_63, %c0_64] : memref<8x3x1x96xf32, #tpu.memory_space<vmem>>, vector<1x3x1x96xf32>
    %97 = vector.shape_cast %96 : vector<1x3x1x96xf32> to vector<3x1x96xf32>
    %98 = vector.broadcast %97 : vector<3x1x96xf32> to vector<3x2x96xf32>
    %99 = arith.addf %95, %98 : vector<3x2x96xf32>
    %c0_65 = arith.constant 0 : index
    %c0_66 = arith.constant 0 : index
    %c0_67 = arith.constant 0 : index
    %c0_68 = arith.constant 0 : index
    %100 = vector.load %arg14[%c0_65, %c0_66, %c0_67, %c0_68] : memref<8x3x32x96xf32, #tpu.memory_space<vmem>>, vector<1x3x32x96xf32>
    %101 = vector.shape_cast %100 : vector<1x3x32x96xf32> to vector<3x32x96xf32>
    "tpu.trace_start"() <{level = 10 : i32, message = "npi,nij->npj"}> : () -> ()
    %cst_69 = arith.constant dense<0.000000e+00> : vector<3x2x96xf32>
    %102 = tpu.matmul %62, %101, %cst_69 {dimension_numbers = #tpu.dot_dimension_numbers<[2], [1], [1], [2], [0, 0, 0, 1, 1, 2], [0], [0]>} : vector<3x2x32xf32>, vector<3x32x96xf32>, vector<3x2x96xf32> -> vector<3x2x96xf32>
    "tpu.trace_stop"() : () -> ()
    %c0_70 = arith.constant 0 : index
    %c0_71 = arith.constant 0 : index
    %c0_72 = arith.constant 0 : index
    %c0_73 = arith.constant 0 : index
    %103 = vector.load %arg16[%c0_70, %c0_71, %c0_72, %c0_73] : memref<8x3x1x96xf32, #tpu.memory_space<vmem>>, vector<1x3x1x96xf32>
    %104 = vector.shape_cast %103 : vector<1x3x1x96xf32> to vector<3x1x96xf32>
    %105 = vector.broadcast %104 : vector<3x1x96xf32> to vector<3x2x96xf32>
    %106 = arith.addf %102, %105 : vector<3x2x96xf32>
    %107 = vector.extract_strided_slice %99 {offsets = [0, 0, 0], sizes = [3, 2, 32], strides = [1, 1, 1]} : vector<3x2x96xf32> to vector<3x2x32xf32>
    %108 = vector.extract_strided_slice %106 {offsets = [0, 0, 0], sizes = [3, 2, 32], strides = [1, 1, 1]} : vector<3x2x96xf32> to vector<3x2x32xf32>
    %109 = arith.addf %107, %108 : vector<3x2x32xf32>
    %110 = arith.negf %109 : vector<3x2x32xf32>
    %111 = math.exp %110 : vector<3x2x32xf32>
    %cst_74 = arith.constant 1.000000e+00 : f32
    %112 = vector.broadcast %cst_74 : f32 to vector<3x2x32xf32>
    %113 = arith.addf %112, %111 : vector<3x2x32xf32>
    %114 = arith.divf %112, %113 : vector<3x2x32xf32>
    %115 = vector.extract_strided_slice %99 {offsets = [0, 0, 32], sizes = [3, 2, 32], strides = [1, 1, 1]} : vector<3x2x96xf32> to vector<3x2x32xf32>
    %116 = vector.extract_strided_slice %106 {offsets = [0, 0, 32], sizes = [3, 2, 32], strides = [1, 1, 1]} : vector<3x2x96xf32> to vector<3x2x32xf32>
    %117 = arith.addf %115, %116 : vector<3x2x32xf32>
    %118 = arith.negf %117 : vector<3x2x32xf32>
    %119 = math.exp %118 : vector<3x2x32xf32>
    %cst_75 = arith.constant 1.000000e+00 : f32
    %120 = vector.broadcast %cst_75 : f32 to vector<3x2x32xf32>
    %121 = arith.addf %120, %119 : vector<3x2x32xf32>
    %122 = arith.divf %120, %121 : vector<3x2x32xf32>
    %123 = vector.extract_strided_slice %99 {offsets = [0, 0, 64], sizes = [3, 2, 32], strides = [1, 1, 1]} : vector<3x2x96xf32> to vector<3x2x32xf32>
    %124 = vector.extract_strided_slice %106 {offsets = [0, 0, 64], sizes = [3, 2, 32], strides = [1, 1, 1]} : vector<3x2x96xf32> to vector<3x2x32xf32>
    %125 = arith.mulf %114, %124 : vector<3x2x32xf32>
    %126 = arith.addf %123, %125 : vector<3x2x32xf32>
    %127 = math.tanh %126 : vector<3x2x32xf32>
    %cst_76 = arith.constant 1.000000e+00 : f32
    %128 = vector.broadcast %cst_76 : f32 to vector<3x2x32xf32>
    %129 = arith.subf %128, %122 : vector<3x2x32xf32>
    %130 = arith.mulf %129, %127 : vector<3x2x32xf32>
    %131 = arith.mulf %122, %62 : vector<3x2x32xf32>
    %132 = arith.addf %130, %131 : vector<3x2x32xf32>
    %c1 = arith.constant 1 : index
    %c0_77 = arith.constant 0 : index
    %c0_78 = arith.constant 0 : index
    %c0_79 = arith.constant 0 : index
    %133 = vector.load %arg12[%c1, %c0_77, %c0_78, %c0_79] : memref<4x3x128x96xf32, #tpu.memory_space<vmem>>, vector<1x3x128x96xf32>
    %134 = vector.shape_cast %133 : vector<1x3x128x96xf32> to vector<3x128x96xf32>
    "tpu.trace_start"() <{level = 10 : i32, message = "npi,nij->npj"}> : () -> ()
    %cst_80 = arith.constant dense<0.000000e+00> : vector<3x2x96xf32>
    %135 = tpu.matmul %92, %134, %cst_80 {dimension_numbers = #tpu.dot_dimension_numbers<[2], [1], [1], [2], [0, 0, 0, 1, 1, 2], [0], [0]>} : vector<3x2x128xf32>, vector<3x128x96xf32>, vector<3x2x96xf32> -> vector<3x2x96xf32>
    "tpu.trace_stop"() : () -> ()
    %c1_81 = arith.constant 1 : index
    %c0_82 = arith.constant 0 : index
    %c0_83 = arith.constant 0 : index
    %c0_84 = arith.constant 0 : index
    %136 = vector.load %arg15[%c1_81, %c0_82, %c0_83, %c0_84] : memref<8x3x1x96xf32, #tpu.memory_space<vmem>>, vector<1x3x1x96xf32>
    %137 = vector.shape_cast %136 : vector<1x3x1x96xf32> to vector<3x1x96xf32>
    %138 = vector.broadcast %137 : vector<3x1x96xf32> to vector<3x2x96xf32>
    %139 = arith.addf %135, %138 : vector<3x2x96xf32>
    %c1_85 = arith.constant 1 : index
    %c0_86 = arith.constant 0 : index
    %c0_87 = arith.constant 0 : index
    %c0_88 = arith.constant 0 : index
    %140 = vector.load %arg14[%c1_85, %c0_86, %c0_87, %c0_88] : memref<8x3x32x96xf32, #tpu.memory_space<vmem>>, vector<1x3x32x96xf32>
    %141 = vector.shape_cast %140 : vector<1x3x32x96xf32> to vector<3x32x96xf32>
    "tpu.trace_start"() <{level = 10 : i32, message = "npi,nij->npj"}> : () -> ()
    %cst_89 = arith.constant dense<0.000000e+00> : vector<3x2x96xf32>
    %142 = tpu.matmul %63, %141, %cst_89 {dimension_numbers = #tpu.dot_dimension_numbers<[2], [1], [1], [2], [0, 0, 0, 1, 1, 2], [0], [0]>} : vector<3x2x32xf32>, vector<3x32x96xf32>, vector<3x2x96xf32> -> vector<3x2x96xf32>
    "tpu.trace_stop"() : () -> ()
    %c1_90 = arith.constant 1 : index
    %c0_91 = arith.constant 0 : index
    %c0_92 = arith.constant 0 : index
    %c0_93 = arith.constant 0 : index
    %143 = vector.load %arg16[%c1_90, %c0_91, %c0_92, %c0_93] : memref<8x3x1x96xf32, #tpu.memory_space<vmem>>, vector<1x3x1x96xf32>
    %144 = vector.shape_cast %143 : vector<1x3x1x96xf32> to vector<3x1x96xf32>
    %145 = vector.broadcast %144 : vector<3x1x96xf32> to vector<3x2x96xf32>
    %146 = arith.addf %142, %145 : vector<3x2x96xf32>
    %147 = vector.extract_strided_slice %139 {offsets = [0, 0, 0], sizes = [3, 2, 32], strides = [1, 1, 1]} : vector<3x2x96xf32> to vector<3x2x32xf32>
    %148 = vector.extract_strided_slice %146 {offsets = [0, 0, 0], sizes = [3, 2, 32], strides = [1, 1, 1]} : vector<3x2x96xf32> to vector<3x2x32xf32>
    %149 = arith.addf %147, %148 : vector<3x2x32xf32>
    %150 = arith.negf %149 : vector<3x2x32xf32>
    %151 = math.exp %150 : vector<3x2x32xf32>
    %cst_94 = arith.constant 1.000000e+00 : f32
    %152 = vector.broadcast %cst_94 : f32 to vector<3x2x32xf32>
    %153 = arith.addf %152, %151 : vector<3x2x32xf32>
    %154 = arith.divf %152, %153 : vector<3x2x32xf32>
    %155 = vector.extract_strided_slice %139 {offsets = [0, 0, 32], sizes = [3, 2, 32], strides = [1, 1, 1]} : vector<3x2x96xf32> to vector<3x2x32xf32>
    %156 = vector.extract_strided_slice %146 {offsets = [0, 0, 32], sizes = [3, 2, 32], strides = [1, 1, 1]} : vector<3x2x96xf32> to vector<3x2x32xf32>
    %157 = arith.addf %155, %156 : vector<3x2x32xf32>
    %158 = arith.negf %157 : vector<3x2x32xf32>
    %159 = math.exp %158 : vector<3x2x32xf32>
    %cst_95 = arith.constant 1.000000e+00 : f32
    %160 = vector.broadcast %cst_95 : f32 to vector<3x2x32xf32>
    %161 = arith.addf %160, %159 : vector<3x2x32xf32>
    %162 = arith.divf %160, %161 : vector<3x2x32xf32>
    %163 = vector.extract_strided_slice %139 {offsets = [0, 0, 64], sizes = [3, 2, 32], strides = [1, 1, 1]} : vector<3x2x96xf32> to vector<3x2x32xf32>
    %164 = vector.extract_strided_slice %146 {offsets = [0, 0, 64], sizes = [3, 2, 32], strides = [1, 1, 1]} : vector<3x2x96xf32> to vector<3x2x32xf32>
    %165 = arith.mulf %154, %164 : vector<3x2x32xf32>
    %166 = arith.addf %163, %165 : vector<3x2x32xf32>
    %167 = math.tanh %166 : vector<3x2x32xf32>
    %cst_96 = arith.constant 1.000000e+00 : f32
    %168 = vector.broadcast %cst_96 : f32 to vector<3x2x32xf32>
    %169 = arith.subf %168, %162 : vector<3x2x32xf32>
    %170 = arith.mulf %169, %167 : vector<3x2x32xf32>
    %171 = arith.mulf %162, %63 : vector<3x2x32xf32>
    %172 = arith.addf %170, %171 : vector<3x2x32xf32>
    %173 = tpu.concatenate %132, %172 in 2 : vector<3x2x32xf32>, vector<3x2x32xf32> -> vector<3x2x64xf32>
    %c0_97 = arith.constant 0 : index
    %c0_98 = arith.constant 0 : index
    %c0_99 = arith.constant 0 : index
    %c0_100 = arith.constant 0 : index
    %174 = vector.load %arg13[%c0_97, %c0_98, %c0_99, %c0_100] : memref<4x3x64x96xf32, #tpu.memory_space<vmem>>, vector<1x3x64x96xf32>
    %175 = vector.shape_cast %174 : vector<1x3x64x96xf32> to vector<3x64x96xf32>
    "tpu.trace_start"() <{level = 10 : i32, message = "npi,nij->npj"}> : () -> ()
    %cst_101 = arith.constant dense<0.000000e+00> : vector<3x2x96xf32>
    %176 = tpu.matmul %173, %175, %cst_101 {dimension_numbers = #tpu.dot_dimension_numbers<[2], [1], [1], [2], [0, 0, 0, 1, 1, 2], [0], [0]>} : vector<3x2x64xf32>, vector<3x64x96xf32>, vector<3x2x96xf32> -> vector<3x2x96xf32>
    "tpu.trace_stop"() : () -> ()
    %c2 = arith.constant 2 : index
    %c0_102 = arith.constant 0 : index
    %c0_103 = arith.constant 0 : index
    %c0_104 = arith.constant 0 : index
    %177 = vector.load %arg15[%c2, %c0_102, %c0_103, %c0_104] : memref<8x3x1x96xf32, #tpu.memory_space<vmem>>, vector<1x3x1x96xf32>
    %178 = vector.shape_cast %177 : vector<1x3x1x96xf32> to vector<3x1x96xf32>
    %179 = vector.broadcast %178 : vector<3x1x96xf32> to vector<3x2x96xf32>
    %180 = arith.addf %176, %179 : vector<3x2x96xf32>
    %c2_105 = arith.constant 2 : index
    %c0_106 = arith.constant 0 : index
    %c0_107 = arith.constant 0 : index
    %c0_108 = arith.constant 0 : index
    %181 = vector.load %arg14[%c2_105, %c0_106, %c0_107, %c0_108] : memref<8x3x32x96xf32, #tpu.memory_space<vmem>>, vector<1x3x32x96xf32>
    %182 = vector.shape_cast %181 : vector<1x3x32x96xf32> to vector<3x32x96xf32>
    "tpu.trace_start"() <{level = 10 : i32, message = "npi,nij->npj"}> : () -> ()
    %cst_109 = arith.constant dense<0.000000e+00> : vector<3x2x96xf32>
    %183 = tpu.matmul %64, %182, %cst_109 {dimension_numbers = #tpu.dot_dimension_numbers<[2], [1], [1], [2], [0, 0, 0, 1, 1, 2], [0], [0]>} : vector<3x2x32xf32>, vector<3x32x96xf32>, vector<3x2x96xf32> -> vector<3x2x96xf32>
    "tpu.trace_stop"() : () -> ()
    %c2_110 = arith.constant 2 : index
    %c0_111 = arith.constant 0 : index
    %c0_112 = arith.constant 0 : index
    %c0_113 = arith.constant 0 : index
    %184 = vector.load %arg16[%c2_110, %c0_111, %c0_112, %c0_113] : memref<8x3x1x96xf32, #tpu.memory_space<vmem>>, vector<1x3x1x96xf32>
    %185 = vector.shape_cast %184 : vector<1x3x1x96xf32> to vector<3x1x96xf32>
    %186 = vector.broadcast %185 : vector<3x1x96xf32> to vector<3x2x96xf32>
    %187 = arith.addf %183, %186 : vector<3x2x96xf32>
    %188 = vector.extract_strided_slice %180 {offsets = [0, 0, 0], sizes = [3, 2, 32], strides = [1, 1, 1]} : vector<3x2x96xf32> to vector<3x2x32xf32>
    %189 = vector.extract_strided_slice %187 {offsets = [0, 0, 0], sizes = [3, 2, 32], strides = [1, 1, 1]} : vector<3x2x96xf32> to vector<3x2x32xf32>
    %190 = arith.addf %188, %189 : vector<3x2x32xf32>
    %191 = arith.negf %190 : vector<3x2x32xf32>
    %192 = math.exp %191 : vector<3x2x32xf32>
    %cst_114 = arith.constant 1.000000e+00 : f32
    %193 = vector.broadcast %cst_114 : f32 to vector<3x2x32xf32>
    %194 = arith.addf %193, %192 : vector<3x2x32xf32>
    %195 = arith.divf %193, %194 : vector<3x2x32xf32>
    %196 = vector.extract_strided_slice %180 {offsets = [0, 0, 32], sizes = [3, 2, 32], strides = [1, 1, 1]} : vector<3x2x96xf32> to vector<3x2x32xf32>
    %197 = vector.extract_strided_slice %187 {offsets = [0, 0, 32], sizes = [3, 2, 32], strides = [1, 1, 1]} : vector<3x2x96xf32> to vector<3x2x32xf32>
    %198 = arith.addf %196, %197 : vector<3x2x32xf32>
    %199 = arith.negf %198 : vector<3x2x32xf32>
    %200 = math.exp %199 : vector<3x2x32xf32>
    %cst_115 = arith.constant 1.000000e+00 : f32
    %201 = vector.broadcast %cst_115 : f32 to vector<3x2x32xf32>
    %202 = arith.addf %201, %200 : vector<3x2x32xf32>
    %203 = arith.divf %201, %202 : vector<3x2x32xf32>
    %204 = vector.extract_strided_slice %180 {offsets = [0, 0, 64], sizes = [3, 2, 32], strides = [1, 1, 1]} : vector<3x2x96xf32> to vector<3x2x32xf32>
    %205 = vector.extract_strided_slice %187 {offsets = [0, 0, 64], sizes = [3, 2, 32], strides = [1, 1, 1]} : vector<3x2x96xf32> to vector<3x2x32xf32>
    %206 = arith.mulf %195, %205 : vector<3x2x32xf32>
    %207 = arith.addf %204, %206 : vector<3x2x32xf32>
    %208 = math.tanh %207 : vector<3x2x32xf32>
    %cst_116 = arith.constant 1.000000e+00 : f32
    %209 = vector.broadcast %cst_116 : f32 to vector<3x2x32xf32>
    %210 = arith.subf %209, %203 : vector<3x2x32xf32>
    %211 = arith.mulf %210, %208 : vector<3x2x32xf32>
    %212 = arith.mulf %203, %64 : vector<3x2x32xf32>
    %213 = arith.addf %211, %212 : vector<3x2x32xf32>
    %c1_117 = arith.constant 1 : index
    %c0_118 = arith.constant 0 : index
    %c0_119 = arith.constant 0 : index
    %c0_120 = arith.constant 0 : index
    %214 = vector.load %arg13[%c1_117, %c0_118, %c0_119, %c0_120] : memref<4x3x64x96xf32, #tpu.memory_space<vmem>>, vector<1x3x64x96xf32>
    %215 = vector.shape_cast %214 : vector<1x3x64x96xf32> to vector<3x64x96xf32>
    "tpu.trace_start"() <{level = 10 : i32, message = "npi,nij->npj"}> : () -> ()
    %cst_121 = arith.constant dense<0.000000e+00> : vector<3x2x96xf32>
    %216 = tpu.matmul %173, %215, %cst_121 {dimension_numbers = #tpu.dot_dimension_numbers<[2], [1], [1], [2], [0, 0, 0, 1, 1, 2], [0], [0]>} : vector<3x2x64xf32>, vector<3x64x96xf32>, vector<3x2x96xf32> -> vector<3x2x96xf32>
    "tpu.trace_stop"() : () -> ()
    %c3 = arith.constant 3 : index
    %c0_122 = arith.constant 0 : index
    %c0_123 = arith.constant 0 : index
    %c0_124 = arith.constant 0 : index
    %217 = vector.load %arg15[%c3, %c0_122, %c0_123, %c0_124] : memref<8x3x1x96xf32, #tpu.memory_space<vmem>>, vector<1x3x1x96xf32>
    %218 = vector.shape_cast %217 : vector<1x3x1x96xf32> to vector<3x1x96xf32>
    %219 = vector.broadcast %218 : vector<3x1x96xf32> to vector<3x2x96xf32>
    %220 = arith.addf %216, %219 : vector<3x2x96xf32>
    %c3_125 = arith.constant 3 : index
    %c0_126 = arith.constant 0 : index
    %c0_127 = arith.constant 0 : index
    %c0_128 = arith.constant 0 : index
    %221 = vector.load %arg14[%c3_125, %c0_126, %c0_127, %c0_128] : memref<8x3x32x96xf32, #tpu.memory_space<vmem>>, vector<1x3x32x96xf32>
    %222 = vector.shape_cast %221 : vector<1x3x32x96xf32> to vector<3x32x96xf32>
    "tpu.trace_start"() <{level = 10 : i32, message = "npi,nij->npj"}> : () -> ()
    %cst_129 = arith.constant dense<0.000000e+00> : vector<3x2x96xf32>
    %223 = tpu.matmul %65, %222, %cst_129 {dimension_numbers = #tpu.dot_dimension_numbers<[2], [1], [1], [2], [0, 0, 0, 1, 1, 2], [0], [0]>} : vector<3x2x32xf32>, vector<3x32x96xf32>, vector<3x2x96xf32> -> vector<3x2x96xf32>
    "tpu.trace_stop"() : () -> ()
    %c3_130 = arith.constant 3 : index
    %c0_131 = arith.constant 0 : index
    %c0_132 = arith.constant 0 : index
    %c0_133 = arith.constant 0 : index
    %224 = vector.load %arg16[%c3_130, %c0_131, %c0_132, %c0_133] : memref<8x3x1x96xf32, #tpu.memory_space<vmem>>, vector<1x3x1x96xf32>
    %225 = vector.shape_cast %224 : vector<1x3x1x96xf32> to vector<3x1x96xf32>
    %226 = vector.broadcast %225 : vector<3x1x96xf32> to vector<3x2x96xf32>
    %227 = arith.addf %223, %226 : vector<3x2x96xf32>
    %228 = vector.extract_strided_slice %220 {offsets = [0, 0, 0], sizes = [3, 2, 32], strides = [1, 1, 1]} : vector<3x2x96xf32> to vector<3x2x32xf32>
    %229 = vector.extract_strided_slice %227 {offsets = [0, 0, 0], sizes = [3, 2, 32], strides = [1, 1, 1]} : vector<3x2x96xf32> to vector<3x2x32xf32>
    %230 = arith.addf %228, %229 : vector<3x2x32xf32>
    %231 = arith.negf %230 : vector<3x2x32xf32>
    %232 = math.exp %231 : vector<3x2x32xf32>
    %cst_134 = arith.constant 1.000000e+00 : f32
    %233 = vector.broadcast %cst_134 : f32 to vector<3x2x32xf32>
    %234 = arith.addf %233, %232 : vector<3x2x32xf32>
    %235 = arith.divf %233, %234 : vector<3x2x32xf32>
    %236 = vector.extract_strided_slice %220 {offsets = [0, 0, 32], sizes = [3, 2, 32], strides = [1, 1, 1]} : vector<3x2x96xf32> to vector<3x2x32xf32>
    %237 = vector.extract_strided_slice %227 {offsets = [0, 0, 32], sizes = [3, 2, 32], strides = [1, 1, 1]} : vector<3x2x96xf32> to vector<3x2x32xf32>
    %238 = arith.addf %236, %237 : vector<3x2x32xf32>
    %239 = arith.negf %238 : vector<3x2x32xf32>
    %240 = math.exp %239 : vector<3x2x32xf32>
    %cst_135 = arith.constant 1.000000e+00 : f32
    %241 = vector.broadcast %cst_135 : f32 to vector<3x2x32xf32>
    %242 = arith.addf %241, %240 : vector<3x2x32xf32>
    %243 = arith.divf %241, %242 : vector<3x2x32xf32>
    %244 = vector.extract_strided_slice %220 {offsets = [0, 0, 64], sizes = [3, 2, 32], strides = [1, 1, 1]} : vector<3x2x96xf32> to vector<3x2x32xf32>
    %245 = vector.extract_strided_slice %227 {offsets = [0, 0, 64], sizes = [3, 2, 32], strides = [1, 1, 1]} : vector<3x2x96xf32> to vector<3x2x32xf32>
    %246 = arith.mulf %235, %245 : vector<3x2x32xf32>
    %247 = arith.addf %244, %246 : vector<3x2x32xf32>
    %248 = math.tanh %247 : vector<3x2x32xf32>
    %cst_136 = arith.constant 1.000000e+00 : f32
    %249 = vector.broadcast %cst_136 : f32 to vector<3x2x32xf32>
    %250 = arith.subf %249, %243 : vector<3x2x32xf32>
    %251 = arith.mulf %250, %248 : vector<3x2x32xf32>
    %252 = arith.mulf %243, %65 : vector<3x2x32xf32>
    %253 = arith.addf %251, %252 : vector<3x2x32xf32>
    %254 = tpu.concatenate %213, %253 in 2 : vector<3x2x32xf32>, vector<3x2x32xf32> -> vector<3x2x64xf32>
    %cst_137 = arith.constant 5.000000e-01 : f32
    %255 = vector.broadcast %cst_137 : f32 to vector<3x2x64xf32>
    %256 = arith.mulf %255, %254 : vector<3x2x64xf32>
    %cst_138 = arith.constant 4.471500e-02 : f32
    %257 = vector.broadcast %cst_138 : f32 to vector<3x2x64xf32>
    %258 = arith.mulf %257, %254 : vector<3x2x64xf32>
    %259 = arith.mulf %258, %254 : vector<3x2x64xf32>
    %260 = arith.mulf %259, %254 : vector<3x2x64xf32>
    %261 = arith.addf %254, %260 : vector<3x2x64xf32>
    %cst_139 = arith.constant 0.797884583 : f32
    %262 = vector.broadcast %cst_139 : f32 to vector<3x2x64xf32>
    %263 = arith.mulf %262, %261 : vector<3x2x64xf32>
    %264 = math.tanh %263 : vector<3x2x64xf32>
    %cst_140 = arith.constant 1.000000e+00 : f32
    %265 = vector.broadcast %cst_140 : f32 to vector<3x2x64xf32>
    %266 = arith.addf %265, %264 : vector<3x2x64xf32>
    %267 = arith.mulf %256, %266 : vector<3x2x64xf32>
    %268 = tpu.concatenate %267, %61 in 2 : vector<3x2x64xf32>, vector<3x2x64xf32> -> vector<3x2x128xf32>
    %c1_141 = arith.constant 1 : index
    %c0_142 = arith.constant 0 : index
    %c0_143 = arith.constant 0 : index
    %c0_144 = arith.constant 0 : index
    %269 = vector.load %arg10[%c1_141, %c0_142, %c0_143, %c0_144] : memref<2x3x1x128xf32, #tpu.memory_space<vmem>>, vector<1x3x1x128xf32>
    %270 = vector.shape_cast %269 : vector<1x3x1x128xf32> to vector<3x1x128xf32>
    %c1_145 = arith.constant 1 : index
    %c0_146 = arith.constant 0 : index
    %c0_147 = arith.constant 0 : index
    %c0_148 = arith.constant 0 : index
    %271 = vector.load %arg11[%c1_145, %c0_146, %c0_147, %c0_148] : memref<2x3x1x128xf32, #tpu.memory_space<vmem>>, vector<1x3x1x128xf32>
    %272 = vector.shape_cast %271 : vector<1x3x1x128xf32> to vector<3x1x128xf32>
    %cst_149 = arith.constant dense<0.000000e+00> : vector<3x2xf32>
    %273 = vector.multi_reduction <add>, %268, %cst_149 [2] : vector<3x2x128xf32> to vector<3x2xf32>
    %274 = vector.shape_cast %273 : vector<3x2xf32> to vector<3x2x1xf32>
    %cst_150 = arith.constant 1.280000e+02 : f32
    %275 = vector.broadcast %cst_150 : f32 to vector<3x2x1xf32>
    %276 = arith.divf %274, %275 : vector<3x2x1xf32>
    %277 = vector.broadcast %276 : vector<3x2x1xf32> to vector<3x2x128xf32>
    %278 = arith.subf %268, %277 : vector<3x2x128xf32>
    %279 = arith.mulf %278, %278 : vector<3x2x128xf32>
    %cst_151 = arith.constant dense<0.000000e+00> : vector<3x2xf32>
    %280 = vector.multi_reduction <add>, %279, %cst_151 [2] : vector<3x2x128xf32> to vector<3x2xf32>
    %281 = vector.shape_cast %280 : vector<3x2xf32> to vector<3x2x1xf32>
    %cst_152 = arith.constant 1.280000e+02 : f32
    %282 = vector.broadcast %cst_152 : f32 to vector<3x2x1xf32>
    %283 = arith.divf %281, %282 : vector<3x2x1xf32>
    %284 = vector.broadcast %276 : vector<3x2x1xf32> to vector<3x2x128xf32>
    %285 = arith.subf %268, %284 : vector<3x2x128xf32>
    %cst_153 = arith.constant 9.99999974E-6 : f32
    %286 = vector.broadcast %cst_153 : f32 to vector<3x2x1xf32>
    %287 = arith.addf %283, %286 : vector<3x2x1xf32>
    %288 = math.rsqrt %287 : vector<3x2x1xf32>
    %289 = vector.broadcast %288 : vector<3x2x1xf32> to vector<3x2x128xf32>
    %290 = arith.mulf %285, %289 : vector<3x2x128xf32>
    %291 = vector.broadcast %270 : vector<3x1x128xf32> to vector<3x2x128xf32>
    %292 = arith.mulf %290, %291 : vector<3x2x128xf32>
    %293 = vector.broadcast %272 : vector<3x1x128xf32> to vector<3x2x128xf32>
    %294 = arith.addf %292, %293 : vector<3x2x128xf32>
    %c2_154 = arith.constant 2 : index
    %c0_155 = arith.constant 0 : index
    %c0_156 = arith.constant 0 : index
    %c0_157 = arith.constant 0 : index
    %295 = vector.load %arg12[%c2_154, %c0_155, %c0_156, %c0_157] : memref<4x3x128x96xf32, #tpu.memory_space<vmem>>, vector<1x3x128x96xf32>
    %296 = vector.shape_cast %295 : vector<1x3x128x96xf32> to vector<3x128x96xf32>
    "tpu.trace_start"() <{level = 10 : i32, message = "npi,nij->npj"}> : () -> ()
    %cst_158 = arith.constant dense<0.000000e+00> : vector<3x2x96xf32>
    %297 = tpu.matmul %294, %296, %cst_158 {dimension_numbers = #tpu.dot_dimension_numbers<[2], [1], [1], [2], [0, 0, 0, 1, 1, 2], [0], [0]>} : vector<3x2x128xf32>, vector<3x128x96xf32>, vector<3x2x96xf32> -> vector<3x2x96xf32>
    "tpu.trace_stop"() : () -> ()
    %c4 = arith.constant 4 : index
    %c0_159 = arith.constant 0 : index
    %c0_160 = arith.constant 0 : index
    %c0_161 = arith.constant 0 : index
    %298 = vector.load %arg15[%c4, %c0_159, %c0_160, %c0_161] : memref<8x3x1x96xf32, #tpu.memory_space<vmem>>, vector<1x3x1x96xf32>
    %299 = vector.shape_cast %298 : vector<1x3x1x96xf32> to vector<3x1x96xf32>
    %300 = vector.broadcast %299 : vector<3x1x96xf32> to vector<3x2x96xf32>
    %301 = arith.addf %297, %300 : vector<3x2x96xf32>
    %c4_162 = arith.constant 4 : index
    %c0_163 = arith.constant 0 : index
    %c0_164 = arith.constant 0 : index
    %c0_165 = arith.constant 0 : index
    %302 = vector.load %arg14[%c4_162, %c0_163, %c0_164, %c0_165] : memref<8x3x32x96xf32, #tpu.memory_space<vmem>>, vector<1x3x32x96xf32>
    %303 = vector.shape_cast %302 : vector<1x3x32x96xf32> to vector<3x32x96xf32>
    "tpu.trace_start"() <{level = 10 : i32, message = "npi,nij->npj"}> : () -> ()
    %cst_166 = arith.constant dense<0.000000e+00> : vector<3x2x96xf32>
    %304 = tpu.matmul %132, %303, %cst_166 {dimension_numbers = #tpu.dot_dimension_numbers<[2], [1], [1], [2], [0, 0, 0, 1, 1, 2], [0], [0]>} : vector<3x2x32xf32>, vector<3x32x96xf32>, vector<3x2x96xf32> -> vector<3x2x96xf32>
    "tpu.trace_stop"() : () -> ()
    %c4_167 = arith.constant 4 : index
    %c0_168 = arith.constant 0 : index
    %c0_169 = arith.constant 0 : index
    %c0_170 = arith.constant 0 : index
    %305 = vector.load %arg16[%c4_167, %c0_168, %c0_169, %c0_170] : memref<8x3x1x96xf32, #tpu.memory_space<vmem>>, vector<1x3x1x96xf32>
    %306 = vector.shape_cast %305 : vector<1x3x1x96xf32> to vector<3x1x96xf32>
    %307 = vector.broadcast %306 : vector<3x1x96xf32> to vector<3x2x96xf32>
    %308 = arith.addf %304, %307 : vector<3x2x96xf32>
    %309 = vector.extract_strided_slice %301 {offsets = [0, 0, 0], sizes = [3, 2, 32], strides = [1, 1, 1]} : vector<3x2x96xf32> to vector<3x2x32xf32>
    %310 = vector.extract_strided_slice %308 {offsets = [0, 0, 0], sizes = [3, 2, 32], strides = [1, 1, 1]} : vector<3x2x96xf32> to vector<3x2x32xf32>
    %311 = arith.addf %309, %310 : vector<3x2x32xf32>
    %312 = arith.negf %311 : vector<3x2x32xf32>
    %313 = math.exp %312 : vector<3x2x32xf32>
    %cst_171 = arith.constant 1.000000e+00 : f32
    %314 = vector.broadcast %cst_171 : f32 to vector<3x2x32xf32>
    %315 = arith.addf %314, %313 : vector<3x2x32xf32>
    %316 = arith.divf %314, %315 : vector<3x2x32xf32>
    %317 = vector.extract_strided_slice %301 {offsets = [0, 0, 32], sizes = [3, 2, 32], strides = [1, 1, 1]} : vector<3x2x96xf32> to vector<3x2x32xf32>
    %318 = vector.extract_strided_slice %308 {offsets = [0, 0, 32], sizes = [3, 2, 32], strides = [1, 1, 1]} : vector<3x2x96xf32> to vector<3x2x32xf32>
    %319 = arith.addf %317, %318 : vector<3x2x32xf32>
    %320 = arith.negf %319 : vector<3x2x32xf32>
    %321 = math.exp %320 : vector<3x2x32xf32>
    %cst_172 = arith.constant 1.000000e+00 : f32
    %322 = vector.broadcast %cst_172 : f32 to vector<3x2x32xf32>
    %323 = arith.addf %322, %321 : vector<3x2x32xf32>
    %324 = arith.divf %322, %323 : vector<3x2x32xf32>
    %325 = vector.extract_strided_slice %301 {offsets = [0, 0, 64], sizes = [3, 2, 32], strides = [1, 1, 1]} : vector<3x2x96xf32> to vector<3x2x32xf32>
    %326 = vector.extract_strided_slice %308 {offsets = [0, 0, 64], sizes = [3, 2, 32], strides = [1, 1, 1]} : vector<3x2x96xf32> to vector<3x2x32xf32>
    %327 = arith.mulf %316, %326 : vector<3x2x32xf32>
    %328 = arith.addf %325, %327 : vector<3x2x32xf32>
    %329 = math.tanh %328 : vector<3x2x32xf32>
    %cst_173 = arith.constant 1.000000e+00 : f32
    %330 = vector.broadcast %cst_173 : f32 to vector<3x2x32xf32>
    %331 = arith.subf %330, %324 : vector<3x2x32xf32>
    %332 = arith.mulf %331, %329 : vector<3x2x32xf32>
    %333 = arith.mulf %324, %132 : vector<3x2x32xf32>
    %334 = arith.addf %332, %333 : vector<3x2x32xf32>
    %c3_174 = arith.constant 3 : index
    %c0_175 = arith.constant 0 : index
    %c0_176 = arith.constant 0 : index
    %c0_177 = arith.constant 0 : index
    %335 = vector.load %arg12[%c3_174, %c0_175, %c0_176, %c0_177] : memref<4x3x128x96xf32, #tpu.memory_space<vmem>>, vector<1x3x128x96xf32>
    %336 = vector.shape_cast %335 : vector<1x3x128x96xf32> to vector<3x128x96xf32>
    "tpu.trace_start"() <{level = 10 : i32, message = "npi,nij->npj"}> : () -> ()
    %cst_178 = arith.constant dense<0.000000e+00> : vector<3x2x96xf32>
    %337 = tpu.matmul %294, %336, %cst_178 {dimension_numbers = #tpu.dot_dimension_numbers<[2], [1], [1], [2], [0, 0, 0, 1, 1, 2], [0], [0]>} : vector<3x2x128xf32>, vector<3x128x96xf32>, vector<3x2x96xf32> -> vector<3x2x96xf32>
    "tpu.trace_stop"() : () -> ()
    %c5 = arith.constant 5 : index
    %c0_179 = arith.constant 0 : index
    %c0_180 = arith.constant 0 : index
    %c0_181 = arith.constant 0 : index
    %338 = vector.load %arg15[%c5, %c0_179, %c0_180, %c0_181] : memref<8x3x1x96xf32, #tpu.memory_space<vmem>>, vector<1x3x1x96xf32>
    %339 = vector.shape_cast %338 : vector<1x3x1x96xf32> to vector<3x1x96xf32>
    %340 = vector.broadcast %339 : vector<3x1x96xf32> to vector<3x2x96xf32>
    %341 = arith.addf %337, %340 : vector<3x2x96xf32>
    %c5_182 = arith.constant 5 : index
    %c0_183 = arith.constant 0 : index
    %c0_184 = arith.constant 0 : index
    %c0_185 = arith.constant 0 : index
    %342 = vector.load %arg14[%c5_182, %c0_183, %c0_184, %c0_185] : memref<8x3x32x96xf32, #tpu.memory_space<vmem>>, vector<1x3x32x96xf32>
    %343 = vector.shape_cast %342 : vector<1x3x32x96xf32> to vector<3x32x96xf32>
    "tpu.trace_start"() <{level = 10 : i32, message = "npi,nij->npj"}> : () -> ()
    %cst_186 = arith.constant dense<0.000000e+00> : vector<3x2x96xf32>
    %344 = tpu.matmul %172, %343, %cst_186 {dimension_numbers = #tpu.dot_dimension_numbers<[2], [1], [1], [2], [0, 0, 0, 1, 1, 2], [0], [0]>} : vector<3x2x32xf32>, vector<3x32x96xf32>, vector<3x2x96xf32> -> vector<3x2x96xf32>
    "tpu.trace_stop"() : () -> ()
    %c5_187 = arith.constant 5 : index
    %c0_188 = arith.constant 0 : index
    %c0_189 = arith.constant 0 : index
    %c0_190 = arith.constant 0 : index
    %345 = vector.load %arg16[%c5_187, %c0_188, %c0_189, %c0_190] : memref<8x3x1x96xf32, #tpu.memory_space<vmem>>, vector<1x3x1x96xf32>
    %346 = vector.shape_cast %345 : vector<1x3x1x96xf32> to vector<3x1x96xf32>
    %347 = vector.broadcast %346 : vector<3x1x96xf32> to vector<3x2x96xf32>
    %348 = arith.addf %344, %347 : vector<3x2x96xf32>
    %349 = vector.extract_strided_slice %341 {offsets = [0, 0, 0], sizes = [3, 2, 32], strides = [1, 1, 1]} : vector<3x2x96xf32> to vector<3x2x32xf32>
    %350 = vector.extract_strided_slice %348 {offsets = [0, 0, 0], sizes = [3, 2, 32], strides = [1, 1, 1]} : vector<3x2x96xf32> to vector<3x2x32xf32>
    %351 = arith.addf %349, %350 : vector<3x2x32xf32>
    %352 = arith.negf %351 : vector<3x2x32xf32>
    %353 = math.exp %352 : vector<3x2x32xf32>
    %cst_191 = arith.constant 1.000000e+00 : f32
    %354 = vector.broadcast %cst_191 : f32 to vector<3x2x32xf32>
    %355 = arith.addf %354, %353 : vector<3x2x32xf32>
    %356 = arith.divf %354, %355 : vector<3x2x32xf32>
    %357 = vector.extract_strided_slice %341 {offsets = [0, 0, 32], sizes = [3, 2, 32], strides = [1, 1, 1]} : vector<3x2x96xf32> to vector<3x2x32xf32>
    %358 = vector.extract_strided_slice %348 {offsets = [0, 0, 32], sizes = [3, 2, 32], strides = [1, 1, 1]} : vector<3x2x96xf32> to vector<3x2x32xf32>
    %359 = arith.addf %357, %358 : vector<3x2x32xf32>
    %360 = arith.negf %359 : vector<3x2x32xf32>
    %361 = math.exp %360 : vector<3x2x32xf32>
    %cst_192 = arith.constant 1.000000e+00 : f32
    %362 = vector.broadcast %cst_192 : f32 to vector<3x2x32xf32>
    %363 = arith.addf %362, %361 : vector<3x2x32xf32>
    %364 = arith.divf %362, %363 : vector<3x2x32xf32>
    %365 = vector.extract_strided_slice %341 {offsets = [0, 0, 64], sizes = [3, 2, 32], strides = [1, 1, 1]} : vector<3x2x96xf32> to vector<3x2x32xf32>
    %366 = vector.extract_strided_slice %348 {offsets = [0, 0, 64], sizes = [3, 2, 32], strides = [1, 1, 1]} : vector<3x2x96xf32> to vector<3x2x32xf32>
    %367 = arith.mulf %356, %366 : vector<3x2x32xf32>
    %368 = arith.addf %365, %367 : vector<3x2x32xf32>
    %369 = math.tanh %368 : vector<3x2x32xf32>
    %cst_193 = arith.constant 1.000000e+00 : f32
    %370 = vector.broadcast %cst_193 : f32 to vector<3x2x32xf32>
    %371 = arith.subf %370, %364 : vector<3x2x32xf32>
    %372 = arith.mulf %371, %369 : vector<3x2x32xf32>
    %373 = arith.mulf %364, %172 : vector<3x2x32xf32>
    %374 = arith.addf %372, %373 : vector<3x2x32xf32>
    %375 = tpu.concatenate %334, %374 in 2 : vector<3x2x32xf32>, vector<3x2x32xf32> -> vector<3x2x64xf32>
    %c2_194 = arith.constant 2 : index
    %c0_195 = arith.constant 0 : index
    %c0_196 = arith.constant 0 : index
    %c0_197 = arith.constant 0 : index
    %376 = vector.load %arg13[%c2_194, %c0_195, %c0_196, %c0_197] : memref<4x3x64x96xf32, #tpu.memory_space<vmem>>, vector<1x3x64x96xf32>
    %377 = vector.shape_cast %376 : vector<1x3x64x96xf32> to vector<3x64x96xf32>
    "tpu.trace_start"() <{level = 10 : i32, message = "npi,nij->npj"}> : () -> ()
    %cst_198 = arith.constant dense<0.000000e+00> : vector<3x2x96xf32>
    %378 = tpu.matmul %375, %377, %cst_198 {dimension_numbers = #tpu.dot_dimension_numbers<[2], [1], [1], [2], [0, 0, 0, 1, 1, 2], [0], [0]>} : vector<3x2x64xf32>, vector<3x64x96xf32>, vector<3x2x96xf32> -> vector<3x2x96xf32>
    "tpu.trace_stop"() : () -> ()
    %c6 = arith.constant 6 : index
    %c0_199 = arith.constant 0 : index
    %c0_200 = arith.constant 0 : index
    %c0_201 = arith.constant 0 : index
    %379 = vector.load %arg15[%c6, %c0_199, %c0_200, %c0_201] : memref<8x3x1x96xf32, #tpu.memory_space<vmem>>, vector<1x3x1x96xf32>
    %380 = vector.shape_cast %379 : vector<1x3x1x96xf32> to vector<3x1x96xf32>
    %381 = vector.broadcast %380 : vector<3x1x96xf32> to vector<3x2x96xf32>
    %382 = arith.addf %378, %381 : vector<3x2x96xf32>
    %c6_202 = arith.constant 6 : index
    %c0_203 = arith.constant 0 : index
    %c0_204 = arith.constant 0 : index
    %c0_205 = arith.constant 0 : index
    %383 = vector.load %arg14[%c6_202, %c0_203, %c0_204, %c0_205] : memref<8x3x32x96xf32, #tpu.memory_space<vmem>>, vector<1x3x32x96xf32>
    %384 = vector.shape_cast %383 : vector<1x3x32x96xf32> to vector<3x32x96xf32>
    "tpu.trace_start"() <{level = 10 : i32, message = "npi,nij->npj"}> : () -> ()
    %cst_206 = arith.constant dense<0.000000e+00> : vector<3x2x96xf32>
    %385 = tpu.matmul %213, %384, %cst_206 {dimension_numbers = #tpu.dot_dimension_numbers<[2], [1], [1], [2], [0, 0, 0, 1, 1, 2], [0], [0]>} : vector<3x2x32xf32>, vector<3x32x96xf32>, vector<3x2x96xf32> -> vector<3x2x96xf32>
    "tpu.trace_stop"() : () -> ()
    %c6_207 = arith.constant 6 : index
    %c0_208 = arith.constant 0 : index
    %c0_209 = arith.constant 0 : index
    %c0_210 = arith.constant 0 : index
    %386 = vector.load %arg16[%c6_207, %c0_208, %c0_209, %c0_210] : memref<8x3x1x96xf32, #tpu.memory_space<vmem>>, vector<1x3x1x96xf32>
    %387 = vector.shape_cast %386 : vector<1x3x1x96xf32> to vector<3x1x96xf32>
    %388 = vector.broadcast %387 : vector<3x1x96xf32> to vector<3x2x96xf32>
    %389 = arith.addf %385, %388 : vector<3x2x96xf32>
    %390 = vector.extract_strided_slice %382 {offsets = [0, 0, 0], sizes = [3, 2, 32], strides = [1, 1, 1]} : vector<3x2x96xf32> to vector<3x2x32xf32>
    %391 = vector.extract_strided_slice %389 {offsets = [0, 0, 0], sizes = [3, 2, 32], strides = [1, 1, 1]} : vector<3x2x96xf32> to vector<3x2x32xf32>
    %392 = arith.addf %390, %391 : vector<3x2x32xf32>
    %393 = arith.negf %392 : vector<3x2x32xf32>
    %394 = math.exp %393 : vector<3x2x32xf32>
    %cst_211 = arith.constant 1.000000e+00 : f32
    %395 = vector.broadcast %cst_211 : f32 to vector<3x2x32xf32>
    %396 = arith.addf %395, %394 : vector<3x2x32xf32>
    %397 = arith.divf %395, %396 : vector<3x2x32xf32>
    %398 = vector.extract_strided_slice %382 {offsets = [0, 0, 32], sizes = [3, 2, 32], strides = [1, 1, 1]} : vector<3x2x96xf32> to vector<3x2x32xf32>
    %399 = vector.extract_strided_slice %389 {offsets = [0, 0, 32], sizes = [3, 2, 32], strides = [1, 1, 1]} : vector<3x2x96xf32> to vector<3x2x32xf32>
    %400 = arith.addf %398, %399 : vector<3x2x32xf32>
    %401 = arith.negf %400 : vector<3x2x32xf32>
    %402 = math.exp %401 : vector<3x2x32xf32>
    %cst_212 = arith.constant 1.000000e+00 : f32
    %403 = vector.broadcast %cst_212 : f32 to vector<3x2x32xf32>
    %404 = arith.addf %403, %402 : vector<3x2x32xf32>
    %405 = arith.divf %403, %404 : vector<3x2x32xf32>
    %406 = vector.extract_strided_slice %382 {offsets = [0, 0, 64], sizes = [3, 2, 32], strides = [1, 1, 1]} : vector<3x2x96xf32> to vector<3x2x32xf32>
    %407 = vector.extract_strided_slice %389 {offsets = [0, 0, 64], sizes = [3, 2, 32], strides = [1, 1, 1]} : vector<3x2x96xf32> to vector<3x2x32xf32>
    %408 = arith.mulf %397, %407 : vector<3x2x32xf32>
    %409 = arith.addf %406, %408 : vector<3x2x32xf32>
    %410 = math.tanh %409 : vector<3x2x32xf32>
    %cst_213 = arith.constant 1.000000e+00 : f32
    %411 = vector.broadcast %cst_213 : f32 to vector<3x2x32xf32>
    %412 = arith.subf %411, %405 : vector<3x2x32xf32>
    %413 = arith.mulf %412, %410 : vector<3x2x32xf32>
    %414 = arith.mulf %405, %213 : vector<3x2x32xf32>
    %415 = arith.addf %413, %414 : vector<3x2x32xf32>
    %c3_214 = arith.constant 3 : index
    %c0_215 = arith.constant 0 : index
    %c0_216 = arith.constant 0 : index
    %c0_217 = arith.constant 0 : index
    %416 = vector.load %arg13[%c3_214, %c0_215, %c0_216, %c0_217] : memref<4x3x64x96xf32, #tpu.memory_space<vmem>>, vector<1x3x64x96xf32>
    %417 = vector.shape_cast %416 : vector<1x3x64x96xf32> to vector<3x64x96xf32>
    "tpu.trace_start"() <{level = 10 : i32, message = "npi,nij->npj"}> : () -> ()
    %cst_218 = arith.constant dense<0.000000e+00> : vector<3x2x96xf32>
    %418 = tpu.matmul %375, %417, %cst_218 {dimension_numbers = #tpu.dot_dimension_numbers<[2], [1], [1], [2], [0, 0, 0, 1, 1, 2], [0], [0]>} : vector<3x2x64xf32>, vector<3x64x96xf32>, vector<3x2x96xf32> -> vector<3x2x96xf32>
    "tpu.trace_stop"() : () -> ()
    %c7 = arith.constant 7 : index
    %c0_219 = arith.constant 0 : index
    %c0_220 = arith.constant 0 : index
    %c0_221 = arith.constant 0 : index
    %419 = vector.load %arg15[%c7, %c0_219, %c0_220, %c0_221] : memref<8x3x1x96xf32, #tpu.memory_space<vmem>>, vector<1x3x1x96xf32>
    %420 = vector.shape_cast %419 : vector<1x3x1x96xf32> to vector<3x1x96xf32>
    %421 = vector.broadcast %420 : vector<3x1x96xf32> to vector<3x2x96xf32>
    %422 = arith.addf %418, %421 : vector<3x2x96xf32>
    %c7_222 = arith.constant 7 : index
    %c0_223 = arith.constant 0 : index
    %c0_224 = arith.constant 0 : index
    %c0_225 = arith.constant 0 : index
    %423 = vector.load %arg14[%c7_222, %c0_223, %c0_224, %c0_225] : memref<8x3x32x96xf32, #tpu.memory_space<vmem>>, vector<1x3x32x96xf32>
    %424 = vector.shape_cast %423 : vector<1x3x32x96xf32> to vector<3x32x96xf32>
    "tpu.trace_start"() <{level = 10 : i32, message = "npi,nij->npj"}> : () -> ()
    %cst_226 = arith.constant dense<0.000000e+00> : vector<3x2x96xf32>
    %425 = tpu.matmul %253, %424, %cst_226 {dimension_numbers = #tpu.dot_dimension_numbers<[2], [1], [1], [2], [0, 0, 0, 1, 1, 2], [0], [0]>} : vector<3x2x32xf32>, vector<3x32x96xf32>, vector<3x2x96xf32> -> vector<3x2x96xf32>
    "tpu.trace_stop"() : () -> ()
    %c7_227 = arith.constant 7 : index
    %c0_228 = arith.constant 0 : index
    %c0_229 = arith.constant 0 : index
    %c0_230 = arith.constant 0 : index
    %426 = vector.load %arg16[%c7_227, %c0_228, %c0_229, %c0_230] : memref<8x3x1x96xf32, #tpu.memory_space<vmem>>, vector<1x3x1x96xf32>
    %427 = vector.shape_cast %426 : vector<1x3x1x96xf32> to vector<3x1x96xf32>
    %428 = vector.broadcast %427 : vector<3x1x96xf32> to vector<3x2x96xf32>
    %429 = arith.addf %425, %428 : vector<3x2x96xf32>
    %430 = vector.extract_strided_slice %422 {offsets = [0, 0, 0], sizes = [3, 2, 32], strides = [1, 1, 1]} : vector<3x2x96xf32> to vector<3x2x32xf32>
    %431 = vector.extract_strided_slice %429 {offsets = [0, 0, 0], sizes = [3, 2, 32], strides = [1, 1, 1]} : vector<3x2x96xf32> to vector<3x2x32xf32>
    %432 = arith.addf %430, %431 : vector<3x2x32xf32>
    %433 = arith.negf %432 : vector<3x2x32xf32>
    %434 = math.exp %433 : vector<3x2x32xf32>
    %cst_231 = arith.constant 1.000000e+00 : f32
    %435 = vector.broadcast %cst_231 : f32 to vector<3x2x32xf32>
    %436 = arith.addf %435, %434 : vector<3x2x32xf32>
    %437 = arith.divf %435, %436 : vector<3x2x32xf32>
    %438 = vector.extract_strided_slice %422 {offsets = [0, 0, 32], sizes = [3, 2, 32], strides = [1, 1, 1]} : vector<3x2x96xf32> to vector<3x2x32xf32>
    %439 = vector.extract_strided_slice %429 {offsets = [0, 0, 32], sizes = [3, 2, 32], strides = [1, 1, 1]} : vector<3x2x96xf32> to vector<3x2x32xf32>
    %440 = arith.addf %438, %439 : vector<3x2x32xf32>
    %441 = arith.negf %440 : vector<3x2x32xf32>
    %442 = math.exp %441 : vector<3x2x32xf32>
    %cst_232 = arith.constant 1.000000e+00 : f32
    %443 = vector.broadcast %cst_232 : f32 to vector<3x2x32xf32>
    %444 = arith.addf %443, %442 : vector<3x2x32xf32>
    %445 = arith.divf %443, %444 : vector<3x2x32xf32>
    %446 = vector.extract_strided_slice %422 {offsets = [0, 0, 64], sizes = [3, 2, 32], strides = [1, 1, 1]} : vector<3x2x96xf32> to vector<3x2x32xf32>
    %447 = vector.extract_strided_slice %429 {offsets = [0, 0, 64], sizes = [3, 2, 32], strides = [1, 1, 1]} : vector<3x2x96xf32> to vector<3x2x32xf32>
    %448 = arith.mulf %437, %447 : vector<3x2x32xf32>
    %449 = arith.addf %446, %448 : vector<3x2x32xf32>
    %450 = math.tanh %449 : vector<3x2x32xf32>
    %cst_233 = arith.constant 1.000000e+00 : f32
    %451 = vector.broadcast %cst_233 : f32 to vector<3x2x32xf32>
    %452 = arith.subf %451, %445 : vector<3x2x32xf32>
    %453 = arith.mulf %452, %450 : vector<3x2x32xf32>
    %454 = arith.mulf %445, %253 : vector<3x2x32xf32>
    %455 = arith.addf %453, %454 : vector<3x2x32xf32>
    %456 = tpu.concatenate %415, %455 in 2 : vector<3x2x32xf32>, vector<3x2x32xf32> -> vector<3x2x64xf32>
    %cst_234 = arith.constant 5.000000e-01 : f32
    %457 = vector.broadcast %cst_234 : f32 to vector<3x2x64xf32>
    %458 = arith.mulf %457, %456 : vector<3x2x64xf32>
    %cst_235 = arith.constant 4.471500e-02 : f32
    %459 = vector.broadcast %cst_235 : f32 to vector<3x2x64xf32>
    %460 = arith.mulf %459, %456 : vector<3x2x64xf32>
    %461 = arith.mulf %460, %456 : vector<3x2x64xf32>
    %462 = arith.mulf %461, %456 : vector<3x2x64xf32>
    %463 = arith.addf %456, %462 : vector<3x2x64xf32>
    %cst_236 = arith.constant 0.797884583 : f32
    %464 = vector.broadcast %cst_236 : f32 to vector<3x2x64xf32>
    %465 = arith.mulf %464, %463 : vector<3x2x64xf32>
    %466 = math.tanh %465 : vector<3x2x64xf32>
    %cst_237 = arith.constant 1.000000e+00 : f32
    %467 = vector.broadcast %cst_237 : f32 to vector<3x2x64xf32>
    %468 = arith.addf %467, %466 : vector<3x2x64xf32>
    %469 = arith.mulf %458, %468 : vector<3x2x64xf32>
    %c0_238 = arith.constant 0 : index
    %c0_239 = arith.constant 0 : index
    %c0_240 = arith.constant 0 : index
    %c0_241 = arith.constant 0 : index
    %470 = vector.load %arg17[%c0_238, %c0_239, %c0_240, %c0_241] : memref<3x3x1x64xf32, #tpu.memory_space<vmem>>, vector<1x3x1x64xf32>
    %471 = vector.shape_cast %470 : vector<1x3x1x64xf32> to vector<3x1x64xf32>
    %472 = vector.broadcast %471 : vector<3x1x64xf32> to vector<3x2x64xf32>
    %473 = arith.mulf %57, %472 : vector<3x2x64xf32>
    %cst_242 = arith.constant dense<0.000000e+00> : vector<3x2xf32>
    %474 = vector.multi_reduction <add>, %473, %cst_242 [2] : vector<3x2x64xf32> to vector<3x2xf32>
    %c0_243 = arith.constant 0 : index
    %c0_244 = arith.constant 0 : index
    %c0_245 = arith.constant 0 : index
    %475 = vector.load %arg18[%c0_243, %c0_244, %c0_245] : memref<3x3x1xf32, #tpu.memory_space<vmem>>, vector<1x3x1xf32>
    %476 = vector.shape_cast %475 : vector<1x3x1xf32> to vector<3x1xf32>
    %477 = vector.broadcast %476 : vector<3x1xf32> to vector<3x2xf32>
    %478 = arith.addf %474, %477 : vector<3x2xf32>
    %cst_246 = arith.constant 0.000000e+00 : f32
    %479 = vector.broadcast %cst_246 : f32 to vector<3x2xf32>
    %480 = arith.cmpf ogt, %478, %479 : vector<3x2xf32>
    %cst_247 = arith.constant 0.000000e+00 : f32
    %481 = vector.broadcast %cst_247 : f32 to vector<3x2xf32>
    %482 = arith.minimumf %478, %481 : vector<3x2xf32>
    %483 = math.exp %482 : vector<3x2xf32>
    %cst_248 = arith.constant 1.000000e+00 : f32
    %484 = vector.broadcast %cst_248 : f32 to vector<3x2xf32>
    %485 = arith.subf %483, %484 : vector<3x2xf32>
    %486 = arith.select %480, %478, %485 : vector<3x2xi1>, vector<3x2xf32>
    %487 = vector.extract_strided_slice %486 {offsets = [0, 0], sizes = [3, 1], strides = [1, 1]} : vector<3x2xf32> to vector<3x1xf32>
    %488 = vector.extract_strided_slice %486 {offsets = [0, 1], sizes = [3, 1], strides = [1, 1]} : vector<3x2xf32> to vector<3x1xf32>
    %489 = arith.subf %487, %488 : vector<3x1xf32>
    %cst_249 = arith.constant 0.000000e+00 : f32
    %490 = vector.broadcast %cst_249 : f32 to vector<3x1xf32>
    %491 = arith.maximumf %489, %490 : vector<3x1xf32>
    %c1_250 = arith.constant 1 : index
    %c0_251 = arith.constant 0 : index
    %c0_252 = arith.constant 0 : index
    %c0_253 = arith.constant 0 : index
    %492 = vector.load %arg17[%c1_250, %c0_251, %c0_252, %c0_253] : memref<3x3x1x64xf32, #tpu.memory_space<vmem>>, vector<1x3x1x64xf32>
    %493 = vector.shape_cast %492 : vector<1x3x1x64xf32> to vector<3x1x64xf32>
    %494 = vector.broadcast %493 : vector<3x1x64xf32> to vector<3x2x64xf32>
    %495 = arith.mulf %267, %494 : vector<3x2x64xf32>
    %cst_254 = arith.constant dense<0.000000e+00> : vector<3x2xf32>
    %496 = vector.multi_reduction <add>, %495, %cst_254 [2] : vector<3x2x64xf32> to vector<3x2xf32>
    %c1_255 = arith.constant 1 : index
    %c0_256 = arith.constant 0 : index
    %c0_257 = arith.constant 0 : index
    %497 = vector.load %arg18[%c1_255, %c0_256, %c0_257] : memref<3x3x1xf32, #tpu.memory_space<vmem>>, vector<1x3x1xf32>
    %498 = vector.shape_cast %497 : vector<1x3x1xf32> to vector<3x1xf32>
    %499 = vector.broadcast %498 : vector<3x1xf32> to vector<3x2xf32>
    %500 = arith.addf %496, %499 : vector<3x2xf32>
    %cst_258 = arith.constant 0.000000e+00 : f32
    %501 = vector.broadcast %cst_258 : f32 to vector<3x2xf32>
    %502 = arith.cmpf ogt, %500, %501 : vector<3x2xf32>
    %cst_259 = arith.constant 0.000000e+00 : f32
    %503 = vector.broadcast %cst_259 : f32 to vector<3x2xf32>
    %504 = arith.minimumf %500, %503 : vector<3x2xf32>
    %505 = math.exp %504 : vector<3x2xf32>
    %cst_260 = arith.constant 1.000000e+00 : f32
    %506 = vector.broadcast %cst_260 : f32 to vector<3x2xf32>
    %507 = arith.subf %505, %506 : vector<3x2xf32>
    %508 = arith.select %502, %500, %507 : vector<3x2xi1>, vector<3x2xf32>
    %509 = vector.extract_strided_slice %508 {offsets = [0, 0], sizes = [3, 1], strides = [1, 1]} : vector<3x2xf32> to vector<3x1xf32>
    %510 = vector.extract_strided_slice %508 {offsets = [0, 1], sizes = [3, 1], strides = [1, 1]} : vector<3x2xf32> to vector<3x1xf32>
    %511 = arith.subf %509, %510 : vector<3x1xf32>
    %cst_261 = arith.constant 0.000000e+00 : f32
    %512 = vector.broadcast %cst_261 : f32 to vector<3x1xf32>
    %513 = arith.maximumf %511, %512 : vector<3x1xf32>
    %c2_262 = arith.constant 2 : index
    %c0_263 = arith.constant 0 : index
    %c0_264 = arith.constant 0 : index
    %c0_265 = arith.constant 0 : index
    %514 = vector.load %arg17[%c2_262, %c0_263, %c0_264, %c0_265] : memref<3x3x1x64xf32, #tpu.memory_space<vmem>>, vector<1x3x1x64xf32>
    %515 = vector.shape_cast %514 : vector<1x3x1x64xf32> to vector<3x1x64xf32>
    %516 = vector.broadcast %515 : vector<3x1x64xf32> to vector<3x2x64xf32>
    %517 = arith.mulf %469, %516 : vector<3x2x64xf32>
    %cst_266 = arith.constant dense<0.000000e+00> : vector<3x2xf32>
    %518 = vector.multi_reduction <add>, %517, %cst_266 [2] : vector<3x2x64xf32> to vector<3x2xf32>
    %c2_267 = arith.constant 2 : index
    %c0_268 = arith.constant 0 : index
    %c0_269 = arith.constant 0 : index
    %519 = vector.load %arg18[%c2_267, %c0_268, %c0_269] : memref<3x3x1xf32, #tpu.memory_space<vmem>>, vector<1x3x1xf32>
    %520 = vector.shape_cast %519 : vector<1x3x1xf32> to vector<3x1xf32>
    %521 = vector.broadcast %520 : vector<3x1xf32> to vector<3x2xf32>
    %522 = arith.addf %518, %521 : vector<3x2xf32>
    %cst_270 = arith.constant 0.000000e+00 : f32
    %523 = vector.broadcast %cst_270 : f32 to vector<3x2xf32>
    %524 = arith.cmpf ogt, %522, %523 : vector<3x2xf32>
    %cst_271 = arith.constant 0.000000e+00 : f32
    %525 = vector.broadcast %cst_271 : f32 to vector<3x2xf32>
    %526 = arith.minimumf %522, %525 : vector<3x2xf32>
    %527 = math.exp %526 : vector<3x2xf32>
    %cst_272 = arith.constant 1.000000e+00 : f32
    %528 = vector.broadcast %cst_272 : f32 to vector<3x2xf32>
    %529 = arith.subf %527, %528 : vector<3x2xf32>
    %530 = arith.select %524, %522, %529 : vector<3x2xi1>, vector<3x2xf32>
    %531 = vector.extract_strided_slice %530 {offsets = [0, 0], sizes = [3, 1], strides = [1, 1]} : vector<3x2xf32> to vector<3x1xf32>
    %532 = vector.extract_strided_slice %530 {offsets = [0, 1], sizes = [3, 1], strides = [1, 1]} : vector<3x2xf32> to vector<3x1xf32>
    %533 = arith.subf %531, %532 : vector<3x1xf32>
    %cst_273 = arith.constant 0.000000e+00 : f32
    %534 = vector.broadcast %cst_273 : f32 to vector<3x1xf32>
    %535 = arith.maximumf %533, %534 : vector<3x1xf32>
    %536 = tpu.concatenate %491, %513, %535 in 1 : vector<3x1xf32>, vector<3x1xf32>, vector<3x1xf32> -> vector<3x3xf32>
    %c0_274 = arith.constant 0 : index
    %c0_275 = arith.constant 0 : index
    %537 = vector.load %arg20[%c0_274, %c0_275] : memref<3x3xf32, #tpu.memory_space<vmem>>, vector<3x3xf32>
    tpu.vector_store %arg20[%c0_274, %c0_275], %536 {strides = array<i32>} : memref<3x3xf32, #tpu.memory_space<vmem>>, vector<3x3xf32>,
    %538 = vector.shape_cast %536 : vector<3x3xf32> to vector<1x3x3xf32>
    %cst_276 = arith.constant dense<0.000000e+00> : vector<1xf32>
    %539 = vector.multi_reduction <add>, %538, %cst_276 [1, 2] : vector<1x3x3xf32> to vector<1xf32>
    %540 = vector.shape_cast %539 : vector<1xf32> to vector<1x1x1xf32>
    %541 = vector.extract %540[0, 0, 0] : f32 from vector<1x1x1xf32>
    %542 = vector.broadcast %541 : f32 to vector<1x1xf32>
    %cst_277 = arith.constant 0.000000e+00 : f32
    %543 = vector.broadcast %cst_277 : f32 to vector<1x1xf32>
    %544 = arith.subf %543, %542 : vector<1x1xf32>
    %c0_278 = arith.constant 0 : index
    %c0_279 = arith.constant 0 : index
    %545 = vector.load %arg19[%c0_278, %c0_279] : memref<1x1xf32, #tpu.memory_space<vmem>>, vector<1x1xf32>
    tpu.vector_store %arg19[%c0_278, %c0_279], %544 {strides = array<i32>} : memref<1x1xf32, #tpu.memory_space<vmem>>, vector<1x1xf32>,
    return
  }
}

</mosaic_0001>

<llo_original>
// kernel: forward.1
$region0: #{forward.1}
  #allocation0 [shape = 'u32[]', space=smem, size = 0x4, offset = 0x4, fixed_abs, tag = 'smem constant byte address 0x4 - core index']
  #allocation1 [shape = 'u32[144,128]{1,0:T(1,128)}', space=vmem, size = 0x12000, scoped, tag = 'internal scratch']
  %s0 = inlined_call_operand.vmem [shape: f32[3,2,128], index: 0, kind: input, shape index: {}]
  %s1 = inlined_call_operand.vmem [shape: f32[2,64], index: 1, kind: input, shape index: {}]
  %s2 = inlined_call_operand.vmem [shape: f32[1,128], index: 2, kind: input, shape index: {}]
  %s3 = inlined_call_operand.vmem [shape: f32[1,128], index: 3, kind: input, shape index: {}]
  %s4 = inlined_call_operand.vmem [shape: f32[3,128,64], index: 4, kind: input, shape index: {}]
  %s5 = inlined_call_operand.vmem [shape: f32[3,1,64], index: 5, kind: input, shape index: {}]
  %s6 = inlined_call_operand.vmem [shape: f32[3,64,64], index: 6, kind: input, shape index: {}]
  %s7 = inlined_call_operand.vmem [shape: f32[3,1,64], index: 7, kind: input, shape index: {}]
  %s8 = inlined_call_operand.vmem [shape: f32[3,64,64], index: 8, kind: input, shape index: {}]
  %s9 = inlined_call_operand.vmem [shape: f32[3,1,64], index: 9, kind: input, shape index: {}]
  %s10 = inlined_call_operand.vmem [shape: f32[2,3,1,128], index: 10, kind: input, shape index: {}]
  %s11 = inlined_call_operand.vmem [shape: f32[2,3,1,128], index: 11, kind: input, shape index: {}]
  %s12 = inlined_call_operand.vmem [shape: f32[4,3,128,96], index: 12, kind: input, shape index: {}]
  %s13 = inlined_call_operand.vmem [shape: f32[4,3,64,96], index: 13, kind: input, shape index: {}]
  %s14 = inlined_call_operand.vmem [shape: f32[8,3,32,96], index: 14, kind: input, shape index: {}]
  %s15 = inlined_call_operand.vmem [shape: f32[8,3,1,96], index: 15, kind: input, shape index: {}]
  %s16 = inlined_call_operand.vmem [shape: f32[8,3,1,96], index: 16, kind: input, shape index: {}]
  %s17 = inlined_call_operand.vmem [shape: f32[3,3,1,64], index: 17, kind: input, shape index: {}]
  %s18 = inlined_call_operand.vmem [shape: f32[3,3,1], index: 18, kind: input, shape index: {}]
  %s19 = inlined_call_operand.hbm [shape: f32[1,1], index: 19, kind: output, shape index: {0}]
  %s20 = inlined_call_operand.vmem [shape: f32[3,3], index: 20, kind: output, shape index: {1}]
  %21 = xla_tuple %s19, %s20
  %s22 = sld [smem:[#allocation0]]
  $region94: #{forward.1} parent=0
    _
  %s24 = ssub.s32 1, %s22
  %s25 = scalar_select 0, %s24, %s22
  $region1: #{forward.1} parent=0
    #allocation2 [shape = 'u8[512]{0}', space=vmem, size = 0x400, scoped, tag = 'output window, operand 0, single buffered']
    #allocation3 [shape = 's32[1]{0}', space=sflag, size = 0x4, scoped, tag = 'scoped memory for forward.1']
    %26 = vsyncpa [#allocation3], 0
    // Predicated region
    $region2: #{forward.1} parent=1 // pred_check
      _
    $region3: #{forward.1} parent=1 // pred_check_branch
      %28 = sbr.rel (0) target = $region5
    $region4: #{forward.1} parent=1 // pred_region
      _
    $region5: #{forward.1} parent=1 // pred_fallthru
      _
    // Predicated region
    $region6: #{forward.1} parent=1 // pred_check
      _
    $region7: #{forward.1} parent=1 // pred_check_branch
      %30 = sbr.rel (0) target = $region9
    $region8: #{forward.1} parent=1 // pred_region
      _
    $region9: #{forward.1} parent=1 // pred_fallthru
      _
    // Predicated region
    $region10: #{forward.1} parent=1 // pred_check
      _
    $region11: #{forward.1} parent=1 // pred_check_branch
      %32 = sbr.rel (0) target = $region13
    $region12: #{forward.1} parent=1 // pred_region
      _
    $region13: #{forward.1} parent=1 // pred_fallthru
      _
    // Predicated region
    $region14: #{forward.1} parent=1 // pred_check
      _
    $region15: #{forward.1} parent=1 // pred_check_branch
      %34 = sbr.rel (0) target = $region17
    $region16: #{forward.1} parent=1 // pred_region
      _
    $region17: #{forward.1} parent=1 // pred_fallthru
      _
    // Predicated region
    $region18: #{forward.1} parent=1 // pred_check
      _
    $region19: #{forward.1} parent=1 // pred_check_branch
      %36 = sbr.rel (0) target = $region21
    $region20: #{forward.1} parent=1 // pred_region
      _
    $region21: #{forward.1} parent=1 // pred_fallthru
      _
    // Predicated region
    $region22: #{forward.1} parent=1 // pred_check
      _
    $region23: #{forward.1} parent=1 // pred_check_branch
      %38 = sbr.rel (0) target = $region25
    $region24: #{forward.1} parent=1 // pred_region
      _
    $region25: #{forward.1} parent=1 // pred_fallthru
      _
    // Predicated region
    $region26: #{forward.1} parent=1 // pred_check
      _
    $region27: #{forward.1} parent=1 // pred_check_branch
      %40 = sbr.rel (0) target = $region29
    $region28: #{forward.1} parent=1 // pred_region
      _
    $region29: #{forward.1} parent=1 // pred_fallthru
      _
    // Predicated region
    $region30: #{forward.1} parent=1 // pred_check
      _
    $region31: #{forward.1} parent=1 // pred_check_branch
      %42 = sbr.rel (0) target = $region33
    $region32: #{forward.1} parent=1 // pred_region
      _
    $region33: #{forward.1} parent=1 // pred_fallthru
      _
    // Predicated region
    $region34: #{forward.1} parent=1 // pred_check
      _
    $region35: #{forward.1} parent=1 // pred_check_branch
      %44 = sbr.rel (0) target = $region37
    $region36: #{forward.1} parent=1 // pred_region
      _
    $region37: #{forward.1} parent=1 // pred_fallthru
      _
    // Predicated region
    $region38: #{forward.1} parent=1 // pred_check
      _
    $region39: #{forward.1} parent=1 // pred_check_branch
      %46 = sbr.rel (0) target = $region41
    $region40: #{forward.1} parent=1 // pred_region
      _
    $region41: #{forward.1} parent=1 // pred_fallthru
      _
    // Predicated region
    $region42: #{forward.1} parent=1 // pred_check
      _
    $region43: #{forward.1} parent=1 // pred_check_branch
      %48 = sbr.rel (0) target = $region45
    $region44: #{forward.1} parent=1 // pred_region
      _
    $region45: #{forward.1} parent=1 // pred_fallthru
      _
    // Predicated region
    $region46: #{forward.1} parent=1 // pred_check
      _
    $region47: #{forward.1} parent=1 // pred_check_branch
      %50 = sbr.rel (0) target = $region49
    $region48: #{forward.1} parent=1 // pred_region
      _
    $region49: #{forward.1} parent=1 // pred_fallthru
      _
    // Predicated region
    $region50: #{forward.1} parent=1 // pred_check
      _
    $region51: #{forward.1} parent=1 // pred_check_branch
      %52 = sbr.rel (0) target = $region53
    $region52: #{forward.1} parent=1 // pred_region
      _
    $region53: #{forward.1} parent=1 // pred_fallthru
      _
    // Predicated region
    $region54: #{forward.1} parent=1 // pred_check
      _
    $region55: #{forward.1} parent=1 // pred_check_branch
      %54 = sbr.rel (0) target = $region57
    $region56: #{forward.1} parent=1 // pred_region
      _
    $region57: #{forward.1} parent=1 // pred_fallthru
      _
    // Predicated region
    $region58: #{forward.1} parent=1 // pred_check
      _
    $region59: #{forward.1} parent=1 // pred_check_branch
      %56 = sbr.rel (0) target = $region61
    $region60: #{forward.1} parent=1 // pred_region
      _
    $region61: #{forward.1} parent=1 // pred_fallthru
      _
    // Predicated region
    $region62: #{forward.1} parent=1 // pred_check
      _
    $region63: #{forward.1} parent=1 // pred_check_branch
      %58 = sbr.rel (0) target = $region65
    $region64: #{forward.1} parent=1 // pred_region
      _
    $region65: #{forward.1} parent=1 // pred_fallthru
      _
    // Predicated region
    $region66: #{forward.1} parent=1 // pred_check
      _
    $region67: #{forward.1} parent=1 // pred_check_branch
      %60 = sbr.rel (0) target = $region69
    $region68: #{forward.1} parent=1 // pred_region
      _
    $region69: #{forward.1} parent=1 // pred_fallthru
      _
    // Predicated region
    $region70: #{forward.1} parent=1 // pred_check
      _
    $region71: #{forward.1} parent=1 // pred_check_branch
      %62 = sbr.rel (0) target = $region73
    $region72: #{forward.1} parent=1 // pred_region
      _
    $region73: #{forward.1} parent=1 // pred_fallthru
      _
    // Predicated region
    $region74: #{forward.1} parent=1 // pred_check
      _
    $region75: #{forward.1} parent=1 // pred_check_branch
      %64 = sbr.rel (0) target = $region77
    $region76: #{forward.1} parent=1 // pred_region
      _
    $region77: #{forward.1} parent=1 // pred_fallthru
      _
    %v65 = vld [vmem:[%s0] sm:$0x3]
    %v66 = vld [vmem:[%s0 + $0x2] sm:$0x3]
    %v67 = vld [vmem:[%s0 + $0x4] sm:$0x3]
    %v68 = vld [vmem:[%s2] sm:$0x1]
    %v69 = vld [vmem:[%s3] sm:$0x1]
    %vm70 = vcmask 1041408
    %v71 = vsel %vm70, %v65, 0.0
    %72 = vadd.xlane.f32.xlu0 %v71
    %v73 = vpop.xlane.xlu0 %72
    %v74 = vsel %vm70, %v66, 0.0
    %75 = vadd.xlane.f32.xlu0 %v74
    %v76 = vpop.xlane.xlu0 %75
    %v77 = vsel %vm70, %v67, 0.0
    %78 = vadd.xlane.f32.xlu0 %v77
    %v79 = vpop.xlane.xlu0 %78
    %v80 = vrcp.pop 128.0
    %v81 = vmul.f32 %v73, %v80
    %v82 = vmul.f32 %v76, %v80
    %v83 = vmul.f32 %v79, %v80
    %v84 = vsub.f32 %v65, %v81
    %v85 = vsub.f32 %v66, %v82
    %v86 = vsub.f32 %v67, %v83
    %v87 = vmul.f32 %v84, %v84
    %v88 = vmul.f32 %v85, %v85
    %v89 = vmul.f32 %v86, %v86
    %v90 = vsel %vm70, %v87, 0.0
    %91 = vadd.xlane.f32.xlu0 %v90
    %v92 = vpop.xlane.xlu0 %91
    %v93 = vsel %vm70, %v88, 0.0
    %94 = vadd.xlane.f32.xlu0 %v93
    %v95 = vpop.xlane.xlu0 %94
    %v96 = vsel %vm70, %v89, 0.0
    %97 = vadd.xlane.f32.xlu0 %v96
    %v98 = vpop.xlane.xlu0 %97
    %v99 = vmul.f32 %v92, %v80
    %v100 = vmul.f32 %v95, %v80
    %v101 = vmul.f32 %v98, %v80
    %v102 = vadd.f32 %v99, 1e-05
    %v103 = vadd.f32 %v100, 1e-05
    %v104 = vadd.f32 %v101, 1e-05
    %v105 = vrsqrt.pop %v102
    %v106 = vrsqrt.pop %v103
    %v107 = vrsqrt.pop %v104
    %v108 = vmul.f32 %v84, %v105
    %v109 = vmul.f32 %v85, %v106
    %v110 = vmul.f32 %v86, %v107
    %v112 = vlaneseq
    %v113 = vshrl.u32 %v112, 7
    %v114 = vsub.s32 0, %v113
    %v115 = vrot.slane %v68, %v114
    %v117 = vmul.f32 %v108, %v115
    %v118 = vmul.f32 %v109, %v115
    %v119 = vmul.f32 %v110, %v115
    %v121 = vlaneseq
    %v122 = vshrl.u32 %v121, 7
    %v123 = vsub.s32 0, %v122
    %v124 = vrot.slane %v69, %v123
    %v126 = vadd.f32 %v117, %v124
    %v127 = vadd.f32 %v118, %v124
    %v128 = vadd.f32 %v119, %v124
    %v129 = vld [vmem:[%s4] sm:$0xff]
    %v130 = vld [vmem:[%s4 + $0x8] sm:$0xff]
    %v131 = vld [vmem:[%s4 + $0x10] sm:$0xff]
    %v132 = vld [vmem:[%s4 + $0x18] sm:$0xff]
    %v133 = vld [vmem:[%s4 + $0x20] sm:$0xff]
    %v134 = vld [vmem:[%s4 + $0x28] sm:$0xff]
    %v135 = vld [vmem:[%s4 + $0x30] sm:$0xff]
    %v136 = vld [vmem:[%s4 + $0x38] sm:$0xff]
    %v137 = vld [vmem:[%s4 + $0x40] sm:$0xff]
    %v138 = vld [vmem:[%s4 + $0x48] sm:$0xff]
    %v139 = vld [vmem:[%s4 + $0x50] sm:$0xff]
    %v140 = vld [vmem:[%s4 + $0x58] sm:$0xff]
    %v141 = vld [vmem:[%s4 + $0x60] sm:$0xff]
    %v142 = vld [vmem:[%s4 + $0x68] sm:$0xff]
    %v143 = vld [vmem:[%s4 + $0x70] sm:$0xff]
    %v144 = vld [vmem:[%s4 + $0x78] sm:$0xff]
    %v145 = vld [vmem:[%s4 + $0x80] sm:$0xff]
    %v146 = vld [vmem:[%s4 + $0x88] sm:$0xff]
    %v147 = vld [vmem:[%s4 + $0x90] sm:$0xff]
    %v148 = vld [vmem:[%s4 + $0x98] sm:$0xff]
    %v149 = vld [vmem:[%s4 + $0xa0] sm:$0xff]
    %v150 = vld [vmem:[%s4 + $0xa8] sm:$0xff]
    %v151 = vld [vmem:[%s4 + $0xb0] sm:$0xff]
    %v152 = vld [vmem:[%s4 + $0xb8] sm:$0xff]
    %v153 = vld [vmem:[%s4 + $0xc0] sm:$0xff]
    %v154 = vld [vmem:[%s4 + $0xc8] sm:$0xff]
    %v155 = vld [vmem:[%s4 + $0xd0] sm:$0xff]
    %v156 = vld [vmem:[%s4 + $0xd8] sm:$0xff]
    %v157 = vld [vmem:[%s4 + $0xe0] sm:$0xff]
    %v158 = vld [vmem:[%s4 + $0xe8] sm:$0xff]
    %v159 = vld [vmem:[%s4 + $0xf0] sm:$0xff]
    %v160 = vld [vmem:[%s4 + $0xf8] sm:$0xff]
    %v161 = vld [vmem:[%s4 + $0x100] sm:$0xff]
    %v162 = vld [vmem:[%s4 + $0x108] sm:$0xff]
    %v163 = vld [vmem:[%s4 + $0x110] sm:$0xff]
    %v164 = vld [vmem:[%s4 + $0x118] sm:$0xff]
    %v165 = vld [vmem:[%s4 + $0x120] sm:$0xff]
    %v166 = vld [vmem:[%s4 + $0x128] sm:$0xff]
    %v167 = vld [vmem:[%s4 + $0x130] sm:$0xff]
    %v168 = vld [vmem:[%s4 + $0x138] sm:$0xff]
    %v169 = vld [vmem:[%s4 + $0x140] sm:$0xff]
    %v170 = vld [vmem:[%s4 + $0x148] sm:$0xff]
    %v171 = vld [vmem:[%s4 + $0x150] sm:$0xff]
    %v172 = vld [vmem:[%s4 + $0x158] sm:$0xff]
    %v173 = vld [vmem:[%s4 + $0x160] sm:$0xff]
    %v174 = vld [vmem:[%s4 + $0x168] sm:$0xff]
    %v175 = vld [vmem:[%s4 + $0x170] sm:$0xff]
    %v176 = vld [vmem:[%s4 + $0x178] sm:$0xff]
    %v177 = vld [vmem:[%s5] sm:$0x1]
    %v178 = vld [vmem:[%s5 + $0x1] sm:$0x1]
    %v179 = vld [vmem:[%s5 + $0x2] sm:$0x1]
    %v183 = vlaneseq
    %v184 = vshrl.u32 %v183, 7
    %v185 = vsub.s32 0, %v184
    %v186 = vrot.slane %v177, %v185
    %v187 = vlaneseq
    %v188 = vshrl.u32 %v187, 7
    %v189 = vsub.s32 0, %v188
    %v190 = vrot.slane %v178, %v189
    %v191 = vlaneseq
    %v192 = vshrl.u32 %v191, 7
    %v193 = vsub.s32 0, %v192
    %v194 = vrot.slane %v179, %v193
    %198 = vmatprep.subr.mxu0 0.0
    %199 = vmatpush1.msra.mxu0 %v129
    %200 = vmatprep.subr.mxu0 0.0
    %201 = vmatpush1.msra.mxu0 %v130
    %202 = vmatprep.subr.mxu0 0.0
    %203 = vmatpush1.msra.mxu0 %v131
    %204 = vmatprep.subr.mxu0 0.0
    %205 = vmatpush1.msra.mxu0 %v132
    %206 = vmatprep.subr.mxu0 0.0
    %207 = vmatpush1.msra.mxu0 %v133
    %208 = vmatprep.subr.mxu0 0.0
    %209 = vmatpush1.msra.mxu0 %v134
    %210 = vmatprep.subr.mxu0 0.0
    %211 = vmatpush1.msra.mxu0 %v135
    %212 = vmatprep.subr.mxu0 0.0
    %213 = vmatpush1.msra.mxu0 %v136
    %214 = vmatprep.subr.mxu0 0.0
    %215 = vmatpush1.msra.mxu0 %v137
    %216 = vmatprep.subr.mxu0 0.0
    %217 = vmatpush1.msra.mxu0 %v138
    %218 = vmatprep.subr.mxu0 0.0
    %219 = vmatpush1.msra.mxu0 %v139
    %220 = vmatprep.subr.mxu0 0.0
    %221 = vmatpush1.msra.mxu0 %v140
    %222 = vmatprep.subr.mxu0 0.0
    %223 = vmatpush1.msra.mxu0 %v141
    %224 = vmatprep.subr.mxu0 0.0
    %225 = vmatpush1.msra.mxu0 %v142
    %226 = vmatprep.subr.mxu0 0.0
    %227 = vmatpush1.msra.mxu0 %v143
    %228 = vmatprep.subr.mxu0 0.0
    %229 = vmatpush1.msra.mxu0 %v144
    %230 = vmatprep.subr.mxu0 0.0
    %231 = vmatpush1.msra.mxu0 0.0
    %232 = vmatprep.subr.mxu0 0.0
    %233 = vmatpush1.msra.mxu0 0.0
    %234 = vmatprep.subr.mxu0 0.0
    %235 = vmatpush1.msra.mxu0 0.0
    %236 = vmatprep.subr.mxu0 0.0
    %237 = vmatpush1.msra.mxu0 0.0
    %238 = vmatprep.subr.mxu0 0.0
    %239 = vmatpush1.msra.mxu0 0.0
    %240 = vmatprep.subr.mxu0 0.0
    %241 = vmatpush1.msra.mxu0 0.0
    %242 = vmatprep.subr.mxu0 0.0
    %243 = vmatpush1.msra.mxu0 0.0
    %244 = vmatprep.subr.mxu0 0.0
    %245 = vmatpush1.msra.mxu0 0.0
    %246 = vmatprep.subr.mxu0 0.0
    %247 = vmatpush1.msra.mxu0 0.0
    %248 = vmatprep.subr.mxu0 0.0
    %249 = vmatpush1.msra.mxu0 0.0
    %250 = vmatprep.subr.mxu0 0.0
    %251 = vmatpush1.msra.mxu0 0.0
    %252 = vmatprep.subr.mxu0 0.0
    %253 = vmatpush1.msra.mxu0 0.0
    %254 = vmatprep.subr.mxu0 0.0
    %255 = vmatpush1.msra.mxu0 0.0
    %256 = vmatprep.subr.mxu0 0.0
    %257 = vmatpush1.msra.mxu0 0.0
    %258 = vmatprep.subr.mxu0 0.0
    %259 = vmatpush1.msra.mxu0 0.0
    %260 = vmatprep.subr.mxu0 0.0
    %261 = vmatpush1.msra.mxu0 0.0
    %262 = vmatprep.mubr.f32.mxu0 0.0
    %263 = vmatmul.mubr.f32.gmra.mrb[0].mxu0 %v126
    %v264 = vpop.f32.mrb[0].mxu0
    %v265 = vadd.f32 %v186, %v264
    %v266 = vpop.f32.mrb[0].mxu0
    %267 = vdwg.mxu0
    %268 = vmatprep.subr.mxu0 0.0
    %269 = vmatpush1.msra.mxu0 %v145
    %270 = vmatprep.subr.mxu0 0.0
    %271 = vmatpush1.msra.mxu0 %v146
    %272 = vmatprep.subr.mxu0 0.0
    %273 = vmatpush1.msra.mxu0 %v147
    %274 = vmatprep.subr.mxu0 0.0
    %275 = vmatpush1.msra.mxu0 %v148
    %276 = vmatprep.subr.mxu0 0.0
    %277 = vmatpush1.msra.mxu0 %v149
    %278 = vmatprep.subr.mxu0 0.0
    %279 = vmatpush1.msra.mxu0 %v150
    %280 = vmatprep.subr.mxu0 0.0
    %281 = vmatpush1.msra.mxu0 %v151
    %282 = vmatprep.subr.mxu0 0.0
    %283 = vmatpush1.msra.mxu0 %v152
    %284 = vmatprep.subr.mxu0 0.0
    %285 = vmatpush1.msra.mxu0 %v153
    %286 = vmatprep.subr.mxu0 0.0
    %287 = vmatpush1.msra.mxu0 %v154
    %288 = vmatprep.subr.mxu0 0.0
    %289 = vmatpush1.msra.mxu0 %v155
    %290 = vmatprep.subr.mxu0 0.0
    %291 = vmatpush1.msra.mxu0 %v156
    %292 = vmatprep.subr.mxu0 0.0
    %293 = vmatpush1.msra.mxu0 %v157
    %294 = vmatprep.subr.mxu0 0.0
    %295 = vmatpush1.msra.mxu0 %v158
    %296 = vmatprep.subr.mxu0 0.0
    %297 = vmatpush1.msra.mxu0 %v159
    %298 = vmatprep.subr.mxu0 0.0
    %299 = vmatpush1.msra.mxu0 %v160
    %300 = vmatprep.subr.mxu0 0.0
    %301 = vmatpush1.msra.mxu0 0.0
    %302 = vmatprep.subr.mxu0 0.0
    %303 = vmatpush1.msra.mxu0 0.0
    %304 = vmatprep.subr.mxu0 0.0
    %305 = vmatpush1.msra.mxu0 0.0
    %306 = vmatprep.subr.mxu0 0.0
    %307 = vmatpush1.msra.mxu0 0.0
    %308 = vmatprep.subr.mxu0 0.0
    %309 = vmatpush1.msra.mxu0 0.0
    %310 = vmatprep.subr.mxu0 0.0
    %311 = vmatpush1.msra.mxu0 0.0
    %312 = vmatprep.subr.mxu0 0.0
    %313 = vmatpush1.msra.mxu0 0.0
    %314 = vmatprep.subr.mxu0 0.0
    %315 = vmatpush1.msra.mxu0 0.0
    %316 = vmatprep.subr.mxu0 0.0
    %317 = vmatpush1.msra.mxu0 0.0
    %318 = vmatprep.subr.mxu0 0.0
    %319 = vmatpush1.msra.mxu0 0.0
    %320 = vmatprep.subr.mxu0 0.0
    %321 = vmatpush1.msra.mxu0 0.0
    %322 = vmatprep.subr.mxu0 0.0
    %323 = vmatpush1.msra.mxu0 0.0
    %324 = vmatprep.subr.mxu0 0.0
    %325 = vmatpush1.msra.mxu0 0.0
    %326 = vmatprep.subr.mxu0 0.0
    %327 = vmatpush1.msra.mxu0 0.0
    %328 = vmatprep.subr.mxu0 0.0
    %329 = vmatpush1.msra.mxu0 0.0
    %330 = vmatprep.subr.mxu0 0.0
    %331 = vmatpush1.msra.mxu0 0.0
    %332 = vmatprep.mubr.f32.mxu0 0.0
    %333 = vmatmul.mubr.f32.gmra.mrb[0].mxu0 %v127
    %v334 = vpop.f32.mrb[0].mxu0
    %v335 = vadd.f32 %v190, %v334
    %v336 = vpop.f32.mrb[0].mxu0
    %337 = vdwg.mxu0
    %338 = vmatprep.subr.mxu0 0.0
    %339 = vmatpush1.msra.mxu0 %v161
    %340 = vmatprep.subr.mxu0 0.0
    %341 = vmatpush1.msra.mxu0 %v162
    %342 = vmatprep.subr.mxu0 0.0
    %343 = vmatpush1.msra.mxu0 %v163
    %344 = vmatprep.subr.mxu0 0.0
    %345 = vmatpush1.msra.mxu0 %v164
    %346 = vmatprep.subr.mxu0 0.0
    %347 = vmatpush1.msra.mxu0 %v165
    %348 = vmatprep.subr.mxu0 0.0
    %349 = vmatpush1.msra.mxu0 %v166
    %350 = vmatprep.subr.mxu0 0.0
    %351 = vmatpush1.msra.mxu0 %v167
    %352 = vmatprep.subr.mxu0 0.0
    %353 = vmatpush1.msra.mxu0 %v168
    %354 = vmatprep.subr.mxu0 0.0
    %355 = vmatpush1.msra.mxu0 %v169
    %356 = vmatprep.subr.mxu0 0.0
    %357 = vmatpush1.msra.mxu0 %v170
    %358 = vmatprep.subr.mxu0 0.0
    %359 = vmatpush1.msra.mxu0 %v171
    %360 = vmatprep.subr.mxu0 0.0
    %361 = vmatpush1.msra.mxu0 %v172
    %362 = vmatprep.subr.mxu0 0.0
    %363 = vmatpush1.msra.mxu0 %v173
    %364 = vmatprep.subr.mxu0 0.0
    %365 = vmatpush1.msra.mxu0 %v174
    %366 = vmatprep.subr.mxu0 0.0
    %367 = vmatpush1.msra.mxu0 %v175
    %368 = vmatprep.subr.mxu0 0.0
    %369 = vmatpush1.msra.mxu0 %v176
    %370 = vmatprep.subr.mxu0 0.0
    %371 = vmatpush1.msra.mxu0 0.0
    %372 = vmatprep.subr.mxu0 0.0
    %373 = vmatpush1.msra.mxu0 0.0
    %374 = vmatprep.subr.mxu0 0.0
    %375 = vmatpush1.msra.mxu0 0.0
    %376 = vmatprep.subr.mxu0 0.0
    %377 = vmatpush1.msra.mxu0 0.0
    %378 = vmatprep.subr.mxu0 0.0
    %379 = vmatpush1.msra.mxu0 0.0
    %380 = vmatprep.subr.mxu0 0.0
    %381 = vmatpush1.msra.mxu0 0.0
    %382 = vmatprep.subr.mxu0 0.0
    %383 = vmatpush1.msra.mxu0 0.0
    %384 = vmatprep.subr.mxu0 0.0
    %385 = vmatpush1.msra.mxu0 0.0
    %386 = vmatprep.subr.mxu0 0.0
    %387 = vmatpush1.msra.mxu0 0.0
    %388 = vmatprep.subr.mxu0 0.0
    %389 = vmatpush1.msra.mxu0 0.0
    %390 = vmatprep.subr.mxu0 0.0
    %391 = vmatpush1.msra.mxu0 0.0
    %392 = vmatprep.subr.mxu0 0.0
    %393 = vmatpush1.msra.mxu0 0.0
    %394 = vmatprep.subr.mxu0 0.0
    %395 = vmatpush1.msra.mxu0 0.0
    %396 = vmatprep.subr.mxu0 0.0
    %397 = vmatpush1.msra.mxu0 0.0
    %398 = vmatprep.subr.mxu0 0.0
    %399 = vmatpush1.msra.mxu0 0.0
    %400 = vmatprep.subr.mxu0 0.0
    %401 = vmatpush1.msra.mxu0 0.0
    %402 = vmatprep.mubr.f32.mxu0 0.0
    %403 = vmatmul.mubr.f32.gmra.mrb[0].mxu0 %v128
    %v404 = vpop.f32.mrb[0].mxu0
    %v405 = vadd.f32 %v194, %v404
    %v406 = vpop.f32.mrb[0].mxu0
    %407 = vdwg.mxu0
    %vm408 = vcmp.gt.f32.partialorder %v265, 0.0
    %vm409 = vcmp.gt.f32.partialorder %v335, 0.0
    %vm410 = vcmp.gt.f32.partialorder %v405, 0.0
    %v411 = vmin.f32 %v265, 0.0
    %v412 = vmin.f32 %v335, 0.0
    %v413 = vmin.f32 %v405, 0.0
    %v414 = vmul.f32 %v411, 1.442695
    %v415 = vpow.pop %v414
    %v416 = vmul.f32 %v412, 1.442695
    %v417 = vpow.pop %v416
    %v418 = vmul.f32 %v413, 1.442695
    %v419 = vpow.pop %v418
    %v420 = vsub.f32 %v415, 1.0
    %v421 = vsub.f32 %v417, 1.0
    %v422 = vsub.f32 %v419, 1.0
    %v423 = vsel %vm408, %v265, %v420
    %v424 = vsel %vm409, %v335, %v421
    %v425 = vsel %vm410, %v405, %v422
    %v426 = vld [vmem:[%s6] sm:$0xff]
    %v427 = vld [vmem:[%s6 + $0x8] sm:$0xff]
    %v428 = vld [vmem:[%s6 + $0x10] sm:$0xff]
    %v429 = vld [vmem:[%s6 + $0x18] sm:$0xff]
    %v430 = vld [vmem:[%s6 + $0x20] sm:$0xff]
    %v431 = vld [vmem:[%s6 + $0x28] sm:$0xff]
    %v432 = vld [vmem:[%s6 + $0x30] sm:$0xff]
    %v433 = vld [vmem:[%s6 + $0x38] sm:$0xff]
    %v434 = vld [vmem:[%s6 + $0x40] sm:$0xff]
    %v435 = vld [vmem:[%s6 + $0x48] sm:$0xff]
    %v436 = vld [vmem:[%s6 + $0x50] sm:$0xff]
    %v437 = vld [vmem:[%s6 + $0x58] sm:$0xff]
    %v438 = vld [vmem:[%s6 + $0x60] sm:$0xff]
    %v439 = vld [vmem:[%s6 + $0x68] sm:$0xff]
    %v440 = vld [vmem:[%s6 + $0x70] sm:$0xff]
    %v441 = vld [vmem:[%s6 + $0x78] sm:$0xff]
    %v442 = vld [vmem:[%s6 + $0x80] sm:$0xff]
    %v443 = vld [vmem:[%s6 + $0x88] sm:$0xff]
    %v444 = vld [vmem:[%s6 + $0x90] sm:$0xff]
    %v445 = vld [vmem:[%s6 + $0x98] sm:$0xff]
    %v446 = vld [vmem:[%s6 + $0xa0] sm:$0xff]
    %v447 = vld [vmem:[%s6 + $0xa8] sm:$0xff]
    %v448 = vld [vmem:[%s6 + $0xb0] sm:$0xff]
    %v449 = vld [vmem:[%s6 + $0xb8] sm:$0xff]
    %v450 = vld [vmem:[%s7] sm:$0x1]
    %v451 = vld [vmem:[%s7 + $0x1] sm:$0x1]
    %v452 = vld [vmem:[%s7 + $0x2] sm:$0x1]
    %v456 = vlaneseq
    %v457 = vshrl.u32 %v456, 7
    %v458 = vsub.s32 0, %v457
    %v459 = vrot.slane %v450, %v458
    %v460 = vlaneseq
    %v461 = vshrl.u32 %v460, 7
    %v462 = vsub.s32 0, %v461
    %v463 = vrot.slane %v451, %v462
    %v464 = vlaneseq
    %v465 = vshrl.u32 %v464, 7
    %v466 = vsub.s32 0, %v465
    %v467 = vrot.slane %v452, %v466
    %vm471 = vcmask 523264
    %v473 = vsel %vm471, %v423, 0
    %475 = vmatprep.subr.mxu0 0.0
    %476 = vmatpush1.msra.mxu0 %v426
    %477 = vmatprep.subr.mxu0 0.0
    %478 = vmatpush1.msra.mxu0 %v427
    %479 = vmatprep.subr.mxu0 0.0
    %480 = vmatpush1.msra.mxu0 %v428
    %481 = vmatprep.subr.mxu0 0.0
    %482 = vmatpush1.msra.mxu0 %v429
    %483 = vmatprep.subr.mxu0 0.0
    %484 = vmatpush1.msra.mxu0 %v430
    %485 = vmatprep.subr.mxu0 0.0
    %486 = vmatpush1.msra.mxu0 %v431
    %487 = vmatprep.subr.mxu0 0.0
    %488 = vmatpush1.msra.mxu0 %v432
    %489 = vmatprep.subr.mxu0 0.0
    %490 = vmatpush1.msra.mxu0 %v433
    %491 = vmatprep.subr.mxu0 0.0
    %492 = vmatpush1.msra.mxu0 0.0
    %493 = vmatprep.subr.mxu0 0.0
    %494 = vmatpush1.msra.mxu0 0.0
    %495 = vmatprep.subr.mxu0 0.0
    %496 = vmatpush1.msra.mxu0 0.0
    %497 = vmatprep.subr.mxu0 0.0
    %498 = vmatpush1.msra.mxu0 0.0
    %499 = vmatprep.subr.mxu0 0.0
    %500 = vmatpush1.msra.mxu0 0.0
    %501 = vmatprep.subr.mxu0 0.0
    %502 = vmatpush1.msra.mxu0 0.0
    %503 = vmatprep.subr.mxu0 0.0
    %504 = vmatpush1.msra.mxu0 0.0
    %505 = vmatprep.subr.mxu0 0.0
    %506 = vmatpush1.msra.mxu0 0.0
    %507 = vmatprep.subr.mxu0 0.0
    %508 = vmatpush1.msra.mxu0 0.0
    %509 = vmatprep.subr.mxu0 0.0
    %510 = vmatpush1.msra.mxu0 0.0
    %511 = vmatprep.subr.mxu0 0.0
    %512 = vmatpush1.msra.mxu0 0.0
    %513 = vmatprep.subr.mxu0 0.0
    %514 = vmatpush1.msra.mxu0 0.0
    %515 = vmatprep.subr.mxu0 0.0
    %516 = vmatpush1.msra.mxu0 0.0
    %517 = vmatprep.subr.mxu0 0.0
    %518 = vmatpush1.msra.mxu0 0.0
    %519 = vmatprep.subr.mxu0 0.0
    %520 = vmatpush1.msra.mxu0 0.0
    %521 = vmatprep.subr.mxu0 0.0
    %522 = vmatpush1.msra.mxu0 0.0
    %523 = vmatprep.subr.mxu0 0.0
    %524 = vmatpush1.msra.mxu0 0.0
    %525 = vmatprep.subr.mxu0 0.0
    %526 = vmatpush1.msra.mxu0 0.0
    %527 = vmatprep.subr.mxu0 0.0
    %528 = vmatpush1.msra.mxu0 0.0
    %529 = vmatprep.subr.mxu0 0.0
    %530 = vmatpush1.msra.mxu0 0.0
    %531 = vmatprep.subr.mxu0 0.0
    %532 = vmatpush1.msra.mxu0 0.0
    %533 = vmatprep.subr.mxu0 0.0
    %534 = vmatpush1.msra.mxu0 0.0
    %535 = vmatprep.subr.mxu0 0.0
    %536 = vmatpush1.msra.mxu0 0.0
    %537 = vmatprep.subr.mxu0 0.0
    %538 = vmatpush1.msra.mxu0 0.0
    %539 = vmatprep.mubr.f32.mxu0 0.0
    %540 = vmatmul.mubr.f32.gmra.mrb[0].mxu0 %v473
    %v541 = vpop.f32.mrb[0].mxu0
    %v542 = vadd.f32 %v459, %v541
    %v543 = vpop.f32.mrb[0].mxu0
    %544 = vdwg.mxu0
    %v546 = vsel %vm471, %v424, 0
    %548 = vmatprep.subr.mxu0 0.0
    %549 = vmatpush1.msra.mxu0 %v434
    %550 = vmatprep.subr.mxu0 0.0
    %551 = vmatpush1.msra.mxu0 %v435
    %552 = vmatprep.subr.mxu0 0.0
    %553 = vmatpush1.msra.mxu0 %v436
    %554 = vmatprep.subr.mxu0 0.0
    %555 = vmatpush1.msra.mxu0 %v437
    %556 = vmatprep.subr.mxu0 0.0
    %557 = vmatpush1.msra.mxu0 %v438
    %558 = vmatprep.subr.mxu0 0.0
    %559 = vmatpush1.msra.mxu0 %v439
    %560 = vmatprep.subr.mxu0 0.0
    %561 = vmatpush1.msra.mxu0 %v440
    %562 = vmatprep.subr.mxu0 0.0
    %563 = vmatpush1.msra.mxu0 %v441
    %564 = vmatprep.subr.mxu0 0.0
    %565 = vmatpush1.msra.mxu0 0.0
    %566 = vmatprep.subr.mxu0 0.0
    %567 = vmatpush1.msra.mxu0 0.0
    %568 = vmatprep.subr.mxu0 0.0
    %569 = vmatpush1.msra.mxu0 0.0
    %570 = vmatprep.subr.mxu0 0.0
    %571 = vmatpush1.msra.mxu0 0.0
    %572 = vmatprep.subr.mxu0 0.0
    %573 = vmatpush1.msra.mxu0 0.0
    %574 = vmatprep.subr.mxu0 0.0
    %575 = vmatpush1.msra.mxu0 0.0
    %576 = vmatprep.subr.mxu0 0.0
    %577 = vmatpush1.msra.mxu0 0.0
    %578 = vmatprep.subr.mxu0 0.0
    %579 = vmatpush1.msra.mxu0 0.0
    %580 = vmatprep.subr.mxu0 0.0
    %581 = vmatpush1.msra.mxu0 0.0
    %582 = vmatprep.subr.mxu0 0.0
    %583 = vmatpush1.msra.mxu0 0.0
    %584 = vmatprep.subr.mxu0 0.0
    %585 = vmatpush1.msra.mxu0 0.0
    %586 = vmatprep.subr.mxu0 0.0
    %587 = vmatpush1.msra.mxu0 0.0
    %588 = vmatprep.subr.mxu0 0.0
    %589 = vmatpush1.msra.mxu0 0.0
    %590 = vmatprep.subr.mxu0 0.0
    %591 = vmatpush1.msra.mxu0 0.0
    %592 = vmatprep.subr.mxu0 0.0
    %593 = vmatpush1.msra.mxu0 0.0
    %594 = vmatprep.subr.mxu0 0.0
    %595 = vmatpush1.msra.mxu0 0.0
    %596 = vmatprep.subr.mxu0 0.0
    %597 = vmatpush1.msra.mxu0 0.0
    %598 = vmatprep.subr.mxu0 0.0
    %599 = vmatpush1.msra.mxu0 0.0
    %600 = vmatprep.subr.mxu0 0.0
    %601 = vmatpush1.msra.mxu0 0.0
    %602 = vmatprep.subr.mxu0 0.0
    %603 = vmatpush1.msra.mxu0 0.0
    %604 = vmatprep.subr.mxu0 0.0
    %605 = vmatpush1.msra.mxu0 0.0
    %606 = vmatprep.subr.mxu0 0.0
    %607 = vmatpush1.msra.mxu0 0.0
    %608 = vmatprep.subr.mxu0 0.0
    %609 = vmatpush1.msra.mxu0 0.0
    %610 = vmatprep.subr.mxu0 0.0
    %611 = vmatpush1.msra.mxu0 0.0
    %612 = vmatprep.mubr.f32.mxu0 0.0
    %613 = vmatmul.mubr.f32.gmra.mrb[0].mxu0 %v546
    %v614 = vpop.f32.mrb[0].mxu0
    %v615 = vadd.f32 %v463, %v614
    %v616 = vpop.f32.mrb[0].mxu0
    %617 = vdwg.mxu0
    %v619 = vsel %vm471, %v425, 0
    %621 = vmatprep.subr.mxu0 0.0
    %622 = vmatpush1.msra.mxu0 %v442
    %623 = vmatprep.subr.mxu0 0.0
    %624 = vmatpush1.msra.mxu0 %v443
    %625 = vmatprep.subr.mxu0 0.0
    %626 = vmatpush1.msra.mxu0 %v444
    %627 = vmatprep.subr.mxu0 0.0
    %628 = vmatpush1.msra.mxu0 %v445
    %629 = vmatprep.subr.mxu0 0.0
    %630 = vmatpush1.msra.mxu0 %v446
    %631 = vmatprep.subr.mxu0 0.0
    %632 = vmatpush1.msra.mxu0 %v447
    %633 = vmatprep.subr.mxu0 0.0
    %634 = vmatpush1.msra.mxu0 %v448
    %635 = vmatprep.subr.mxu0 0.0
    %636 = vmatpush1.msra.mxu0 %v449
    %637 = vmatprep.subr.mxu0 0.0
    %638 = vmatpush1.msra.mxu0 0.0
    %639 = vmatprep.subr.mxu0 0.0
    %640 = vmatpush1.msra.mxu0 0.0
    %641 = vmatprep.subr.mxu0 0.0
    %642 = vmatpush1.msra.mxu0 0.0
    %643 = vmatprep.subr.mxu0 0.0
    %644 = vmatpush1.msra.mxu0 0.0
    %645 = vmatprep.subr.mxu0 0.0
    %646 = vmatpush1.msra.mxu0 0.0
    %647 = vmatprep.subr.mxu0 0.0
    %648 = vmatpush1.msra.mxu0 0.0
    %649 = vmatprep.subr.mxu0 0.0
    %650 = vmatpush1.msra.mxu0 0.0
    %651 = vmatprep.subr.mxu0 0.0
    %652 = vmatpush1.msra.mxu0 0.0
    %653 = vmatprep.subr.mxu0 0.0
    %654 = vmatpush1.msra.mxu0 0.0
    %655 = vmatprep.subr.mxu0 0.0
    %656 = vmatpush1.msra.mxu0 0.0
    %657 = vmatprep.subr.mxu0 0.0
    %658 = vmatpush1.msra.mxu0 0.0
    %659 = vmatprep.subr.mxu0 0.0
    %660 = vmatpush1.msra.mxu0 0.0
    %661 = vmatprep.subr.mxu0 0.0
    %662 = vmatpush1.msra.mxu0 0.0
    %663 = vmatprep.subr.mxu0 0.0
    %664 = vmatpush1.msra.mxu0 0.0
    %665 = vmatprep.subr.mxu0 0.0
    %666 = vmatpush1.msra.mxu0 0.0
    %667 = vmatprep.subr.mxu0 0.0
    %668 = vmatpush1.msra.mxu0 0.0
    %669 = vmatprep.subr.mxu0 0.0
    %670 = vmatpush1.msra.mxu0 0.0
    %671 = vmatprep.subr.mxu0 0.0
    %672 = vmatpush1.msra.mxu0 0.0
    %673 = vmatprep.subr.mxu0 0.0
    %674 = vmatpush1.msra.mxu0 0.0
    %675 = vmatprep.subr.mxu0 0.0
    %676 = vmatpush1.msra.mxu0 0.0
    %677 = vmatprep.subr.mxu0 0.0
    %678 = vmatpush1.msra.mxu0 0.0
    %679 = vmatprep.subr.mxu0 0.0
    %680 = vmatpush1.msra.mxu0 0.0
    %681 = vmatprep.subr.mxu0 0.0
    %682 = vmatpush1.msra.mxu0 0.0
    %683 = vmatprep.subr.mxu0 0.0
    %684 = vmatpush1.msra.mxu0 0.0
    %685 = vmatprep.mubr.f32.mxu0 0.0
    %686 = vmatmul.mubr.f32.gmra.mrb[0].mxu0 %v619
    %v687 = vpop.f32.mrb[0].mxu0
    %v688 = vadd.f32 %v467, %v687
    %v689 = vpop.f32.mrb[0].mxu0
    %690 = vdwg.mxu0
    %vm691 = vcmp.gt.f32.partialorder %v542, 0.0
    %vm692 = vcmp.gt.f32.partialorder %v615, 0.0
    %vm693 = vcmp.gt.f32.partialorder %v688, 0.0
    %v694 = vmin.f32 %v542, 0.0
    %v695 = vmin.f32 %v615, 0.0
    %v696 = vmin.f32 %v688, 0.0
    %v697 = vmul.f32 %v694, 1.442695
    %v698 = vpow.pop %v697
    %v699 = vmul.f32 %v695, 1.442695
    %v700 = vpow.pop %v699
    %v701 = vmul.f32 %v696, 1.442695
    %v702 = vpow.pop %v701
    %v703 = vsub.f32 %v698, 1.0
    %v704 = vsub.f32 %v700, 1.0
    %v705 = vsub.f32 %v702, 1.0
    %v706 = vsel %vm691, %v542, %v703
    %v707 = vsel %vm692, %v615, %v704
    %v708 = vsel %vm693, %v688, %v705
    %v709 = vld [vmem:[%s8] sm:$0xff]
    %v710 = vld [vmem:[%s8 + $0x8] sm:$0xff]
    %v711 = vld [vmem:[%s8 + $0x10] sm:$0xff]
    %v712 = vld [vmem:[%s8 + $0x18] sm:$0xff]
    %v713 = vld [vmem:[%s8 + $0x20] sm:$0xff]
    %v714 = vld [vmem:[%s8 + $0x28] sm:$0xff]
    %v715 = vld [vmem:[%s8 + $0x30] sm:$0xff]
    %v716 = vld [vmem:[%s8 + $0x38] sm:$0xff]
    %v717 = vld [vmem:[%s8 + $0x40] sm:$0xff]
    %v718 = vld [vmem:[%s8 + $0x48] sm:$0xff]
    %v719 = vld [vmem:[%s8 + $0x50] sm:$0xff]
    %v720 = vld [vmem:[%s8 + $0x58] sm:$0xff]
    %v721 = vld [vmem:[%s8 + $0x60] sm:$0xff]
    %v722 = vld [vmem:[%s8 + $0x68] sm:$0xff]
    %v723 = vld [vmem:[%s8 + $0x70] sm:$0xff]
    %v724 = vld [vmem:[%s8 + $0x78] sm:$0xff]
    %v725 = vld [vmem:[%s8 + $0x80] sm:$0xff]
    %v726 = vld [vmem:[%s8 + $0x88] sm:$0xff]
    %v727 = vld [vmem:[%s8 + $0x90] sm:$0xff]
    %v728 = vld [vmem:[%s8 + $0x98] sm:$0xff]
    %v729 = vld [vmem:[%s8 + $0xa0] sm:$0xff]
    %v730 = vld [vmem:[%s8 + $0xa8] sm:$0xff]
    %v731 = vld [vmem:[%s8 + $0xb0] sm:$0xff]
    %v732 = vld [vmem:[%s8 + $0xb8] sm:$0xff]
    %v733 = vld [vmem:[%s9] sm:$0x1]
    %v734 = vld [vmem:[%s9 + $0x1] sm:$0x1]
    %v735 = vld [vmem:[%s9 + $0x2] sm:$0x1]
    %v739 = vlaneseq
    %v740 = vshrl.u32 %v739, 7
    %v741 = vsub.s32 0, %v740
    %v742 = vrot.slane %v733, %v741
    %v743 = vlaneseq
    %v744 = vshrl.u32 %v743, 7
    %v745 = vsub.s32 0, %v744
    %v746 = vrot.slane %v734, %v745
    %v747 = vlaneseq
    %v748 = vshrl.u32 %v747, 7
    %v749 = vsub.s32 0, %v748
    %v750 = vrot.slane %v735, %v749
    %v755 = vsel %vm471, %v706, 0
    %757 = vmatprep.subr.mxu0 0.0
    %758 = vmatpush1.msra.mxu0 %v709
    %759 = vmatprep.subr.mxu0 0.0
    %760 = vmatpush1.msra.mxu0 %v710
    %761 = vmatprep.subr.mxu0 0.0
    %762 = vmatpush1.msra.mxu0 %v711
    %763 = vmatprep.subr.mxu0 0.0
    %764 = vmatpush1.msra.mxu0 %v712
    %765 = vmatprep.subr.mxu0 0.0
    %766 = vmatpush1.msra.mxu0 %v713
    %767 = vmatprep.subr.mxu0 0.0
    %768 = vmatpush1.msra.mxu0 %v714
    %769 = vmatprep.subr.mxu0 0.0
    %770 = vmatpush1.msra.mxu0 %v715
    %771 = vmatprep.subr.mxu0 0.0
    %772 = vmatpush1.msra.mxu0 %v716
    %773 = vmatprep.subr.mxu0 0.0
    %774 = vmatpush1.msra.mxu0 0.0
    %775 = vmatprep.subr.mxu0 0.0
    %776 = vmatpush1.msra.mxu0 0.0
    %777 = vmatprep.subr.mxu0 0.0
    %778 = vmatpush1.msra.mxu0 0.0
    %779 = vmatprep.subr.mxu0 0.0
    %780 = vmatpush1.msra.mxu0 0.0
    %781 = vmatprep.subr.mxu0 0.0
    %782 = vmatpush1.msra.mxu0 0.0
    %783 = vmatprep.subr.mxu0 0.0
    %784 = vmatpush1.msra.mxu0 0.0
    %785 = vmatprep.subr.mxu0 0.0
    %786 = vmatpush1.msra.mxu0 0.0
    %787 = vmatprep.subr.mxu0 0.0
    %788 = vmatpush1.msra.mxu0 0.0
    %789 = vmatprep.subr.mxu0 0.0
    %790 = vmatpush1.msra.mxu0 0.0
    %791 = vmatprep.subr.mxu0 0.0
    %792 = vmatpush1.msra.mxu0 0.0
    %793 = vmatprep.subr.mxu0 0.0
    %794 = vmatpush1.msra.mxu0 0.0
    %795 = vmatprep.subr.mxu0 0.0
    %796 = vmatpush1.msra.mxu0 0.0
    %797 = vmatprep.subr.mxu0 0.0
    %798 = vmatpush1.msra.mxu0 0.0
    %799 = vmatprep.subr.mxu0 0.0
    %800 = vmatpush1.msra.mxu0 0.0
    %801 = vmatprep.subr.mxu0 0.0
    %802 = vmatpush1.msra.mxu0 0.0
    %803 = vmatprep.subr.mxu0 0.0
    %804 = vmatpush1.msra.mxu0 0.0
    %805 = vmatprep.subr.mxu0 0.0
    %806 = vmatpush1.msra.mxu0 0.0
    %807 = vmatprep.subr.mxu0 0.0
    %808 = vmatpush1.msra.mxu0 0.0
    %809 = vmatprep.subr.mxu0 0.0
    %810 = vmatpush1.msra.mxu0 0.0
    %811 = vmatprep.subr.mxu0 0.0
    %812 = vmatpush1.msra.mxu0 0.0
    %813 = vmatprep.subr.mxu0 0.0
    %814 = vmatpush1.msra.mxu0 0.0
    %815 = vmatprep.subr.mxu0 0.0
    %816 = vmatpush1.msra.mxu0 0.0
    %817 = vmatprep.subr.mxu0 0.0
    %818 = vmatpush1.msra.mxu0 0.0
    %819 = vmatprep.subr.mxu0 0.0
    %820 = vmatpush1.msra.mxu0 0.0
    %821 = vmatprep.mubr.f32.mxu0 0.0
    %822 = vmatmul.mubr.f32.gmra.mrb[0].mxu0 %v755
    %v823 = vpop.f32.mrb[0].mxu0
    %v824 = vadd.f32 %v742, %v823
    %v825 = vpop.f32.mrb[0].mxu0
    %826 = vdwg.mxu0
    %v828 = vsel %vm471, %v707, 0
    %830 = vmatprep.subr.mxu0 0.0
    %831 = vmatpush1.msra.mxu0 %v717
    %832 = vmatprep.subr.mxu0 0.0
    %833 = vmatpush1.msra.mxu0 %v718
    %834 = vmatprep.subr.mxu0 0.0
    %835 = vmatpush1.msra.mxu0 %v719
    %836 = vmatprep.subr.mxu0 0.0
    %837 = vmatpush1.msra.mxu0 %v720
    %838 = vmatprep.subr.mxu0 0.0
    %839 = vmatpush1.msra.mxu0 %v721
    %840 = vmatprep.subr.mxu0 0.0
    %841 = vmatpush1.msra.mxu0 %v722
    %842 = vmatprep.subr.mxu0 0.0
    %843 = vmatpush1.msra.mxu0 %v723
    %844 = vmatprep.subr.mxu0 0.0
    %845 = vmatpush1.msra.mxu0 %v724
    %846 = vmatprep.subr.mxu0 0.0
    %847 = vmatpush1.msra.mxu0 0.0
    %848 = vmatprep.subr.mxu0 0.0
    %849 = vmatpush1.msra.mxu0 0.0
    %850 = vmatprep.subr.mxu0 0.0
    %851 = vmatpush1.msra.mxu0 0.0
    %852 = vmatprep.subr.mxu0 0.0
    %853 = vmatpush1.msra.mxu0 0.0
    %854 = vmatprep.subr.mxu0 0.0
    %855 = vmatpush1.msra.mxu0 0.0
    %856 = vmatprep.subr.mxu0 0.0
    %857 = vmatpush1.msra.mxu0 0.0
    %858 = vmatprep.subr.mxu0 0.0
    %859 = vmatpush1.msra.mxu0 0.0
    %860 = vmatprep.subr.mxu0 0.0
    %861 = vmatpush1.msra.mxu0 0.0
    %862 = vmatprep.subr.mxu0 0.0
    %863 = vmatpush1.msra.mxu0 0.0
    %864 = vmatprep.subr.mxu0 0.0
    %865 = vmatpush1.msra.mxu0 0.0
    %866 = vmatprep.subr.mxu0 0.0
    %867 = vmatpush1.msra.mxu0 0.0
    %868 = vmatprep.subr.mxu0 0.0
    %869 = vmatpush1.msra.mxu0 0.0
    %870 = vmatprep.subr.mxu0 0.0
    %871 = vmatpush1.msra.mxu0 0.0
    %872 = vmatprep.subr.mxu0 0.0
    %873 = vmatpush1.msra.mxu0 0.0
    %874 = vmatprep.subr.mxu0 0.0
    %875 = vmatpush1.msra.mxu0 0.0
    %876 = vmatprep.subr.mxu0 0.0
    %877 = vmatpush1.msra.mxu0 0.0
    %878 = vmatprep.subr.mxu0 0.0
    %879 = vmatpush1.msra.mxu0 0.0
    %880 = vmatprep.subr.mxu0 0.0
    %881 = vmatpush1.msra.mxu0 0.0
    %882 = vmatprep.subr.mxu0 0.0
    %883 = vmatpush1.msra.mxu0 0.0
    %884 = vmatprep.subr.mxu0 0.0
    %885 = vmatpush1.msra.mxu0 0.0
    %886 = vmatprep.subr.mxu0 0.0
    %887 = vmatpush1.msra.mxu0 0.0
    %888 = vmatprep.subr.mxu0 0.0
    %889 = vmatpush1.msra.mxu0 0.0
    %890 = vmatprep.subr.mxu0 0.0
    %891 = vmatpush1.msra.mxu0 0.0
    %892 = vmatprep.subr.mxu0 0.0
    %893 = vmatpush1.msra.mxu0 0.0
    %894 = vmatprep.mubr.f32.mxu0 0.0
    %895 = vmatmul.mubr.f32.gmra.mrb[0].mxu0 %v828
    %v896 = vpop.f32.mrb[0].mxu0
    %v897 = vadd.f32 %v746, %v896
    %v898 = vpop.f32.mrb[0].mxu0
    %899 = vdwg.mxu0
    %v901 = vsel %vm471, %v708, 0
    %903 = vmatprep.subr.mxu0 0.0
    %904 = vmatpush1.msra.mxu0 %v725
    %905 = vmatprep.subr.mxu0 0.0
    %906 = vmatpush1.msra.mxu0 %v726
    %907 = vmatprep.subr.mxu0 0.0
    %908 = vmatpush1.msra.mxu0 %v727
    %909 = vmatprep.subr.mxu0 0.0
    %910 = vmatpush1.msra.mxu0 %v728
    %911 = vmatprep.subr.mxu0 0.0
    %912 = vmatpush1.msra.mxu0 %v729
    %913 = vmatprep.subr.mxu0 0.0
    %914 = vmatpush1.msra.mxu0 %v730
    %915 = vmatprep.subr.mxu0 0.0
    %916 = vmatpush1.msra.mxu0 %v731
    %917 = vmatprep.subr.mxu0 0.0
    %918 = vmatpush1.msra.mxu0 %v732
    %919 = vmatprep.subr.mxu0 0.0
    %920 = vmatpush1.msra.mxu0 0.0
    %921 = vmatprep.subr.mxu0 0.0
    %922 = vmatpush1.msra.mxu0 0.0
    %923 = vmatprep.subr.mxu0 0.0
    %924 = vmatpush1.msra.mxu0 0.0
    %925 = vmatprep.subr.mxu0 0.0
    %926 = vmatpush1.msra.mxu0 0.0
    %927 = vmatprep.subr.mxu0 0.0
    %928 = vmatpush1.msra.mxu0 0.0
    %929 = vmatprep.subr.mxu0 0.0
    %930 = vmatpush1.msra.mxu0 0.0
    %931 = vmatprep.subr.mxu0 0.0
    %932 = vmatpush1.msra.mxu0 0.0
    %933 = vmatprep.subr.mxu0 0.0
    %934 = vmatpush1.msra.mxu0 0.0
    %935 = vmatprep.subr.mxu0 0.0
    %936 = vmatpush1.msra.mxu0 0.0
    %937 = vmatprep.subr.mxu0 0.0
    %938 = vmatpush1.msra.mxu0 0.0
    %939 = vmatprep.subr.mxu0 0.0
    %940 = vmatpush1.msra.mxu0 0.0
    %941 = vmatprep.subr.mxu0 0.0
    %942 = vmatpush1.msra.mxu0 0.0
    %943 = vmatprep.subr.mxu0 0.0
    %944 = vmatpush1.msra.mxu0 0.0
    %945 = vmatprep.subr.mxu0 0.0
    %946 = vmatpush1.msra.mxu0 0.0
    %947 = vmatprep.subr.mxu0 0.0
    %948 = vmatpush1.msra.mxu0 0.0
    %949 = vmatprep.subr.mxu0 0.0
    %950 = vmatpush1.msra.mxu0 0.0
    %951 = vmatprep.subr.mxu0 0.0
    %952 = vmatpush1.msra.mxu0 0.0
    %953 = vmatprep.subr.mxu0 0.0
    %954 = vmatpush1.msra.mxu0 0.0
    %955 = vmatprep.subr.mxu0 0.0
    %956 = vmatpush1.msra.mxu0 0.0
    %957 = vmatprep.subr.mxu0 0.0
    %958 = vmatpush1.msra.mxu0 0.0
    %959 = vmatprep.subr.mxu0 0.0
    %960 = vmatpush1.msra.mxu0 0.0
    %961 = vmatprep.subr.mxu0 0.0
    %962 = vmatpush1.msra.mxu0 0.0
    %963 = vmatprep.subr.mxu0 0.0
    %964 = vmatpush1.msra.mxu0 0.0
    %965 = vmatprep.subr.mxu0 0.0
    %966 = vmatpush1.msra.mxu0 0.0
    %967 = vmatprep.mubr.f32.mxu0 0.0
    %968 = vmatmul.mubr.f32.gmra.mrb[0].mxu0 %v901
    %v969 = vpop.f32.mrb[0].mxu0
    %v970 = vadd.f32 %v750, %v969
    %v971 = vpop.f32.mrb[0].mxu0
    %972 = vdwg.mxu0
    %v973 = vld [vmem:[%s1] sm:$0x3]
    %975 = vrot.lane.b32.xlu0 %v973, 64
    %v976 = vpop.permute.xlu0 %975
    %v978 = vsel %vm471, %v824, %v976
    %v979 = vsel %vm471, %v897, %v976
    %v980 = vsel %vm471, %v970, %v976
    %v981 = vld [vmem:[%s10] sm:$0x1]
    %v982 = vld [vmem:[%s10 + $0x1] sm:$0x1]
    %v983 = vld [vmem:[%s10 + $0x2] sm:$0x1]
    %v984 = vld [vmem:[%s11] sm:$0x1]
    %v985 = vld [vmem:[%s11 + $0x1] sm:$0x1]
    %v986 = vld [vmem:[%s11 + $0x2] sm:$0x1]
    %v987 = vsel %vm70, %v978, 0.0
    %988 = vadd.xlane.f32.xlu0 %v987
    %v989 = vpop.xlane.xlu0 %988
    %v990 = vsel %vm70, %v979, 0.0
    %991 = vadd.xlane.f32.xlu0 %v990
    %v992 = vpop.xlane.xlu0 %991
    %v993 = vsel %vm70, %v980, 0.0
    %994 = vadd.xlane.f32.xlu0 %v993
    %v995 = vpop.xlane.xlu0 %994
    %v996 = vmul.f32 %v989, %v80
    %v997 = vmul.f32 %v992, %v80
    %v998 = vmul.f32 %v995, %v80
    %v999 = vsub.f32 %v978, %v996
    %v1000 = vsub.f32 %v979, %v997
    %v1001 = vsub.f32 %v980, %v998
    %v1002 = vmul.f32 %v999, %v999
    %v1003 = vmul.f32 %v1000, %v1000
    %v1004 = vmul.f32 %v1001, %v1001
    %v1005 = vsel %vm70, %v1002, 0.0
    %1006 = vadd.xlane.f32.xlu0 %v1005
    %v1007 = vpop.xlane.xlu0 %1006
    %v1008 = vsel %vm70, %v1003, 0.0
    %1009 = vadd.xlane.f32.xlu0 %v1008
    %v1010 = vpop.xlane.xlu0 %1009
    %v1011 = vsel %vm70, %v1004, 0.0
    %1012 = vadd.xlane.f32.xlu0 %v1011
    %v1013 = vpop.xlane.xlu0 %1012
    %v1014 = vmul.f32 %v1007, %v80
    %v1015 = vmul.f32 %v1010, %v80
    %v1016 = vmul.f32 %v1013, %v80
    %v1017 = vadd.f32 %v1014, 1e-05
    %v1018 = vadd.f32 %v1015, 1e-05
    %v1019 = vadd.f32 %v1016, 1e-05
    %v1020 = vrsqrt.pop %v1017
    %v1021 = vrsqrt.pop %v1018
    %v1022 = vrsqrt.pop %v1019
    %v1023 = vmul.f32 %v999, %v1020
    %v1024 = vmul.f32 %v1000, %v1021
    %v1025 = vmul.f32 %v1001, %v1022
    %v1029 = vlaneseq
    %v1030 = vshrl.u32 %v1029, 7
    %v1031 = vsub.s32 0, %v1030
    %v1032 = vrot.slane %v981, %v1031
    %v1033 = vlaneseq
    %v1034 = vshrl.u32 %v1033, 7
    %v1035 = vsub.s32 0, %v1034
    %v1036 = vrot.slane %v982, %v1035
    %v1037 = vlaneseq
    %v1038 = vshrl.u32 %v1037, 7
    %v1039 = vsub.s32 0, %v1038
    %v1040 = vrot.slane %v983, %v1039
    %v1044 = vmul.f32 %v1023, %v1032
    %v1045 = vmul.f32 %v1024, %v1036
    %v1046 = vmul.f32 %v1025, %v1040
    %v1050 = vlaneseq
    %v1051 = vshrl.u32 %v1050, 7
    %v1052 = vsub.s32 0, %v1051
    %v1053 = vrot.slane %v984, %v1052
    %v1054 = vlaneseq
    %v1055 = vshrl.u32 %v1054, 7
    %v1056 = vsub.s32 0, %v1055
    %v1057 = vrot.slane %v985, %v1056
    %v1058 = vlaneseq
    %v1059 = vshrl.u32 %v1058, 7
    %v1060 = vsub.s32 0, %v1059
    %v1061 = vrot.slane %v986, %v1060
    %v1065 = vadd.f32 %v1044, %v1053
    %v1066 = vadd.f32 %v1045, %v1057
    %v1067 = vadd.f32 %v1046, %v1061
    %v1068 = vld [vmem:[%s12] sm:$0xff]
    %v1069 = vld [vmem:[%s12 + $0x8] sm:$0xff]
    %v1070 = vld [vmem:[%s12 + $0x10] sm:$0xff]
    %v1071 = vld [vmem:[%s12 + $0x18] sm:$0xff]
    %v1072 = vld [vmem:[%s12 + $0x20] sm:$0xff]
    %v1073 = vld [vmem:[%s12 + $0x28] sm:$0xff]
    %v1074 = vld [vmem:[%s12 + $0x30] sm:$0xff]
    %v1075 = vld [vmem:[%s12 + $0x38] sm:$0xff]
    %v1076 = vld [vmem:[%s12 + $0x40] sm:$0xff]
    %v1077 = vld [vmem:[%s12 + $0x48] sm:$0xff]
    %v1078 = vld [vmem:[%s12 + $0x50] sm:$0xff]
    %v1079 = vld [vmem:[%s12 + $0x58] sm:$0xff]
    %v1080 = vld [vmem:[%s12 + $0x60] sm:$0xff]
    %v1081 = vld [vmem:[%s12 + $0x68] sm:$0xff]
    %v1082 = vld [vmem:[%s12 + $0x70] sm:$0xff]
    %v1083 = vld [vmem:[%s12 + $0x78] sm:$0xff]
    %v1084 = vld [vmem:[%s12 + $0x80] sm:$0xff]
    %v1085 = vld [vmem:[%s12 + $0x88] sm:$0xff]
    %v1086 = vld [vmem:[%s12 + $0x90] sm:$0xff]
    %v1087 = vld [vmem:[%s12 + $0x98] sm:$0xff]
    %v1088 = vld [vmem:[%s12 + $0xa0] sm:$0xff]
    %v1089 = vld [vmem:[%s12 + $0xa8] sm:$0xff]
    %v1090 = vld [vmem:[%s12 + $0xb0] sm:$0xff]
    %v1091 = vld [vmem:[%s12 + $0xb8] sm:$0xff]
    %v1092 = vld [vmem:[%s12 + $0xc0] sm:$0xff]
    %v1093 = vld [vmem:[%s12 + $0xc8] sm:$0xff]
    %v1094 = vld [vmem:[%s12 + $0xd0] sm:$0xff]
    %v1095 = vld [vmem:[%s12 + $0xd8] sm:$0xff]
    %v1096 = vld [vmem:[%s12 + $0xe0] sm:$0xff]
    %v1097 = vld [vmem:[%s12 + $0xe8] sm:$0xff]
    %v1098 = vld [vmem:[%s12 + $0xf0] sm:$0xff]
    %v1099 = vld [vmem:[%s12 + $0xf8] sm:$0xff]
    %v1100 = vld [vmem:[%s12 + $0x100] sm:$0xff]
    %v1101 = vld [vmem:[%s12 + $0x108] sm:$0xff]
    %v1102 = vld [vmem:[%s12 + $0x110] sm:$0xff]
    %v1103 = vld [vmem:[%s12 + $0x118] sm:$0xff]
    %v1104 = vld [vmem:[%s12 + $0x120] sm:$0xff]
    %v1105 = vld [vmem:[%s12 + $0x128] sm:$0xff]
    %v1106 = vld [vmem:[%s12 + $0x130] sm:$0xff]
    %v1107 = vld [vmem:[%s12 + $0x138] sm:$0xff]
    %v1108 = vld [vmem:[%s12 + $0x140] sm:$0xff]
    %v1109 = vld [vmem:[%s12 + $0x148] sm:$0xff]
    %v1110 = vld [vmem:[%s12 + $0x150] sm:$0xff]
    %v1111 = vld [vmem:[%s12 + $0x158] sm:$0xff]
    %v1112 = vld [vmem:[%s12 + $0x160] sm:$0xff]
    %v1113 = vld [vmem:[%s12 + $0x168] sm:$0xff]
    %v1114 = vld [vmem:[%s12 + $0x170] sm:$0xff]
    %v1115 = vld [vmem:[%s12 + $0x178] sm:$0xff]
    %v1116 = vld [vmem:[%s15] sm:$0x1]
    %v1117 = vld [vmem:[%s15 + $0x1] sm:$0x1]
    %v1118 = vld [vmem:[%s15 + $0x2] sm:$0x1]
    %v1122 = vlaneseq
    %v1123 = vshrl.u32 %v1122, 7
    %v1124 = vsub.s32 0, %v1123
    %v1125 = vrot.slane %v1116, %v1124
    %v1126 = vlaneseq
    %v1127 = vshrl.u32 %v1126, 7
    %v1128 = vsub.s32 0, %v1127
    %v1129 = vrot.slane %v1117, %v1128
    %v1130 = vlaneseq
    %v1131 = vshrl.u32 %v1130, 7
    %v1132 = vsub.s32 0, %v1131
    %v1133 = vrot.slane %v1118, %v1132
    %1137 = vmatprep.subr.mxu0 0.0
    %1138 = vmatpush1.msra.mxu0 %v1068
    %1139 = vmatprep.subr.mxu0 0.0
    %1140 = vmatpush1.msra.mxu0 %v1069
    %1141 = vmatprep.subr.mxu0 0.0
    %1142 = vmatpush1.msra.mxu0 %v1070
    %1143 = vmatprep.subr.mxu0 0.0
    %1144 = vmatpush1.msra.mxu0 %v1071
    %1145 = vmatprep.subr.mxu0 0.0
    %1146 = vmatpush1.msra.mxu0 %v1072
    %1147 = vmatprep.subr.mxu0 0.0
    %1148 = vmatpush1.msra.mxu0 %v1073
    %1149 = vmatprep.subr.mxu0 0.0
    %1150 = vmatpush1.msra.mxu0 %v1074
    %1151 = vmatprep.subr.mxu0 0.0
    %1152 = vmatpush1.msra.mxu0 %v1075
    %1153 = vmatprep.subr.mxu0 0.0
    %1154 = vmatpush1.msra.mxu0 %v1076
    %1155 = vmatprep.subr.mxu0 0.0
    %1156 = vmatpush1.msra.mxu0 %v1077
    %1157 = vmatprep.subr.mxu0 0.0
    %1158 = vmatpush1.msra.mxu0 %v1078
    %1159 = vmatprep.subr.mxu0 0.0
    %1160 = vmatpush1.msra.mxu0 %v1079
    %1161 = vmatprep.subr.mxu0 0.0
    %1162 = vmatpush1.msra.mxu0 %v1080
    %1163 = vmatprep.subr.mxu0 0.0
    %1164 = vmatpush1.msra.mxu0 %v1081
    %1165 = vmatprep.subr.mxu0 0.0
    %1166 = vmatpush1.msra.mxu0 %v1082
    %1167 = vmatprep.subr.mxu0 0.0
    %1168 = vmatpush1.msra.mxu0 %v1083
    %1169 = vmatprep.subr.mxu0 0.0
    %1170 = vmatpush1.msra.mxu0 0.0
    %1171 = vmatprep.subr.mxu0 0.0
    %1172 = vmatpush1.msra.mxu0 0.0
    %1173 = vmatprep.subr.mxu0 0.0
    %1174 = vmatpush1.msra.mxu0 0.0
    %1175 = vmatprep.subr.mxu0 0.0
    %1176 = vmatpush1.msra.mxu0 0.0
    %1177 = vmatprep.subr.mxu0 0.0
    %1178 = vmatpush1.msra.mxu0 0.0
    %1179 = vmatprep.subr.mxu0 0.0
    %1180 = vmatpush1.msra.mxu0 0.0
    %1181 = vmatprep.subr.mxu0 0.0
    %1182 = vmatpush1.msra.mxu0 0.0
    %1183 = vmatprep.subr.mxu0 0.0
    %1184 = vmatpush1.msra.mxu0 0.0
    %1185 = vmatprep.subr.mxu0 0.0
    %1186 = vmatpush1.msra.mxu0 0.0
    %1187 = vmatprep.subr.mxu0 0.0
    %1188 = vmatpush1.msra.mxu0 0.0
    %1189 = vmatprep.subr.mxu0 0.0
    %1190 = vmatpush1.msra.mxu0 0.0
    %1191 = vmatprep.subr.mxu0 0.0
    %1192 = vmatpush1.msra.mxu0 0.0
    %1193 = vmatprep.subr.mxu0 0.0
    %1194 = vmatpush1.msra.mxu0 0.0
    %1195 = vmatprep.subr.mxu0 0.0
    %1196 = vmatpush1.msra.mxu0 0.0
    %1197 = vmatprep.subr.mxu0 0.0
    %1198 = vmatpush1.msra.mxu0 0.0
    %1199 = vmatprep.subr.mxu0 0.0
    %1200 = vmatpush1.msra.mxu0 0.0
    %1201 = vmatprep.mubr.f32.mxu0 0.0
    %1202 = vmatmul.mubr.f32.gmra.mrb[0].mxu0 %v1065
    %v1203 = vpop.f32.mrb[0].mxu0
    %v1204 = vadd.f32 %v1125, %v1203
    %v1205 = vpop.f32.mrb[0].mxu0
    %1206 = vdwg.mxu0
    %1207 = vmatprep.subr.mxu0 0.0
    %1208 = vmatpush1.msra.mxu0 %v1084
    %1209 = vmatprep.subr.mxu0 0.0
    %1210 = vmatpush1.msra.mxu0 %v1085
    %1211 = vmatprep.subr.mxu0 0.0
    %1212 = vmatpush1.msra.mxu0 %v1086
    %1213 = vmatprep.subr.mxu0 0.0
    %1214 = vmatpush1.msra.mxu0 %v1087
    %1215 = vmatprep.subr.mxu0 0.0
    %1216 = vmatpush1.msra.mxu0 %v1088
    %1217 = vmatprep.subr.mxu0 0.0
    %1218 = vmatpush1.msra.mxu0 %v1089
    %1219 = vmatprep.subr.mxu0 0.0
    %1220 = vmatpush1.msra.mxu0 %v1090
    %1221 = vmatprep.subr.mxu0 0.0
    %1222 = vmatpush1.msra.mxu0 %v1091
    %1223 = vmatprep.subr.mxu0 0.0
    %1224 = vmatpush1.msra.mxu0 %v1092
    %1225 = vmatprep.subr.mxu0 0.0
    %1226 = vmatpush1.msra.mxu0 %v1093
    %1227 = vmatprep.subr.mxu0 0.0
    %1228 = vmatpush1.msra.mxu0 %v1094
    %1229 = vmatprep.subr.mxu0 0.0
    %1230 = vmatpush1.msra.mxu0 %v1095
    %1231 = vmatprep.subr.mxu0 0.0
    %1232 = vmatpush1.msra.mxu0 %v1096
    %1233 = vmatprep.subr.mxu0 0.0
    %1234 = vmatpush1.msra.mxu0 %v1097
    %1235 = vmatprep.subr.mxu0 0.0
    %1236 = vmatpush1.msra.mxu0 %v1098
    %1237 = vmatprep.subr.mxu0 0.0
    %1238 = vmatpush1.msra.mxu0 %v1099
    %1239 = vmatprep.subr.mxu0 0.0
    %1240 = vmatpush1.msra.mxu0 0.0
    %1241 = vmatprep.subr.mxu0 0.0
    %1242 = vmatpush1.msra.mxu0 0.0
    %1243 = vmatprep.subr.mxu0 0.0
    %1244 = vmatpush1.msra.mxu0 0.0
    %1245 = vmatprep.subr.mxu0 0.0
    %1246 = vmatpush1.msra.mxu0 0.0
    %1247 = vmatprep.subr.mxu0 0.0
    %1248 = vmatpush1.msra.mxu0 0.0
    %1249 = vmatprep.subr.mxu0 0.0
    %1250 = vmatpush1.msra.mxu0 0.0
    %1251 = vmatprep.subr.mxu0 0.0
    %1252 = vmatpush1.msra.mxu0 0.0
    %1253 = vmatprep.subr.mxu0 0.0
    %1254 = vmatpush1.msra.mxu0 0.0
    %1255 = vmatprep.subr.mxu0 0.0
    %1256 = vmatpush1.msra.mxu0 0.0
    %1257 = vmatprep.subr.mxu0 0.0
    %1258 = vmatpush1.msra.mxu0 0.0
    %1259 = vmatprep.subr.mxu0 0.0
    %1260 = vmatpush1.msra.mxu0 0.0
    %1261 = vmatprep.subr.mxu0 0.0
    %1262 = vmatpush1.msra.mxu0 0.0
    %1263 = vmatprep.subr.mxu0 0.0
    %1264 = vmatpush1.msra.mxu0 0.0
    %1265 = vmatprep.subr.mxu0 0.0
    %1266 = vmatpush1.msra.mxu0 0.0
    %1267 = vmatprep.subr.mxu0 0.0
    %1268 = vmatpush1.msra.mxu0 0.0
    %1269 = vmatprep.subr.mxu0 0.0
    %1270 = vmatpush1.msra.mxu0 0.0
    %1271 = vmatprep.mubr.f32.mxu0 0.0
    %1272 = vmatmul.mubr.f32.gmra.mrb[0].mxu0 %v1066
    %v1273 = vpop.f32.mrb[0].mxu0
    %v1274 = vadd.f32 %v1129, %v1273
    %v1275 = vpop.f32.mrb[0].mxu0
    %1276 = vdwg.mxu0
    %1277 = vmatprep.subr.mxu0 0.0
    %1278 = vmatpush1.msra.mxu0 %v1100
    %1279 = vmatprep.subr.mxu0 0.0
    %1280 = vmatpush1.msra.mxu0 %v1101
    %1281 = vmatprep.subr.mxu0 0.0
    %1282 = vmatpush1.msra.mxu0 %v1102
    %1283 = vmatprep.subr.mxu0 0.0
    %1284 = vmatpush1.msra.mxu0 %v1103
    %1285 = vmatprep.subr.mxu0 0.0
    %1286 = vmatpush1.msra.mxu0 %v1104
    %1287 = vmatprep.subr.mxu0 0.0
    %1288 = vmatpush1.msra.mxu0 %v1105
    %1289 = vmatprep.subr.mxu0 0.0
    %1290 = vmatpush1.msra.mxu0 %v1106
    %1291 = vmatprep.subr.mxu0 0.0
    %1292 = vmatpush1.msra.mxu0 %v1107
    %1293 = vmatprep.subr.mxu0 0.0
    %1294 = vmatpush1.msra.mxu0 %v1108
    %1295 = vmatprep.subr.mxu0 0.0
    %1296 = vmatpush1.msra.mxu0 %v1109
    %1297 = vmatprep.subr.mxu0 0.0
    %1298 = vmatpush1.msra.mxu0 %v1110
    %1299 = vmatprep.subr.mxu0 0.0
    %1300 = vmatpush1.msra.mxu0 %v1111
    %1301 = vmatprep.subr.mxu0 0.0
    %1302 = vmatpush1.msra.mxu0 %v1112
    %1303 = vmatprep.subr.mxu0 0.0
    %1304 = vmatpush1.msra.mxu0 %v1113
    %1305 = vmatprep.subr.mxu0 0.0
    %1306 = vmatpush1.msra.mxu0 %v1114
    %1307 = vmatprep.subr.mxu0 0.0
    %1308 = vmatpush1.msra.mxu0 %v1115
    %1309 = vmatprep.subr.mxu0 0.0
    %1310 = vmatpush1.msra.mxu0 0.0
    %1311 = vmatprep.subr.mxu0 0.0
    %1312 = vmatpush1.msra.mxu0 0.0
    %1313 = vmatprep.subr.mxu0 0.0
    %1314 = vmatpush1.msra.mxu0 0.0
    %1315 = vmatprep.subr.mxu0 0.0
    %1316 = vmatpush1.msra.mxu0 0.0
    %1317 = vmatprep.subr.mxu0 0.0
    %1318 = vmatpush1.msra.mxu0 0.0
    %1319 = vmatprep.subr.mxu0 0.0
    %1320 = vmatpush1.msra.mxu0 0.0
    %1321 = vmatprep.subr.mxu0 0.0
    %1322 = vmatpush1.msra.mxu0 0.0
    %1323 = vmatprep.subr.mxu0 0.0
    %1324 = vmatpush1.msra.mxu0 0.0
    %1325 = vmatprep.subr.mxu0 0.0
    %1326 = vmatpush1.msra.mxu0 0.0
    %1327 = vmatprep.subr.mxu0 0.0
    %1328 = vmatpush1.msra.mxu0 0.0
    %1329 = vmatprep.subr.mxu0 0.0
    %1330 = vmatpush1.msra.mxu0 0.0
    %1331 = vmatprep.subr.mxu0 0.0
    %1332 = vmatpush1.msra.mxu0 0.0
    %1333 = vmatprep.subr.mxu0 0.0
    %1334 = vmatpush1.msra.mxu0 0.0
    %1335 = vmatprep.subr.mxu0 0.0
    %1336 = vmatpush1.msra.mxu0 0.0
    %1337 = vmatprep.subr.mxu0 0.0
    %1338 = vmatpush1.msra.mxu0 0.0
    %1339 = vmatprep.subr.mxu0 0.0
    %1340 = vmatpush1.msra.mxu0 0.0
    %1341 = vmatprep.mubr.f32.mxu0 0.0
    %1342 = vmatmul.mubr.f32.gmra.mrb[0].mxu0 %v1067
    %v1343 = vpop.f32.mrb[0].mxu0
    %v1344 = vadd.f32 %v1133, %v1343
    %v1345 = vpop.f32.mrb[0].mxu0
    %1346 = vdwg.mxu0
    %v1347 = vld [vmem:[%s14] sm:$0xff]
    %v1348 = vld [vmem:[%s14 + $0x8] sm:$0xff]
    %v1349 = vld [vmem:[%s14 + $0x10] sm:$0xff]
    %v1350 = vld [vmem:[%s14 + $0x18] sm:$0xff]
    %v1351 = vld [vmem:[%s14 + $0x20] sm:$0xff]
    %v1352 = vld [vmem:[%s14 + $0x28] sm:$0xff]
    %v1353 = vld [vmem:[%s14 + $0x30] sm:$0xff]
    %v1354 = vld [vmem:[%s14 + $0x38] sm:$0xff]
    %v1355 = vld [vmem:[%s14 + $0x40] sm:$0xff]
    %v1356 = vld [vmem:[%s14 + $0x48] sm:$0xff]
    %v1357 = vld [vmem:[%s14 + $0x50] sm:$0xff]
    %v1358 = vld [vmem:[%s14 + $0x58] sm:$0xff]
    %v1359 = vld [vmem:[%s16] sm:$0x1]
    %v1360 = vld [vmem:[%s16 + $0x1] sm:$0x1]
    %v1361 = vld [vmem:[%s16 + $0x2] sm:$0x1]
    %v1365 = vlaneseq
    %v1366 = vshrl.u32 %v1365, 7
    %v1367 = vsub.s32 0, %v1366
    %v1368 = vrot.slane %v1359, %v1367
    %v1369 = vlaneseq
    %v1370 = vshrl.u32 %v1369, 7
    %v1371 = vsub.s32 0, %v1370
    %v1372 = vrot.slane %v1360, %v1371
    %v1373 = vlaneseq
    %v1374 = vshrl.u32 %v1373, 7
    %v1375 = vsub.s32 0, %v1374
    %v1376 = vrot.slane %v1361, %v1375
    %vm1380 = vcmask 261120
    %v1382 = vsel %vm1380, 0.0, 0
    %1384 = vmatprep.subr.mxu0 0.0
    %1385 = vmatpush1.msra.mxu0 %v1347
    %1386 = vmatprep.subr.mxu0 0.0
    %1387 = vmatpush1.msra.mxu0 %v1348
    %1388 = vmatprep.subr.mxu0 0.0
    %1389 = vmatpush1.msra.mxu0 %v1349
    %1390 = vmatprep.subr.mxu0 0.0
    %1391 = vmatpush1.msra.mxu0 %v1350
    %1392 = vmatprep.subr.mxu0 0.0
    %1393 = vmatpush1.msra.mxu0 0.0
    %1394 = vmatprep.subr.mxu0 0.0
    %1395 = vmatpush1.msra.mxu0 0.0
    %1396 = vmatprep.subr.mxu0 0.0
    %1397 = vmatpush1.msra.mxu0 0.0
    %1398 = vmatprep.subr.mxu0 0.0
    %1399 = vmatpush1.msra.mxu0 0.0
    %1400 = vmatprep.subr.mxu0 0.0
    %1401 = vmatpush1.msra.mxu0 0.0
    %1402 = vmatprep.subr.mxu0 0.0
    %1403 = vmatpush1.msra.mxu0 0.0
    %1404 = vmatprep.subr.mxu0 0.0
    %1405 = vmatpush1.msra.mxu0 0.0
    %1406 = vmatprep.subr.mxu0 0.0
    %1407 = vmatpush1.msra.mxu0 0.0
    %1408 = vmatprep.subr.mxu0 0.0
    %1409 = vmatpush1.msra.mxu0 0.0
    %1410 = vmatprep.subr.mxu0 0.0
    %1411 = vmatpush1.msra.mxu0 0.0
    %1412 = vmatprep.subr.mxu0 0.0
    %1413 = vmatpush1.msra.mxu0 0.0
    %1414 = vmatprep.subr.mxu0 0.0
    %1415 = vmatpush1.msra.mxu0 0.0
    %1416 = vmatprep.subr.mxu0 0.0
    %1417 = vmatpush1.msra.mxu0 0.0
    %1418 = vmatprep.subr.mxu0 0.0
    %1419 = vmatpush1.msra.mxu0 0.0
    %1420 = vmatprep.subr.mxu0 0.0
    %1421 = vmatpush1.msra.mxu0 0.0
    %1422 = vmatprep.subr.mxu0 0.0
    %1423 = vmatpush1.msra.mxu0 0.0
    %1424 = vmatprep.subr.mxu0 0.0
    %1425 = vmatpush1.msra.mxu0 0.0
    %1426 = vmatprep.subr.mxu0 0.0
    %1427 = vmatpush1.msra.mxu0 0.0
    %1428 = vmatprep.subr.mxu0 0.0
    %1429 = vmatpush1.msra.mxu0 0.0
    %1430 = vmatprep.subr.mxu0 0.0
    %1431 = vmatpush1.msra.mxu0 0.0
    %1432 = vmatprep.subr.mxu0 0.0
    %1433 = vmatpush1.msra.mxu0 0.0
    %1434 = vmatprep.subr.mxu0 0.0
    %1435 = vmatpush1.msra.mxu0 0.0
    %1436 = vmatprep.subr.mxu0 0.0
    %1437 = vmatpush1.msra.mxu0 0.0
    %1438 = vmatprep.subr.mxu0 0.0
    %1439 = vmatpush1.msra.mxu0 0.0
    %1440 = vmatprep.subr.mxu0 0.0
    %1441 = vmatpush1.msra.mxu0 0.0
    %1442 = vmatprep.subr.mxu0 0.0
    %1443 = vmatpush1.msra.mxu0 0.0
    %1444 = vmatprep.subr.mxu0 0.0
    %1445 = vmatpush1.msra.mxu0 0.0
    %1446 = vmatprep.subr.mxu0 0.0
    %1447 = vmatpush1.msra.mxu0 0.0
    %1448 = vmatprep.mubr.f32.mxu0 0.0
    %1449 = vmatmul.mubr.f32.gmra.mrb[0].mxu0 %v1382
    %v1450 = vpop.f32.mrb[0].mxu0
    %v1451 = vadd.f32 %v1368, %v1450
    %v1452 = vpop.f32.mrb[0].mxu0
    %1453 = vdwg.mxu0
    %1454 = vmatprep.subr.mxu0 0.0
    %1455 = vmatpush1.msra.mxu0 %v1351
    %1456 = vmatprep.subr.mxu0 0.0
    %1457 = vmatpush1.msra.mxu0 %v1352
    %1458 = vmatprep.subr.mxu0 0.0
    %1459 = vmatpush1.msra.mxu0 %v1353
    %1460 = vmatprep.subr.mxu0 0.0
    %1461 = vmatpush1.msra.mxu0 %v1354
    %1462 = vmatprep.subr.mxu0 0.0
    %1463 = vmatpush1.msra.mxu0 0.0
    %1464 = vmatprep.subr.mxu0 0.0
    %1465 = vmatpush1.msra.mxu0 0.0
    %1466 = vmatprep.subr.mxu0 0.0
    %1467 = vmatpush1.msra.mxu0 0.0
    %1468 = vmatprep.subr.mxu0 0.0
    %1469 = vmatpush1.msra.mxu0 0.0
    %1470 = vmatprep.subr.mxu0 0.0
    %1471 = vmatpush1.msra.mxu0 0.0
    %1472 = vmatprep.subr.mxu0 0.0
    %1473 = vmatpush1.msra.mxu0 0.0
    %1474 = vmatprep.subr.mxu0 0.0
    %1475 = vmatpush1.msra.mxu0 0.0
    %1476 = vmatprep.subr.mxu0 0.0
    %1477 = vmatpush1.msra.mxu0 0.0
    %1478 = vmatprep.subr.mxu0 0.0
    %1479 = vmatpush1.msra.mxu0 0.0
    %1480 = vmatprep.subr.mxu0 0.0
    %1481 = vmatpush1.msra.mxu0 0.0
    %1482 = vmatprep.subr.mxu0 0.0
    %1483 = vmatpush1.msra.mxu0 0.0
    %1484 = vmatprep.subr.mxu0 0.0
    %1485 = vmatpush1.msra.mxu0 0.0
    %1486 = vmatprep.subr.mxu0 0.0
    %1487 = vmatpush1.msra.mxu0 0.0
    %1488 = vmatprep.subr.mxu0 0.0
    %1489 = vmatpush1.msra.mxu0 0.0
    %1490 = vmatprep.subr.mxu0 0.0
    %1491 = vmatpush1.msra.mxu0 0.0
    %1492 = vmatprep.subr.mxu0 0.0
    %1493 = vmatpush1.msra.mxu0 0.0
    %1494 = vmatprep.subr.mxu0 0.0
    %1495 = vmatpush1.msra.mxu0 0.0
    %1496 = vmatprep.subr.mxu0 0.0
    %1497 = vmatpush1.msra.mxu0 0.0
    %1498 = vmatprep.subr.mxu0 0.0
    %1499 = vmatpush1.msra.mxu0 0.0
    %1500 = vmatprep.subr.mxu0 0.0
    %1501 = vmatpush1.msra.mxu0 0.0
    %1502 = vmatprep.subr.mxu0 0.0
    %1503 = vmatpush1.msra.mxu0 0.0
    %1504 = vmatprep.subr.mxu0 0.0
    %1505 = vmatpush1.msra.mxu0 0.0
    %1506 = vmatprep.subr.mxu0 0.0
    %1507 = vmatpush1.msra.mxu0 0.0
    %1508 = vmatprep.subr.mxu0 0.0
    %1509 = vmatpush1.msra.mxu0 0.0
    %1510 = vmatprep.subr.mxu0 0.0
    %1511 = vmatpush1.msra.mxu0 0.0
    %1512 = vmatprep.subr.mxu0 0.0
    %1513 = vmatpush1.msra.mxu0 0.0
    %1514 = vmatprep.subr.mxu0 0.0
    %1515 = vmatpush1.msra.mxu0 0.0
    %1516 = vmatprep.subr.mxu0 0.0
    %1517 = vmatpush1.msra.mxu0 0.0
    %1518 = vmatprep.mubr.f32.mxu0 0.0
    %1519 = vmatmul.mubr.f32.gmra.mrb[0].mxu0 %v1382
    %v1520 = vpop.f32.mrb[0].mxu0
    %v1521 = vadd.f32 %v1372, %v1520
    %v1522 = vpop.f32.mrb[0].mxu0
    %1523 = vdwg.mxu0
    %1524 = vmatprep.subr.mxu0 0.0
    %1525 = vmatpush1.msra.mxu0 %v1355
    %1526 = vmatprep.subr.mxu0 0.0
    %1527 = vmatpush1.msra.mxu0 %v1356
    %1528 = vmatprep.subr.mxu0 0.0
    %1529 = vmatpush1.msra.mxu0 %v1357
    %1530 = vmatprep.subr.mxu0 0.0
    %1531 = vmatpush1.msra.mxu0 %v1358
    %1532 = vmatprep.subr.mxu0 0.0
    %1533 = vmatpush1.msra.mxu0 0.0
    %1534 = vmatprep.subr.mxu0 0.0
    %1535 = vmatpush1.msra.mxu0 0.0
    %1536 = vmatprep.subr.mxu0 0.0
    %1537 = vmatpush1.msra.mxu0 0.0
    %1538 = vmatprep.subr.mxu0 0.0
    %1539 = vmatpush1.msra.mxu0 0.0
    %1540 = vmatprep.subr.mxu0 0.0
    %1541 = vmatpush1.msra.mxu0 0.0
    %1542 = vmatprep.subr.mxu0 0.0
    %1543 = vmatpush1.msra.mxu0 0.0
    %1544 = vmatprep.subr.mxu0 0.0
    %1545 = vmatpush1.msra.mxu0 0.0
    %1546 = vmatprep.subr.mxu0 0.0
    %1547 = vmatpush1.msra.mxu0 0.0
    %1548 = vmatprep.subr.mxu0 0.0
    %1549 = vmatpush1.msra.mxu0 0.0
    %1550 = vmatprep.subr.mxu0 0.0
    %1551 = vmatpush1.msra.mxu0 0.0
    %1552 = vmatprep.subr.mxu0 0.0
    %1553 = vmatpush1.msra.mxu0 0.0
    %1554 = vmatprep.subr.mxu0 0.0
    %1555 = vmatpush1.msra.mxu0 0.0
    %1556 = vmatprep.subr.mxu0 0.0
    %1557 = vmatpush1.msra.mxu0 0.0
    %1558 = vmatprep.subr.mxu0 0.0
    %1559 = vmatpush1.msra.mxu0 0.0
    %1560 = vmatprep.subr.mxu0 0.0
    %1561 = vmatpush1.msra.mxu0 0.0
    %1562 = vmatprep.subr.mxu0 0.0
    %1563 = vmatpush1.msra.mxu0 0.0
    %1564 = vmatprep.subr.mxu0 0.0
    %1565 = vmatpush1.msra.mxu0 0.0
    %1566 = vmatprep.subr.mxu0 0.0
    %1567 = vmatpush1.msra.mxu0 0.0
    %1568 = vmatprep.subr.mxu0 0.0
    %1569 = vmatpush1.msra.mxu0 0.0
    %1570 = vmatprep.subr.mxu0 0.0
    %1571 = vmatpush1.msra.mxu0 0.0
    %1572 = vmatprep.subr.mxu0 0.0
    %1573 = vmatpush1.msra.mxu0 0.0
    %1574 = vmatprep.subr.mxu0 0.0
    %1575 = vmatpush1.msra.mxu0 0.0
    %1576 = vmatprep.subr.mxu0 0.0
    %1577 = vmatpush1.msra.mxu0 0.0
    %1578 = vmatprep.subr.mxu0 0.0
    %1579 = vmatpush1.msra.mxu0 0.0
    %1580 = vmatprep.subr.mxu0 0.0
    %1581 = vmatpush1.msra.mxu0 0.0
    %1582 = vmatprep.subr.mxu0 0.0
    %1583 = vmatpush1.msra.mxu0 0.0
    %1584 = vmatprep.subr.mxu0 0.0
    %1585 = vmatpush1.msra.mxu0 0.0
    %1586 = vmatprep.subr.mxu0 0.0
    %1587 = vmatpush1.msra.mxu0 0.0
    %1588 = vmatprep.mubr.f32.mxu0 0.0
    %1589 = vmatmul.mubr.f32.gmra.mrb[0].mxu0 %v1382
    %v1590 = vpop.f32.mrb[0].mxu0
    %v1591 = vadd.f32 %v1376, %v1590
    %v1592 = vpop.f32.mrb[0].mxu0
    %1593 = vdwg.mxu0
    %v1594 = vadd.f32 %v1204, %v1451
    %v1595 = vadd.f32 %v1274, %v1521
    %v1596 = vadd.f32 %v1344, %v1591
    %v1597 = vxor.u32 %v1594, 2147483648
    %v1598 = vxor.u32 %v1595, 2147483648
    %v1599 = vxor.u32 %v1596, 2147483648
    %v1600 = vmul.f32 %v1597, 1.442695
    %v1601 = vpow.pop %v1600
    %v1602 = vmul.f32 %v1598, 1.442695
    %v1603 = vpow.pop %v1602
    %v1604 = vmul.f32 %v1599, 1.442695
    %v1605 = vpow.pop %v1604
    %v1606 = vadd.f32 %v1601, 1.0
    %v1607 = vadd.f32 %v1603, 1.0
    %v1608 = vadd.f32 %v1605, 1.0
    %v1609 = vrcp.pop %v1606
    %v1610 = vmul.f32 1.0, %v1609
    %v1611 = vrcp.pop %v1607
    %v1612 = vmul.f32 1.0, %v1611
    %v1613 = vrcp.pop %v1608
    %v1614 = vmul.f32 1.0, %v1613
    %1618 = vrot.lane.b32.xlu0 %v1451, 64
    %v1619 = vpop.permute.xlu0 %1618
    %1620 = vrot.lane.b32.xlu0 %v1521, 64
    %v1621 = vpop.permute.xlu0 %1620
    %1622 = vrot.lane.b32.xlu0 %v1591, 64
    %v1623 = vpop.permute.xlu0 %1622
    %v1627 = vmul.f32 %v1610, %v1619
    %v1628 = vmul.f32 %v1612, %v1621
    %v1629 = vmul.f32 %v1614, %v1623
    %1633 = vrot.lane.b32.xlu0 %v1627, 64
    %v1634 = vpop.permute.xlu0 %1633
    %1635 = vrot.lane.b32.xlu0 %v1628, 64
    %v1636 = vpop.permute.xlu0 %1635
    %1637 = vrot.lane.b32.xlu0 %v1629, 64
    %v1638 = vpop.permute.xlu0 %1637
    %v1642 = vadd.f32 %v1204, %v1634
    %v1643 = vadd.f32 %v1274, %v1636
    %v1644 = vadd.f32 %v1344, %v1638
    %v1645 = vtanh.pop %v1642
    %v1646 = vtanh.pop %v1643
    %v1647 = vtanh.pop %v1644
    %v1648 = vsub.f32 1.0, %v1610
    %v1649 = vsub.f32 1.0, %v1612
    %v1650 = vsub.f32 1.0, %v1614
    %1654 = vrot.lane.b32.xlu0 %v1645, 96
    %v1655 = vpop.permute.xlu0 %1654
    %1656 = vrot.lane.b32.xlu0 %v1646, 96
    %v1657 = vpop.permute.xlu0 %1656
    %1658 = vrot.lane.b32.xlu0 %v1647, 96
    %v1659 = vpop.permute.xlu0 %1658
    %v1663 = vmul.f32 %v1648, %v1655
    %v1664 = vmul.f32 %v1649, %v1657
    %v1665 = vmul.f32 %v1650, %v1659
    %v1666 = vmul.f32 %v1610, 0.0
    %v1667 = vmul.f32 %v1612, 0.0
    %v1668 = vmul.f32 %v1614, 0.0
    %v1669 = vadd.f32 %v1663, %v1666
    %v1670 = vadd.f32 %v1664, %v1667
    %v1671 = vadd.f32 %v1665, %v1668
    %s1672 = scalar_lea.vmem %s12, 384
    %v1673 = vld [vmem:[%s1672] sm:$0xff]
    %v1674 = vld [vmem:[%s1672 + $0x8] sm:$0xff]
    %v1675 = vld [vmem:[%s1672 + $0x10] sm:$0xff]
    %v1676 = vld [vmem:[%s1672 + $0x18] sm:$0xff]
    %v1677 = vld [vmem:[%s1672 + $0x20] sm:$0xff]
    %v1678 = vld [vmem:[%s1672 + $0x28] sm:$0xff]
    %v1679 = vld [vmem:[%s1672 + $0x30] sm:$0xff]
    %v1680 = vld [vmem:[%s1672 + $0x38] sm:$0xff]
    %v1681 = vld [vmem:[%s1672 + $0x40] sm:$0xff]
    %v1682 = vld [vmem:[%s1672 + $0x48] sm:$0xff]
    %v1683 = vld [vmem:[%s1672 + $0x50] sm:$0xff]
    %v1684 = vld [vmem:[%s1672 + $0x58] sm:$0xff]
    %v1685 = vld [vmem:[%s1672 + $0x60] sm:$0xff]
    %v1686 = vld [vmem:[%s1672 + $0x68] sm:$0xff]
    %v1687 = vld [vmem:[%s1672 + $0x70] sm:$0xff]
    %v1688 = vld [vmem:[%s1672 + $0x78] sm:$0xff]
    %v1689 = vld [vmem:[%s1672 + $0x80] sm:$0xff]
    %v1690 = vld [vmem:[%s1672 + $0x88] sm:$0xff]
    %v1691 = vld [vmem:[%s1672 + $0x90] sm:$0xff]
    %v1692 = vld [vmem:[%s1672 + $0x98] sm:$0xff]
    %v1693 = vld [vmem:[%s1672 + $0xa0] sm:$0xff]
    %v1694 = vld [vmem:[%s1672 + $0xa8] sm:$0xff]
    %v1695 = vld [vmem:[%s1672 + $0xb0] sm:$0xff]
    %v1696 = vld [vmem:[%s1672 + $0xb8] sm:$0xff]
    %v1697 = vld [vmem:[%s1672 + $0xc0] sm:$0xff]
    %v1698 = vld [vmem:[%s1672 + $0xc8] sm:$0xff]
    %v1699 = vld [vmem:[%s1672 + $0xd0] sm:$0xff]
    %v1700 = vld [vmem:[%s1672 + $0xd8] sm:$0xff]
    %v1701 = vld [vmem:[%s1672 + $0xe0] sm:$0xff]
    %v1702 = vld [vmem:[%s1672 + $0xe8] sm:$0xff]
    %v1703 = vld [vmem:[%s1672 + $0xf0] sm:$0xff]
    %v1704 = vld [vmem:[%s1672 + $0xf8] sm:$0xff]
    %v1705 = vld [vmem:[%s1672 + $0x100] sm:$0xff]
    %v1706 = vld [vmem:[%s1672 + $0x108] sm:$0xff]
    %v1707 = vld [vmem:[%s1672 + $0x110] sm:$0xff]
    %v1708 = vld [vmem:[%s1672 + $0x118] sm:$0xff]
    %v1709 = vld [vmem:[%s1672 + $0x120] sm:$0xff]
    %v1710 = vld [vmem:[%s1672 + $0x128] sm:$0xff]
    %v1711 = vld [vmem:[%s1672 + $0x130] sm:$0xff]
    %v1712 = vld [vmem:[%s1672 + $0x138] sm:$0xff]
    %v1713 = vld [vmem:[%s1672 + $0x140] sm:$0xff]
    %v1714 = vld [vmem:[%s1672 + $0x148] sm:$0xff]
    %v1715 = vld [vmem:[%s1672 + $0x150] sm:$0xff]
    %v1716 = vld [vmem:[%s1672 + $0x158] sm:$0xff]
    %v1717 = vld [vmem:[%s1672 + $0x160] sm:$0xff]
    %v1718 = vld [vmem:[%s1672 + $0x168] sm:$0xff]
    %v1719 = vld [vmem:[%s1672 + $0x170] sm:$0xff]
    %v1720 = vld [vmem:[%s1672 + $0x178] sm:$0xff]
    %s1721 = scalar_lea.vmem %s15, 3
    %v1722 = vld [vmem:[%s1721] sm:$0x1]
    %v1723 = vld [vmem:[%s1721 + $0x1] sm:$0x1]
    %v1724 = vld [vmem:[%s1721 + $0x2] sm:$0x1]
    %v1728 = vlaneseq
    %v1729 = vshrl.u32 %v1728, 7
    %v1730 = vsub.s32 0, %v1729
    %v1731 = vrot.slane %v1722, %v1730
    %v1732 = vlaneseq
    %v1733 = vshrl.u32 %v1732, 7
    %v1734 = vsub.s32 0, %v1733
    %v1735 = vrot.slane %v1723, %v1734
    %v1736 = vlaneseq
    %v1737 = vshrl.u32 %v1736, 7
    %v1738 = vsub.s32 0, %v1737
    %v1739 = vrot.slane %v1724, %v1738
    %1743 = vmatprep.subr.mxu0 0.0
    %1744 = vmatpush1.msra.mxu0 %v1673
    %1745 = vmatprep.subr.mxu0 0.0
    %1746 = vmatpush1.msra.mxu0 %v1674
    %1747 = vmatprep.subr.mxu0 0.0
    %1748 = vmatpush1.msra.mxu0 %v1675
    %1749 = vmatprep.subr.mxu0 0.0
    %1750 = vmatpush1.msra.mxu0 %v1676
    %1751 = vmatprep.subr.mxu0 0.0
    %1752 = vmatpush1.msra.mxu0 %v1677
    %1753 = vmatprep.subr.mxu0 0.0
    %1754 = vmatpush1.msra.mxu0 %v1678
    %1755 = vmatprep.subr.mxu0 0.0
    %1756 = vmatpush1.msra.mxu0 %v1679
    %1757 = vmatprep.subr.mxu0 0.0
    %1758 = vmatpush1.msra.mxu0 %v1680
    %1759 = vmatprep.subr.mxu0 0.0
    %1760 = vmatpush1.msra.mxu0 %v1681
    %1761 = vmatprep.subr.mxu0 0.0
    %1762 = vmatpush1.msra.mxu0 %v1682
    %1763 = vmatprep.subr.mxu0 0.0
    %1764 = vmatpush1.msra.mxu0 %v1683
    %1765 = vmatprep.subr.mxu0 0.0
    %1766 = vmatpush1.msra.mxu0 %v1684
    %1767 = vmatprep.subr.mxu0 0.0
    %1768 = vmatpush1.msra.mxu0 %v1685
    %1769 = vmatprep.subr.mxu0 0.0
    %1770 = vmatpush1.msra.mxu0 %v1686
    %1771 = vmatprep.subr.mxu0 0.0
    %1772 = vmatpush1.msra.mxu0 %v1687
    %1773 = vmatprep.subr.mxu0 0.0
    %1774 = vmatpush1.msra.mxu0 %v1688
    %1775 = vmatprep.subr.mxu0 0.0
    %1776 = vmatpush1.msra.mxu0 0.0
    %1777 = vmatprep.subr.mxu0 0.0
    %1778 = vmatpush1.msra.mxu0 0.0
    %1779 = vmatprep.subr.mxu0 0.0
    %1780 = vmatpush1.msra.mxu0 0.0
    %1781 = vmatprep.subr.mxu0 0.0
    %1782 = vmatpush1.msra.mxu0 0.0
    %1783 = vmatprep.subr.mxu0 0.0
    %1784 = vmatpush1.msra.mxu0 0.0
    %1785 = vmatprep.subr.mxu0 0.0
    %1786 = vmatpush1.msra.mxu0 0.0
    %1787 = vmatprep.subr.mxu0 0.0
    %1788 = vmatpush1.msra.mxu0 0.0
    %1789 = vmatprep.subr.mxu0 0.0
    %1790 = vmatpush1.msra.mxu0 0.0
    %1791 = vmatprep.subr.mxu0 0.0
    %1792 = vmatpush1.msra.mxu0 0.0
    %1793 = vmatprep.subr.mxu0 0.0
    %1794 = vmatpush1.msra.mxu0 0.0
    %1795 = vmatprep.subr.mxu0 0.0
    %1796 = vmatpush1.msra.mxu0 0.0
    %1797 = vmatprep.subr.mxu0 0.0
    %1798 = vmatpush1.msra.mxu0 0.0
    %1799 = vmatprep.subr.mxu0 0.0
    %1800 = vmatpush1.msra.mxu0 0.0
    %1801 = vmatprep.subr.mxu0 0.0
    %1802 = vmatpush1.msra.mxu0 0.0
    %1803 = vmatprep.subr.mxu0 0.0
    %1804 = vmatpush1.msra.mxu0 0.0
    %1805 = vmatprep.subr.mxu0 0.0
    %1806 = vmatpush1.msra.mxu0 0.0
    %1807 = vmatprep.mubr.f32.mxu0 0.0
    %1808 = vmatmul.mubr.f32.gmra.mrb[0].mxu0 %v1065
    %v1809 = vpop.f32.mrb[0].mxu0
    %v1810 = vadd.f32 %v1731, %v1809
    %v1811 = vpop.f32.mrb[0].mxu0
    %1812 = vdwg.mxu0
    %1813 = vmatprep.subr.mxu0 0.0
    %1814 = vmatpush1.msra.mxu0 %v1689
    %1815 = vmatprep.subr.mxu0 0.0
    %1816 = vmatpush1.msra.mxu0 %v1690
    %1817 = vmatprep.subr.mxu0 0.0
    %1818 = vmatpush1.msra.mxu0 %v1691
    %1819 = vmatprep.subr.mxu0 0.0
    %1820 = vmatpush1.msra.mxu0 %v1692
    %1821 = vmatprep.subr.mxu0 0.0
    %1822 = vmatpush1.msra.mxu0 %v1693
    %1823 = vmatprep.subr.mxu0 0.0
    %1824 = vmatpush1.msra.mxu0 %v1694
    %1825 = vmatprep.subr.mxu0 0.0
    %1826 = vmatpush1.msra.mxu0 %v1695
    %1827 = vmatprep.subr.mxu0 0.0
    %1828 = vmatpush1.msra.mxu0 %v1696
    %1829 = vmatprep.subr.mxu0 0.0
    %1830 = vmatpush1.msra.mxu0 %v1697
    %1831 = vmatprep.subr.mxu0 0.0
    %1832 = vmatpush1.msra.mxu0 %v1698
    %1833 = vmatprep.subr.mxu0 0.0
    %1834 = vmatpush1.msra.mxu0 %v1699
    %1835 = vmatprep.subr.mxu0 0.0
    %1836 = vmatpush1.msra.mxu0 %v1700
    %1837 = vmatprep.subr.mxu0 0.0
    %1838 = vmatpush1.msra.mxu0 %v1701
    %1839 = vmatprep.subr.mxu0 0.0
    %1840 = vmatpush1.msra.mxu0 %v1702
    %1841 = vmatprep.subr.mxu0 0.0
    %1842 = vmatpush1.msra.mxu0 %v1703
    %1843 = vmatprep.subr.mxu0 0.0
    %1844 = vmatpush1.msra.mxu0 %v1704
    %1845 = vmatprep.subr.mxu0 0.0
    %1846 = vmatpush1.msra.mxu0 0.0
    %1847 = vmatprep.subr.mxu0 0.0
    %1848 = vmatpush1.msra.mxu0 0.0
    %1849 = vmatprep.subr.mxu0 0.0
    %1850 = vmatpush1.msra.mxu0 0.0
    %1851 = vmatprep.subr.mxu0 0.0
    %1852 = vmatpush1.msra.mxu0 0.0
    %1853 = vmatprep.subr.mxu0 0.0
    %1854 = vmatpush1.msra.mxu0 0.0
    %1855 = vmatprep.subr.mxu0 0.0
    %1856 = vmatpush1.msra.mxu0 0.0
    %1857 = vmatprep.subr.mxu0 0.0
    %1858 = vmatpush1.msra.mxu0 0.0
    %1859 = vmatprep.subr.mxu0 0.0
    %1860 = vmatpush1.msra.mxu0 0.0
    %1861 = vmatprep.subr.mxu0 0.0
    %1862 = vmatpush1.msra.mxu0 0.0
    %1863 = vmatprep.subr.mxu0 0.0
    %1864 = vmatpush1.msra.mxu0 0.0
    %1865 = vmatprep.subr.mxu0 0.0
    %1866 = vmatpush1.msra.mxu0 0.0
    %1867 = vmatprep.subr.mxu0 0.0
    %1868 = vmatpush1.msra.mxu0 0.0
    %1869 = vmatprep.subr.mxu0 0.0
    %1870 = vmatpush1.msra.mxu0 0.0
    %1871 = vmatprep.subr.mxu0 0.0
    %1872 = vmatpush1.msra.mxu0 0.0
    %1873 = vmatprep.subr.mxu0 0.0
    %1874 = vmatpush1.msra.mxu0 0.0
    %1875 = vmatprep.subr.mxu0 0.0
    %1876 = vmatpush1.msra.mxu0 0.0
    %1877 = vmatprep.mubr.f32.mxu0 0.0
    %1878 = vmatmul.mubr.f32.gmra.mrb[0].mxu0 %v1066
    %v1879 = vpop.f32.mrb[0].mxu0
    %v1880 = vadd.f32 %v1735, %v1879
    %v1881 = vpop.f32.mrb[0].mxu0
    %1882 = vdwg.mxu0
    %1883 = vmatprep.subr.mxu0 0.0
    %1884 = vmatpush1.msra.mxu0 %v1705
    %1885 = vmatprep.subr.mxu0 0.0
    %1886 = vmatpush1.msra.mxu0 %v1706
    %1887 = vmatprep.subr.mxu0 0.0
    %1888 = vmatpush1.msra.mxu0 %v1707
    %1889 = vmatprep.subr.mxu0 0.0
    %1890 = vmatpush1.msra.mxu0 %v1708
    %1891 = vmatprep.subr.mxu0 0.0
    %1892 = vmatpush1.msra.mxu0 %v1709
    %1893 = vmatprep.subr.mxu0 0.0
    %1894 = vmatpush1.msra.mxu0 %v1710
    %1895 = vmatprep.subr.mxu0 0.0
    %1896 = vmatpush1.msra.mxu0 %v1711
    %1897 = vmatprep.subr.mxu0 0.0
    %1898 = vmatpush1.msra.mxu0 %v1712
    %1899 = vmatprep.subr.mxu0 0.0
    %1900 = vmatpush1.msra.mxu0 %v1713
    %1901 = vmatprep.subr.mxu0 0.0
    %1902 = vmatpush1.msra.mxu0 %v1714
    %1903 = vmatprep.subr.mxu0 0.0
    %1904 = vmatpush1.msra.mxu0 %v1715
    %1905 = vmatprep.subr.mxu0 0.0
    %1906 = vmatpush1.msra.mxu0 %v1716
    %1907 = vmatprep.subr.mxu0 0.0
    %1908 = vmatpush1.msra.mxu0 %v1717
    %1909 = vmatprep.subr.mxu0 0.0
    %1910 = vmatpush1.msra.mxu0 %v1718
    %1911 = vmatprep.subr.mxu0 0.0
    %1912 = vmatpush1.msra.mxu0 %v1719
    %1913 = vmatprep.subr.mxu0 0.0
    %1914 = vmatpush1.msra.mxu0 %v1720
    %1915 = vmatprep.subr.mxu0 0.0
    %1916 = vmatpush1.msra.mxu0 0.0
    %1917 = vmatprep.subr.mxu0 0.0
    %1918 = vmatpush1.msra.mxu0 0.0
    %1919 = vmatprep.subr.mxu0 0.0
    %1920 = vmatpush1.msra.mxu0 0.0
    %1921 = vmatprep.subr.mxu0 0.0
    %1922 = vmatpush1.msra.mxu0 0.0
    %1923 = vmatprep.subr.mxu0 0.0
    %1924 = vmatpush1.msra.mxu0 0.0
    %1925 = vmatprep.subr.mxu0 0.0
    %1926 = vmatpush1.msra.mxu0 0.0
    %1927 = vmatprep.subr.mxu0 0.0
    %1928 = vmatpush1.msra.mxu0 0.0
    %1929 = vmatprep.subr.mxu0 0.0
    %1930 = vmatpush1.msra.mxu0 0.0
    %1931 = vmatprep.subr.mxu0 0.0
    %1932 = vmatpush1.msra.mxu0 0.0
    %1933 = vmatprep.subr.mxu0 0.0
    %1934 = vmatpush1.msra.mxu0 0.0
    %1935 = vmatprep.subr.mxu0 0.0
    %1936 = vmatpush1.msra.mxu0 0.0
    %1937 = vmatprep.subr.mxu0 0.0
    %1938 = vmatpush1.msra.mxu0 0.0
    %1939 = vmatprep.subr.mxu0 0.0
    %1940 = vmatpush1.msra.mxu0 0.0
    %1941 = vmatprep.subr.mxu0 0.0
    %1942 = vmatpush1.msra.mxu0 0.0
    %1943 = vmatprep.subr.mxu0 0.0
    %1944 = vmatpush1.msra.mxu0 0.0
    %1945 = vmatprep.subr.mxu0 0.0
    %1946 = vmatpush1.msra.mxu0 0.0
    %1947 = vmatprep.mubr.f32.mxu0 0.0
    %1948 = vmatmul.mubr.f32.gmra.mrb[0].mxu0 %v1067
    %v1949 = vpop.f32.mrb[0].mxu0
    %v1950 = vadd.f32 %v1739, %v1949
    %v1951 = vpop.f32.mrb[0].mxu0
    %1952 = vdwg.mxu0
    %s1953 = scalar_lea.vmem %s14, 96
    %v1954 = vld [vmem:[%s1953] sm:$0xff]
    %v1955 = vld [vmem:[%s1953 + $0x8] sm:$0xff]
    %v1956 = vld [vmem:[%s1953 + $0x10] sm:$0xff]
    %v1957 = vld [vmem:[%s1953 + $0x18] sm:$0xff]
    %v1958 = vld [vmem:[%s1953 + $0x20] sm:$0xff]
    %v1959 = vld [vmem:[%s1953 + $0x28] sm:$0xff]
    %v1960 = vld [vmem:[%s1953 + $0x30] sm:$0xff]
    %v1961 = vld [vmem:[%s1953 + $0x38] sm:$0xff]
    %v1962 = vld [vmem:[%s1953 + $0x40] sm:$0xff]
    %v1963 = vld [vmem:[%s1953 + $0x48] sm:$0xff]
    %v1964 = vld [vmem:[%s1953 + $0x50] sm:$0xff]
    %v1965 = vld [vmem:[%s1953 + $0x58] sm:$0xff]
    %s1966 = scalar_lea.vmem %s16, 3
    %v1967 = vld [vmem:[%s1966] sm:$0x1]
    %v1968 = vld [vmem:[%s1966 + $0x1] sm:$0x1]
    %v1969 = vld [vmem:[%s1966 + $0x2] sm:$0x1]
    %v1973 = vlaneseq
    %v1974 = vshrl.u32 %v1973, 7
    %v1975 = vsub.s32 0, %v1974
    %v1976 = vrot.slane %v1967, %v1975
    %v1977 = vlaneseq
    %v1978 = vshrl.u32 %v1977, 7
    %v1979 = vsub.s32 0, %v1978
    %v1980 = vrot.slane %v1968, %v1979
    %v1981 = vlaneseq
    %v1982 = vshrl.u32 %v1981, 7
    %v1983 = vsub.s32 0, %v1982
    %v1984 = vrot.slane %v1969, %v1983
    %1988 = vmatprep.subr.mxu0 0.0
    %1989 = vmatpush1.msra.mxu0 %v1954
    %1990 = vmatprep.subr.mxu0 0.0
    %1991 = vmatpush1.msra.mxu0 %v1955
    %1992 = vmatprep.subr.mxu0 0.0
    %1993 = vmatpush1.msra.mxu0 %v1956
    %1994 = vmatprep.subr.mxu0 0.0
    %1995 = vmatpush1.msra.mxu0 %v1957
    %1996 = vmatprep.subr.mxu0 0.0
    %1997 = vmatpush1.msra.mxu0 0.0
    %1998 = vmatprep.subr.mxu0 0.0
    %1999 = vmatpush1.msra.mxu0 0.0
    %2000 = vmatprep.subr.mxu0 0.0
    %2001 = vmatpush1.msra.mxu0 0.0
    %2002 = vmatprep.subr.mxu0 0.0
    %2003 = vmatpush1.msra.mxu0 0.0
    %2004 = vmatprep.subr.mxu0 0.0
    %2005 = vmatpush1.msra.mxu0 0.0
    %2006 = vmatprep.subr.mxu0 0.0
    %2007 = vmatpush1.msra.mxu0 0.0
    %2008 = vmatprep.subr.mxu0 0.0
    %2009 = vmatpush1.msra.mxu0 0.0
    %2010 = vmatprep.subr.mxu0 0.0
    %2011 = vmatpush1.msra.mxu0 0.0
    %2012 = vmatprep.subr.mxu0 0.0
    %2013 = vmatpush1.msra.mxu0 0.0
    %2014 = vmatprep.subr.mxu0 0.0
    %2015 = vmatpush1.msra.mxu0 0.0
    %2016 = vmatprep.subr.mxu0 0.0
    %2017 = vmatpush1.msra.mxu0 0.0
    %2018 = vmatprep.subr.mxu0 0.0
    %2019 = vmatpush1.msra.mxu0 0.0
    %2020 = vmatprep.subr.mxu0 0.0
    %2021 = vmatpush1.msra.mxu0 0.0
    %2022 = vmatprep.subr.mxu0 0.0
    %2023 = vmatpush1.msra.mxu0 0.0
    %2024 = vmatprep.subr.mxu0 0.0
    %2025 = vmatpush1.msra.mxu0 0.0
    %2026 = vmatprep.subr.mxu0 0.0
    %2027 = vmatpush1.msra.mxu0 0.0
    %2028 = vmatprep.subr.mxu0 0.0
    %2029 = vmatpush1.msra.mxu0 0.0
    %2030 = vmatprep.subr.mxu0 0.0
    %2031 = vmatpush1.msra.mxu0 0.0
    %2032 = vmatprep.subr.mxu0 0.0
    %2033 = vmatpush1.msra.mxu0 0.0
    %2034 = vmatprep.subr.mxu0 0.0
    %2035 = vmatpush1.msra.mxu0 0.0
    %2036 = vmatprep.subr.mxu0 0.0
    %2037 = vmatpush1.msra.mxu0 0.0
    %2038 = vmatprep.subr.mxu0 0.0
    %2039 = vmatpush1.msra.mxu0 0.0
    %2040 = vmatprep.subr.mxu0 0.0
    %2041 = vmatpush1.msra.mxu0 0.0
    %2042 = vmatprep.subr.mxu0 0.0
    %2043 = vmatpush1.msra.mxu0 0.0
    %2044 = vmatprep.subr.mxu0 0.0
    %2045 = vmatpush1.msra.mxu0 0.0
    %2046 = vmatprep.subr.mxu0 0.0
    %2047 = vmatpush1.msra.mxu0 0.0
    %2048 = vmatprep.subr.mxu0 0.0
    %2049 = vmatpush1.msra.mxu0 0.0
    %2050 = vmatprep.subr.mxu0 0.0
    %2051 = vmatpush1.msra.mxu0 0.0
    %2052 = vmatprep.mubr.f32.mxu0 0.0
    %2053 = vmatmul.mubr.f32.gmra.mrb[0].mxu0 %v1382
    %v2054 = vpop.f32.mrb[0].mxu0
    %v2055 = vadd.f32 %v1976, %v2054
    %v2056 = vpop.f32.mrb[0].mxu0
    %2057 = vdwg.mxu0
    %2058 = vmatprep.subr.mxu0 0.0
    %2059 = vmatpush1.msra.mxu0 %v1958
    %2060 = vmatprep.subr.mxu0 0.0
    %2061 = vmatpush1.msra.mxu0 %v1959
    %2062 = vmatprep.subr.mxu0 0.0
    %2063 = vmatpush1.msra.mxu0 %v1960
    %2064 = vmatprep.subr.mxu0 0.0
    %2065 = vmatpush1.msra.mxu0 %v1961
    %2066 = vmatprep.subr.mxu0 0.0
    %2067 = vmatpush1.msra.mxu0 0.0
    %2068 = vmatprep.subr.mxu0 0.0
    %2069 = vmatpush1.msra.mxu0 0.0
    %2070 = vmatprep.subr.mxu0 0.0
    %2071 = vmatpush1.msra.mxu0 0.0
    %2072 = vmatprep.subr.mxu0 0.0
    %2073 = vmatpush1.msra.mxu0 0.0
    %2074 = vmatprep.subr.mxu0 0.0
    %2075 = vmatpush1.msra.mxu0 0.0
    %2076 = vmatprep.subr.mxu0 0.0
    %2077 = vmatpush1.msra.mxu0 0.0
    %2078 = vmatprep.subr.mxu0 0.0
    %2079 = vmatpush1.msra.mxu0 0.0
    %2080 = vmatprep.subr.mxu0 0.0
    %2081 = vmatpush1.msra.mxu0 0.0
    %2082 = vmatprep.subr.mxu0 0.0
    %2083 = vmatpush1.msra.mxu0 0.0
    %2084 = vmatprep.subr.mxu0 0.0
    %2085 = vmatpush1.msra.mxu0 0.0
    %2086 = vmatprep.subr.mxu0 0.0
    %2087 = vmatpush1.msra.mxu0 0.0
    %2088 = vmatprep.subr.mxu0 0.0
    %2089 = vmatpush1.msra.mxu0 0.0
    %2090 = vmatprep.subr.mxu0 0.0
    %2091 = vmatpush1.msra.mxu0 0.0
    %2092 = vmatprep.subr.mxu0 0.0
    %2093 = vmatpush1.msra.mxu0 0.0
    %2094 = vmatprep.subr.mxu0 0.0
    %2095 = vmatpush1.msra.mxu0 0.0
    %2096 = vmatprep.subr.mxu0 0.0
    %2097 = vmatpush1.msra.mxu0 0.0
    %2098 = vmatprep.subr.mxu0 0.0
    %2099 = vmatpush1.msra.mxu0 0.0
    %2100 = vmatprep.subr.mxu0 0.0
    %2101 = vmatpush1.msra.mxu0 0.0
    %2102 = vmatprep.subr.mxu0 0.0
    %2103 = vmatpush1.msra.mxu0 0.0
    %2104 = vmatprep.subr.mxu0 0.0
    %2105 = vmatpush1.msra.mxu0 0.0
    %2106 = vmatprep.subr.mxu0 0.0
    %2107 = vmatpush1.msra.mxu0 0.0
    %2108 = vmatprep.subr.mxu0 0.0
    %2109 = vmatpush1.msra.mxu0 0.0
    %2110 = vmatprep.subr.mxu0 0.0
    %2111 = vmatpush1.msra.mxu0 0.0
    %2112 = vmatprep.subr.mxu0 0.0
    %2113 = vmatpush1.msra.mxu0 0.0
    %2114 = vmatprep.subr.mxu0 0.0
    %2115 = vmatpush1.msra.mxu0 0.0
    %2116 = vmatprep.subr.mxu0 0.0
    %2117 = vmatpush1.msra.mxu0 0.0
    %2118 = vmatprep.subr.mxu0 0.0
    %2119 = vmatpush1.msra.mxu0 0.0
    %2120 = vmatprep.subr.mxu0 0.0
    %2121 = vmatpush1.msra.mxu0 0.0
    %2122 = vmatprep.mubr.f32.mxu0 0.0
    %2123 = vmatmul.mubr.f32.gmra.mrb[0].mxu0 %v1382
    %v2124 = vpop.f32.mrb[0].mxu0
    %v2125 = vadd.f32 %v1980, %v2124
    %v2126 = vpop.f32.mrb[0].mxu0
    %2127 = vdwg.mxu0
    %2128 = vmatprep.subr.mxu0 0.0
    %2129 = vmatpush1.msra.mxu0 %v1962
    %2130 = vmatprep.subr.mxu0 0.0
    %2131 = vmatpush1.msra.mxu0 %v1963
    %2132 = vmatprep.subr.mxu0 0.0
    %2133 = vmatpush1.msra.mxu0 %v1964
    %2134 = vmatprep.subr.mxu0 0.0
    %2135 = vmatpush1.msra.mxu0 %v1965
    %2136 = vmatprep.subr.mxu0 0.0
    %2137 = vmatpush1.msra.mxu0 0.0
    %2138 = vmatprep.subr.mxu0 0.0
    %2139 = vmatpush1.msra.mxu0 0.0
    %2140 = vmatprep.subr.mxu0 0.0
    %2141 = vmatpush1.msra.mxu0 0.0
    %2142 = vmatprep.subr.mxu0 0.0
    %2143 = vmatpush1.msra.mxu0 0.0
    %2144 = vmatprep.subr.mxu0 0.0
    %2145 = vmatpush1.msra.mxu0 0.0
    %2146 = vmatprep.subr.mxu0 0.0
    %2147 = vmatpush1.msra.mxu0 0.0
    %2148 = vmatprep.subr.mxu0 0.0
    %2149 = vmatpush1.msra.mxu0 0.0
    %2150 = vmatprep.subr.mxu0 0.0
    %2151 = vmatpush1.msra.mxu0 0.0
    %2152 = vmatprep.subr.mxu0 0.0
    %2153 = vmatpush1.msra.mxu0 0.0
    %2154 = vmatprep.subr.mxu0 0.0
    %2155 = vmatpush1.msra.mxu0 0.0
    %2156 = vmatprep.subr.mxu0 0.0
    %2157 = vmatpush1.msra.mxu0 0.0
    %2158 = vmatprep.subr.mxu0 0.0
    %2159 = vmatpush1.msra.mxu0 0.0
    %2160 = vmatprep.subr.mxu0 0.0
    %2161 = vmatpush1.msra.mxu0 0.0
    %2162 = vmatprep.subr.mxu0 0.0
    %2163 = vmatpush1.msra.mxu0 0.0
    %2164 = vmatprep.subr.mxu0 0.0
    %2165 = vmatpush1.msra.mxu0 0.0
    %2166 = vmatprep.subr.mxu0 0.0
    %2167 = vmatpush1.msra.mxu0 0.0
    %2168 = vmatprep.subr.mxu0 0.0
    %2169 = vmatpush1.msra.mxu0 0.0
    %2170 = vmatprep.subr.mxu0 0.0
    %2171 = vmatpush1.msra.mxu0 0.0
    %2172 = vmatprep.subr.mxu0 0.0
    %2173 = vmatpush1.msra.mxu0 0.0
    %2174 = vmatprep.subr.mxu0 0.0
    %2175 = vmatpush1.msra.mxu0 0.0
    %2176 = vmatprep.subr.mxu0 0.0
    %2177 = vmatpush1.msra.mxu0 0.0
    %2178 = vmatprep.subr.mxu0 0.0
    %2179 = vmatpush1.msra.mxu0 0.0
    %2180 = vmatprep.subr.mxu0 0.0
    %2181 = vmatpush1.msra.mxu0 0.0
    %2182 = vmatprep.subr.mxu0 0.0
    %2183 = vmatpush1.msra.mxu0 0.0
    %2184 = vmatprep.subr.mxu0 0.0
    %2185 = vmatpush1.msra.mxu0 0.0
    %2186 = vmatprep.subr.mxu0 0.0
    %2187 = vmatpush1.msra.mxu0 0.0
    %2188 = vmatprep.subr.mxu0 0.0
    %2189 = vmatpush1.msra.mxu0 0.0
    %2190 = vmatprep.subr.mxu0 0.0
    %2191 = vmatpush1.msra.mxu0 0.0
    %2192 = vmatprep.mubr.f32.mxu0 0.0
    %2193 = vmatmul.mubr.f32.gmra.mrb[0].mxu0 %v1382
    %v2194 = vpop.f32.mrb[0].mxu0
    %v2195 = vadd.f32 %v1984, %v2194
    %v2196 = vpop.f32.mrb[0].mxu0
    %2197 = vdwg.mxu0
    %v2198 = vadd.f32 %v1810, %v2055
    %v2199 = vadd.f32 %v1880, %v2125
    %v2200 = vadd.f32 %v1950, %v2195
    %v2201 = vxor.u32 %v2198, 2147483648
    %v2202 = vxor.u32 %v2199, 2147483648
    %v2203 = vxor.u32 %v2200, 2147483648
    %v2204 = vmul.f32 %v2201, 1.442695
    %v2205 = vpow.pop %v2204
    %v2206 = vmul.f32 %v2202, 1.442695
    %v2207 = vpow.pop %v2206
    %v2208 = vmul.f32 %v2203, 1.442695
    %v2209 = vpow.pop %v2208
    %v2210 = vadd.f32 %v2205, 1.0
    %v2211 = vadd.f32 %v2207, 1.0
    %v2212 = vadd.f32 %v2209, 1.0
    %v2213 = vrcp.pop %v2210
    %v2214 = vmul.f32 1.0, %v2213
    %v2215 = vrcp.pop %v2211
    %v2216 = vmul.f32 1.0, %v2215
    %v2217 = vrcp.pop %v2212
    %v2218 = vmul.f32 1.0, %v2217
    %2222 = vrot.lane.b32.xlu0 %v2055, 64
    %v2223 = vpop.permute.xlu0 %2222
    %2224 = vrot.lane.b32.xlu0 %v2125, 64
    %v2225 = vpop.permute.xlu0 %2224
    %2226 = vrot.lane.b32.xlu0 %v2195, 64
    %v2227 = vpop.permute.xlu0 %2226
    %v2231 = vmul.f32 %v2214, %v2223
    %v2232 = vmul.f32 %v2216, %v2225
    %v2233 = vmul.f32 %v2218, %v2227
    %2237 = vrot.lane.b32.xlu0 %v2231, 64
    %v2238 = vpop.permute.xlu0 %2237
    %2239 = vrot.lane.b32.xlu0 %v2232, 64
    %v2240 = vpop.permute.xlu0 %2239
    %2241 = vrot.lane.b32.xlu0 %v2233, 64
    %v2242 = vpop.permute.xlu0 %2241
    %v2246 = vadd.f32 %v1810, %v2238
    %v2247 = vadd.f32 %v1880, %v2240
    %v2248 = vadd.f32 %v1950, %v2242
    %v2249 = vtanh.pop %v2246
    %v2250 = vtanh.pop %v2247
    %v2251 = vtanh.pop %v2248
    %v2252 = vsub.f32 1.0, %v2214
    %v2253 = vsub.f32 1.0, %v2216
    %v2254 = vsub.f32 1.0, %v2218
    %2258 = vrot.lane.b32.xlu0 %v2249, 96
    %v2259 = vpop.permute.xlu0 %2258
    %2260 = vrot.lane.b32.xlu0 %v2250, 96
    %v2261 = vpop.permute.xlu0 %2260
    %2262 = vrot.lane.b32.xlu0 %v2251, 96
    %v2263 = vpop.permute.xlu0 %2262
    %v2267 = vmul.f32 %v2252, %v2259
    %v2268 = vmul.f32 %v2253, %v2261
    %v2269 = vmul.f32 %v2254, %v2263
    %v2270 = vmul.f32 %v2214, 0.0
    %v2271 = vmul.f32 %v2216, 0.0
    %v2272 = vmul.f32 %v2218, 0.0
    %v2273 = vadd.f32 %v2267, %v2270
    %v2274 = vadd.f32 %v2268, %v2271
    %v2275 = vadd.f32 %v2269, %v2272
    %2279 = vrot.lane.b32.xlu0 %v1669, 96
    %v2280 = vpop.permute.xlu0 %2279
    %2281 = vrot.lane.b32.xlu0 %v1670, 96
    %v2282 = vpop.permute.xlu0 %2281
    %2283 = vrot.lane.b32.xlu0 %v1671, 96
    %v2284 = vpop.permute.xlu0 %2283
    %v2288 = vsel %vm1380, %v2280, %v2273
    %v2289 = vsel %vm1380, %v2282, %v2274
    %v2290 = vsel %vm1380, %v2284, %v2275
    %v2291 = vld [vmem:[%s13] sm:$0xff]
    %v2292 = vld [vmem:[%s13 + $0x8] sm:$0xff]
    %v2293 = vld [vmem:[%s13 + $0x10] sm:$0xff]
    %v2294 = vld [vmem:[%s13 + $0x18] sm:$0xff]
    %v2295 = vld [vmem:[%s13 + $0x20] sm:$0xff]
    %v2296 = vld [vmem:[%s13 + $0x28] sm:$0xff]
    %v2297 = vld [vmem:[%s13 + $0x30] sm:$0xff]
    %v2298 = vld [vmem:[%s13 + $0x38] sm:$0xff]
    %v2299 = vld [vmem:[%s13 + $0x40] sm:$0xff]
    %v2300 = vld [vmem:[%s13 + $0x48] sm:$0xff]
    %v2301 = vld [vmem:[%s13 + $0x50] sm:$0xff]
    %v2302 = vld [vmem:[%s13 + $0x58] sm:$0xff]
    %v2303 = vld [vmem:[%s13 + $0x60] sm:$0xff]
    %v2304 = vld [vmem:[%s13 + $0x68] sm:$0xff]
    %v2305 = vld [vmem:[%s13 + $0x70] sm:$0xff]
    %v2306 = vld [vmem:[%s13 + $0x78] sm:$0xff]
    %v2307 = vld [vmem:[%s13 + $0x80] sm:$0xff]
    %v2308 = vld [vmem:[%s13 + $0x88] sm:$0xff]
    %v2309 = vld [vmem:[%s13 + $0x90] sm:$0xff]
    %v2310 = vld [vmem:[%s13 + $0x98] sm:$0xff]
    %v2311 = vld [vmem:[%s13 + $0xa0] sm:$0xff]
    %v2312 = vld [vmem:[%s13 + $0xa8] sm:$0xff]
    %v2313 = vld [vmem:[%s13 + $0xb0] sm:$0xff]
    %v2314 = vld [vmem:[%s13 + $0xb8] sm:$0xff]
    %s2315 = scalar_lea.vmem %s15, 6
    %v2316 = vld [vmem:[%s2315] sm:$0x1]
    %v2317 = vld [vmem:[%s2315 + $0x1] sm:$0x1]
    %v2318 = vld [vmem:[%s2315 + $0x2] sm:$0x1]
    %v2322 = vlaneseq
    %v2323 = vshrl.u32 %v2322, 7
    %v2324 = vsub.s32 0, %v2323
    %v2325 = vrot.slane %v2316, %v2324
    %v2326 = vlaneseq
    %v2327 = vshrl.u32 %v2326, 7
    %v2328 = vsub.s32 0, %v2327
    %v2329 = vrot.slane %v2317, %v2328
    %v2330 = vlaneseq
    %v2331 = vshrl.u32 %v2330, 7
    %v2332 = vsub.s32 0, %v2331
    %v2333 = vrot.slane %v2318, %v2332
    %v2338 = vsel %vm471, %v2288, 0
    %2340 = vmatprep.subr.mxu0 0.0
    %2341 = vmatpush1.msra.mxu0 %v2291
    %2342 = vmatprep.subr.mxu0 0.0
    %2343 = vmatpush1.msra.mxu0 %v2292
    %2344 = vmatprep.subr.mxu0 0.0
    %2345 = vmatpush1.msra.mxu0 %v2293
    %2346 = vmatprep.subr.mxu0 0.0
    %2347 = vmatpush1.msra.mxu0 %v2294
    %2348 = vmatprep.subr.mxu0 0.0
    %2349 = vmatpush1.msra.mxu0 %v2295
    %2350 = vmatprep.subr.mxu0 0.0
    %2351 = vmatpush1.msra.mxu0 %v2296
    %2352 = vmatprep.subr.mxu0 0.0
    %2353 = vmatpush1.msra.mxu0 %v2297
    %2354 = vmatprep.subr.mxu0 0.0
    %2355 = vmatpush1.msra.mxu0 %v2298
    %2356 = vmatprep.subr.mxu0 0.0
    %2357 = vmatpush1.msra.mxu0 0.0
    %2358 = vmatprep.subr.mxu0 0.0
    %2359 = vmatpush1.msra.mxu0 0.0
    %2360 = vmatprep.subr.mxu0 0.0
    %2361 = vmatpush1.msra.mxu0 0.0
    %2362 = vmatprep.subr.mxu0 0.0
    %2363 = vmatpush1.msra.mxu0 0.0
    %2364 = vmatprep.subr.mxu0 0.0
    %2365 = vmatpush1.msra.mxu0 0.0
    %2366 = vmatprep.subr.mxu0 0.0
    %2367 = vmatpush1.msra.mxu0 0.0
    %2368 = vmatprep.subr.mxu0 0.0
    %2369 = vmatpush1.msra.mxu0 0.0
    %2370 = vmatprep.subr.mxu0 0.0
    %2371 = vmatpush1.msra.mxu0 0.0
    %2372 = vmatprep.subr.mxu0 0.0
    %2373 = vmatpush1.msra.mxu0 0.0
    %2374 = vmatprep.subr.mxu0 0.0
    %2375 = vmatpush1.msra.mxu0 0.0
    %2376 = vmatprep.subr.mxu0 0.0
    %2377 = vmatpush1.msra.mxu0 0.0
    %2378 = vmatprep.subr.mxu0 0.0
    %2379 = vmatpush1.msra.mxu0 0.0
    %2380 = vmatprep.subr.mxu0 0.0
    %2381 = vmatpush1.msra.mxu0 0.0
    %2382 = vmatprep.subr.mxu0 0.0
    %2383 = vmatpush1.msra.mxu0 0.0
    %2384 = vmatprep.subr.mxu0 0.0
    %2385 = vmatpush1.msra.mxu0 0.0
    %2386 = vmatprep.subr.mxu0 0.0
    %2387 = vmatpush1.msra.mxu0 0.0
    %2388 = vmatprep.subr.mxu0 0.0
    %2389 = vmatpush1.msra.mxu0 0.0
    %2390 = vmatprep.subr.mxu0 0.0
    %2391 = vmatpush1.msra.mxu0 0.0
    %2392 = vmatprep.subr.mxu0 0.0
    %2393 = vmatpush1.msra.mxu0 0.0
    %2394 = vmatprep.subr.mxu0 0.0
    %2395 = vmatpush1.msra.mxu0 0.0
    %2396 = vmatprep.subr.mxu0 0.0
    %2397 = vmatpush1.msra.mxu0 0.0
    %2398 = vmatprep.subr.mxu0 0.0
    %2399 = vmatpush1.msra.mxu0 0.0
    %2400 = vmatprep.subr.mxu0 0.0
    %2401 = vmatpush1.msra.mxu0 0.0
    %2402 = vmatprep.subr.mxu0 0.0
    %2403 = vmatpush1.msra.mxu0 0.0
    %2404 = vmatprep.mubr.f32.mxu0 0.0
    %2405 = vmatmul.mubr.f32.gmra.mrb[0].mxu0 %v2338
    %v2406 = vpop.f32.mrb[0].mxu0
    %v2407 = vadd.f32 %v2325, %v2406
    %v2408 = vpop.f32.mrb[0].mxu0
    %2409 = vdwg.mxu0
    %v2411 = vsel %vm471, %v2289, 0
    %2413 = vmatprep.subr.mxu0 0.0
    %2414 = vmatpush1.msra.mxu0 %v2299
    %2415 = vmatprep.subr.mxu0 0.0
    %2416 = vmatpush1.msra.mxu0 %v2300
    %2417 = vmatprep.subr.mxu0 0.0
    %2418 = vmatpush1.msra.mxu0 %v2301
    %2419 = vmatprep.subr.mxu0 0.0
    %2420 = vmatpush1.msra.mxu0 %v2302
    %2421 = vmatprep.subr.mxu0 0.0
    %2422 = vmatpush1.msra.mxu0 %v2303
    %2423 = vmatprep.subr.mxu0 0.0
    %2424 = vmatpush1.msra.mxu0 %v2304
    %2425 = vmatprep.subr.mxu0 0.0
    %2426 = vmatpush1.msra.mxu0 %v2305
    %2427 = vmatprep.subr.mxu0 0.0
    %2428 = vmatpush1.msra.mxu0 %v2306
    %2429 = vmatprep.subr.mxu0 0.0
    %2430 = vmatpush1.msra.mxu0 0.0
    %2431 = vmatprep.subr.mxu0 0.0
    %2432 = vmatpush1.msra.mxu0 0.0
    %2433 = vmatprep.subr.mxu0 0.0
    %2434 = vmatpush1.msra.mxu0 0.0
    %2435 = vmatprep.subr.mxu0 0.0
    %2436 = vmatpush1.msra.mxu0 0.0
    %2437 = vmatprep.subr.mxu0 0.0
    %2438 = vmatpush1.msra.mxu0 0.0
    %2439 = vmatprep.subr.mxu0 0.0
    %2440 = vmatpush1.msra.mxu0 0.0
    %2441 = vmatprep.subr.mxu0 0.0
    %2442 = vmatpush1.msra.mxu0 0.0
    %2443 = vmatprep.subr.mxu0 0.0
    %2444 = vmatpush1.msra.mxu0 0.0
    %2445 = vmatprep.subr.mxu0 0.0
    %2446 = vmatpush1.msra.mxu0 0.0
    %2447 = vmatprep.subr.mxu0 0.0
    %2448 = vmatpush1.msra.mxu0 0.0
    %2449 = vmatprep.subr.mxu0 0.0
    %2450 = vmatpush1.msra.mxu0 0.0
    %2451 = vmatprep.subr.mxu0 0.0
    %2452 = vmatpush1.msra.mxu0 0.0
    %2453 = vmatprep.subr.mxu0 0.0
    %2454 = vmatpush1.msra.mxu0 0.0
    %2455 = vmatprep.subr.mxu0 0.0
    %2456 = vmatpush1.msra.mxu0 0.0
    %2457 = vmatprep.subr.mxu0 0.0
    %2458 = vmatpush1.msra.mxu0 0.0
    %2459 = vmatprep.subr.mxu0 0.0
    %2460 = vmatpush1.msra.mxu0 0.0
    %2461 = vmatprep.subr.mxu0 0.0
    %2462 = vmatpush1.msra.mxu0 0.0
    %2463 = vmatprep.subr.mxu0 0.0
    %2464 = vmatpush1.msra.mxu0 0.0
    %2465 = vmatprep.subr.mxu0 0.0
    %2466 = vmatpush1.msra.mxu0 0.0
    %2467 = vmatprep.subr.mxu0 0.0
    %2468 = vmatpush1.msra.mxu0 0.0
    %2469 = vmatprep.subr.mxu0 0.0
    %2470 = vmatpush1.msra.mxu0 0.0
    %2471 = vmatprep.subr.mxu0 0.0
    %2472 = vmatpush1.msra.mxu0 0.0
    %2473 = vmatprep.subr.mxu0 0.0
    %2474 = vmatpush1.msra.mxu0 0.0
    %2475 = vmatprep.subr.mxu0 0.0
    %2476 = vmatpush1.msra.mxu0 0.0
    %2477 = vmatprep.mubr.f32.mxu0 0.0
    %2478 = vmatmul.mubr.f32.gmra.mrb[0].mxu0 %v2411
    %v2479 = vpop.f32.mrb[0].mxu0
    %v2480 = vadd.f32 %v2329, %v2479
    %v2481 = vpop.f32.mrb[0].mxu0
    %2482 = vdwg.mxu0
    %v2484 = vsel %vm471, %v2290, 0
    %2486 = vmatprep.subr.mxu0 0.0
    %2487 = vmatpush1.msra.mxu0 %v2307
    %2488 = vmatprep.subr.mxu0 0.0
    %2489 = vmatpush1.msra.mxu0 %v2308
    %2490 = vmatprep.subr.mxu0 0.0
    %2491 = vmatpush1.msra.mxu0 %v2309
    %2492 = vmatprep.subr.mxu0 0.0
    %2493 = vmatpush1.msra.mxu0 %v2310
    %2494 = vmatprep.subr.mxu0 0.0
    %2495 = vmatpush1.msra.mxu0 %v2311
    %2496 = vmatprep.subr.mxu0 0.0
    %2497 = vmatpush1.msra.mxu0 %v2312
    %2498 = vmatprep.subr.mxu0 0.0
    %2499 = vmatpush1.msra.mxu0 %v2313
    %2500 = vmatprep.subr.mxu0 0.0
    %2501 = vmatpush1.msra.mxu0 %v2314
    %2502 = vmatprep.subr.mxu0 0.0
    %2503 = vmatpush1.msra.mxu0 0.0
    %2504 = vmatprep.subr.mxu0 0.0
    %2505 = vmatpush1.msra.mxu0 0.0
    %2506 = vmatprep.subr.mxu0 0.0
    %2507 = vmatpush1.msra.mxu0 0.0
    %2508 = vmatprep.subr.mxu0 0.0
    %2509 = vmatpush1.msra.mxu0 0.0
    %2510 = vmatprep.subr.mxu0 0.0
    %2511 = vmatpush1.msra.mxu0 0.0
    %2512 = vmatprep.subr.mxu0 0.0
    %2513 = vmatpush1.msra.mxu0 0.0
    %2514 = vmatprep.subr.mxu0 0.0
    %2515 = vmatpush1.msra.mxu0 0.0
    %2516 = vmatprep.subr.mxu0 0.0
    %2517 = vmatpush1.msra.mxu0 0.0
    %2518 = vmatprep.subr.mxu0 0.0
    %2519 = vmatpush1.msra.mxu0 0.0
    %2520 = vmatprep.subr.mxu0 0.0
    %2521 = vmatpush1.msra.mxu0 0.0
    %2522 = vmatprep.subr.mxu0 0.0
    %2523 = vmatpush1.msra.mxu0 0.0
    %2524 = vmatprep.subr.mxu0 0.0
    %2525 = vmatpush1.msra.mxu0 0.0
    %2526 = vmatprep.subr.mxu0 0.0
    %2527 = vmatpush1.msra.mxu0 0.0
    %2528 = vmatprep.subr.mxu0 0.0
    %2529 = vmatpush1.msra.mxu0 0.0
    %2530 = vmatprep.subr.mxu0 0.0
    %2531 = vmatpush1.msra.mxu0 0.0
    %2532 = vmatprep.subr.mxu0 0.0
    %2533 = vmatpush1.msra.mxu0 0.0
    %2534 = vmatprep.subr.mxu0 0.0
    %2535 = vmatpush1.msra.mxu0 0.0
    %2536 = vmatprep.subr.mxu0 0.0
    %2537 = vmatpush1.msra.mxu0 0.0
    %2538 = vmatprep.subr.mxu0 0.0
    %2539 = vmatpush1.msra.mxu0 0.0
    %2540 = vmatprep.subr.mxu0 0.0
    %2541 = vmatpush1.msra.mxu0 0.0
    %2542 = vmatprep.subr.mxu0 0.0
    %2543 = vmatpush1.msra.mxu0 0.0
    %2544 = vmatprep.subr.mxu0 0.0
    %2545 = vmatpush1.msra.mxu0 0.0
    %2546 = vmatprep.subr.mxu0 0.0
    %2547 = vmatpush1.msra.mxu0 0.0
    %2548 = vmatprep.subr.mxu0 0.0
    %2549 = vmatpush1.msra.mxu0 0.0
    %2550 = vmatprep.mubr.f32.mxu0 0.0
    %2551 = vmatmul.mubr.f32.gmra.mrb[0].mxu0 %v2484
    %v2552 = vpop.f32.mrb[0].mxu0
    %v2553 = vadd.f32 %v2333, %v2552
    %v2554 = vpop.f32.mrb[0].mxu0
    %2555 = vdwg.mxu0
    %s2556 = scalar_lea.vmem %s14, 192
    %v2557 = vld [vmem:[%s2556] sm:$0xff]
    %v2558 = vld [vmem:[%s2556 + $0x8] sm:$0xff]
    %v2559 = vld [vmem:[%s2556 + $0x10] sm:$0xff]
    %v2560 = vld [vmem:[%s2556 + $0x18] sm:$0xff]
    %v2561 = vld [vmem:[%s2556 + $0x20] sm:$0xff]
    %v2562 = vld [vmem:[%s2556 + $0x28] sm:$0xff]
    %v2563 = vld [vmem:[%s2556 + $0x30] sm:$0xff]
    %v2564 = vld [vmem:[%s2556 + $0x38] sm:$0xff]
    %v2565 = vld [vmem:[%s2556 + $0x40] sm:$0xff]
    %v2566 = vld [vmem:[%s2556 + $0x48] sm:$0xff]
    %v2567 = vld [vmem:[%s2556 + $0x50] sm:$0xff]
    %v2568 = vld [vmem:[%s2556 + $0x58] sm:$0xff]
    %s2569 = scalar_lea.vmem %s16, 6
    %v2570 = vld [vmem:[%s2569] sm:$0x1]
    %v2571 = vld [vmem:[%s2569 + $0x1] sm:$0x1]
    %v2572 = vld [vmem:[%s2569 + $0x2] sm:$0x1]
    %v2576 = vlaneseq
    %v2577 = vshrl.u32 %v2576, 7
    %v2578 = vsub.s32 0, %v2577
    %v2579 = vrot.slane %v2570, %v2578
    %v2580 = vlaneseq
    %v2581 = vshrl.u32 %v2580, 7
    %v2582 = vsub.s32 0, %v2581
    %v2583 = vrot.slane %v2571, %v2582
    %v2584 = vlaneseq
    %v2585 = vshrl.u32 %v2584, 7
    %v2586 = vsub.s32 0, %v2585
    %v2587 = vrot.slane %v2572, %v2586
    %2591 = vmatprep.subr.mxu0 0.0
    %2592 = vmatpush1.msra.mxu0 %v2557
    %2593 = vmatprep.subr.mxu0 0.0
    %2594 = vmatpush1.msra.mxu0 %v2558
    %2595 = vmatprep.subr.mxu0 0.0
    %2596 = vmatpush1.msra.mxu0 %v2559
    %2597 = vmatprep.subr.mxu0 0.0
    %2598 = vmatpush1.msra.mxu0 %v2560
    %2599 = vmatprep.subr.mxu0 0.0
    %2600 = vmatpush1.msra.mxu0 0.0
    %2601 = vmatprep.subr.mxu0 0.0
    %2602 = vmatpush1.msra.mxu0 0.0
    %2603 = vmatprep.subr.mxu0 0.0
    %2604 = vmatpush1.msra.mxu0 0.0
    %2605 = vmatprep.subr.mxu0 0.0
    %2606 = vmatpush1.msra.mxu0 0.0
    %2607 = vmatprep.subr.mxu0 0.0
    %2608 = vmatpush1.msra.mxu0 0.0
    %2609 = vmatprep.subr.mxu0 0.0
    %2610 = vmatpush1.msra.mxu0 0.0
    %2611 = vmatprep.subr.mxu0 0.0
    %2612 = vmatpush1.msra.mxu0 0.0
    %2613 = vmatprep.subr.mxu0 0.0
    %2614 = vmatpush1.msra.mxu0 0.0
    %2615 = vmatprep.subr.mxu0 0.0
    %2616 = vmatpush1.msra.mxu0 0.0
    %2617 = vmatprep.subr.mxu0 0.0
    %2618 = vmatpush1.msra.mxu0 0.0
    %2619 = vmatprep.subr.mxu0 0.0
    %2620 = vmatpush1.msra.mxu0 0.0
    %2621 = vmatprep.subr.mxu0 0.0
    %2622 = vmatpush1.msra.mxu0 0.0
    %2623 = vmatprep.subr.mxu0 0.0
    %2624 = vmatpush1.msra.mxu0 0.0
    %2625 = vmatprep.subr.mxu0 0.0
    %2626 = vmatpush1.msra.mxu0 0.0
    %2627 = vmatprep.subr.mxu0 0.0
    %2628 = vmatpush1.msra.mxu0 0.0
    %2629 = vmatprep.subr.mxu0 0.0
    %2630 = vmatpush1.msra.mxu0 0.0
    %2631 = vmatprep.subr.mxu0 0.0
    %2632 = vmatpush1.msra.mxu0 0.0
    %2633 = vmatprep.subr.mxu0 0.0
    %2634 = vmatpush1.msra.mxu0 0.0
    %2635 = vmatprep.subr.mxu0 0.0
    %2636 = vmatpush1.msra.mxu0 0.0
    %2637 = vmatprep.subr.mxu0 0.0
    %2638 = vmatpush1.msra.mxu0 0.0
    %2639 = vmatprep.subr.mxu0 0.0
    %2640 = vmatpush1.msra.mxu0 0.0
    %2641 = vmatprep.subr.mxu0 0.0
    %2642 = vmatpush1.msra.mxu0 0.0
    %2643 = vmatprep.subr.mxu0 0.0
    %2644 = vmatpush1.msra.mxu0 0.0
    %2645 = vmatprep.subr.mxu0 0.0
    %2646 = vmatpush1.msra.mxu0 0.0
    %2647 = vmatprep.subr.mxu0 0.0
    %2648 = vmatpush1.msra.mxu0 0.0
    %2649 = vmatprep.subr.mxu0 0.0
    %2650 = vmatpush1.msra.mxu0 0.0
    %2651 = vmatprep.subr.mxu0 0.0
    %2652 = vmatpush1.msra.mxu0 0.0
    %2653 = vmatprep.subr.mxu0 0.0
    %2654 = vmatpush1.msra.mxu0 0.0
    %2655 = vmatprep.mubr.f32.mxu0 0.0
    %2656 = vmatmul.mubr.f32.gmra.mrb[0].mxu0 %v1382
    %v2657 = vpop.f32.mrb[0].mxu0
    %v2658 = vadd.f32 %v2579, %v2657
    %v2659 = vpop.f32.mrb[0].mxu0
    %2660 = vdwg.mxu0
    %2661 = vmatprep.subr.mxu0 0.0
    %2662 = vmatpush1.msra.mxu0 %v2561
    %2663 = vmatprep.subr.mxu0 0.0
    %2664 = vmatpush1.msra.mxu0 %v2562
    %2665 = vmatprep.subr.mxu0 0.0
    %2666 = vmatpush1.msra.mxu0 %v2563
    %2667 = vmatprep.subr.mxu0 0.0
    %2668 = vmatpush1.msra.mxu0 %v2564
    %2669 = vmatprep.subr.mxu0 0.0
    %2670 = vmatpush1.msra.mxu0 0.0
    %2671 = vmatprep.subr.mxu0 0.0
    %2672 = vmatpush1.msra.mxu0 0.0
    %2673 = vmatprep.subr.mxu0 0.0
    %2674 = vmatpush1.msra.mxu0 0.0
    %2675 = vmatprep.subr.mxu0 0.0
    %2676 = vmatpush1.msra.mxu0 0.0
    %2677 = vmatprep.subr.mxu0 0.0
    %2678 = vmatpush1.msra.mxu0 0.0
    %2679 = vmatprep.subr.mxu0 0.0
    %2680 = vmatpush1.msra.mxu0 0.0
    %2681 = vmatprep.subr.mxu0 0.0
    %2682 = vmatpush1.msra.mxu0 0.0
    %2683 = vmatprep.subr.mxu0 0.0
    %2684 = vmatpush1.msra.mxu0 0.0
    %2685 = vmatprep.subr.mxu0 0.0
    %2686 = vmatpush1.msra.mxu0 0.0
    %2687 = vmatprep.subr.mxu0 0.0
    %2688 = vmatpush1.msra.mxu0 0.0
    %2689 = vmatprep.subr.mxu0 0.0
    %2690 = vmatpush1.msra.mxu0 0.0
    %2691 = vmatprep.subr.mxu0 0.0
    %2692 = vmatpush1.msra.mxu0 0.0
    %2693 = vmatprep.subr.mxu0 0.0
    %2694 = vmatpush1.msra.mxu0 0.0
    %2695 = vmatprep.subr.mxu0 0.0
    %2696 = vmatpush1.msra.mxu0 0.0
    %2697 = vmatprep.subr.mxu0 0.0
    %2698 = vmatpush1.msra.mxu0 0.0
    %2699 = vmatprep.subr.mxu0 0.0
    %2700 = vmatpush1.msra.mxu0 0.0
    %2701 = vmatprep.subr.mxu0 0.0
    %2702 = vmatpush1.msra.mxu0 0.0
    %2703 = vmatprep.subr.mxu0 0.0
    %2704 = vmatpush1.msra.mxu0 0.0
    %2705 = vmatprep.subr.mxu0 0.0
    %2706 = vmatpush1.msra.mxu0 0.0
    %2707 = vmatprep.subr.mxu0 0.0
    %2708 = vmatpush1.msra.mxu0 0.0
    %2709 = vmatprep.subr.mxu0 0.0
    %2710 = vmatpush1.msra.mxu0 0.0
    %2711 = vmatprep.subr.mxu0 0.0
    %2712 = vmatpush1.msra.mxu0 0.0
    %2713 = vmatprep.subr.mxu0 0.0
    %2714 = vmatpush1.msra.mxu0 0.0
    %2715 = vmatprep.subr.mxu0 0.0
    %2716 = vmatpush1.msra.mxu0 0.0
    %2717 = vmatprep.subr.mxu0 0.0
    %2718 = vmatpush1.msra.mxu0 0.0
    %2719 = vmatprep.subr.mxu0 0.0
    %2720 = vmatpush1.msra.mxu0 0.0
    %2721 = vmatprep.subr.mxu0 0.0
    %2722 = vmatpush1.msra.mxu0 0.0
    %2723 = vmatprep.subr.mxu0 0.0
    %2724 = vmatpush1.msra.mxu0 0.0
    %2725 = vmatprep.mubr.f32.mxu0 0.0
    %2726 = vmatmul.mubr.f32.gmra.mrb[0].mxu0 %v1382
    %v2727 = vpop.f32.mrb[0].mxu0
    %v2728 = vadd.f32 %v2583, %v2727
    %v2729 = vpop.f32.mrb[0].mxu0
    %2730 = vdwg.mxu0
    %2731 = vmatprep.subr.mxu0 0.0
    %2732 = vmatpush1.msra.mxu0 %v2565
    %2733 = vmatprep.subr.mxu0 0.0
    %2734 = vmatpush1.msra.mxu0 %v2566
    %2735 = vmatprep.subr.mxu0 0.0
    %2736 = vmatpush1.msra.mxu0 %v2567
    %2737 = vmatprep.subr.mxu0 0.0
    %2738 = vmatpush1.msra.mxu0 %v2568
    %2739 = vmatprep.subr.mxu0 0.0
    %2740 = vmatpush1.msra.mxu0 0.0
    %2741 = vmatprep.subr.mxu0 0.0
    %2742 = vmatpush1.msra.mxu0 0.0
    %2743 = vmatprep.subr.mxu0 0.0
    %2744 = vmatpush1.msra.mxu0 0.0
    %2745 = vmatprep.subr.mxu0 0.0
    %2746 = vmatpush1.msra.mxu0 0.0
    %2747 = vmatprep.subr.mxu0 0.0
    %2748 = vmatpush1.msra.mxu0 0.0
    %2749 = vmatprep.subr.mxu0 0.0
    %2750 = vmatpush1.msra.mxu0 0.0
    %2751 = vmatprep.subr.mxu0 0.0
    %2752 = vmatpush1.msra.mxu0 0.0
    %2753 = vmatprep.subr.mxu0 0.0
    %2754 = vmatpush1.msra.mxu0 0.0
    %2755 = vmatprep.subr.mxu0 0.0
    %2756 = vmatpush1.msra.mxu0 0.0
    %2757 = vmatprep.subr.mxu0 0.0
    %2758 = vmatpush1.msra.mxu0 0.0
    %2759 = vmatprep.subr.mxu0 0.0
    %2760 = vmatpush1.msra.mxu0 0.0
    %2761 = vmatprep.subr.mxu0 0.0
    %2762 = vmatpush1.msra.mxu0 0.0
    %2763 = vmatprep.subr.mxu0 0.0
    %2764 = vmatpush1.msra.mxu0 0.0
    %2765 = vmatprep.subr.mxu0 0.0
    %2766 = vmatpush1.msra.mxu0 0.0
    %2767 = vmatprep.subr.mxu0 0.0
    %2768 = vmatpush1.msra.mxu0 0.0
    %2769 = vmatprep.subr.mxu0 0.0
    %2770 = vmatpush1.msra.mxu0 0.0
    %2771 = vmatprep.subr.mxu0 0.0
    %2772 = vmatpush1.msra.mxu0 0.0
    %2773 = vmatprep.subr.mxu0 0.0
    %2774 = vmatpush1.msra.mxu0 0.0
    %2775 = vmatprep.subr.mxu0 0.0
    %2776 = vmatpush1.msra.mxu0 0.0
    %2777 = vmatprep.subr.mxu0 0.0
    %2778 = vmatpush1.msra.mxu0 0.0
    %2779 = vmatprep.subr.mxu0 0.0
    %2780 = vmatpush1.msra.mxu0 0.0
    %2781 = vmatprep.subr.mxu0 0.0
    %2782 = vmatpush1.msra.mxu0 0.0
    %2783 = vmatprep.subr.mxu0 0.0
    %2784 = vmatpush1.msra.mxu0 0.0
    %2785 = vmatprep.subr.mxu0 0.0
    %2786 = vmatpush1.msra.mxu0 0.0
    %2787 = vmatprep.subr.mxu0 0.0
    %2788 = vmatpush1.msra.mxu0 0.0
    %2789 = vmatprep.subr.mxu0 0.0
    %2790 = vmatpush1.msra.mxu0 0.0
    %2791 = vmatprep.subr.mxu0 0.0
    %2792 = vmatpush1.msra.mxu0 0.0
    %2793 = vmatprep.subr.mxu0 0.0
    %2794 = vmatpush1.msra.mxu0 0.0
    %2795 = vmatprep.mubr.f32.mxu0 0.0
    %2796 = vmatmul.mubr.f32.gmra.mrb[0].mxu0 %v1382
    %v2797 = vpop.f32.mrb[0].mxu0
    %v2798 = vadd.f32 %v2587, %v2797
    %v2799 = vpop.f32.mrb[0].mxu0
    %2800 = vdwg.mxu0
    %v2801 = vadd.f32 %v2407, %v2658
    %v2802 = vadd.f32 %v2480, %v2728
    %v2803 = vadd.f32 %v2553, %v2798
    %v2804 = vxor.u32 %v2801, 2147483648
    %v2805 = vxor.u32 %v2802, 2147483648
    %v2806 = vxor.u32 %v2803, 2147483648
    %v2807 = vmul.f32 %v2804, 1.442695
    %v2808 = vpow.pop %v2807
    %v2809 = vmul.f32 %v2805, 1.442695
    %v2810 = vpow.pop %v2809
    %v2811 = vmul.f32 %v2806, 1.442695
    %v2812 = vpow.pop %v2811
    %v2813 = vadd.f32 %v2808, 1.0
    %v2814 = vadd.f32 %v2810, 1.0
    %v2815 = vadd.f32 %v2812, 1.0
    %v2816 = vrcp.pop %v2813
    %v2817 = vmul.f32 1.0, %v2816
    %v2818 = vrcp.pop %v2814
    %v2819 = vmul.f32 1.0, %v2818
    %v2820 = vrcp.pop %v2815
    %v2821 = vmul.f32 1.0, %v2820
    %2825 = vrot.lane.b32.xlu0 %v2658, 64
    %v2826 = vpop.permute.xlu0 %2825
    %2827 = vrot.lane.b32.xlu0 %v2728, 64
    %v2828 = vpop.permute.xlu0 %2827
    %2829 = vrot.lane.b32.xlu0 %v2798, 64
    %v2830 = vpop.permute.xlu0 %2829
    %v2834 = vmul.f32 %v2817, %v2826
    %v2835 = vmul.f32 %v2819, %v2828
    %v2836 = vmul.f32 %v2821, %v2830
    %2840 = vrot.lane.b32.xlu0 %v2834, 64
    %v2841 = vpop.permute.xlu0 %2840
    %2842 = vrot.lane.b32.xlu0 %v2835, 64
    %v2843 = vpop.permute.xlu0 %2842
    %2844 = vrot.lane.b32.xlu0 %v2836, 64
    %v2845 = vpop.permute.xlu0 %2844
    %v2849 = vadd.f32 %v2407, %v2841
    %v2850 = vadd.f32 %v2480, %v2843
    %v2851 = vadd.f32 %v2553, %v2845
    %v2852 = vtanh.pop %v2849
    %v2853 = vtanh.pop %v2850
    %v2854 = vtanh.pop %v2851
    %v2855 = vsub.f32 1.0, %v2817
    %v2856 = vsub.f32 1.0, %v2819
    %v2857 = vsub.f32 1.0, %v2821
    %2861 = vrot.lane.b32.xlu0 %v2852, 96
    %v2862 = vpop.permute.xlu0 %2861
    %2863 = vrot.lane.b32.xlu0 %v2853, 96
    %v2864 = vpop.permute.xlu0 %2863
    %2865 = vrot.lane.b32.xlu0 %v2854, 96
    %v2866 = vpop.permute.xlu0 %2865
    %v2870 = vmul.f32 %v2855, %v2862
    %v2871 = vmul.f32 %v2856, %v2864
    %v2872 = vmul.f32 %v2857, %v2866
    %v2873 = vmul.f32 %v2817, 0.0
    %v2874 = vmul.f32 %v2819, 0.0
    %v2875 = vmul.f32 %v2821, 0.0
    %v2876 = vadd.f32 %v2870, %v2873
    %v2877 = vadd.f32 %v2871, %v2874
    %v2878 = vadd.f32 %v2872, %v2875
    %s2879 = scalar_lea.vmem %s13, 192
    %v2880 = vld [vmem:[%s2879] sm:$0xff]
    %v2881 = vld [vmem:[%s2879 + $0x8] sm:$0xff]
    %v2882 = vld [vmem:[%s2879 + $0x10] sm:$0xff]
    %v2883 = vld [vmem:[%s2879 + $0x18] sm:$0xff]
    %v2884 = vld [vmem:[%s2879 + $0x20] sm:$0xff]
    %v2885 = vld [vmem:[%s2879 + $0x28] sm:$0xff]
    %v2886 = vld [vmem:[%s2879 + $0x30] sm:$0xff]
    %v2887 = vld [vmem:[%s2879 + $0x38] sm:$0xff]
    %v2888 = vld [vmem:[%s2879 + $0x40] sm:$0xff]
    %v2889 = vld [vmem:[%s2879 + $0x48] sm:$0xff]
    %v2890 = vld [vmem:[%s2879 + $0x50] sm:$0xff]
    %v2891 = vld [vmem:[%s2879 + $0x58] sm:$0xff]
    %v2892 = vld [vmem:[%s2879 + $0x60] sm:$0xff]
    %v2893 = vld [vmem:[%s2879 + $0x68] sm:$0xff]
    %v2894 = vld [vmem:[%s2879 + $0x70] sm:$0xff]
    %v2895 = vld [vmem:[%s2879 + $0x78] sm:$0xff]
    %v2896 = vld [vmem:[%s2879 + $0x80] sm:$0xff]
    %v2897 = vld [vmem:[%s2879 + $0x88] sm:$0xff]
    %v2898 = vld [vmem:[%s2879 + $0x90] sm:$0xff]
    %v2899 = vld [vmem:[%s2879 + $0x98] sm:$0xff]
    %v2900 = vld [vmem:[%s2879 + $0xa0] sm:$0xff]
    %v2901 = vld [vmem:[%s2879 + $0xa8] sm:$0xff]
    %v2902 = vld [vmem:[%s2879 + $0xb0] sm:$0xff]
    %v2903 = vld [vmem:[%s2879 + $0xb8] sm:$0xff]
    %s2904 = scalar_lea.vmem %s15, 9
    %v2905 = vld [vmem:[%s2904] sm:$0x1]
    %v2906 = vld [vmem:[%s2904 + $0x1] sm:$0x1]
    %v2907 = vld [vmem:[%s2904 + $0x2] sm:$0x1]
    %v2911 = vlaneseq
    %v2912 = vshrl.u32 %v2911, 7
    %v2913 = vsub.s32 0, %v2912
    %v2914 = vrot.slane %v2905, %v2913
    %v2915 = vlaneseq
    %v2916 = vshrl.u32 %v2915, 7
    %v2917 = vsub.s32 0, %v2916
    %v2918 = vrot.slane %v2906, %v2917
    %v2919 = vlaneseq
    %v2920 = vshrl.u32 %v2919, 7
    %v2921 = vsub.s32 0, %v2920
    %v2922 = vrot.slane %v2907, %v2921
    %2926 = vmatprep.subr.mxu0 0.0
    %2927 = vmatpush1.msra.mxu0 %v2880
    %2928 = vmatprep.subr.mxu0 0.0
    %2929 = vmatpush1.msra.mxu0 %v2881
    %2930 = vmatprep.subr.mxu0 0.0
    %2931 = vmatpush1.msra.mxu0 %v2882
    %2932 = vmatprep.subr.mxu0 0.0
    %2933 = vmatpush1.msra.mxu0 %v2883
    %2934 = vmatprep.subr.mxu0 0.0
    %2935 = vmatpush1.msra.mxu0 %v2884
    %2936 = vmatprep.subr.mxu0 0.0
    %2937 = vmatpush1.msra.mxu0 %v2885
    %2938 = vmatprep.subr.mxu0 0.0
    %2939 = vmatpush1.msra.mxu0 %v2886
    %2940 = vmatprep.subr.mxu0 0.0
    %2941 = vmatpush1.msra.mxu0 %v2887
    %2942 = vmatprep.subr.mxu0 0.0
    %2943 = vmatpush1.msra.mxu0 0.0
    %2944 = vmatprep.subr.mxu0 0.0
    %2945 = vmatpush1.msra.mxu0 0.0
    %2946 = vmatprep.subr.mxu0 0.0
    %2947 = vmatpush1.msra.mxu0 0.0
    %2948 = vmatprep.subr.mxu0 0.0
    %2949 = vmatpush1.msra.mxu0 0.0
    %2950 = vmatprep.subr.mxu0 0.0
    %2951 = vmatpush1.msra.mxu0 0.0
    %2952 = vmatprep.subr.mxu0 0.0
    %2953 = vmatpush1.msra.mxu0 0.0
    %2954 = vmatprep.subr.mxu0 0.0
    %2955 = vmatpush1.msra.mxu0 0.0
    %2956 = vmatprep.subr.mxu0 0.0
    %2957 = vmatpush1.msra.mxu0 0.0
    %2958 = vmatprep.subr.mxu0 0.0
    %2959 = vmatpush1.msra.mxu0 0.0
    %2960 = vmatprep.subr.mxu0 0.0
    %2961 = vmatpush1.msra.mxu0 0.0
    %2962 = vmatprep.subr.mxu0 0.0
    %2963 = vmatpush1.msra.mxu0 0.0
    %2964 = vmatprep.subr.mxu0 0.0
    %2965 = vmatpush1.msra.mxu0 0.0
    %2966 = vmatprep.subr.mxu0 0.0
    %2967 = vmatpush1.msra.mxu0 0.0
    %2968 = vmatprep.subr.mxu0 0.0
    %2969 = vmatpush1.msra.mxu0 0.0
    %2970 = vmatprep.subr.mxu0 0.0
    %2971 = vmatpush1.msra.mxu0 0.0
    %2972 = vmatprep.subr.mxu0 0.0
    %2973 = vmatpush1.msra.mxu0 0.0
    %2974 = vmatprep.subr.mxu0 0.0
    %2975 = vmatpush1.msra.mxu0 0.0
    %2976 = vmatprep.subr.mxu0 0.0
    %2977 = vmatpush1.msra.mxu0 0.0
    %2978 = vmatprep.subr.mxu0 0.0
    %2979 = vmatpush1.msra.mxu0 0.0
    %2980 = vmatprep.subr.mxu0 0.0
    %2981 = vmatpush1.msra.mxu0 0.0
    %2982 = vmatprep.subr.mxu0 0.0
    %2983 = vmatpush1.msra.mxu0 0.0
    %2984 = vmatprep.subr.mxu0 0.0
    %2985 = vmatpush1.msra.mxu0 0.0
    %2986 = vmatprep.subr.mxu0 0.0
    %2987 = vmatpush1.msra.mxu0 0.0
    %2988 = vmatprep.subr.mxu0 0.0
    %2989 = vmatpush1.msra.mxu0 0.0
    %2990 = vmatprep.mubr.f32.mxu0 0.0
    %2991 = vmatmul.mubr.f32.gmra.mrb[0].mxu0 %v2338
    %v2992 = vpop.f32.mrb[0].mxu0
    %v2993 = vadd.f32 %v2914, %v2992
    %v2994 = vpop.f32.mrb[0].mxu0
    %2995 = vdwg.mxu0
    %2996 = vmatprep.subr.mxu0 0.0
    %2997 = vmatpush1.msra.mxu0 %v2888
    %2998 = vmatprep.subr.mxu0 0.0
    %2999 = vmatpush1.msra.mxu0 %v2889
    %3000 = vmatprep.subr.mxu0 0.0
    %3001 = vmatpush1.msra.mxu0 %v2890
    %3002 = vmatprep.subr.mxu0 0.0
    %3003 = vmatpush1.msra.mxu0 %v2891
    %3004 = vmatprep.subr.mxu0 0.0
    %3005 = vmatpush1.msra.mxu0 %v2892
    %3006 = vmatprep.subr.mxu0 0.0
    %3007 = vmatpush1.msra.mxu0 %v2893
    %3008 = vmatprep.subr.mxu0 0.0
    %3009 = vmatpush1.msra.mxu0 %v2894
    %3010 = vmatprep.subr.mxu0 0.0
    %3011 = vmatpush1.msra.mxu0 %v2895
    %3012 = vmatprep.subr.mxu0 0.0
    %3013 = vmatpush1.msra.mxu0 0.0
    %3014 = vmatprep.subr.mxu0 0.0
    %3015 = vmatpush1.msra.mxu0 0.0
    %3016 = vmatprep.subr.mxu0 0.0
    %3017 = vmatpush1.msra.mxu0 0.0
    %3018 = vmatprep.subr.mxu0 0.0
    %3019 = vmatpush1.msra.mxu0 0.0
    %3020 = vmatprep.subr.mxu0 0.0
    %3021 = vmatpush1.msra.mxu0 0.0
    %3022 = vmatprep.subr.mxu0 0.0
    %3023 = vmatpush1.msra.mxu0 0.0
    %3024 = vmatprep.subr.mxu0 0.0
    %3025 = vmatpush1.msra.mxu0 0.0
    %3026 = vmatprep.subr.mxu0 0.0
    %3027 = vmatpush1.msra.mxu0 0.0
    %3028 = vmatprep.subr.mxu0 0.0
    %3029 = vmatpush1.msra.mxu0 0.0
    %3030 = vmatprep.subr.mxu0 0.0
    %3031 = vmatpush1.msra.mxu0 0.0
    %3032 = vmatprep.subr.mxu0 0.0
    %3033 = vmatpush1.msra.mxu0 0.0
    %3034 = vmatprep.subr.mxu0 0.0
    %3035 = vmatpush1.msra.mxu0 0.0
    %3036 = vmatprep.subr.mxu0 0.0
    %3037 = vmatpush1.msra.mxu0 0.0
    %3038 = vmatprep.subr.mxu0 0.0
    %3039 = vmatpush1.msra.mxu0 0.0
    %3040 = vmatprep.subr.mxu0 0.0
    %3041 = vmatpush1.msra.mxu0 0.0
    %3042 = vmatprep.subr.mxu0 0.0
    %3043 = vmatpush1.msra.mxu0 0.0
    %3044 = vmatprep.subr.mxu0 0.0
    %3045 = vmatpush1.msra.mxu0 0.0
    %3046 = vmatprep.subr.mxu0 0.0
    %3047 = vmatpush1.msra.mxu0 0.0
    %3048 = vmatprep.subr.mxu0 0.0
    %3049 = vmatpush1.msra.mxu0 0.0
    %3050 = vmatprep.subr.mxu0 0.0
    %3051 = vmatpush1.msra.mxu0 0.0
    %3052 = vmatprep.subr.mxu0 0.0
    %3053 = vmatpush1.msra.mxu0 0.0
    %3054 = vmatprep.subr.mxu0 0.0
    %3055 = vmatpush1.msra.mxu0 0.0
    %3056 = vmatprep.subr.mxu0 0.0
    %3057 = vmatpush1.msra.mxu0 0.0
    %3058 = vmatprep.subr.mxu0 0.0
    %3059 = vmatpush1.msra.mxu0 0.0
    %3060 = vmatprep.mubr.f32.mxu0 0.0
    %3061 = vmatmul.mubr.f32.gmra.mrb[0].mxu0 %v2411
    %v3062 = vpop.f32.mrb[0].mxu0
    %v3063 = vadd.f32 %v2918, %v3062
    %v3064 = vpop.f32.mrb[0].mxu0
    %3065 = vdwg.mxu0
    %3066 = vmatprep.subr.mxu0 0.0
    %3067 = vmatpush1.msra.mxu0 %v2896
    %3068 = vmatprep.subr.mxu0 0.0
    %3069 = vmatpush1.msra.mxu0 %v2897
    %3070 = vmatprep.subr.mxu0 0.0
    %3071 = vmatpush1.msra.mxu0 %v2898
    %3072 = vmatprep.subr.mxu0 0.0
    %3073 = vmatpush1.msra.mxu0 %v2899
    %3074 = vmatprep.subr.mxu0 0.0
    %3075 = vmatpush1.msra.mxu0 %v2900
    %3076 = vmatprep.subr.mxu0 0.0
    %3077 = vmatpush1.msra.mxu0 %v2901
    %3078 = vmatprep.subr.mxu0 0.0
    %3079 = vmatpush1.msra.mxu0 %v2902
    %3080 = vmatprep.subr.mxu0 0.0
    %3081 = vmatpush1.msra.mxu0 %v2903
    %3082 = vmatprep.subr.mxu0 0.0
    %3083 = vmatpush1.msra.mxu0 0.0
    %3084 = vmatprep.subr.mxu0 0.0
    %3085 = vmatpush1.msra.mxu0 0.0
    %3086 = vmatprep.subr.mxu0 0.0
    %3087 = vmatpush1.msra.mxu0 0.0
    %3088 = vmatprep.subr.mxu0 0.0
    %3089 = vmatpush1.msra.mxu0 0.0
    %3090 = vmatprep.subr.mxu0 0.0
    %3091 = vmatpush1.msra.mxu0 0.0
    %3092 = vmatprep.subr.mxu0 0.0
    %3093 = vmatpush1.msra.mxu0 0.0
    %3094 = vmatprep.subr.mxu0 0.0
    %3095 = vmatpush1.msra.mxu0 0.0
    %3096 = vmatprep.subr.mxu0 0.0
    %3097 = vmatpush1.msra.mxu0 0.0
    %3098 = vmatprep.subr.mxu0 0.0
    %3099 = vmatpush1.msra.mxu0 0.0
    %3100 = vmatprep.subr.mxu0 0.0
    %3101 = vmatpush1.msra.mxu0 0.0
    %3102 = vmatprep.subr.mxu0 0.0
    %3103 = vmatpush1.msra.mxu0 0.0
    %3104 = vmatprep.subr.mxu0 0.0
    %3105 = vmatpush1.msra.mxu0 0.0
    %3106 = vmatprep.subr.mxu0 0.0
    %3107 = vmatpush1.msra.mxu0 0.0
    %3108 = vmatprep.subr.mxu0 0.0
    %3109 = vmatpush1.msra.mxu0 0.0
    %3110 = vmatprep.subr.mxu0 0.0
    %3111 = vmatpush1.msra.mxu0 0.0
    %3112 = vmatprep.subr.mxu0 0.0
    %3113 = vmatpush1.msra.mxu0 0.0
    %3114 = vmatprep.subr.mxu0 0.0
    %3115 = vmatpush1.msra.mxu0 0.0
    %3116 = vmatprep.subr.mxu0 0.0
    %3117 = vmatpush1.msra.mxu0 0.0
    %3118 = vmatprep.subr.mxu0 0.0
    %3119 = vmatpush1.msra.mxu0 0.0
    %3120 = vmatprep.subr.mxu0 0.0
    %3121 = vmatpush1.msra.mxu0 0.0
    %3122 = vmatprep.subr.mxu0 0.0
    %3123 = vmatpush1.msra.mxu0 0.0
    %3124 = vmatprep.subr.mxu0 0.0
    %3125 = vmatpush1.msra.mxu0 0.0
    %3126 = vmatprep.subr.mxu0 0.0
    %3127 = vmatpush1.msra.mxu0 0.0
    %3128 = vmatprep.subr.mxu0 0.0
    %3129 = vmatpush1.msra.mxu0 0.0
    %3130 = vmatprep.mubr.f32.mxu0 0.0
    %3131 = vmatmul.mubr.f32.gmra.mrb[0].mxu0 %v2484
    %v3132 = vpop.f32.mrb[0].mxu0
    %v3133 = vadd.f32 %v2922, %v3132
    %v3134 = vpop.f32.mrb[0].mxu0
    %3135 = vdwg.mxu0
    %s3136 = scalar_lea.vmem %s14, 288
    %v3137 = vld [vmem:[%s3136] sm:$0xff]
    %v3138 = vld [vmem:[%s3136 + $0x8] sm:$0xff]
    %v3139 = vld [vmem:[%s3136 + $0x10] sm:$0xff]
    %v3140 = vld [vmem:[%s3136 + $0x18] sm:$0xff]
    %v3141 = vld [vmem:[%s3136 + $0x20] sm:$0xff]
    %v3142 = vld [vmem:[%s3136 + $0x28] sm:$0xff]
    %v3143 = vld [vmem:[%s3136 + $0x30] sm:$0xff]
    %v3144 = vld [vmem:[%s3136 + $0x38] sm:$0xff]
    %v3145 = vld [vmem:[%s3136 + $0x40] sm:$0xff]
    %v3146 = vld [vmem:[%s3136 + $0x48] sm:$0xff]
    %v3147 = vld [vmem:[%s3136 + $0x50] sm:$0xff]
    %v3148 = vld [vmem:[%s3136 + $0x58] sm:$0xff]
    %s3149 = scalar_lea.vmem %s16, 9
    %v3150 = vld [vmem:[%s3149] sm:$0x1]
    %v3151 = vld [vmem:[%s3149 + $0x1] sm:$0x1]
    %v3152 = vld [vmem:[%s3149 + $0x2] sm:$0x1]
    %v3156 = vlaneseq
    %v3157 = vshrl.u32 %v3156, 7
    %v3158 = vsub.s32 0, %v3157
    %v3159 = vrot.slane %v3150, %v3158
    %v3160 = vlaneseq
    %v3161 = vshrl.u32 %v3160, 7
    %v3162 = vsub.s32 0, %v3161
    %v3163 = vrot.slane %v3151, %v3162
    %v3164 = vlaneseq
    %v3165 = vshrl.u32 %v3164, 7
    %v3166 = vsub.s32 0, %v3165
    %v3167 = vrot.slane %v3152, %v3166
    %3171 = vmatprep.subr.mxu0 0.0
    %3172 = vmatpush1.msra.mxu0 %v3137
    %3173 = vmatprep.subr.mxu0 0.0
    %3174 = vmatpush1.msra.mxu0 %v3138
    %3175 = vmatprep.subr.mxu0 0.0
    %3176 = vmatpush1.msra.mxu0 %v3139
    %3177 = vmatprep.subr.mxu0 0.0
    %3178 = vmatpush1.msra.mxu0 %v3140
    %3179 = vmatprep.subr.mxu0 0.0
    %3180 = vmatpush1.msra.mxu0 0.0
    %3181 = vmatprep.subr.mxu0 0.0
    %3182 = vmatpush1.msra.mxu0 0.0
    %3183 = vmatprep.subr.mxu0 0.0
    %3184 = vmatpush1.msra.mxu0 0.0
    %3185 = vmatprep.subr.mxu0 0.0
    %3186 = vmatpush1.msra.mxu0 0.0
    %3187 = vmatprep.subr.mxu0 0.0
    %3188 = vmatpush1.msra.mxu0 0.0
    %3189 = vmatprep.subr.mxu0 0.0
    %3190 = vmatpush1.msra.mxu0 0.0
    %3191 = vmatprep.subr.mxu0 0.0
    %3192 = vmatpush1.msra.mxu0 0.0
    %3193 = vmatprep.subr.mxu0 0.0
    %3194 = vmatpush1.msra.mxu0 0.0
    %3195 = vmatprep.subr.mxu0 0.0
    %3196 = vmatpush1.msra.mxu0 0.0
    %3197 = vmatprep.subr.mxu0 0.0
    %3198 = vmatpush1.msra.mxu0 0.0
    %3199 = vmatprep.subr.mxu0 0.0
    %3200 = vmatpush1.msra.mxu0 0.0
    %3201 = vmatprep.subr.mxu0 0.0
    %3202 = vmatpush1.msra.mxu0 0.0
    %3203 = vmatprep.subr.mxu0 0.0
    %3204 = vmatpush1.msra.mxu0 0.0
    %3205 = vmatprep.subr.mxu0 0.0
    %3206 = vmatpush1.msra.mxu0 0.0
    %3207 = vmatprep.subr.mxu0 0.0
    %3208 = vmatpush1.msra.mxu0 0.0
    %3209 = vmatprep.subr.mxu0 0.0
    %3210 = vmatpush1.msra.mxu0 0.0
    %3211 = vmatprep.subr.mxu0 0.0
    %3212 = vmatpush1.msra.mxu0 0.0
    %3213 = vmatprep.subr.mxu0 0.0
    %3214 = vmatpush1.msra.mxu0 0.0
    %3215 = vmatprep.subr.mxu0 0.0
    %3216 = vmatpush1.msra.mxu0 0.0
    %3217 = vmatprep.subr.mxu0 0.0
    %3218 = vmatpush1.msra.mxu0 0.0
    %3219 = vmatprep.subr.mxu0 0.0
    %3220 = vmatpush1.msra.mxu0 0.0
    %3221 = vmatprep.subr.mxu0 0.0
    %3222 = vmatpush1.msra.mxu0 0.0
    %3223 = vmatprep.subr.mxu0 0.0
    %3224 = vmatpush1.msra.mxu0 0.0
    %3225 = vmatprep.subr.mxu0 0.0
    %3226 = vmatpush1.msra.mxu0 0.0
    %3227 = vmatprep.subr.mxu0 0.0
    %3228 = vmatpush1.msra.mxu0 0.0
    %3229 = vmatprep.subr.mxu0 0.0
    %3230 = vmatpush1.msra.mxu0 0.0
    %3231 = vmatprep.subr.mxu0 0.0
    %3232 = vmatpush1.msra.mxu0 0.0
    %3233 = vmatprep.subr.mxu0 0.0
    %3234 = vmatpush1.msra.mxu0 0.0
    %3235 = vmatprep.mubr.f32.mxu0 0.0
    %3236 = vmatmul.mubr.f32.gmra.mrb[0].mxu0 %v1382
    %v3237 = vpop.f32.mrb[0].mxu0
    %v3238 = vadd.f32 %v3159, %v3237
    %v3239 = vpop.f32.mrb[0].mxu0
    %3240 = vdwg.mxu0
    %3241 = vmatprep.subr.mxu0 0.0
    %3242 = vmatpush1.msra.mxu0 %v3141
    %3243 = vmatprep.subr.mxu0 0.0
    %3244 = vmatpush1.msra.mxu0 %v3142
    %3245 = vmatprep.subr.mxu0 0.0
    %3246 = vmatpush1.msra.mxu0 %v3143
    %3247 = vmatprep.subr.mxu0 0.0
    %3248 = vmatpush1.msra.mxu0 %v3144
    %3249 = vmatprep.subr.mxu0 0.0
    %3250 = vmatpush1.msra.mxu0 0.0
    %3251 = vmatprep.subr.mxu0 0.0
    %3252 = vmatpush1.msra.mxu0 0.0
    %3253 = vmatprep.subr.mxu0 0.0
    %3254 = vmatpush1.msra.mxu0 0.0
    %3255 = vmatprep.subr.mxu0 0.0
    %3256 = vmatpush1.msra.mxu0 0.0
    %3257 = vmatprep.subr.mxu0 0.0
    %3258 = vmatpush1.msra.mxu0 0.0
    %3259 = vmatprep.subr.mxu0 0.0
    %3260 = vmatpush1.msra.mxu0 0.0
    %3261 = vmatprep.subr.mxu0 0.0
    %3262 = vmatpush1.msra.mxu0 0.0
    %3263 = vmatprep.subr.mxu0 0.0
    %3264 = vmatpush1.msra.mxu0 0.0
    %3265 = vmatprep.subr.mxu0 0.0
    %3266 = vmatpush1.msra.mxu0 0.0
    %3267 = vmatprep.subr.mxu0 0.0
    %3268 = vmatpush1.msra.mxu0 0.0
    %3269 = vmatprep.subr.mxu0 0.0
    %3270 = vmatpush1.msra.mxu0 0.0
    %3271 = vmatprep.subr.mxu0 0.0
    %3272 = vmatpush1.msra.mxu0 0.0
    %3273 = vmatprep.subr.mxu0 0.0
    %3274 = vmatpush1.msra.mxu0 0.0
    %3275 = vmatprep.subr.mxu0 0.0
    %3276 = vmatpush1.msra.mxu0 0.0
    %3277 = vmatprep.subr.mxu0 0.0
    %3278 = vmatpush1.msra.mxu0 0.0
    %3279 = vmatprep.subr.mxu0 0.0
    %3280 = vmatpush1.msra.mxu0 0.0
    %3281 = vmatprep.subr.mxu0 0.0
    %3282 = vmatpush1.msra.mxu0 0.0
    %3283 = vmatprep.subr.mxu0 0.0
    %3284 = vmatpush1.msra.mxu0 0.0
    %3285 = vmatprep.subr.mxu0 0.0
    %3286 = vmatpush1.msra.mxu0 0.0
    %3287 = vmatprep.subr.mxu0 0.0
    %3288 = vmatpush1.msra.mxu0 0.0
    %3289 = vmatprep.subr.mxu0 0.0
    %3290 = vmatpush1.msra.mxu0 0.0
    %3291 = vmatprep.subr.mxu0 0.0
    %3292 = vmatpush1.msra.mxu0 0.0
    %3293 = vmatprep.subr.mxu0 0.0
    %3294 = vmatpush1.msra.mxu0 0.0
    %3295 = vmatprep.subr.mxu0 0.0
    %3296 = vmatpush1.msra.mxu0 0.0
    %3297 = vmatprep.subr.mxu0 0.0
    %3298 = vmatpush1.msra.mxu0 0.0
    %3299 = vmatprep.subr.mxu0 0.0
    %3300 = vmatpush1.msra.mxu0 0.0
    %3301 = vmatprep.subr.mxu0 0.0
    %3302 = vmatpush1.msra.mxu0 0.0
    %3303 = vmatprep.subr.mxu0 0.0
    %3304 = vmatpush1.msra.mxu0 0.0
    %3305 = vmatprep.mubr.f32.mxu0 0.0
    %3306 = vmatmul.mubr.f32.gmra.mrb[0].mxu0 %v1382
    %v3307 = vpop.f32.mrb[0].mxu0
    %v3308 = vadd.f32 %v3163, %v3307
    %v3309 = vpop.f32.mrb[0].mxu0
    %3310 = vdwg.mxu0
    %3311 = vmatprep.subr.mxu0 0.0
    %3312 = vmatpush1.msra.mxu0 %v3145
    %3313 = vmatprep.subr.mxu0 0.0
    %3314 = vmatpush1.msra.mxu0 %v3146
    %3315 = vmatprep.subr.mxu0 0.0
    %3316 = vmatpush1.msra.mxu0 %v3147
    %3317 = vmatprep.subr.mxu0 0.0
    %3318 = vmatpush1.msra.mxu0 %v3148
    %3319 = vmatprep.subr.mxu0 0.0
    %3320 = vmatpush1.msra.mxu0 0.0
    %3321 = vmatprep.subr.mxu0 0.0
    %3322 = vmatpush1.msra.mxu0 0.0
    %3323 = vmatprep.subr.mxu0 0.0
    %3324 = vmatpush1.msra.mxu0 0.0
    %3325 = vmatprep.subr.mxu0 0.0
    %3326 = vmatpush1.msra.mxu0 0.0
    %3327 = vmatprep.subr.mxu0 0.0
    %3328 = vmatpush1.msra.mxu0 0.0
    %3329 = vmatprep.subr.mxu0 0.0
    %3330 = vmatpush1.msra.mxu0 0.0
    %3331 = vmatprep.subr.mxu0 0.0
    %3332 = vmatpush1.msra.mxu0 0.0
    %3333 = vmatprep.subr.mxu0 0.0
    %3334 = vmatpush1.msra.mxu0 0.0
    %3335 = vmatprep.subr.mxu0 0.0
    %3336 = vmatpush1.msra.mxu0 0.0
    %3337 = vmatprep.subr.mxu0 0.0
    %3338 = vmatpush1.msra.mxu0 0.0
    %3339 = vmatprep.subr.mxu0 0.0
    %3340 = vmatpush1.msra.mxu0 0.0
    %3341 = vmatprep.subr.mxu0 0.0
    %3342 = vmatpush1.msra.mxu0 0.0
    %3343 = vmatprep.subr.mxu0 0.0
    %3344 = vmatpush1.msra.mxu0 0.0
    %3345 = vmatprep.subr.mxu0 0.0
    %3346 = vmatpush1.msra.mxu0 0.0
    %3347 = vmatprep.subr.mxu0 0.0
    %3348 = vmatpush1.msra.mxu0 0.0
    %3349 = vmatprep.subr.mxu0 0.0
    %3350 = vmatpush1.msra.mxu0 0.0
    %3351 = vmatprep.subr.mxu0 0.0
    %3352 = vmatpush1.msra.mxu0 0.0
    %3353 = vmatprep.subr.mxu0 0.0
    %3354 = vmatpush1.msra.mxu0 0.0
    %3355 = vmatprep.subr.mxu0 0.0
    %3356 = vmatpush1.msra.mxu0 0.0
    %3357 = vmatprep.subr.mxu0 0.0
    %3358 = vmatpush1.msra.mxu0 0.0
    %3359 = vmatprep.subr.mxu0 0.0
    %3360 = vmatpush1.msra.mxu0 0.0
    %3361 = vmatprep.subr.mxu0 0.0
    %3362 = vmatpush1.msra.mxu0 0.0
    %3363 = vmatprep.subr.mxu0 0.0
    %3364 = vmatpush1.msra.mxu0 0.0
    %3365 = vmatprep.subr.mxu0 0.0
    %3366 = vmatpush1.msra.mxu0 0.0
    %3367 = vmatprep.subr.mxu0 0.0
    %3368 = vmatpush1.msra.mxu0 0.0
    %3369 = vmatprep.subr.mxu0 0.0
    %3370 = vmatpush1.msra.mxu0 0.0
    %3371 = vmatprep.subr.mxu0 0.0
    %3372 = vmatpush1.msra.mxu0 0.0
    %3373 = vmatprep.subr.mxu0 0.0
    %3374 = vmatpush1.msra.mxu0 0.0
    %3375 = vmatprep.mubr.f32.mxu0 0.0
    %3376 = vmatmul.mubr.f32.gmra.mrb[0].mxu0 %v1382
    %v3377 = vpop.f32.mrb[0].mxu0
    %v3378 = vadd.f32 %v3167, %v3377
    %v3379 = vpop.f32.mrb[0].mxu0
    %3380 = vdwg.mxu0
    %v3381 = vadd.f32 %v2993, %v3238
    %v3382 = vadd.f32 %v3063, %v3308
    %v3383 = vadd.f32 %v3133, %v3378
    %v3384 = vxor.u32 %v3381, 2147483648
    %v3385 = vxor.u32 %v3382, 2147483648
    %v3386 = vxor.u32 %v3383, 2147483648
    %v3387 = vmul.f32 %v3384, 1.442695
    %v3388 = vpow.pop %v3387
    %v3389 = vmul.f32 %v3385, 1.442695
    %v3390 = vpow.pop %v3389
    %v3391 = vmul.f32 %v3386, 1.442695
    %v3392 = vpow.pop %v3391
    %v3393 = vadd.f32 %v3388, 1.0
    %v3394 = vadd.f32 %v3390, 1.0
    %v3395 = vadd.f32 %v3392, 1.0
    %v3396 = vrcp.pop %v3393
    %v3397 = vmul.f32 1.0, %v3396
    %v3398 = vrcp.pop %v3394
    %v3399 = vmul.f32 1.0, %v3398
    %v3400 = vrcp.pop %v3395
    %v3401 = vmul.f32 1.0, %v3400
    %3405 = vrot.lane.b32.xlu0 %v3238, 64
    %v3406 = vpop.permute.xlu0 %3405
    %3407 = vrot.lane.b32.xlu0 %v3308, 64
    %v3408 = vpop.permute.xlu0 %3407
    %3409 = vrot.lane.b32.xlu0 %v3378, 64
    %v3410 = vpop.permute.xlu0 %3409
    %v3414 = vmul.f32 %v3397, %v3406
    %v3415 = vmul.f32 %v3399, %v3408
    %v3416 = vmul.f32 %v3401, %v3410
    %3420 = vrot.lane.b32.xlu0 %v3414, 64
    %v3421 = vpop.permute.xlu0 %3420
    %3422 = vrot.lane.b32.xlu0 %v3415, 64
    %v3423 = vpop.permute.xlu0 %3422
    %3424 = vrot.lane.b32.xlu0 %v3416, 64
    %v3425 = vpop.permute.xlu0 %3424
    %v3429 = vadd.f32 %v2993, %v3421
    %v3430 = vadd.f32 %v3063, %v3423
    %v3431 = vadd.f32 %v3133, %v3425
    %v3432 = vtanh.pop %v3429
    %v3433 = vtanh.pop %v3430
    %v3434 = vtanh.pop %v3431
    %v3435 = vsub.f32 1.0, %v3397
    %v3436 = vsub.f32 1.0, %v3399
    %v3437 = vsub.f32 1.0, %v3401
    %3441 = vrot.lane.b32.xlu0 %v3432, 96
    %v3442 = vpop.permute.xlu0 %3441
    %3443 = vrot.lane.b32.xlu0 %v3433, 96
    %v3444 = vpop.permute.xlu0 %3443
    %3445 = vrot.lane.b32.xlu0 %v3434, 96
    %v3446 = vpop.permute.xlu0 %3445
    %v3450 = vmul.f32 %v3435, %v3442
    %v3451 = vmul.f32 %v3436, %v3444
    %v3452 = vmul.f32 %v3437, %v3446
    %v3453 = vmul.f32 %v3397, 0.0
    %v3454 = vmul.f32 %v3399, 0.0
    %v3455 = vmul.f32 %v3401, 0.0
    %v3456 = vadd.f32 %v3450, %v3453
    %v3457 = vadd.f32 %v3451, %v3454
    %v3458 = vadd.f32 %v3452, %v3455
    %3462 = vrot.lane.b32.xlu0 %v2876, 96
    %v3463 = vpop.permute.xlu0 %3462
    %3464 = vrot.lane.b32.xlu0 %v2877, 96
    %v3465 = vpop.permute.xlu0 %3464
    %3466 = vrot.lane.b32.xlu0 %v2878, 96
    %v3467 = vpop.permute.xlu0 %3466
    %v3471 = vsel %vm1380, %v3463, %v3456
    %v3472 = vsel %vm1380, %v3465, %v3457
    %v3473 = vsel %vm1380, %v3467, %v3458
    %v3474 = vmul.f32 %v3471, 0.5
    %v3475 = vmul.f32 %v3472, 0.5
    %v3476 = vmul.f32 %v3473, 0.5
    %v3477 = vmul.f32 %v3471, 0.044715
    %v3478 = vmul.f32 %v3472, 0.044715
    %v3479 = vmul.f32 %v3473, 0.044715
    %v3480 = vmul.f32 %v3477, %v3471
    %v3481 = vmul.f32 %v3478, %v3472
    %v3482 = vmul.f32 %v3479, %v3473
    %v3483 = vmul.f32 %v3480, %v3471
    %v3484 = vmul.f32 %v3481, %v3472
    %v3485 = vmul.f32 %v3482, %v3473
    %v3486 = vadd.f32 %v3471, %v3483
    %v3487 = vadd.f32 %v3472, %v3484
    %v3488 = vadd.f32 %v3473, %v3485
    %v3489 = vmul.f32 %v3486, 0.7978846
    %v3490 = vmul.f32 %v3487, 0.7978846
    %v3491 = vmul.f32 %v3488, 0.7978846
    %v3492 = vtanh.pop %v3489
    %v3493 = vtanh.pop %v3490
    %v3494 = vtanh.pop %v3491
    %v3495 = vadd.f32 %v3492, 1.0
    %v3496 = vadd.f32 %v3493, 1.0
    %v3497 = vadd.f32 %v3494, 1.0
    %v3498 = vmul.f32 %v3474, %v3495
    %v3499 = vmul.f32 %v3475, %v3496
    %v3500 = vmul.f32 %v3476, %v3497
    %v3501 = vsel %vm471, %v3498, %v976
    %v3502 = vsel %vm471, %v3499, %v976
    %v3503 = vsel %vm471, %v3500, %v976
    %s3504 = scalar_lea.vmem %s10, 3
    %v3505 = vld [vmem:[%s3504] sm:$0x1]
    %v3506 = vld [vmem:[%s3504 + $0x1] sm:$0x1]
    %v3507 = vld [vmem:[%s3504 + $0x2] sm:$0x1]
    %s3508 = scalar_lea.vmem %s11, 3
    %v3509 = vld [vmem:[%s3508] sm:$0x1]
    %v3510 = vld [vmem:[%s3508 + $0x1] sm:$0x1]
    %v3511 = vld [vmem:[%s3508 + $0x2] sm:$0x1]
    %v3512 = vsel %vm70, %v3501, 0.0
    %3513 = vadd.xlane.f32.xlu0 %v3512
    %v3514 = vpop.xlane.xlu0 %3513
    %v3515 = vsel %vm70, %v3502, 0.0
    %3516 = vadd.xlane.f32.xlu0 %v3515
    %v3517 = vpop.xlane.xlu0 %3516
    %v3518 = vsel %vm70, %v3503, 0.0
    %3519 = vadd.xlane.f32.xlu0 %v3518
    %v3520 = vpop.xlane.xlu0 %3519
    %v3521 = vmul.f32 %v3514, %v80
    %v3522 = vmul.f32 %v3517, %v80
    %v3523 = vmul.f32 %v3520, %v80
    %v3524 = vsub.f32 %v3501, %v3521
    %v3525 = vsub.f32 %v3502, %v3522
    %v3526 = vsub.f32 %v3503, %v3523
    %v3527 = vmul.f32 %v3524, %v3524
    %v3528 = vmul.f32 %v3525, %v3525
    %v3529 = vmul.f32 %v3526, %v3526
    %v3530 = vsel %vm70, %v3527, 0.0
    %3531 = vadd.xlane.f32.xlu0 %v3530
    %v3532 = vpop.xlane.xlu0 %3531
    %v3533 = vsel %vm70, %v3528, 0.0
    %3534 = vadd.xlane.f32.xlu0 %v3533
    %v3535 = vpop.xlane.xlu0 %3534
    %v3536 = vsel %vm70, %v3529, 0.0
    %3537 = vadd.xlane.f32.xlu0 %v3536
    %v3538 = vpop.xlane.xlu0 %3537
    %v3539 = vmul.f32 %v3532, %v80
    %v3540 = vmul.f32 %v3535, %v80
    %v3541 = vmul.f32 %v3538, %v80
    %v3542 = vadd.f32 %v3539, 1e-05
    %v3543 = vadd.f32 %v3540, 1e-05
    %v3544 = vadd.f32 %v3541, 1e-05
    %v3545 = vrsqrt.pop %v3542
    %v3546 = vrsqrt.pop %v3543
    %v3547 = vrsqrt.pop %v3544
    %v3548 = vmul.f32 %v3524, %v3545
    %v3549 = vmul.f32 %v3525, %v3546
    %v3550 = vmul.f32 %v3526, %v3547
    %v3554 = vlaneseq
    %v3555 = vshrl.u32 %v3554, 7
    %v3556 = vsub.s32 0, %v3555
    %v3557 = vrot.slane %v3505, %v3556
    %v3558 = vlaneseq
    %v3559 = vshrl.u32 %v3558, 7
    %v3560 = vsub.s32 0, %v3559
    %v3561 = vrot.slane %v3506, %v3560
    %v3562 = vlaneseq
    %v3563 = vshrl.u32 %v3562, 7
    %v3564 = vsub.s32 0, %v3563
    %v3565 = vrot.slane %v3507, %v3564
    %v3569 = vmul.f32 %v3548, %v3557
    %v3570 = vmul.f32 %v3549, %v3561
    %v3571 = vmul.f32 %v3550, %v3565
    %v3575 = vlaneseq
    %v3576 = vshrl.u32 %v3575, 7
    %v3577 = vsub.s32 0, %v3576
    %v3578 = vrot.slane %v3509, %v3577
    %v3579 = vlaneseq
    %v3580 = vshrl.u32 %v3579, 7
    %v3581 = vsub.s32 0, %v3580
    %v3582 = vrot.slane %v3510, %v3581
    %v3583 = vlaneseq
    %v3584 = vshrl.u32 %v3583, 7
    %v3585 = vsub.s32 0, %v3584
    %v3586 = vrot.slane %v3511, %v3585
    %v3590 = vadd.f32 %v3569, %v3578
    %v3591 = vadd.f32 %v3570, %v3582
    %v3592 = vadd.f32 %v3571, %v3586
    %s3593 = scalar_lea.vmem %s12, 768
    %v3594 = vld [vmem:[%s3593] sm:$0xff]
    %v3595 = vld [vmem:[%s3593 + $0x8] sm:$0xff]
    %v3596 = vld [vmem:[%s3593 + $0x10] sm:$0xff]
    %v3597 = vld [vmem:[%s3593 + $0x18] sm:$0xff]
    %v3598 = vld [vmem:[%s3593 + $0x20] sm:$0xff]
    %v3599 = vld [vmem:[%s3593 + $0x28] sm:$0xff]
    %v3600 = vld [vmem:[%s3593 + $0x30] sm:$0xff]
    %v3601 = vld [vmem:[%s3593 + $0x38] sm:$0xff]
    %v3602 = vld [vmem:[%s3593 + $0x40] sm:$0xff]
    %v3603 = vld [vmem:[%s3593 + $0x48] sm:$0xff]
    %v3604 = vld [vmem:[%s3593 + $0x50] sm:$0xff]
    %v3605 = vld [vmem:[%s3593 + $0x58] sm:$0xff]
    %v3606 = vld [vmem:[%s3593 + $0x60] sm:$0xff]
    %v3607 = vld [vmem:[%s3593 + $0x68] sm:$0xff]
    %v3608 = vld [vmem:[%s3593 + $0x70] sm:$0xff]
    %v3609 = vld [vmem:[%s3593 + $0x78] sm:$0xff]
    %v3610 = vld [vmem:[%s3593 + $0x80] sm:$0xff]
    %v3611 = vld [vmem:[%s3593 + $0x88] sm:$0xff]
    %v3612 = vld [vmem:[%s3593 + $0x90] sm:$0xff]
    %v3613 = vld [vmem:[%s3593 + $0x98] sm:$0xff]
    %v3614 = vld [vmem:[%s3593 + $0xa0] sm:$0xff]
    %v3615 = vld [vmem:[%s3593 + $0xa8] sm:$0xff]
    %v3616 = vld [vmem:[%s3593 + $0xb0] sm:$0xff]
    %v3617 = vld [vmem:[%s3593 + $0xb8] sm:$0xff]
    %v3618 = vld [vmem:[%s3593 + $0xc0] sm:$0xff]
    %v3619 = vld [vmem:[%s3593 + $0xc8] sm:$0xff]
    %v3620 = vld [vmem:[%s3593 + $0xd0] sm:$0xff]
    %v3621 = vld [vmem:[%s3593 + $0xd8] sm:$0xff]
    %v3622 = vld [vmem:[%s3593 + $0xe0] sm:$0xff]
    %v3623 = vld [vmem:[%s3593 + $0xe8] sm:$0xff]
    %v3624 = vld [vmem:[%s3593 + $0xf0] sm:$0xff]
    %v3625 = vld [vmem:[%s3593 + $0xf8] sm:$0xff]
    %v3626 = vld [vmem:[%s3593 + $0x100] sm:$0xff]
    %v3627 = vld [vmem:[%s3593 + $0x108] sm:$0xff]
    %v3628 = vld [vmem:[%s3593 + $0x110] sm:$0xff]
    %v3629 = vld [vmem:[%s3593 + $0x118] sm:$0xff]
    %v3630 = vld [vmem:[%s3593 + $0x120] sm:$0xff]
    %v3631 = vld [vmem:[%s3593 + $0x128] sm:$0xff]
    %v3632 = vld [vmem:[%s3593 + $0x130] sm:$0xff]
    %v3633 = vld [vmem:[%s3593 + $0x138] sm:$0xff]
    %v3634 = vld [vmem:[%s3593 + $0x140] sm:$0xff]
    %v3635 = vld [vmem:[%s3593 + $0x148] sm:$0xff]
    %v3636 = vld [vmem:[%s3593 + $0x150] sm:$0xff]
    %v3637 = vld [vmem:[%s3593 + $0x158] sm:$0xff]
    %v3638 = vld [vmem:[%s3593 + $0x160] sm:$0xff]
    %v3639 = vld [vmem:[%s3593 + $0x168] sm:$0xff]
    %v3640 = vld [vmem:[%s3593 + $0x170] sm:$0xff]
    %v3641 = vld [vmem:[%s3593 + $0x178] sm:$0xff]
    %s3642 = scalar_lea.vmem %s15, 12
    %v3643 = vld [vmem:[%s3642] sm:$0x1]
    %v3644 = vld [vmem:[%s3642 + $0x1] sm:$0x1]
    %v3645 = vld [vmem:[%s3642 + $0x2] sm:$0x1]
    %v3649 = vlaneseq
    %v3650 = vshrl.u32 %v3649, 7
    %v3651 = vsub.s32 0, %v3650
    %v3652 = vrot.slane %v3643, %v3651
    %v3653 = vlaneseq
    %v3654 = vshrl.u32 %v3653, 7
    %v3655 = vsub.s32 0, %v3654
    %v3656 = vrot.slane %v3644, %v3655
    %v3657 = vlaneseq
    %v3658 = vshrl.u32 %v3657, 7
    %v3659 = vsub.s32 0, %v3658
    %v3660 = vrot.slane %v3645, %v3659
    %3664 = vmatprep.subr.mxu0 0.0
    %3665 = vmatpush1.msra.mxu0 %v3594
    %3666 = vmatprep.subr.mxu0 0.0
    %3667 = vmatpush1.msra.mxu0 %v3595
    %3668 = vmatprep.subr.mxu0 0.0
    %3669 = vmatpush1.msra.mxu0 %v3596
    %3670 = vmatprep.subr.mxu0 0.0
    %3671 = vmatpush1.msra.mxu0 %v3597
    %3672 = vmatprep.subr.mxu0 0.0
    %3673 = vmatpush1.msra.mxu0 %v3598
    %3674 = vmatprep.subr.mxu0 0.0
    %3675 = vmatpush1.msra.mxu0 %v3599
    %3676 = vmatprep.subr.mxu0 0.0
    %3677 = vmatpush1.msra.mxu0 %v3600
    %3678 = vmatprep.subr.mxu0 0.0
    %3679 = vmatpush1.msra.mxu0 %v3601
    %3680 = vmatprep.subr.mxu0 0.0
    %3681 = vmatpush1.msra.mxu0 %v3602
    %3682 = vmatprep.subr.mxu0 0.0
    %3683 = vmatpush1.msra.mxu0 %v3603
    %3684 = vmatprep.subr.mxu0 0.0
    %3685 = vmatpush1.msra.mxu0 %v3604
    %3686 = vmatprep.subr.mxu0 0.0
    %3687 = vmatpush1.msra.mxu0 %v3605
    %3688 = vmatprep.subr.mxu0 0.0
    %3689 = vmatpush1.msra.mxu0 %v3606
    %3690 = vmatprep.subr.mxu0 0.0
    %3691 = vmatpush1.msra.mxu0 %v3607
    %3692 = vmatprep.subr.mxu0 0.0
    %3693 = vmatpush1.msra.mxu0 %v3608
    %3694 = vmatprep.subr.mxu0 0.0
    %3695 = vmatpush1.msra.mxu0 %v3609
    %3696 = vmatprep.subr.mxu0 0.0
    %3697 = vmatpush1.msra.mxu0 0.0
    %3698 = vmatprep.subr.mxu0 0.0
    %3699 = vmatpush1.msra.mxu0 0.0
    %3700 = vmatprep.subr.mxu0 0.0
    %3701 = vmatpush1.msra.mxu0 0.0
    %3702 = vmatprep.subr.mxu0 0.0
    %3703 = vmatpush1.msra.mxu0 0.0
    %3704 = vmatprep.subr.mxu0 0.0
    %3705 = vmatpush1.msra.mxu0 0.0
    %3706 = vmatprep.subr.mxu0 0.0
    %3707 = vmatpush1.msra.mxu0 0.0
    %3708 = vmatprep.subr.mxu0 0.0
    %3709 = vmatpush1.msra.mxu0 0.0
    %3710 = vmatprep.subr.mxu0 0.0
    %3711 = vmatpush1.msra.mxu0 0.0
    %3712 = vmatprep.subr.mxu0 0.0
    %3713 = vmatpush1.msra.mxu0 0.0
    %3714 = vmatprep.subr.mxu0 0.0
    %3715 = vmatpush1.msra.mxu0 0.0
    %3716 = vmatprep.subr.mxu0 0.0
    %3717 = vmatpush1.msra.mxu0 0.0
    %3718 = vmatprep.subr.mxu0 0.0
    %3719 = vmatpush1.msra.mxu0 0.0
    %3720 = vmatprep.subr.mxu0 0.0
    %3721 = vmatpush1.msra.mxu0 0.0
    %3722 = vmatprep.subr.mxu0 0.0
    %3723 = vmatpush1.msra.mxu0 0.0
    %3724 = vmatprep.subr.mxu0 0.0
    %3725 = vmatpush1.msra.mxu0 0.0
    %3726 = vmatprep.subr.mxu0 0.0
    %3727 = vmatpush1.msra.mxu0 0.0
    %3728 = vmatprep.mubr.f32.mxu0 0.0
    %3729 = vmatmul.mubr.f32.gmra.mrb[0].mxu0 %v3590
    %v3730 = vpop.f32.mrb[0].mxu0
    %v3731 = vadd.f32 %v3652, %v3730
    %v3732 = vpop.f32.mrb[0].mxu0
    %3733 = vdwg.mxu0
    %3734 = vmatprep.subr.mxu0 0.0
    %3735 = vmatpush1.msra.mxu0 %v3610
    %3736 = vmatprep.subr.mxu0 0.0
    %3737 = vmatpush1.msra.mxu0 %v3611
    %3738 = vmatprep.subr.mxu0 0.0
    %3739 = vmatpush1.msra.mxu0 %v3612
    %3740 = vmatprep.subr.mxu0 0.0
    %3741 = vmatpush1.msra.mxu0 %v3613
    %3742 = vmatprep.subr.mxu0 0.0
    %3743 = vmatpush1.msra.mxu0 %v3614
    %3744 = vmatprep.subr.mxu0 0.0
    %3745 = vmatpush1.msra.mxu0 %v3615
    %3746 = vmatprep.subr.mxu0 0.0
    %3747 = vmatpush1.msra.mxu0 %v3616
    %3748 = vmatprep.subr.mxu0 0.0
    %3749 = vmatpush1.msra.mxu0 %v3617
    %3750 = vmatprep.subr.mxu0 0.0
    %3751 = vmatpush1.msra.mxu0 %v3618
    %3752 = vmatprep.subr.mxu0 0.0
    %3753 = vmatpush1.msra.mxu0 %v3619
    %3754 = vmatprep.subr.mxu0 0.0
    %3755 = vmatpush1.msra.mxu0 %v3620
    %3756 = vmatprep.subr.mxu0 0.0
    %3757 = vmatpush1.msra.mxu0 %v3621
    %3758 = vmatprep.subr.mxu0 0.0
    %3759 = vmatpush1.msra.mxu0 %v3622
    %3760 = vmatprep.subr.mxu0 0.0
    %3761 = vmatpush1.msra.mxu0 %v3623
    %3762 = vmatprep.subr.mxu0 0.0
    %3763 = vmatpush1.msra.mxu0 %v3624
    %3764 = vmatprep.subr.mxu0 0.0
    %3765 = vmatpush1.msra.mxu0 %v3625
    %3766 = vmatprep.subr.mxu0 0.0
    %3767 = vmatpush1.msra.mxu0 0.0
    %3768 = vmatprep.subr.mxu0 0.0
    %3769 = vmatpush1.msra.mxu0 0.0
    %3770 = vmatprep.subr.mxu0 0.0
    %3771 = vmatpush1.msra.mxu0 0.0
    %3772 = vmatprep.subr.mxu0 0.0
    %3773 = vmatpush1.msra.mxu0 0.0
    %3774 = vmatprep.subr.mxu0 0.0
    %3775 = vmatpush1.msra.mxu0 0.0
    %3776 = vmatprep.subr.mxu0 0.0
    %3777 = vmatpush1.msra.mxu0 0.0
    %3778 = vmatprep.subr.mxu0 0.0
    %3779 = vmatpush1.msra.mxu0 0.0
    %3780 = vmatprep.subr.mxu0 0.0
    %3781 = vmatpush1.msra.mxu0 0.0
    %3782 = vmatprep.subr.mxu0 0.0
    %3783 = vmatpush1.msra.mxu0 0.0
    %3784 = vmatprep.subr.mxu0 0.0
    %3785 = vmatpush1.msra.mxu0 0.0
    %3786 = vmatprep.subr.mxu0 0.0
    %3787 = vmatpush1.msra.mxu0 0.0
    %3788 = vmatprep.subr.mxu0 0.0
    %3789 = vmatpush1.msra.mxu0 0.0
    %3790 = vmatprep.subr.mxu0 0.0
    %3791 = vmatpush1.msra.mxu0 0.0
    %3792 = vmatprep.subr.mxu0 0.0
    %3793 = vmatpush1.msra.mxu0 0.0
    %3794 = vmatprep.subr.mxu0 0.0
    %3795 = vmatpush1.msra.mxu0 0.0
    %3796 = vmatprep.subr.mxu0 0.0
    %3797 = vmatpush1.msra.mxu0 0.0
    %3798 = vmatprep.mubr.f32.mxu0 0.0
    %3799 = vmatmul.mubr.f32.gmra.mrb[0].mxu0 %v3591
    %v3800 = vpop.f32.mrb[0].mxu0
    %v3801 = vadd.f32 %v3656, %v3800
    %v3802 = vpop.f32.mrb[0].mxu0
    %3803 = vdwg.mxu0
    %3804 = vmatprep.subr.mxu0 0.0
    %3805 = vmatpush1.msra.mxu0 %v3626
    %3806 = vmatprep.subr.mxu0 0.0
    %3807 = vmatpush1.msra.mxu0 %v3627
    %3808 = vmatprep.subr.mxu0 0.0
    %3809 = vmatpush1.msra.mxu0 %v3628
    %3810 = vmatprep.subr.mxu0 0.0
    %3811 = vmatpush1.msra.mxu0 %v3629
    %3812 = vmatprep.subr.mxu0 0.0
    %3813 = vmatpush1.msra.mxu0 %v3630
    %3814 = vmatprep.subr.mxu0 0.0
    %3815 = vmatpush1.msra.mxu0 %v3631
    %3816 = vmatprep.subr.mxu0 0.0
    %3817 = vmatpush1.msra.mxu0 %v3632
    %3818 = vmatprep.subr.mxu0 0.0
    %3819 = vmatpush1.msra.mxu0 %v3633
    %3820 = vmatprep.subr.mxu0 0.0
    %3821 = vmatpush1.msra.mxu0 %v3634
    %3822 = vmatprep.subr.mxu0 0.0
    %3823 = vmatpush1.msra.mxu0 %v3635
    %3824 = vmatprep.subr.mxu0 0.0
    %3825 = vmatpush1.msra.mxu0 %v3636
    %3826 = vmatprep.subr.mxu0 0.0
    %3827 = vmatpush1.msra.mxu0 %v3637
    %3828 = vmatprep.subr.mxu0 0.0
    %3829 = vmatpush1.msra.mxu0 %v3638
    %3830 = vmatprep.subr.mxu0 0.0
    %3831 = vmatpush1.msra.mxu0 %v3639
    %3832 = vmatprep.subr.mxu0 0.0
    %3833 = vmatpush1.msra.mxu0 %v3640
    %3834 = vmatprep.subr.mxu0 0.0
    %3835 = vmatpush1.msra.mxu0 %v3641
    %3836 = vmatprep.subr.mxu0 0.0
    %3837 = vmatpush1.msra.mxu0 0.0
    %3838 = vmatprep.subr.mxu0 0.0
    %3839 = vmatpush1.msra.mxu0 0.0
    %3840 = vmatprep.subr.mxu0 0.0
    %3841 = vmatpush1.msra.mxu0 0.0
    %3842 = vmatprep.subr.mxu0 0.0
    %3843 = vmatpush1.msra.mxu0 0.0
    %3844 = vmatprep.subr.mxu0 0.0
    %3845 = vmatpush1.msra.mxu0 0.0
    %3846 = vmatprep.subr.mxu0 0.0
    %3847 = vmatpush1.msra.mxu0 0.0
    %3848 = vmatprep.subr.mxu0 0.0
    %3849 = vmatpush1.msra.mxu0 0.0
    %3850 = vmatprep.subr.mxu0 0.0
    %3851 = vmatpush1.msra.mxu0 0.0
    %3852 = vmatprep.subr.mxu0 0.0
    %3853 = vmatpush1.msra.mxu0 0.0
    %3854 = vmatprep.subr.mxu0 0.0
    %3855 = vmatpush1.msra.mxu0 0.0
    %3856 = vmatprep.subr.mxu0 0.0
    %3857 = vmatpush1.msra.mxu0 0.0
    %3858 = vmatprep.subr.mxu0 0.0
    %3859 = vmatpush1.msra.mxu0 0.0
    %3860 = vmatprep.subr.mxu0 0.0
    %3861 = vmatpush1.msra.mxu0 0.0
    %3862 = vmatprep.subr.mxu0 0.0
    %3863 = vmatpush1.msra.mxu0 0.0
    %3864 = vmatprep.subr.mxu0 0.0
    %3865 = vmatpush1.msra.mxu0 0.0
    %3866 = vmatprep.subr.mxu0 0.0
    %3867 = vmatpush1.msra.mxu0 0.0
    %3868 = vmatprep.mubr.f32.mxu0 0.0
    %3869 = vmatmul.mubr.f32.gmra.mrb[0].mxu0 %v3592
    %v3870 = vpop.f32.mrb[0].mxu0
    %v3871 = vadd.f32 %v3660, %v3870
    %v3872 = vpop.f32.mrb[0].mxu0
    %3873 = vdwg.mxu0
    %s3874 = scalar_lea.vmem %s14, 384
    %v3875 = vld [vmem:[%s3874] sm:$0xff]
    %v3876 = vld [vmem:[%s3874 + $0x8] sm:$0xff]
    %v3877 = vld [vmem:[%s3874 + $0x10] sm:$0xff]
    %v3878 = vld [vmem:[%s3874 + $0x18] sm:$0xff]
    %v3879 = vld [vmem:[%s3874 + $0x20] sm:$0xff]
    %v3880 = vld [vmem:[%s3874 + $0x28] sm:$0xff]
    %v3881 = vld [vmem:[%s3874 + $0x30] sm:$0xff]
    %v3882 = vld [vmem:[%s3874 + $0x38] sm:$0xff]
    %v3883 = vld [vmem:[%s3874 + $0x40] sm:$0xff]
    %v3884 = vld [vmem:[%s3874 + $0x48] sm:$0xff]
    %v3885 = vld [vmem:[%s3874 + $0x50] sm:$0xff]
    %v3886 = vld [vmem:[%s3874 + $0x58] sm:$0xff]
    %s3887 = scalar_lea.vmem %s16, 12
    %v3888 = vld [vmem:[%s3887] sm:$0x1]
    %v3889 = vld [vmem:[%s3887 + $0x1] sm:$0x1]
    %v3890 = vld [vmem:[%s3887 + $0x2] sm:$0x1]
    %v3894 = vlaneseq
    %v3895 = vshrl.u32 %v3894, 7
    %v3896 = vsub.s32 0, %v3895
    %v3897 = vrot.slane %v3888, %v3896
    %v3898 = vlaneseq
    %v3899 = vshrl.u32 %v3898, 7
    %v3900 = vsub.s32 0, %v3899
    %v3901 = vrot.slane %v3889, %v3900
    %v3902 = vlaneseq
    %v3903 = vshrl.u32 %v3902, 7
    %v3904 = vsub.s32 0, %v3903
    %v3905 = vrot.slane %v3890, %v3904
    %v3909 = vsel %vm1380, %v2280, 0
    %3911 = vmatprep.subr.mxu0 0.0
    %3912 = vmatpush1.msra.mxu0 %v3875
    %3913 = vmatprep.subr.mxu0 0.0
    %3914 = vmatpush1.msra.mxu0 %v3876
    %3915 = vmatprep.subr.mxu0 0.0
    %3916 = vmatpush1.msra.mxu0 %v3877
    %3917 = vmatprep.subr.mxu0 0.0
    %3918 = vmatpush1.msra.mxu0 %v3878
    %3919 = vmatprep.subr.mxu0 0.0
    %3920 = vmatpush1.msra.mxu0 0.0
    %3921 = vmatprep.subr.mxu0 0.0
    %3922 = vmatpush1.msra.mxu0 0.0
    %3923 = vmatprep.subr.mxu0 0.0
    %3924 = vmatpush1.msra.mxu0 0.0
    %3925 = vmatprep.subr.mxu0 0.0
    %3926 = vmatpush1.msra.mxu0 0.0
    %3927 = vmatprep.subr.mxu0 0.0
    %3928 = vmatpush1.msra.mxu0 0.0
    %3929 = vmatprep.subr.mxu0 0.0
    %3930 = vmatpush1.msra.mxu0 0.0
    %3931 = vmatprep.subr.mxu0 0.0
    %3932 = vmatpush1.msra.mxu0 0.0
    %3933 = vmatprep.subr.mxu0 0.0
    %3934 = vmatpush1.msra.mxu0 0.0
    %3935 = vmatprep.subr.mxu0 0.0
    %3936 = vmatpush1.msra.mxu0 0.0
    %3937 = vmatprep.subr.mxu0 0.0
    %3938 = vmatpush1.msra.mxu0 0.0
    %3939 = vmatprep.subr.mxu0 0.0
    %3940 = vmatpush1.msra.mxu0 0.0
    %3941 = vmatprep.subr.mxu0 0.0
    %3942 = vmatpush1.msra.mxu0 0.0
    %3943 = vmatprep.subr.mxu0 0.0
    %3944 = vmatpush1.msra.mxu0 0.0
    %3945 = vmatprep.subr.mxu0 0.0
    %3946 = vmatpush1.msra.mxu0 0.0
    %3947 = vmatprep.subr.mxu0 0.0
    %3948 = vmatpush1.msra.mxu0 0.0
    %3949 = vmatprep.subr.mxu0 0.0
    %3950 = vmatpush1.msra.mxu0 0.0
    %3951 = vmatprep.subr.mxu0 0.0
    %3952 = vmatpush1.msra.mxu0 0.0
    %3953 = vmatprep.subr.mxu0 0.0
    %3954 = vmatpush1.msra.mxu0 0.0
    %3955 = vmatprep.subr.mxu0 0.0
    %3956 = vmatpush1.msra.mxu0 0.0
    %3957 = vmatprep.subr.mxu0 0.0
    %3958 = vmatpush1.msra.mxu0 0.0
    %3959 = vmatprep.subr.mxu0 0.0
    %3960 = vmatpush1.msra.mxu0 0.0
    %3961 = vmatprep.subr.mxu0 0.0
    %3962 = vmatpush1.msra.mxu0 0.0
    %3963 = vmatprep.subr.mxu0 0.0
    %3964 = vmatpush1.msra.mxu0 0.0
    %3965 = vmatprep.subr.mxu0 0.0
    %3966 = vmatpush1.msra.mxu0 0.0
    %3967 = vmatprep.subr.mxu0 0.0
    %3968 = vmatpush1.msra.mxu0 0.0
    %3969 = vmatprep.subr.mxu0 0.0
    %3970 = vmatpush1.msra.mxu0 0.0
    %3971 = vmatprep.subr.mxu0 0.0
    %3972 = vmatpush1.msra.mxu0 0.0
    %3973 = vmatprep.subr.mxu0 0.0
    %3974 = vmatpush1.msra.mxu0 0.0
    %3975 = vmatprep.mubr.f32.mxu0 0.0
    %3976 = vmatmul.mubr.f32.gmra.mrb[0].mxu0 %v3909
    %v3977 = vpop.f32.mrb[0].mxu0
    %v3978 = vadd.f32 %v3897, %v3977
    %v3979 = vpop.f32.mrb[0].mxu0
    %3980 = vdwg.mxu0
    %v3981 = vsel %vm1380, %v2282, 0
    %3983 = vmatprep.subr.mxu0 0.0
    %3984 = vmatpush1.msra.mxu0 %v3879
    %3985 = vmatprep.subr.mxu0 0.0
    %3986 = vmatpush1.msra.mxu0 %v3880
    %3987 = vmatprep.subr.mxu0 0.0
    %3988 = vmatpush1.msra.mxu0 %v3881
    %3989 = vmatprep.subr.mxu0 0.0
    %3990 = vmatpush1.msra.mxu0 %v3882
    %3991 = vmatprep.subr.mxu0 0.0
    %3992 = vmatpush1.msra.mxu0 0.0
    %3993 = vmatprep.subr.mxu0 0.0
    %3994 = vmatpush1.msra.mxu0 0.0
    %3995 = vmatprep.subr.mxu0 0.0
    %3996 = vmatpush1.msra.mxu0 0.0
    %3997 = vmatprep.subr.mxu0 0.0
    %3998 = vmatpush1.msra.mxu0 0.0
    %3999 = vmatprep.subr.mxu0 0.0
    %4000 = vmatpush1.msra.mxu0 0.0
    %4001 = vmatprep.subr.mxu0 0.0
    %4002 = vmatpush1.msra.mxu0 0.0
    %4003 = vmatprep.subr.mxu0 0.0
    %4004 = vmatpush1.msra.mxu0 0.0
    %4005 = vmatprep.subr.mxu0 0.0
    %4006 = vmatpush1.msra.mxu0 0.0
    %4007 = vmatprep.subr.mxu0 0.0
    %4008 = vmatpush1.msra.mxu0 0.0
    %4009 = vmatprep.subr.mxu0 0.0
    %4010 = vmatpush1.msra.mxu0 0.0
    %4011 = vmatprep.subr.mxu0 0.0
    %4012 = vmatpush1.msra.mxu0 0.0
    %4013 = vmatprep.subr.mxu0 0.0
    %4014 = vmatpush1.msra.mxu0 0.0
    %4015 = vmatprep.subr.mxu0 0.0
    %4016 = vmatpush1.msra.mxu0 0.0
    %4017 = vmatprep.subr.mxu0 0.0
    %4018 = vmatpush1.msra.mxu0 0.0
    %4019 = vmatprep.subr.mxu0 0.0
    %4020 = vmatpush1.msra.mxu0 0.0
    %4021 = vmatprep.subr.mxu0 0.0
    %4022 = vmatpush1.msra.mxu0 0.0
    %4023 = vmatprep.subr.mxu0 0.0
    %4024 = vmatpush1.msra.mxu0 0.0
    %4025 = vmatprep.subr.mxu0 0.0
    %4026 = vmatpush1.msra.mxu0 0.0
    %4027 = vmatprep.subr.mxu0 0.0
    %4028 = vmatpush1.msra.mxu0 0.0
    %4029 = vmatprep.subr.mxu0 0.0
    %4030 = vmatpush1.msra.mxu0 0.0
    %4031 = vmatprep.subr.mxu0 0.0
    %4032 = vmatpush1.msra.mxu0 0.0
    %4033 = vmatprep.subr.mxu0 0.0
    %4034 = vmatpush1.msra.mxu0 0.0
    %4035 = vmatprep.subr.mxu0 0.0
    %4036 = vmatpush1.msra.mxu0 0.0
    %4037 = vmatprep.subr.mxu0 0.0
    %4038 = vmatpush1.msra.mxu0 0.0
    %4039 = vmatprep.subr.mxu0 0.0
    %4040 = vmatpush1.msra.mxu0 0.0
    %4041 = vmatprep.subr.mxu0 0.0
    %4042 = vmatpush1.msra.mxu0 0.0
    %4043 = vmatprep.subr.mxu0 0.0
    %4044 = vmatpush1.msra.mxu0 0.0
    %4045 = vmatprep.subr.mxu0 0.0
    %4046 = vmatpush1.msra.mxu0 0.0
    %4047 = vmatprep.mubr.f32.mxu0 0.0
    %4048 = vmatmul.mubr.f32.gmra.mrb[0].mxu0 %v3981
    %v4049 = vpop.f32.mrb[0].mxu0
    %v4050 = vadd.f32 %v3901, %v4049
    %v4051 = vpop.f32.mrb[0].mxu0
    %4052 = vdwg.mxu0
    %v4053 = vsel %vm1380, %v2284, 0
    %4055 = vmatprep.subr.mxu0 0.0
    %4056 = vmatpush1.msra.mxu0 %v3883
    %4057 = vmatprep.subr.mxu0 0.0
    %4058 = vmatpush1.msra.mxu0 %v3884
    %4059 = vmatprep.subr.mxu0 0.0
    %4060 = vmatpush1.msra.mxu0 %v3885
    %4061 = vmatprep.subr.mxu0 0.0
    %4062 = vmatpush1.msra.mxu0 %v3886
    %4063 = vmatprep.subr.mxu0 0.0
    %4064 = vmatpush1.msra.mxu0 0.0
    %4065 = vmatprep.subr.mxu0 0.0
    %4066 = vmatpush1.msra.mxu0 0.0
    %4067 = vmatprep.subr.mxu0 0.0
    %4068 = vmatpush1.msra.mxu0 0.0
    %4069 = vmatprep.subr.mxu0 0.0
    %4070 = vmatpush1.msra.mxu0 0.0
    %4071 = vmatprep.subr.mxu0 0.0
    %4072 = vmatpush1.msra.mxu0 0.0
    %4073 = vmatprep.subr.mxu0 0.0
    %4074 = vmatpush1.msra.mxu0 0.0
    %4075 = vmatprep.subr.mxu0 0.0
    %4076 = vmatpush1.msra.mxu0 0.0
    %4077 = vmatprep.subr.mxu0 0.0
    %4078 = vmatpush1.msra.mxu0 0.0
    %4079 = vmatprep.subr.mxu0 0.0
    %4080 = vmatpush1.msra.mxu0 0.0
    %4081 = vmatprep.subr.mxu0 0.0
    %4082 = vmatpush1.msra.mxu0 0.0
    %4083 = vmatprep.subr.mxu0 0.0
    %4084 = vmatpush1.msra.mxu0 0.0
    %4085 = vmatprep.subr.mxu0 0.0
    %4086 = vmatpush1.msra.mxu0 0.0
    %4087 = vmatprep.subr.mxu0 0.0
    %4088 = vmatpush1.msra.mxu0 0.0
    %4089 = vmatprep.subr.mxu0 0.0
    %4090 = vmatpush1.msra.mxu0 0.0
    %4091 = vmatprep.subr.mxu0 0.0
    %4092 = vmatpush1.msra.mxu0 0.0
    %4093 = vmatprep.subr.mxu0 0.0
    %4094 = vmatpush1.msra.mxu0 0.0
    %4095 = vmatprep.subr.mxu0 0.0
    %4096 = vmatpush1.msra.mxu0 0.0
    %4097 = vmatprep.subr.mxu0 0.0
    %4098 = vmatpush1.msra.mxu0 0.0
    %4099 = vmatprep.subr.mxu0 0.0
    %4100 = vmatpush1.msra.mxu0 0.0
    %4101 = vmatprep.subr.mxu0 0.0
    %4102 = vmatpush1.msra.mxu0 0.0
    %4103 = vmatprep.subr.mxu0 0.0
    %4104 = vmatpush1.msra.mxu0 0.0
    %4105 = vmatprep.subr.mxu0 0.0
    %4106 = vmatpush1.msra.mxu0 0.0
    %4107 = vmatprep.subr.mxu0 0.0
    %4108 = vmatpush1.msra.mxu0 0.0
    %4109 = vmatprep.subr.mxu0 0.0
    %4110 = vmatpush1.msra.mxu0 0.0
    %4111 = vmatprep.subr.mxu0 0.0
    %4112 = vmatpush1.msra.mxu0 0.0
    %4113 = vmatprep.subr.mxu0 0.0
    %4114 = vmatpush1.msra.mxu0 0.0
    %4115 = vmatprep.subr.mxu0 0.0
    %4116 = vmatpush1.msra.mxu0 0.0
    %4117 = vmatprep.subr.mxu0 0.0
    %4118 = vmatpush1.msra.mxu0 0.0
    %4119 = vmatprep.mubr.f32.mxu0 0.0
    %4120 = vmatmul.mubr.f32.gmra.mrb[0].mxu0 %v4053
    %v4121 = vpop.f32.mrb[0].mxu0
    %v4122 = vadd.f32 %v3905, %v4121
    %v4123 = vpop.f32.mrb[0].mxu0
    %4124 = vdwg.mxu0
    %v4125 = vadd.f32 %v3731, %v3978
    %v4126 = vadd.f32 %v3801, %v4050
    %v4127 = vadd.f32 %v3871, %v4122
    %v4128 = vxor.u32 %v4125, 2147483648
    %v4129 = vxor.u32 %v4126, 2147483648
    %v4130 = vxor.u32 %v4127, 2147483648
    %v4131 = vmul.f32 %v4128, 1.442695
    %v4132 = vpow.pop %v4131
    %v4133 = vmul.f32 %v4129, 1.442695
    %v4134 = vpow.pop %v4133
    %v4135 = vmul.f32 %v4130, 1.442695
    %v4136 = vpow.pop %v4135
    %v4137 = vadd.f32 %v4132, 1.0
    %v4138 = vadd.f32 %v4134, 1.0
    %v4139 = vadd.f32 %v4136, 1.0
    %v4140 = vrcp.pop %v4137
    %v4141 = vmul.f32 1.0, %v4140
    %v4142 = vrcp.pop %v4138
    %v4143 = vmul.f32 1.0, %v4142
    %v4144 = vrcp.pop %v4139
    %v4145 = vmul.f32 1.0, %v4144
    %4149 = vrot.lane.b32.xlu0 %v3978, 64
    %v4150 = vpop.permute.xlu0 %4149
    %4151 = vrot.lane.b32.xlu0 %v4050, 64
    %v4152 = vpop.permute.xlu0 %4151
    %4153 = vrot.lane.b32.xlu0 %v4122, 64
    %v4154 = vpop.permute.xlu0 %4153
    %v4158 = vmul.f32 %v4141, %v4150
    %v4159 = vmul.f32 %v4143, %v4152
    %v4160 = vmul.f32 %v4145, %v4154
    %4164 = vrot.lane.b32.xlu0 %v4158, 64
    %v4165 = vpop.permute.xlu0 %4164
    %4166 = vrot.lane.b32.xlu0 %v4159, 64
    %v4167 = vpop.permute.xlu0 %4166
    %4168 = vrot.lane.b32.xlu0 %v4160, 64
    %v4169 = vpop.permute.xlu0 %4168
    %v4173 = vadd.f32 %v3731, %v4165
    %v4174 = vadd.f32 %v3801, %v4167
    %v4175 = vadd.f32 %v3871, %v4169
    %v4176 = vtanh.pop %v4173
    %v4177 = vtanh.pop %v4174
    %v4178 = vtanh.pop %v4175
    %v4179 = vsub.f32 1.0, %v4141
    %v4180 = vsub.f32 1.0, %v4143
    %v4181 = vsub.f32 1.0, %v4145
    %4185 = vrot.lane.b32.xlu0 %v4176, 96
    %v4186 = vpop.permute.xlu0 %4185
    %4187 = vrot.lane.b32.xlu0 %v4177, 96
    %v4188 = vpop.permute.xlu0 %4187
    %4189 = vrot.lane.b32.xlu0 %v4178, 96
    %v4190 = vpop.permute.xlu0 %4189
    %v4194 = vmul.f32 %v4179, %v4186
    %v4195 = vmul.f32 %v4180, %v4188
    %v4196 = vmul.f32 %v4181, %v4190
    %v4197 = vmul.f32 %v4141, %v1669
    %v4198 = vmul.f32 %v4143, %v1670
    %v4199 = vmul.f32 %v4145, %v1671
    %v4200 = vadd.f32 %v4194, %v4197
    %v4201 = vadd.f32 %v4195, %v4198
    %v4202 = vadd.f32 %v4196, %v4199
    %s4203 = scalar_lea.vmem %s12, 1152
    %v4204 = vld [vmem:[%s4203] sm:$0xff]
    %v4205 = vld [vmem:[%s4203 + $0x8] sm:$0xff]
    %v4206 = vld [vmem:[%s4203 + $0x10] sm:$0xff]
    %v4207 = vld [vmem:[%s4203 + $0x18] sm:$0xff]
    %v4208 = vld [vmem:[%s4203 + $0x20] sm:$0xff]
    %v4209 = vld [vmem:[%s4203 + $0x28] sm:$0xff]
    %v4210 = vld [vmem:[%s4203 + $0x30] sm:$0xff]
    %v4211 = vld [vmem:[%s4203 + $0x38] sm:$0xff]
    %v4212 = vld [vmem:[%s4203 + $0x40] sm:$0xff]
    %v4213 = vld [vmem:[%s4203 + $0x48] sm:$0xff]
    %v4214 = vld [vmem:[%s4203 + $0x50] sm:$0xff]
    %v4215 = vld [vmem:[%s4203 + $0x58] sm:$0xff]
    %v4216 = vld [vmem:[%s4203 + $0x60] sm:$0xff]
    %v4217 = vld [vmem:[%s4203 + $0x68] sm:$0xff]
    %v4218 = vld [vmem:[%s4203 + $0x70] sm:$0xff]
    %v4219 = vld [vmem:[%s4203 + $0x78] sm:$0xff]
    %v4220 = vld [vmem:[%s4203 + $0x80] sm:$0xff]
    %v4221 = vld [vmem:[%s4203 + $0x88] sm:$0xff]
    %v4222 = vld [vmem:[%s4203 + $0x90] sm:$0xff]
    %v4223 = vld [vmem:[%s4203 + $0x98] sm:$0xff]
    %v4224 = vld [vmem:[%s4203 + $0xa0] sm:$0xff]
    %v4225 = vld [vmem:[%s4203 + $0xa8] sm:$0xff]
    %v4226 = vld [vmem:[%s4203 + $0xb0] sm:$0xff]
    %v4227 = vld [vmem:[%s4203 + $0xb8] sm:$0xff]
    %v4228 = vld [vmem:[%s4203 + $0xc0] sm:$0xff]
    %v4229 = vld [vmem:[%s4203 + $0xc8] sm:$0xff]
    %v4230 = vld [vmem:[%s4203 + $0xd0] sm:$0xff]
    %v4231 = vld [vmem:[%s4203 + $0xd8] sm:$0xff]
    %v4232 = vld [vmem:[%s4203 + $0xe0] sm:$0xff]
    %v4233 = vld [vmem:[%s4203 + $0xe8] sm:$0xff]
    %v4234 = vld [vmem:[%s4203 + $0xf0] sm:$0xff]
    %v4235 = vld [vmem:[%s4203 + $0xf8] sm:$0xff]
    %v4236 = vld [vmem:[%s4203 + $0x100] sm:$0xff]
    %v4237 = vld [vmem:[%s4203 + $0x108] sm:$0xff]
    %v4238 = vld [vmem:[%s4203 + $0x110] sm:$0xff]
    %v4239 = vld [vmem:[%s4203 + $0x118] sm:$0xff]
    %v4240 = vld [vmem:[%s4203 + $0x120] sm:$0xff]
    %v4241 = vld [vmem:[%s4203 + $0x128] sm:$0xff]
    %v4242 = vld [vmem:[%s4203 + $0x130] sm:$0xff]
    %v4243 = vld [vmem:[%s4203 + $0x138] sm:$0xff]
    %v4244 = vld [vmem:[%s4203 + $0x140] sm:$0xff]
    %v4245 = vld [vmem:[%s4203 + $0x148] sm:$0xff]
    %v4246 = vld [vmem:[%s4203 + $0x150] sm:$0xff]
    %v4247 = vld [vmem:[%s4203 + $0x158] sm:$0xff]
    %v4248 = vld [vmem:[%s4203 + $0x160] sm:$0xff]
    %v4249 = vld [vmem:[%s4203 + $0x168] sm:$0xff]
    %v4250 = vld [vmem:[%s4203 + $0x170] sm:$0xff]
    %v4251 = vld [vmem:[%s4203 + $0x178] sm:$0xff]
    %s4252 = scalar_lea.vmem %s15, 15
    %v4253 = vld [vmem:[%s4252] sm:$0x1]
    %v4254 = vld [vmem:[%s4252 + $0x1] sm:$0x1]
    %v4255 = vld [vmem:[%s4252 + $0x2] sm:$0x1]
    %v4259 = vlaneseq
    %v4260 = vshrl.u32 %v4259, 7
    %v4261 = vsub.s32 0, %v4260
    %v4262 = vrot.slane %v4253, %v4261
    %v4263 = vlaneseq
    %v4264 = vshrl.u32 %v4263, 7
    %v4265 = vsub.s32 0, %v4264
    %v4266 = vrot.slane %v4254, %v4265
    %v4267 = vlaneseq
    %v4268 = vshrl.u32 %v4267, 7
    %v4269 = vsub.s32 0, %v4268
    %v4270 = vrot.slane %v4255, %v4269
    %4274 = vmatprep.subr.mxu0 0.0
    %4275 = vmatpush1.msra.mxu0 %v4204
    %4276 = vmatprep.subr.mxu0 0.0
    %4277 = vmatpush1.msra.mxu0 %v4205
    %4278 = vmatprep.subr.mxu0 0.0
    %4279 = vmatpush1.msra.mxu0 %v4206
    %4280 = vmatprep.subr.mxu0 0.0
    %4281 = vmatpush1.msra.mxu0 %v4207
    %4282 = vmatprep.subr.mxu0 0.0
    %4283 = vmatpush1.msra.mxu0 %v4208
    %4284 = vmatprep.subr.mxu0 0.0
    %4285 = vmatpush1.msra.mxu0 %v4209
    %4286 = vmatprep.subr.mxu0 0.0
    %4287 = vmatpush1.msra.mxu0 %v4210
    %4288 = vmatprep.subr.mxu0 0.0
    %4289 = vmatpush1.msra.mxu0 %v4211
    %4290 = vmatprep.subr.mxu0 0.0
    %4291 = vmatpush1.msra.mxu0 %v4212
    %4292 = vmatprep.subr.mxu0 0.0
    %4293 = vmatpush1.msra.mxu0 %v4213
    %4294 = vmatprep.subr.mxu0 0.0
    %4295 = vmatpush1.msra.mxu0 %v4214
    %4296 = vmatprep.subr.mxu0 0.0
    %4297 = vmatpush1.msra.mxu0 %v4215
    %4298 = vmatprep.subr.mxu0 0.0
    %4299 = vmatpush1.msra.mxu0 %v4216
    %4300 = vmatprep.subr.mxu0 0.0
    %4301 = vmatpush1.msra.mxu0 %v4217
    %4302 = vmatprep.subr.mxu0 0.0
    %4303 = vmatpush1.msra.mxu0 %v4218
    %4304 = vmatprep.subr.mxu0 0.0
    %4305 = vmatpush1.msra.mxu0 %v4219
    %4306 = vmatprep.subr.mxu0 0.0
    %4307 = vmatpush1.msra.mxu0 0.0
    %4308 = vmatprep.subr.mxu0 0.0
    %4309 = vmatpush1.msra.mxu0 0.0
    %4310 = vmatprep.subr.mxu0 0.0
    %4311 = vmatpush1.msra.mxu0 0.0
    %4312 = vmatprep.subr.mxu0 0.0
    %4313 = vmatpush1.msra.mxu0 0.0
    %4314 = vmatprep.subr.mxu0 0.0
    %4315 = vmatpush1.msra.mxu0 0.0
    %4316 = vmatprep.subr.mxu0 0.0
    %4317 = vmatpush1.msra.mxu0 0.0
    %4318 = vmatprep.subr.mxu0 0.0
    %4319 = vmatpush1.msra.mxu0 0.0
    %4320 = vmatprep.subr.mxu0 0.0
    %4321 = vmatpush1.msra.mxu0 0.0
    %4322 = vmatprep.subr.mxu0 0.0
    %4323 = vmatpush1.msra.mxu0 0.0
    %4324 = vmatprep.subr.mxu0 0.0
    %4325 = vmatpush1.msra.mxu0 0.0
    %4326 = vmatprep.subr.mxu0 0.0
    %4327 = vmatpush1.msra.mxu0 0.0
    %4328 = vmatprep.subr.mxu0 0.0
    %4329 = vmatpush1.msra.mxu0 0.0
    %4330 = vmatprep.subr.mxu0 0.0
    %4331 = vmatpush1.msra.mxu0 0.0
    %4332 = vmatprep.subr.mxu0 0.0
    %4333 = vmatpush1.msra.mxu0 0.0
    %4334 = vmatprep.subr.mxu0 0.0
    %4335 = vmatpush1.msra.mxu0 0.0
    %4336 = vmatprep.subr.mxu0 0.0
    %4337 = vmatpush1.msra.mxu0 0.0
    %4338 = vmatprep.mubr.f32.mxu0 0.0
    %4339 = vmatmul.mubr.f32.gmra.mrb[0].mxu0 %v3590
    %v4340 = vpop.f32.mrb[0].mxu0
    %v4341 = vadd.f32 %v4262, %v4340
    %v4342 = vpop.f32.mrb[0].mxu0
    %4343 = vdwg.mxu0
    %4344 = vmatprep.subr.mxu0 0.0
    %4345 = vmatpush1.msra.mxu0 %v4220
    %4346 = vmatprep.subr.mxu0 0.0
    %4347 = vmatpush1.msra.mxu0 %v4221
    %4348 = vmatprep.subr.mxu0 0.0
    %4349 = vmatpush1.msra.mxu0 %v4222
    %4350 = vmatprep.subr.mxu0 0.0
    %4351 = vmatpush1.msra.mxu0 %v4223
    %4352 = vmatprep.subr.mxu0 0.0
    %4353 = vmatpush1.msra.mxu0 %v4224
    %4354 = vmatprep.subr.mxu0 0.0
    %4355 = vmatpush1.msra.mxu0 %v4225
    %4356 = vmatprep.subr.mxu0 0.0
    %4357 = vmatpush1.msra.mxu0 %v4226
    %4358 = vmatprep.subr.mxu0 0.0
    %4359 = vmatpush1.msra.mxu0 %v4227
    %4360 = vmatprep.subr.mxu0 0.0
    %4361 = vmatpush1.msra.mxu0 %v4228
    %4362 = vmatprep.subr.mxu0 0.0
    %4363 = vmatpush1.msra.mxu0 %v4229
    %4364 = vmatprep.subr.mxu0 0.0
    %4365 = vmatpush1.msra.mxu0 %v4230
    %4366 = vmatprep.subr.mxu0 0.0
    %4367 = vmatpush1.msra.mxu0 %v4231
    %4368 = vmatprep.subr.mxu0 0.0
    %4369 = vmatpush1.msra.mxu0 %v4232
    %4370 = vmatprep.subr.mxu0 0.0
    %4371 = vmatpush1.msra.mxu0 %v4233
    %4372 = vmatprep.subr.mxu0 0.0
    %4373 = vmatpush1.msra.mxu0 %v4234
    %4374 = vmatprep.subr.mxu0 0.0
    %4375 = vmatpush1.msra.mxu0 %v4235
    %4376 = vmatprep.subr.mxu0 0.0
    %4377 = vmatpush1.msra.mxu0 0.0
    %4378 = vmatprep.subr.mxu0 0.0
    %4379 = vmatpush1.msra.mxu0 0.0
    %4380 = vmatprep.subr.mxu0 0.0
    %4381 = vmatpush1.msra.mxu0 0.0
    %4382 = vmatprep.subr.mxu0 0.0
    %4383 = vmatpush1.msra.mxu0 0.0
    %4384 = vmatprep.subr.mxu0 0.0
    %4385 = vmatpush1.msra.mxu0 0.0
    %4386 = vmatprep.subr.mxu0 0.0
    %4387 = vmatpush1.msra.mxu0 0.0
    %4388 = vmatprep.subr.mxu0 0.0
    %4389 = vmatpush1.msra.mxu0 0.0
    %4390 = vmatprep.subr.mxu0 0.0
    %4391 = vmatpush1.msra.mxu0 0.0
    %4392 = vmatprep.subr.mxu0 0.0
    %4393 = vmatpush1.msra.mxu0 0.0
    %4394 = vmatprep.subr.mxu0 0.0
    %4395 = vmatpush1.msra.mxu0 0.0
    %4396 = vmatprep.subr.mxu0 0.0
    %4397 = vmatpush1.msra.mxu0 0.0
    %4398 = vmatprep.subr.mxu0 0.0
    %4399 = vmatpush1.msra.mxu0 0.0
    %4400 = vmatprep.subr.mxu0 0.0
    %4401 = vmatpush1.msra.mxu0 0.0
    %4402 = vmatprep.subr.mxu0 0.0
    %4403 = vmatpush1.msra.mxu0 0.0
    %4404 = vmatprep.subr.mxu0 0.0
    %4405 = vmatpush1.msra.mxu0 0.0
    %4406 = vmatprep.subr.mxu0 0.0
    %4407 = vmatpush1.msra.mxu0 0.0
    %4408 = vmatprep.mubr.f32.mxu0 0.0
    %4409 = vmatmul.mubr.f32.gmra.mrb[0].mxu0 %v3591
    %v4410 = vpop.f32.mrb[0].mxu0
    %v4411 = vadd.f32 %v4266, %v4410
    %v4412 = vpop.f32.mrb[0].mxu0
    %4413 = vdwg.mxu0
    %4414 = vmatprep.subr.mxu0 0.0
    %4415 = vmatpush1.msra.mxu0 %v4236
    %4416 = vmatprep.subr.mxu0 0.0
    %4417 = vmatpush1.msra.mxu0 %v4237
    %4418 = vmatprep.subr.mxu0 0.0
    %4419 = vmatpush1.msra.mxu0 %v4238
    %4420 = vmatprep.subr.mxu0 0.0
    %4421 = vmatpush1.msra.mxu0 %v4239
    %4422 = vmatprep.subr.mxu0 0.0
    %4423 = vmatpush1.msra.mxu0 %v4240
    %4424 = vmatprep.subr.mxu0 0.0
    %4425 = vmatpush1.msra.mxu0 %v4241
    %4426 = vmatprep.subr.mxu0 0.0
    %4427 = vmatpush1.msra.mxu0 %v4242
    %4428 = vmatprep.subr.mxu0 0.0
    %4429 = vmatpush1.msra.mxu0 %v4243
    %4430 = vmatprep.subr.mxu0 0.0
    %4431 = vmatpush1.msra.mxu0 %v4244
    %4432 = vmatprep.subr.mxu0 0.0
    %4433 = vmatpush1.msra.mxu0 %v4245
    %4434 = vmatprep.subr.mxu0 0.0
    %4435 = vmatpush1.msra.mxu0 %v4246
    %4436 = vmatprep.subr.mxu0 0.0
    %4437 = vmatpush1.msra.mxu0 %v4247
    %4438 = vmatprep.subr.mxu0 0.0
    %4439 = vmatpush1.msra.mxu0 %v4248
    %4440 = vmatprep.subr.mxu0 0.0
    %4441 = vmatpush1.msra.mxu0 %v4249
    %4442 = vmatprep.subr.mxu0 0.0
    %4443 = vmatpush1.msra.mxu0 %v4250
    %4444 = vmatprep.subr.mxu0 0.0
    %4445 = vmatpush1.msra.mxu0 %v4251
    %4446 = vmatprep.subr.mxu0 0.0
    %4447 = vmatpush1.msra.mxu0 0.0
    %4448 = vmatprep.subr.mxu0 0.0
    %4449 = vmatpush1.msra.mxu0 0.0
    %4450 = vmatprep.subr.mxu0 0.0
    %4451 = vmatpush1.msra.mxu0 0.0
    %4452 = vmatprep.subr.mxu0 0.0
    %4453 = vmatpush1.msra.mxu0 0.0
    %4454 = vmatprep.subr.mxu0 0.0
    %4455 = vmatpush1.msra.mxu0 0.0
    %4456 = vmatprep.subr.mxu0 0.0
    %4457 = vmatpush1.msra.mxu0 0.0
    %4458 = vmatprep.subr.mxu0 0.0
    %4459 = vmatpush1.msra.mxu0 0.0
    %4460 = vmatprep.subr.mxu0 0.0
    %4461 = vmatpush1.msra.mxu0 0.0
    %4462 = vmatprep.subr.mxu0 0.0
    %4463 = vmatpush1.msra.mxu0 0.0
    %4464 = vmatprep.subr.mxu0 0.0
    %4465 = vmatpush1.msra.mxu0 0.0
    %4466 = vmatprep.subr.mxu0 0.0
    %4467 = vmatpush1.msra.mxu0 0.0
    %4468 = vmatprep.subr.mxu0 0.0
    %4469 = vmatpush1.msra.mxu0 0.0
    %4470 = vmatprep.subr.mxu0 0.0
    %4471 = vmatpush1.msra.mxu0 0.0
    %4472 = vmatprep.subr.mxu0 0.0
    %4473 = vmatpush1.msra.mxu0 0.0
    %4474 = vmatprep.subr.mxu0 0.0
    %4475 = vmatpush1.msra.mxu0 0.0
    %4476 = vmatprep.subr.mxu0 0.0
    %4477 = vmatpush1.msra.mxu0 0.0
    %4478 = vmatprep.mubr.f32.mxu0 0.0
    %4479 = vmatmul.mubr.f32.gmra.mrb[0].mxu0 %v3592
    %v4480 = vpop.f32.mrb[0].mxu0
    %v4481 = vadd.f32 %v4270, %v4480
    %v4482 = vpop.f32.mrb[0].mxu0
    %4483 = vdwg.mxu0
    %s4484 = scalar_lea.vmem %s14, 480
    %v4485 = vld [vmem:[%s4484] sm:$0xff]
    %v4486 = vld [vmem:[%s4484 + $0x8] sm:$0xff]
    %v4487 = vld [vmem:[%s4484 + $0x10] sm:$0xff]
    %v4488 = vld [vmem:[%s4484 + $0x18] sm:$0xff]
    %v4489 = vld [vmem:[%s4484 + $0x20] sm:$0xff]
    %v4490 = vld [vmem:[%s4484 + $0x28] sm:$0xff]
    %v4491 = vld [vmem:[%s4484 + $0x30] sm:$0xff]
    %v4492 = vld [vmem:[%s4484 + $0x38] sm:$0xff]
    %v4493 = vld [vmem:[%s4484 + $0x40] sm:$0xff]
    %v4494 = vld [vmem:[%s4484 + $0x48] sm:$0xff]
    %v4495 = vld [vmem:[%s4484 + $0x50] sm:$0xff]
    %v4496 = vld [vmem:[%s4484 + $0x58] sm:$0xff]
    %s4497 = scalar_lea.vmem %s16, 15
    %v4498 = vld [vmem:[%s4497] sm:$0x1]
    %v4499 = vld [vmem:[%s4497 + $0x1] sm:$0x1]
    %v4500 = vld [vmem:[%s4497 + $0x2] sm:$0x1]
    %v4504 = vlaneseq
    %v4505 = vshrl.u32 %v4504, 7
    %v4506 = vsub.s32 0, %v4505
    %v4507 = vrot.slane %v4498, %v4506
    %v4508 = vlaneseq
    %v4509 = vshrl.u32 %v4508, 7
    %v4510 = vsub.s32 0, %v4509
    %v4511 = vrot.slane %v4499, %v4510
    %v4512 = vlaneseq
    %v4513 = vshrl.u32 %v4512, 7
    %v4514 = vsub.s32 0, %v4513
    %v4515 = vrot.slane %v4500, %v4514
    %4520 = vrot.lane.b32.xlu0 %v2273, 96
    %v4521 = vpop.permute.xlu0 %4520
    %v4522 = vsel %vm1380, %v4521, 0
    %4524 = vmatprep.subr.mxu0 0.0
    %4525 = vmatpush1.msra.mxu0 %v4485
    %4526 = vmatprep.subr.mxu0 0.0
    %4527 = vmatpush1.msra.mxu0 %v4486
    %4528 = vmatprep.subr.mxu0 0.0
    %4529 = vmatpush1.msra.mxu0 %v4487
    %4530 = vmatprep.subr.mxu0 0.0
    %4531 = vmatpush1.msra.mxu0 %v4488
    %4532 = vmatprep.subr.mxu0 0.0
    %4533 = vmatpush1.msra.mxu0 0.0
    %4534 = vmatprep.subr.mxu0 0.0
    %4535 = vmatpush1.msra.mxu0 0.0
    %4536 = vmatprep.subr.mxu0 0.0
    %4537 = vmatpush1.msra.mxu0 0.0
    %4538 = vmatprep.subr.mxu0 0.0
    %4539 = vmatpush1.msra.mxu0 0.0
    %4540 = vmatprep.subr.mxu0 0.0
    %4541 = vmatpush1.msra.mxu0 0.0
    %4542 = vmatprep.subr.mxu0 0.0
    %4543 = vmatpush1.msra.mxu0 0.0
    %4544 = vmatprep.subr.mxu0 0.0
    %4545 = vmatpush1.msra.mxu0 0.0
    %4546 = vmatprep.subr.mxu0 0.0
    %4547 = vmatpush1.msra.mxu0 0.0
    %4548 = vmatprep.subr.mxu0 0.0
    %4549 = vmatpush1.msra.mxu0 0.0
    %4550 = vmatprep.subr.mxu0 0.0
    %4551 = vmatpush1.msra.mxu0 0.0
    %4552 = vmatprep.subr.mxu0 0.0
    %4553 = vmatpush1.msra.mxu0 0.0
    %4554 = vmatprep.subr.mxu0 0.0
    %4555 = vmatpush1.msra.mxu0 0.0
    %4556 = vmatprep.subr.mxu0 0.0
    %4557 = vmatpush1.msra.mxu0 0.0
    %4558 = vmatprep.subr.mxu0 0.0
    %4559 = vmatpush1.msra.mxu0 0.0
    %4560 = vmatprep.subr.mxu0 0.0
    %4561 = vmatpush1.msra.mxu0 0.0
    %4562 = vmatprep.subr.mxu0 0.0
    %4563 = vmatpush1.msra.mxu0 0.0
    %4564 = vmatprep.subr.mxu0 0.0
    %4565 = vmatpush1.msra.mxu0 0.0
    %4566 = vmatprep.subr.mxu0 0.0
    %4567 = vmatpush1.msra.mxu0 0.0
    %4568 = vmatprep.subr.mxu0 0.0
    %4569 = vmatpush1.msra.mxu0 0.0
    %4570 = vmatprep.subr.mxu0 0.0
    %4571 = vmatpush1.msra.mxu0 0.0
    %4572 = vmatprep.subr.mxu0 0.0
    %4573 = vmatpush1.msra.mxu0 0.0
    %4574 = vmatprep.subr.mxu0 0.0
    %4575 = vmatpush1.msra.mxu0 0.0
    %4576 = vmatprep.subr.mxu0 0.0
    %4577 = vmatpush1.msra.mxu0 0.0
    %4578 = vmatprep.subr.mxu0 0.0
    %4579 = vmatpush1.msra.mxu0 0.0
    %4580 = vmatprep.subr.mxu0 0.0
    %4581 = vmatpush1.msra.mxu0 0.0
    %4582 = vmatprep.subr.mxu0 0.0
    %4583 = vmatpush1.msra.mxu0 0.0
    %4584 = vmatprep.subr.mxu0 0.0
    %4585 = vmatpush1.msra.mxu0 0.0
    %4586 = vmatprep.subr.mxu0 0.0
    %4587 = vmatpush1.msra.mxu0 0.0
    %4588 = vmatprep.mubr.f32.mxu0 0.0
    %4589 = vmatmul.mubr.f32.gmra.mrb[0].mxu0 %v4522
    %v4590 = vpop.f32.mrb[0].mxu0
    %v4591 = vadd.f32 %v4507, %v4590
    %v4592 = vpop.f32.mrb[0].mxu0
    %4593 = vdwg.mxu0
    %4595 = vrot.lane.b32.xlu0 %v2274, 96
    %v4596 = vpop.permute.xlu0 %4595
    %v4597 = vsel %vm1380, %v4596, 0
    %4599 = vmatprep.subr.mxu0 0.0
    %4600 = vmatpush1.msra.mxu0 %v4489
    %4601 = vmatprep.subr.mxu0 0.0
    %4602 = vmatpush1.msra.mxu0 %v4490
    %4603 = vmatprep.subr.mxu0 0.0
    %4604 = vmatpush1.msra.mxu0 %v4491
    %4605 = vmatprep.subr.mxu0 0.0
    %4606 = vmatpush1.msra.mxu0 %v4492
    %4607 = vmatprep.subr.mxu0 0.0
    %4608 = vmatpush1.msra.mxu0 0.0
    %4609 = vmatprep.subr.mxu0 0.0
    %4610 = vmatpush1.msra.mxu0 0.0
    %4611 = vmatprep.subr.mxu0 0.0
    %4612 = vmatpush1.msra.mxu0 0.0
    %4613 = vmatprep.subr.mxu0 0.0
    %4614 = vmatpush1.msra.mxu0 0.0
    %4615 = vmatprep.subr.mxu0 0.0
    %4616 = vmatpush1.msra.mxu0 0.0
    %4617 = vmatprep.subr.mxu0 0.0
    %4618 = vmatpush1.msra.mxu0 0.0
    %4619 = vmatprep.subr.mxu0 0.0
    %4620 = vmatpush1.msra.mxu0 0.0
    %4621 = vmatprep.subr.mxu0 0.0
    %4622 = vmatpush1.msra.mxu0 0.0
    %4623 = vmatprep.subr.mxu0 0.0
    %4624 = vmatpush1.msra.mxu0 0.0
    %4625 = vmatprep.subr.mxu0 0.0
    %4626 = vmatpush1.msra.mxu0 0.0
    %4627 = vmatprep.subr.mxu0 0.0
    %4628 = vmatpush1.msra.mxu0 0.0
    %4629 = vmatprep.subr.mxu0 0.0
    %4630 = vmatpush1.msra.mxu0 0.0
    %4631 = vmatprep.subr.mxu0 0.0
    %4632 = vmatpush1.msra.mxu0 0.0
    %4633 = vmatprep.subr.mxu0 0.0
    %4634 = vmatpush1.msra.mxu0 0.0
    %4635 = vmatprep.subr.mxu0 0.0
    %4636 = vmatpush1.msra.mxu0 0.0
    %4637 = vmatprep.subr.mxu0 0.0
    %4638 = vmatpush1.msra.mxu0 0.0
    %4639 = vmatprep.subr.mxu0 0.0
    %4640 = vmatpush1.msra.mxu0 0.0
    %4641 = vmatprep.subr.mxu0 0.0
    %4642 = vmatpush1.msra.mxu0 0.0
    %4643 = vmatprep.subr.mxu0 0.0
    %4644 = vmatpush1.msra.mxu0 0.0
    %4645 = vmatprep.subr.mxu0 0.0
    %4646 = vmatpush1.msra.mxu0 0.0
    %4647 = vmatprep.subr.mxu0 0.0
    %4648 = vmatpush1.msra.mxu0 0.0
    %4649 = vmatprep.subr.mxu0 0.0
    %4650 = vmatpush1.msra.mxu0 0.0
    %4651 = vmatprep.subr.mxu0 0.0
    %4652 = vmatpush1.msra.mxu0 0.0
    %4653 = vmatprep.subr.mxu0 0.0
    %4654 = vmatpush1.msra.mxu0 0.0
    %4655 = vmatprep.subr.mxu0 0.0
    %4656 = vmatpush1.msra.mxu0 0.0
    %4657 = vmatprep.subr.mxu0 0.0
    %4658 = vmatpush1.msra.mxu0 0.0
    %4659 = vmatprep.subr.mxu0 0.0
    %4660 = vmatpush1.msra.mxu0 0.0
    %4661 = vmatprep.subr.mxu0 0.0
    %4662 = vmatpush1.msra.mxu0 0.0
    %4663 = vmatprep.mubr.f32.mxu0 0.0
    %4664 = vmatmul.mubr.f32.gmra.mrb[0].mxu0 %v4597
    %v4665 = vpop.f32.mrb[0].mxu0
    %v4666 = vadd.f32 %v4511, %v4665
    %v4667 = vpop.f32.mrb[0].mxu0
    %4668 = vdwg.mxu0
    %4670 = vrot.lane.b32.xlu0 %v2275, 96
    %v4671 = vpop.permute.xlu0 %4670
    %v4672 = vsel %vm1380, %v4671, 0
    %4674 = vmatprep.subr.mxu0 0.0
    %4675 = vmatpush1.msra.mxu0 %v4493
    %4676 = vmatprep.subr.mxu0 0.0
    %4677 = vmatpush1.msra.mxu0 %v4494
    %4678 = vmatprep.subr.mxu0 0.0
    %4679 = vmatpush1.msra.mxu0 %v4495
    %4680 = vmatprep.subr.mxu0 0.0
    %4681 = vmatpush1.msra.mxu0 %v4496
    %4682 = vmatprep.subr.mxu0 0.0
    %4683 = vmatpush1.msra.mxu0 0.0
    %4684 = vmatprep.subr.mxu0 0.0
    %4685 = vmatpush1.msra.mxu0 0.0
    %4686 = vmatprep.subr.mxu0 0.0
    %4687 = vmatpush1.msra.mxu0 0.0
    %4688 = vmatprep.subr.mxu0 0.0
    %4689 = vmatpush1.msra.mxu0 0.0
    %4690 = vmatprep.subr.mxu0 0.0
    %4691 = vmatpush1.msra.mxu0 0.0
    %4692 = vmatprep.subr.mxu0 0.0
    %4693 = vmatpush1.msra.mxu0 0.0
    %4694 = vmatprep.subr.mxu0 0.0
    %4695 = vmatpush1.msra.mxu0 0.0
    %4696 = vmatprep.subr.mxu0 0.0
    %4697 = vmatpush1.msra.mxu0 0.0
    %4698 = vmatprep.subr.mxu0 0.0
    %4699 = vmatpush1.msra.mxu0 0.0
    %4700 = vmatprep.subr.mxu0 0.0
    %4701 = vmatpush1.msra.mxu0 0.0
    %4702 = vmatprep.subr.mxu0 0.0
    %4703 = vmatpush1.msra.mxu0 0.0
    %4704 = vmatprep.subr.mxu0 0.0
    %4705 = vmatpush1.msra.mxu0 0.0
    %4706 = vmatprep.subr.mxu0 0.0
    %4707 = vmatpush1.msra.mxu0 0.0
    %4708 = vmatprep.subr.mxu0 0.0
    %4709 = vmatpush1.msra.mxu0 0.0
    %4710 = vmatprep.subr.mxu0 0.0
    %4711 = vmatpush1.msra.mxu0 0.0
    %4712 = vmatprep.subr.mxu0 0.0
    %4713 = vmatpush1.msra.mxu0 0.0
    %4714 = vmatprep.subr.mxu0 0.0
    %4715 = vmatpush1.msra.mxu0 0.0
    %4716 = vmatprep.subr.mxu0 0.0
    %4717 = vmatpush1.msra.mxu0 0.0
    %4718 = vmatprep.subr.mxu0 0.0
    %4719 = vmatpush1.msra.mxu0 0.0
    %4720 = vmatprep.subr.mxu0 0.0
    %4721 = vmatpush1.msra.mxu0 0.0
    %4722 = vmatprep.subr.mxu0 0.0
    %4723 = vmatpush1.msra.mxu0 0.0
    %4724 = vmatprep.subr.mxu0 0.0
    %4725 = vmatpush1.msra.mxu0 0.0
    %4726 = vmatprep.subr.mxu0 0.0
    %4727 = vmatpush1.msra.mxu0 0.0
    %4728 = vmatprep.subr.mxu0 0.0
    %4729 = vmatpush1.msra.mxu0 0.0
    %4730 = vmatprep.subr.mxu0 0.0
    %4731 = vmatpush1.msra.mxu0 0.0
    %4732 = vmatprep.subr.mxu0 0.0
    %4733 = vmatpush1.msra.mxu0 0.0
    %4734 = vmatprep.subr.mxu0 0.0
    %4735 = vmatpush1.msra.mxu0 0.0
    %4736 = vmatprep.subr.mxu0 0.0
    %4737 = vmatpush1.msra.mxu0 0.0
    %4738 = vmatprep.mubr.f32.mxu0 0.0
    %4739 = vmatmul.mubr.f32.gmra.mrb[0].mxu0 %v4672
    %v4740 = vpop.f32.mrb[0].mxu0
    %v4741 = vadd.f32 %v4515, %v4740
    %v4742 = vpop.f32.mrb[0].mxu0
    %4743 = vdwg.mxu0
    %v4744 = vadd.f32 %v4341, %v4591
    %v4745 = vadd.f32 %v4411, %v4666
    %v4746 = vadd.f32 %v4481, %v4741
    %v4747 = vxor.u32 %v4744, 2147483648
    %v4748 = vxor.u32 %v4745, 2147483648
    %v4749 = vxor.u32 %v4746, 2147483648
    %v4750 = vmul.f32 %v4747, 1.442695
    %v4751 = vpow.pop %v4750
    %v4752 = vmul.f32 %v4748, 1.442695
    %v4753 = vpow.pop %v4752
    %v4754 = vmul.f32 %v4749, 1.442695
    %v4755 = vpow.pop %v4754
    %v4756 = vadd.f32 %v4751, 1.0
    %v4757 = vadd.f32 %v4753, 1.0
    %v4758 = vadd.f32 %v4755, 1.0
    %v4759 = vrcp.pop %v4756
    %v4760 = vmul.f32 1.0, %v4759
    %v4761 = vrcp.pop %v4757
    %v4762 = vmul.f32 1.0, %v4761
    %v4763 = vrcp.pop %v4758
    %v4764 = vmul.f32 1.0, %v4763
    %4768 = vrot.lane.b32.xlu0 %v4591, 64
    %v4769 = vpop.permute.xlu0 %4768
    %4770 = vrot.lane.b32.xlu0 %v4666, 64
    %v4771 = vpop.permute.xlu0 %4770
    %4772 = vrot.lane.b32.xlu0 %v4741, 64
    %v4773 = vpop.permute.xlu0 %4772
    %v4777 = vmul.f32 %v4760, %v4769
    %v4778 = vmul.f32 %v4762, %v4771
    %v4779 = vmul.f32 %v4764, %v4773
    %4783 = vrot.lane.b32.xlu0 %v4777, 64
    %v4784 = vpop.permute.xlu0 %4783
    %4785 = vrot.lane.b32.xlu0 %v4778, 64
    %v4786 = vpop.permute.xlu0 %4785
    %4787 = vrot.lane.b32.xlu0 %v4779, 64
    %v4788 = vpop.permute.xlu0 %4787
    %v4792 = vadd.f32 %v4341, %v4784
    %v4793 = vadd.f32 %v4411, %v4786
    %v4794 = vadd.f32 %v4481, %v4788
    %v4795 = vtanh.pop %v4792
    %v4796 = vtanh.pop %v4793
    %v4797 = vtanh.pop %v4794
    %v4798 = vsub.f32 1.0, %v4760
    %v4799 = vsub.f32 1.0, %v4762
    %v4800 = vsub.f32 1.0, %v4764
    %4804 = vrot.lane.b32.xlu0 %v4795, 96
    %v4805 = vpop.permute.xlu0 %4804
    %4806 = vrot.lane.b32.xlu0 %v4796, 96
    %v4807 = vpop.permute.xlu0 %4806
    %4808 = vrot.lane.b32.xlu0 %v4797, 96
    %v4809 = vpop.permute.xlu0 %4808
    %v4813 = vmul.f32 %v4798, %v4805
    %v4814 = vmul.f32 %v4799, %v4807
    %v4815 = vmul.f32 %v4800, %v4809
    %v4816 = vmul.f32 %v4760, %v2273
    %v4817 = vmul.f32 %v4762, %v2274
    %v4818 = vmul.f32 %v4764, %v2275
    %v4819 = vadd.f32 %v4813, %v4816
    %v4820 = vadd.f32 %v4814, %v4817
    %v4821 = vadd.f32 %v4815, %v4818
    %4825 = vrot.lane.b32.xlu0 %v4200, 96
    %v4826 = vpop.permute.xlu0 %4825
    %4827 = vrot.lane.b32.xlu0 %v4201, 96
    %v4828 = vpop.permute.xlu0 %4827
    %4829 = vrot.lane.b32.xlu0 %v4202, 96
    %v4830 = vpop.permute.xlu0 %4829
    %v4834 = vsel %vm1380, %v4826, %v4819
    %v4835 = vsel %vm1380, %v4828, %v4820
    %v4836 = vsel %vm1380, %v4830, %v4821
    %s4837 = scalar_lea.vmem %s13, 384
    %v4838 = vld [vmem:[%s4837] sm:$0xff]
    %v4839 = vld [vmem:[%s4837 + $0x8] sm:$0xff]
    %v4840 = vld [vmem:[%s4837 + $0x10] sm:$0xff]
    %v4841 = vld [vmem:[%s4837 + $0x18] sm:$0xff]
    %v4842 = vld [vmem:[%s4837 + $0x20] sm:$0xff]
    %v4843 = vld [vmem:[%s4837 + $0x28] sm:$0xff]
    %v4844 = vld [vmem:[%s4837 + $0x30] sm:$0xff]
    %v4845 = vld [vmem:[%s4837 + $0x38] sm:$0xff]
    %v4846 = vld [vmem:[%s4837 + $0x40] sm:$0xff]
    %v4847 = vld [vmem:[%s4837 + $0x48] sm:$0xff]
    %v4848 = vld [vmem:[%s4837 + $0x50] sm:$0xff]
    %v4849 = vld [vmem:[%s4837 + $0x58] sm:$0xff]
    %v4850 = vld [vmem:[%s4837 + $0x60] sm:$0xff]
    %v4851 = vld [vmem:[%s4837 + $0x68] sm:$0xff]
    %v4852 = vld [vmem:[%s4837 + $0x70] sm:$0xff]
    %v4853 = vld [vmem:[%s4837 + $0x78] sm:$0xff]
    %v4854 = vld [vmem:[%s4837 + $0x80] sm:$0xff]
    %v4855 = vld [vmem:[%s4837 + $0x88] sm:$0xff]
    %v4856 = vld [vmem:[%s4837 + $0x90] sm:$0xff]
    %v4857 = vld [vmem:[%s4837 + $0x98] sm:$0xff]
    %v4858 = vld [vmem:[%s4837 + $0xa0] sm:$0xff]
    %v4859 = vld [vmem:[%s4837 + $0xa8] sm:$0xff]
    %v4860 = vld [vmem:[%s4837 + $0xb0] sm:$0xff]
    %v4861 = vld [vmem:[%s4837 + $0xb8] sm:$0xff]
    %s4862 = scalar_lea.vmem %s15, 18
    %v4863 = vld [vmem:[%s4862] sm:$0x1]
    %v4864 = vld [vmem:[%s4862 + $0x1] sm:$0x1]
    %v4865 = vld [vmem:[%s4862 + $0x2] sm:$0x1]
    %v4869 = vlaneseq
    %v4870 = vshrl.u32 %v4869, 7
    %v4871 = vsub.s32 0, %v4870
    %v4872 = vrot.slane %v4863, %v4871
    %v4873 = vlaneseq
    %v4874 = vshrl.u32 %v4873, 7
    %v4875 = vsub.s32 0, %v4874
    %v4876 = vrot.slane %v4864, %v4875
    %v4877 = vlaneseq
    %v4878 = vshrl.u32 %v4877, 7
    %v4879 = vsub.s32 0, %v4878
    %v4880 = vrot.slane %v4865, %v4879
    %v4885 = vsel %vm471, %v4834, 0
    %4887 = vmatprep.subr.mxu0 0.0
    %4888 = vmatpush1.msra.mxu0 %v4838
    %4889 = vmatprep.subr.mxu0 0.0
    %4890 = vmatpush1.msra.mxu0 %v4839
    %4891 = vmatprep.subr.mxu0 0.0
    %4892 = vmatpush1.msra.mxu0 %v4840
    %4893 = vmatprep.subr.mxu0 0.0
    %4894 = vmatpush1.msra.mxu0 %v4841
    %4895 = vmatprep.subr.mxu0 0.0
    %4896 = vmatpush1.msra.mxu0 %v4842
    %4897 = vmatprep.subr.mxu0 0.0
    %4898 = vmatpush1.msra.mxu0 %v4843
    %4899 = vmatprep.subr.mxu0 0.0
    %4900 = vmatpush1.msra.mxu0 %v4844
    %4901 = vmatprep.subr.mxu0 0.0
    %4902 = vmatpush1.msra.mxu0 %v4845
    %4903 = vmatprep.subr.mxu0 0.0
    %4904 = vmatpush1.msra.mxu0 0.0
    %4905 = vmatprep.subr.mxu0 0.0
    %4906 = vmatpush1.msra.mxu0 0.0
    %4907 = vmatprep.subr.mxu0 0.0
    %4908 = vmatpush1.msra.mxu0 0.0
    %4909 = vmatprep.subr.mxu0 0.0
    %4910 = vmatpush1.msra.mxu0 0.0
    %4911 = vmatprep.subr.mxu0 0.0
    %4912 = vmatpush1.msra.mxu0 0.0
    %4913 = vmatprep.subr.mxu0 0.0
    %4914 = vmatpush1.msra.mxu0 0.0
    %4915 = vmatprep.subr.mxu0 0.0
    %4916 = vmatpush1.msra.mxu0 0.0
    %4917 = vmatprep.subr.mxu0 0.0
    %4918 = vmatpush1.msra.mxu0 0.0
    %4919 = vmatprep.subr.mxu0 0.0
    %4920 = vmatpush1.msra.mxu0 0.0
    %4921 = vmatprep.subr.mxu0 0.0
    %4922 = vmatpush1.msra.mxu0 0.0
    %4923 = vmatprep.subr.mxu0 0.0
    %4924 = vmatpush1.msra.mxu0 0.0
    %4925 = vmatprep.subr.mxu0 0.0
    %4926 = vmatpush1.msra.mxu0 0.0
    %4927 = vmatprep.subr.mxu0 0.0
    %4928 = vmatpush1.msra.mxu0 0.0
    %4929 = vmatprep.subr.mxu0 0.0
    %4930 = vmatpush1.msra.mxu0 0.0
    %4931 = vmatprep.subr.mxu0 0.0
    %4932 = vmatpush1.msra.mxu0 0.0
    %4933 = vmatprep.subr.mxu0 0.0
    %4934 = vmatpush1.msra.mxu0 0.0
    %4935 = vmatprep.subr.mxu0 0.0
    %4936 = vmatpush1.msra.mxu0 0.0
    %4937 = vmatprep.subr.mxu0 0.0
    %4938 = vmatpush1.msra.mxu0 0.0
    %4939 = vmatprep.subr.mxu0 0.0
    %4940 = vmatpush1.msra.mxu0 0.0
    %4941 = vmatprep.subr.mxu0 0.0
    %4942 = vmatpush1.msra.mxu0 0.0
    %4943 = vmatprep.subr.mxu0 0.0
    %4944 = vmatpush1.msra.mxu0 0.0
    %4945 = vmatprep.subr.mxu0 0.0
    %4946 = vmatpush1.msra.mxu0 0.0
    %4947 = vmatprep.subr.mxu0 0.0
    %4948 = vmatpush1.msra.mxu0 0.0
    %4949 = vmatprep.subr.mxu0 0.0
    %4950 = vmatpush1.msra.mxu0 0.0
    %4951 = vmatprep.mubr.f32.mxu0 0.0
    %4952 = vmatmul.mubr.f32.gmra.mrb[0].mxu0 %v4885
    %v4953 = vpop.f32.mrb[0].mxu0
    %v4954 = vadd.f32 %v4872, %v4953
    %v4955 = vpop.f32.mrb[0].mxu0
    %4956 = vdwg.mxu0
    %v4958 = vsel %vm471, %v4835, 0
    %4960 = vmatprep.subr.mxu0 0.0
    %4961 = vmatpush1.msra.mxu0 %v4846
    %4962 = vmatprep.subr.mxu0 0.0
    %4963 = vmatpush1.msra.mxu0 %v4847
    %4964 = vmatprep.subr.mxu0 0.0
    %4965 = vmatpush1.msra.mxu0 %v4848
    %4966 = vmatprep.subr.mxu0 0.0
    %4967 = vmatpush1.msra.mxu0 %v4849
    %4968 = vmatprep.subr.mxu0 0.0
    %4969 = vmatpush1.msra.mxu0 %v4850
    %4970 = vmatprep.subr.mxu0 0.0
    %4971 = vmatpush1.msra.mxu0 %v4851
    %4972 = vmatprep.subr.mxu0 0.0
    %4973 = vmatpush1.msra.mxu0 %v4852
    %4974 = vmatprep.subr.mxu0 0.0
    %4975 = vmatpush1.msra.mxu0 %v4853
    %4976 = vmatprep.subr.mxu0 0.0
    %4977 = vmatpush1.msra.mxu0 0.0
    %4978 = vmatprep.subr.mxu0 0.0
    %4979 = vmatpush1.msra.mxu0 0.0
    %4980 = vmatprep.subr.mxu0 0.0
    %4981 = vmatpush1.msra.mxu0 0.0
    %4982 = vmatprep.subr.mxu0 0.0
    %4983 = vmatpush1.msra.mxu0 0.0
    %4984 = vmatprep.subr.mxu0 0.0
    %4985 = vmatpush1.msra.mxu0 0.0
    %4986 = vmatprep.subr.mxu0 0.0
    %4987 = vmatpush1.msra.mxu0 0.0
    %4988 = vmatprep.subr.mxu0 0.0
    %4989 = vmatpush1.msra.mxu0 0.0
    %4990 = vmatprep.subr.mxu0 0.0
    %4991 = vmatpush1.msra.mxu0 0.0
    %4992 = vmatprep.subr.mxu0 0.0
    %4993 = vmatpush1.msra.mxu0 0.0
    %4994 = vmatprep.subr.mxu0 0.0
    %4995 = vmatpush1.msra.mxu0 0.0
    %4996 = vmatprep.subr.mxu0 0.0
    %4997 = vmatpush1.msra.mxu0 0.0
    %4998 = vmatprep.subr.mxu0 0.0
    %4999 = vmatpush1.msra.mxu0 0.0
    %5000 = vmatprep.subr.mxu0 0.0
    %5001 = vmatpush1.msra.mxu0 0.0
    %5002 = vmatprep.subr.mxu0 0.0
    %5003 = vmatpush1.msra.mxu0 0.0
    %5004 = vmatprep.subr.mxu0 0.0
    %5005 = vmatpush1.msra.mxu0 0.0
    %5006 = vmatprep.subr.mxu0 0.0
    %5007 = vmatpush1.msra.mxu0 0.0
    %5008 = vmatprep.subr.mxu0 0.0
    %5009 = vmatpush1.msra.mxu0 0.0
    %5010 = vmatprep.subr.mxu0 0.0
    %5011 = vmatpush1.msra.mxu0 0.0
    %5012 = vmatprep.subr.mxu0 0.0
    %5013 = vmatpush1.msra.mxu0 0.0
    %5014 = vmatprep.subr.mxu0 0.0
    %5015 = vmatpush1.msra.mxu0 0.0
    %5016 = vmatprep.subr.mxu0 0.0
    %5017 = vmatpush1.msra.mxu0 0.0
    %5018 = vmatprep.subr.mxu0 0.0
    %5019 = vmatpush1.msra.mxu0 0.0
    %5020 = vmatprep.subr.mxu0 0.0
    %5021 = vmatpush1.msra.mxu0 0.0
    %5022 = vmatprep.subr.mxu0 0.0
    %5023 = vmatpush1.msra.mxu0 0.0
    %5024 = vmatprep.mubr.f32.mxu0 0.0
    %5025 = vmatmul.mubr.f32.gmra.mrb[0].mxu0 %v4958
    %v5026 = vpop.f32.mrb[0].mxu0
    %v5027 = vadd.f32 %v4876, %v5026
    %v5028 = vpop.f32.mrb[0].mxu0
    %5029 = vdwg.mxu0
    %v5031 = vsel %vm471, %v4836, 0
    %5033 = vmatprep.subr.mxu0 0.0
    %5034 = vmatpush1.msra.mxu0 %v4854
    %5035 = vmatprep.subr.mxu0 0.0
    %5036 = vmatpush1.msra.mxu0 %v4855
    %5037 = vmatprep.subr.mxu0 0.0
    %5038 = vmatpush1.msra.mxu0 %v4856
    %5039 = vmatprep.subr.mxu0 0.0
    %5040 = vmatpush1.msra.mxu0 %v4857
    %5041 = vmatprep.subr.mxu0 0.0
    %5042 = vmatpush1.msra.mxu0 %v4858
    %5043 = vmatprep.subr.mxu0 0.0
    %5044 = vmatpush1.msra.mxu0 %v4859
    %5045 = vmatprep.subr.mxu0 0.0
    %5046 = vmatpush1.msra.mxu0 %v4860
    %5047 = vmatprep.subr.mxu0 0.0
    %5048 = vmatpush1.msra.mxu0 %v4861
    %5049 = vmatprep.subr.mxu0 0.0
    %5050 = vmatpush1.msra.mxu0 0.0
    %5051 = vmatprep.subr.mxu0 0.0
    %5052 = vmatpush1.msra.mxu0 0.0
    %5053 = vmatprep.subr.mxu0 0.0
    %5054 = vmatpush1.msra.mxu0 0.0
    %5055 = vmatprep.subr.mxu0 0.0
    %5056 = vmatpush1.msra.mxu0 0.0
    %5057 = vmatprep.subr.mxu0 0.0
    %5058 = vmatpush1.msra.mxu0 0.0
    %5059 = vmatprep.subr.mxu0 0.0
    %5060 = vmatpush1.msra.mxu0 0.0
    %5061 = vmatprep.subr.mxu0 0.0
    %5062 = vmatpush1.msra.mxu0 0.0
    %5063 = vmatprep.subr.mxu0 0.0
    %5064 = vmatpush1.msra.mxu0 0.0
    %5065 = vmatprep.subr.mxu0 0.0
    %5066 = vmatpush1.msra.mxu0 0.0
    %5067 = vmatprep.subr.mxu0 0.0
    %5068 = vmatpush1.msra.mxu0 0.0
    %5069 = vmatprep.subr.mxu0 0.0
    %5070 = vmatpush1.msra.mxu0 0.0
    %5071 = vmatprep.subr.mxu0 0.0
    %5072 = vmatpush1.msra.mxu0 0.0
    %5073 = vmatprep.subr.mxu0 0.0
    %5074 = vmatpush1.msra.mxu0 0.0
    %5075 = vmatprep.subr.mxu0 0.0
    %5076 = vmatpush1.msra.mxu0 0.0
    %5077 = vmatprep.subr.mxu0 0.0
    %5078 = vmatpush1.msra.mxu0 0.0
    %5079 = vmatprep.subr.mxu0 0.0
    %5080 = vmatpush1.msra.mxu0 0.0
    %5081 = vmatprep.subr.mxu0 0.0
    %5082 = vmatpush1.msra.mxu0 0.0
    %5083 = vmatprep.subr.mxu0 0.0
    %5084 = vmatpush1.msra.mxu0 0.0
    %5085 = vmatprep.subr.mxu0 0.0
    %5086 = vmatpush1.msra.mxu0 0.0
    %5087 = vmatprep.subr.mxu0 0.0
    %5088 = vmatpush1.msra.mxu0 0.0
    %5089 = vmatprep.subr.mxu0 0.0
    %5090 = vmatpush1.msra.mxu0 0.0
    %5091 = vmatprep.subr.mxu0 0.0
    %5092 = vmatpush1.msra.mxu0 0.0
    %5093 = vmatprep.subr.mxu0 0.0
    %5094 = vmatpush1.msra.mxu0 0.0
    %5095 = vmatprep.subr.mxu0 0.0
    %5096 = vmatpush1.msra.mxu0 0.0
    %5097 = vmatprep.mubr.f32.mxu0 0.0
    %5098 = vmatmul.mubr.f32.gmra.mrb[0].mxu0 %v5031
    %v5099 = vpop.f32.mrb[0].mxu0
    %v5100 = vadd.f32 %v4880, %v5099
    %v5101 = vpop.f32.mrb[0].mxu0
    %5102 = vdwg.mxu0
    %s5103 = scalar_lea.vmem %s14, 576
    %v5104 = vld [vmem:[%s5103] sm:$0xff]
    %v5105 = vld [vmem:[%s5103 + $0x8] sm:$0xff]
    %v5106 = vld [vmem:[%s5103 + $0x10] sm:$0xff]
    %v5107 = vld [vmem:[%s5103 + $0x18] sm:$0xff]
    %v5108 = vld [vmem:[%s5103 + $0x20] sm:$0xff]
    %v5109 = vld [vmem:[%s5103 + $0x28] sm:$0xff]
    %v5110 = vld [vmem:[%s5103 + $0x30] sm:$0xff]
    %v5111 = vld [vmem:[%s5103 + $0x38] sm:$0xff]
    %v5112 = vld [vmem:[%s5103 + $0x40] sm:$0xff]
    %v5113 = vld [vmem:[%s5103 + $0x48] sm:$0xff]
    %v5114 = vld [vmem:[%s5103 + $0x50] sm:$0xff]
    %v5115 = vld [vmem:[%s5103 + $0x58] sm:$0xff]
    %s5116 = scalar_lea.vmem %s16, 18
    %v5117 = vld [vmem:[%s5116] sm:$0x1]
    %v5118 = vld [vmem:[%s5116 + $0x1] sm:$0x1]
    %v5119 = vld [vmem:[%s5116 + $0x2] sm:$0x1]
    %v5123 = vlaneseq
    %v5124 = vshrl.u32 %v5123, 7
    %v5125 = vsub.s32 0, %v5124
    %v5126 = vrot.slane %v5117, %v5125
    %v5127 = vlaneseq
    %v5128 = vshrl.u32 %v5127, 7
    %v5129 = vsub.s32 0, %v5128
    %v5130 = vrot.slane %v5118, %v5129
    %v5131 = vlaneseq
    %v5132 = vshrl.u32 %v5131, 7
    %v5133 = vsub.s32 0, %v5132
    %v5134 = vrot.slane %v5119, %v5133
    %v5138 = vsel %vm1380, %v3463, 0
    %5140 = vmatprep.subr.mxu0 0.0
    %5141 = vmatpush1.msra.mxu0 %v5104
    %5142 = vmatprep.subr.mxu0 0.0
    %5143 = vmatpush1.msra.mxu0 %v5105
    %5144 = vmatprep.subr.mxu0 0.0
    %5145 = vmatpush1.msra.mxu0 %v5106
    %5146 = vmatprep.subr.mxu0 0.0
    %5147 = vmatpush1.msra.mxu0 %v5107
    %5148 = vmatprep.subr.mxu0 0.0
    %5149 = vmatpush1.msra.mxu0 0.0
    %5150 = vmatprep.subr.mxu0 0.0
    %5151 = vmatpush1.msra.mxu0 0.0
    %5152 = vmatprep.subr.mxu0 0.0
    %5153 = vmatpush1.msra.mxu0 0.0
    %5154 = vmatprep.subr.mxu0 0.0
    %5155 = vmatpush1.msra.mxu0 0.0
    %5156 = vmatprep.subr.mxu0 0.0
    %5157 = vmatpush1.msra.mxu0 0.0
    %5158 = vmatprep.subr.mxu0 0.0
    %5159 = vmatpush1.msra.mxu0 0.0
    %5160 = vmatprep.subr.mxu0 0.0
    %5161 = vmatpush1.msra.mxu0 0.0
    %5162 = vmatprep.subr.mxu0 0.0
    %5163 = vmatpush1.msra.mxu0 0.0
    %5164 = vmatprep.subr.mxu0 0.0
    %5165 = vmatpush1.msra.mxu0 0.0
    %5166 = vmatprep.subr.mxu0 0.0
    %5167 = vmatpush1.msra.mxu0 0.0
    %5168 = vmatprep.subr.mxu0 0.0
    %5169 = vmatpush1.msra.mxu0 0.0
    %5170 = vmatprep.subr.mxu0 0.0
    %5171 = vmatpush1.msra.mxu0 0.0
    %5172 = vmatprep.subr.mxu0 0.0
    %5173 = vmatpush1.msra.mxu0 0.0
    %5174 = vmatprep.subr.mxu0 0.0
    %5175 = vmatpush1.msra.mxu0 0.0
    %5176 = vmatprep.subr.mxu0 0.0
    %5177 = vmatpush1.msra.mxu0 0.0
    %5178 = vmatprep.subr.mxu0 0.0
    %5179 = vmatpush1.msra.mxu0 0.0
    %5180 = vmatprep.subr.mxu0 0.0
    %5181 = vmatpush1.msra.mxu0 0.0
    %5182 = vmatprep.subr.mxu0 0.0
    %5183 = vmatpush1.msra.mxu0 0.0
    %5184 = vmatprep.subr.mxu0 0.0
    %5185 = vmatpush1.msra.mxu0 0.0
    %5186 = vmatprep.subr.mxu0 0.0
    %5187 = vmatpush1.msra.mxu0 0.0
    %5188 = vmatprep.subr.mxu0 0.0
    %5189 = vmatpush1.msra.mxu0 0.0
    %5190 = vmatprep.subr.mxu0 0.0
    %5191 = vmatpush1.msra.mxu0 0.0
    %5192 = vmatprep.subr.mxu0 0.0
    %5193 = vmatpush1.msra.mxu0 0.0
    %5194 = vmatprep.subr.mxu0 0.0
    %5195 = vmatpush1.msra.mxu0 0.0
    %5196 = vmatprep.subr.mxu0 0.0
    %5197 = vmatpush1.msra.mxu0 0.0
    %5198 = vmatprep.subr.mxu0 0.0
    %5199 = vmatpush1.msra.mxu0 0.0
    %5200 = vmatprep.subr.mxu0 0.0
    %5201 = vmatpush1.msra.mxu0 0.0
    %5202 = vmatprep.subr.mxu0 0.0
    %5203 = vmatpush1.msra.mxu0 0.0
    %5204 = vmatprep.mubr.f32.mxu0 0.0
    %5205 = vmatmul.mubr.f32.gmra.mrb[0].mxu0 %v5138
    %v5206 = vpop.f32.mrb[0].mxu0
    %v5207 = vadd.f32 %v5126, %v5206
    %v5208 = vpop.f32.mrb[0].mxu0
    %5209 = vdwg.mxu0
    %v5210 = vsel %vm1380, %v3465, 0
    %5212 = vmatprep.subr.mxu0 0.0
    %5213 = vmatpush1.msra.mxu0 %v5108
    %5214 = vmatprep.subr.mxu0 0.0
    %5215 = vmatpush1.msra.mxu0 %v5109
    %5216 = vmatprep.subr.mxu0 0.0
    %5217 = vmatpush1.msra.mxu0 %v5110
    %5218 = vmatprep.subr.mxu0 0.0
    %5219 = vmatpush1.msra.mxu0 %v5111
    %5220 = vmatprep.subr.mxu0 0.0
    %5221 = vmatpush1.msra.mxu0 0.0
    %5222 = vmatprep.subr.mxu0 0.0
    %5223 = vmatpush1.msra.mxu0 0.0
    %5224 = vmatprep.subr.mxu0 0.0
    %5225 = vmatpush1.msra.mxu0 0.0
    %5226 = vmatprep.subr.mxu0 0.0
    %5227 = vmatpush1.msra.mxu0 0.0
    %5228 = vmatprep.subr.mxu0 0.0
    %5229 = vmatpush1.msra.mxu0 0.0
    %5230 = vmatprep.subr.mxu0 0.0
    %5231 = vmatpush1.msra.mxu0 0.0
    %5232 = vmatprep.subr.mxu0 0.0
    %5233 = vmatpush1.msra.mxu0 0.0
    %5234 = vmatprep.subr.mxu0 0.0
    %5235 = vmatpush1.msra.mxu0 0.0
    %5236 = vmatprep.subr.mxu0 0.0
    %5237 = vmatpush1.msra.mxu0 0.0
    %5238 = vmatprep.subr.mxu0 0.0
    %5239 = vmatpush1.msra.mxu0 0.0
    %5240 = vmatprep.subr.mxu0 0.0
    %5241 = vmatpush1.msra.mxu0 0.0
    %5242 = vmatprep.subr.mxu0 0.0
    %5243 = vmatpush1.msra.mxu0 0.0
    %5244 = vmatprep.subr.mxu0 0.0
    %5245 = vmatpush1.msra.mxu0 0.0
    %5246 = vmatprep.subr.mxu0 0.0
    %5247 = vmatpush1.msra.mxu0 0.0
    %5248 = vmatprep.subr.mxu0 0.0
    %5249 = vmatpush1.msra.mxu0 0.0
    %5250 = vmatprep.subr.mxu0 0.0
    %5251 = vmatpush1.msra.mxu0 0.0
    %5252 = vmatprep.subr.mxu0 0.0
    %5253 = vmatpush1.msra.mxu0 0.0
    %5254 = vmatprep.subr.mxu0 0.0
    %5255 = vmatpush1.msra.mxu0 0.0
    %5256 = vmatprep.subr.mxu0 0.0
    %5257 = vmatpush1.msra.mxu0 0.0
    %5258 = vmatprep.subr.mxu0 0.0
    %5259 = vmatpush1.msra.mxu0 0.0
    %5260 = vmatprep.subr.mxu0 0.0
    %5261 = vmatpush1.msra.mxu0 0.0
    %5262 = vmatprep.subr.mxu0 0.0
    %5263 = vmatpush1.msra.mxu0 0.0
    %5264 = vmatprep.subr.mxu0 0.0
    %5265 = vmatpush1.msra.mxu0 0.0
    %5266 = vmatprep.subr.mxu0 0.0
    %5267 = vmatpush1.msra.mxu0 0.0
    %5268 = vmatprep.subr.mxu0 0.0
    %5269 = vmatpush1.msra.mxu0 0.0
    %5270 = vmatprep.subr.mxu0 0.0
    %5271 = vmatpush1.msra.mxu0 0.0
    %5272 = vmatprep.subr.mxu0 0.0
    %5273 = vmatpush1.msra.mxu0 0.0
    %5274 = vmatprep.subr.mxu0 0.0
    %5275 = vmatpush1.msra.mxu0 0.0
    %5276 = vmatprep.mubr.f32.mxu0 0.0
    %5277 = vmatmul.mubr.f32.gmra.mrb[0].mxu0 %v5210
    %v5278 = vpop.f32.mrb[0].mxu0
    %v5279 = vadd.f32 %v5130, %v5278
    %v5280 = vpop.f32.mrb[0].mxu0
    %5281 = vdwg.mxu0
    %v5282 = vsel %vm1380, %v3467, 0
    %5284 = vmatprep.subr.mxu0 0.0
    %5285 = vmatpush1.msra.mxu0 %v5112
    %5286 = vmatprep.subr.mxu0 0.0
    %5287 = vmatpush1.msra.mxu0 %v5113
    %5288 = vmatprep.subr.mxu0 0.0
    %5289 = vmatpush1.msra.mxu0 %v5114
    %5290 = vmatprep.subr.mxu0 0.0
    %5291 = vmatpush1.msra.mxu0 %v5115
    %5292 = vmatprep.subr.mxu0 0.0
    %5293 = vmatpush1.msra.mxu0 0.0
    %5294 = vmatprep.subr.mxu0 0.0
    %5295 = vmatpush1.msra.mxu0 0.0
    %5296 = vmatprep.subr.mxu0 0.0
    %5297 = vmatpush1.msra.mxu0 0.0
    %5298 = vmatprep.subr.mxu0 0.0
    %5299 = vmatpush1.msra.mxu0 0.0
    %5300 = vmatprep.subr.mxu0 0.0
    %5301 = vmatpush1.msra.mxu0 0.0
    %5302 = vmatprep.subr.mxu0 0.0
    %5303 = vmatpush1.msra.mxu0 0.0
    %5304 = vmatprep.subr.mxu0 0.0
    %5305 = vmatpush1.msra.mxu0 0.0
    %5306 = vmatprep.subr.mxu0 0.0
    %5307 = vmatpush1.msra.mxu0 0.0
    %5308 = vmatprep.subr.mxu0 0.0
    %5309 = vmatpush1.msra.mxu0 0.0
    %5310 = vmatprep.subr.mxu0 0.0
    %5311 = vmatpush1.msra.mxu0 0.0
    %5312 = vmatprep.subr.mxu0 0.0
    %5313 = vmatpush1.msra.mxu0 0.0
    %5314 = vmatprep.subr.mxu0 0.0
    %5315 = vmatpush1.msra.mxu0 0.0
    %5316 = vmatprep.subr.mxu0 0.0
    %5317 = vmatpush1.msra.mxu0 0.0
    %5318 = vmatprep.subr.mxu0 0.0
    %5319 = vmatpush1.msra.mxu0 0.0
    %5320 = vmatprep.subr.mxu0 0.0
    %5321 = vmatpush1.msra.mxu0 0.0
    %5322 = vmatprep.subr.mxu0 0.0
    %5323 = vmatpush1.msra.mxu0 0.0
    %5324 = vmatprep.subr.mxu0 0.0
    %5325 = vmatpush1.msra.mxu0 0.0
    %5326 = vmatprep.subr.mxu0 0.0
    %5327 = vmatpush1.msra.mxu0 0.0
    %5328 = vmatprep.subr.mxu0 0.0
    %5329 = vmatpush1.msra.mxu0 0.0
    %5330 = vmatprep.subr.mxu0 0.0
    %5331 = vmatpush1.msra.mxu0 0.0
    %5332 = vmatprep.subr.mxu0 0.0
    %5333 = vmatpush1.msra.mxu0 0.0
    %5334 = vmatprep.subr.mxu0 0.0
    %5335 = vmatpush1.msra.mxu0 0.0
    %5336 = vmatprep.subr.mxu0 0.0
    %5337 = vmatpush1.msra.mxu0 0.0
    %5338 = vmatprep.subr.mxu0 0.0
    %5339 = vmatpush1.msra.mxu0 0.0
    %5340 = vmatprep.subr.mxu0 0.0
    %5341 = vmatpush1.msra.mxu0 0.0
    %5342 = vmatprep.subr.mxu0 0.0
    %5343 = vmatpush1.msra.mxu0 0.0
    %5344 = vmatprep.subr.mxu0 0.0
    %5345 = vmatpush1.msra.mxu0 0.0
    %5346 = vmatprep.subr.mxu0 0.0
    %5347 = vmatpush1.msra.mxu0 0.0
    %5348 = vmatprep.mubr.f32.mxu0 0.0
    %5349 = vmatmul.mubr.f32.gmra.mrb[0].mxu0 %v5282
    %v5350 = vpop.f32.mrb[0].mxu0
    %v5351 = vadd.f32 %v5134, %v5350
    %v5352 = vpop.f32.mrb[0].mxu0
    %5353 = vdwg.mxu0
    %v5354 = vadd.f32 %v4954, %v5207
    %v5355 = vadd.f32 %v5027, %v5279
    %v5356 = vadd.f32 %v5100, %v5351
    %v5357 = vxor.u32 %v5354, 2147483648
    %v5358 = vxor.u32 %v5355, 2147483648
    %v5359 = vxor.u32 %v5356, 2147483648
    %v5360 = vmul.f32 %v5357, 1.442695
    %v5361 = vpow.pop %v5360
    %v5362 = vmul.f32 %v5358, 1.442695
    %v5363 = vpow.pop %v5362
    %v5364 = vmul.f32 %v5359, 1.442695
    %v5365 = vpow.pop %v5364
    %v5366 = vadd.f32 %v5361, 1.0
    %v5367 = vadd.f32 %v5363, 1.0
    %v5368 = vadd.f32 %v5365, 1.0
    %v5369 = vrcp.pop %v5366
    %v5370 = vmul.f32 1.0, %v5369
    %v5371 = vrcp.pop %v5367
    %v5372 = vmul.f32 1.0, %v5371
    %v5373 = vrcp.pop %v5368
    %v5374 = vmul.f32 1.0, %v5373
    %5378 = vrot.lane.b32.xlu0 %v5207, 64
    %v5379 = vpop.permute.xlu0 %5378
    %5380 = vrot.lane.b32.xlu0 %v5279, 64
    %v5381 = vpop.permute.xlu0 %5380
    %5382 = vrot.lane.b32.xlu0 %v5351, 64
    %v5383 = vpop.permute.xlu0 %5382
    %v5387 = vmul.f32 %v5370, %v5379
    %v5388 = vmul.f32 %v5372, %v5381
    %v5389 = vmul.f32 %v5374, %v5383
    %5393 = vrot.lane.b32.xlu0 %v5387, 64
    %v5394 = vpop.permute.xlu0 %5393
    %5395 = vrot.lane.b32.xlu0 %v5388, 64
    %v5396 = vpop.permute.xlu0 %5395
    %5397 = vrot.lane.b32.xlu0 %v5389, 64
    %v5398 = vpop.permute.xlu0 %5397
    %v5402 = vadd.f32 %v4954, %v5394
    %v5403 = vadd.f32 %v5027, %v5396
    %v5404 = vadd.f32 %v5100, %v5398
    %v5405 = vtanh.pop %v5402
    %v5406 = vtanh.pop %v5403
    %v5407 = vtanh.pop %v5404
    %v5408 = vsub.f32 1.0, %v5370
    %v5409 = vsub.f32 1.0, %v5372
    %v5410 = vsub.f32 1.0, %v5374
    %5414 = vrot.lane.b32.xlu0 %v5405, 96
    %v5415 = vpop.permute.xlu0 %5414
    %5416 = vrot.lane.b32.xlu0 %v5406, 96
    %v5417 = vpop.permute.xlu0 %5416
    %5418 = vrot.lane.b32.xlu0 %v5407, 96
    %v5419 = vpop.permute.xlu0 %5418
    %v5423 = vmul.f32 %v5408, %v5415
    %v5424 = vmul.f32 %v5409, %v5417
    %v5425 = vmul.f32 %v5410, %v5419
    %v5426 = vmul.f32 %v5370, %v2876
    %v5427 = vmul.f32 %v5372, %v2877
    %v5428 = vmul.f32 %v5374, %v2878
    %v5429 = vadd.f32 %v5423, %v5426
    %v5430 = vadd.f32 %v5424, %v5427
    %v5431 = vadd.f32 %v5425, %v5428
    %s5432 = scalar_lea.vmem %s13, 576
    %v5433 = vld [vmem:[%s5432] sm:$0xff]
    %v5434 = vld [vmem:[%s5432 + $0x8] sm:$0xff]
    %v5435 = vld [vmem:[%s5432 + $0x10] sm:$0xff]
    %v5436 = vld [vmem:[%s5432 + $0x18] sm:$0xff]
    %v5437 = vld [vmem:[%s5432 + $0x20] sm:$0xff]
    %v5438 = vld [vmem:[%s5432 + $0x28] sm:$0xff]
    %v5439 = vld [vmem:[%s5432 + $0x30] sm:$0xff]
    %v5440 = vld [vmem:[%s5432 + $0x38] sm:$0xff]
    %v5441 = vld [vmem:[%s5432 + $0x40] sm:$0xff]
    %v5442 = vld [vmem:[%s5432 + $0x48] sm:$0xff]
    %v5443 = vld [vmem:[%s5432 + $0x50] sm:$0xff]
    %v5444 = vld [vmem:[%s5432 + $0x58] sm:$0xff]
    %v5445 = vld [vmem:[%s5432 + $0x60] sm:$0xff]
    %v5446 = vld [vmem:[%s5432 + $0x68] sm:$0xff]
    %v5447 = vld [vmem:[%s5432 + $0x70] sm:$0xff]
    %v5448 = vld [vmem:[%s5432 + $0x78] sm:$0xff]
    %v5449 = vld [vmem:[%s5432 + $0x80] sm:$0xff]
    %v5450 = vld [vmem:[%s5432 + $0x88] sm:$0xff]
    %v5451 = vld [vmem:[%s5432 + $0x90] sm:$0xff]
    %v5452 = vld [vmem:[%s5432 + $0x98] sm:$0xff]
    %v5453 = vld [vmem:[%s5432 + $0xa0] sm:$0xff]
    %v5454 = vld [vmem:[%s5432 + $0xa8] sm:$0xff]
    %v5455 = vld [vmem:[%s5432 + $0xb0] sm:$0xff]
    %v5456 = vld [vmem:[%s5432 + $0xb8] sm:$0xff]
    %s5457 = scalar_lea.vmem %s15, 21
    %v5458 = vld [vmem:[%s5457] sm:$0x1]
    %v5459 = vld [vmem:[%s5457 + $0x1] sm:$0x1]
    %v5460 = vld [vmem:[%s5457 + $0x2] sm:$0x1]
    %v5464 = vlaneseq
    %v5465 = vshrl.u32 %v5464, 7
    %v5466 = vsub.s32 0, %v5465
    %v5467 = vrot.slane %v5458, %v5466
    %v5468 = vlaneseq
    %v5469 = vshrl.u32 %v5468, 7
    %v5470 = vsub.s32 0, %v5469
    %v5471 = vrot.slane %v5459, %v5470
    %v5472 = vlaneseq
    %v5473 = vshrl.u32 %v5472, 7
    %v5474 = vsub.s32 0, %v5473
    %v5475 = vrot.slane %v5460, %v5474
    %5479 = vmatprep.subr.mxu0 0.0
    %5480 = vmatpush1.msra.mxu0 %v5433
    %5481 = vmatprep.subr.mxu0 0.0
    %5482 = vmatpush1.msra.mxu0 %v5434
    %5483 = vmatprep.subr.mxu0 0.0
    %5484 = vmatpush1.msra.mxu0 %v5435
    %5485 = vmatprep.subr.mxu0 0.0
    %5486 = vmatpush1.msra.mxu0 %v5436
    %5487 = vmatprep.subr.mxu0 0.0
    %5488 = vmatpush1.msra.mxu0 %v5437
    %5489 = vmatprep.subr.mxu0 0.0
    %5490 = vmatpush1.msra.mxu0 %v5438
    %5491 = vmatprep.subr.mxu0 0.0
    %5492 = vmatpush1.msra.mxu0 %v5439
    %5493 = vmatprep.subr.mxu0 0.0
    %5494 = vmatpush1.msra.mxu0 %v5440
    %5495 = vmatprep.subr.mxu0 0.0
    %5496 = vmatpush1.msra.mxu0 0.0
    %5497 = vmatprep.subr.mxu0 0.0
    %5498 = vmatpush1.msra.mxu0 0.0
    %5499 = vmatprep.subr.mxu0 0.0
    %5500 = vmatpush1.msra.mxu0 0.0
    %5501 = vmatprep.subr.mxu0 0.0
    %5502 = vmatpush1.msra.mxu0 0.0
    %5503 = vmatprep.subr.mxu0 0.0
    %5504 = vmatpush1.msra.mxu0 0.0
    %5505 = vmatprep.subr.mxu0 0.0
    %5506 = vmatpush1.msra.mxu0 0.0
    %5507 = vmatprep.subr.mxu0 0.0
    %5508 = vmatpush1.msra.mxu0 0.0
    %5509 = vmatprep.subr.mxu0 0.0
    %5510 = vmatpush1.msra.mxu0 0.0
    %5511 = vmatprep.subr.mxu0 0.0
    %5512 = vmatpush1.msra.mxu0 0.0
    %5513 = vmatprep.subr.mxu0 0.0
    %5514 = vmatpush1.msra.mxu0 0.0
    %5515 = vmatprep.subr.mxu0 0.0
    %5516 = vmatpush1.msra.mxu0 0.0
    %5517 = vmatprep.subr.mxu0 0.0
    %5518 = vmatpush1.msra.mxu0 0.0
    %5519 = vmatprep.subr.mxu0 0.0
    %5520 = vmatpush1.msra.mxu0 0.0
    %5521 = vmatprep.subr.mxu0 0.0
    %5522 = vmatpush1.msra.mxu0 0.0
    %5523 = vmatprep.subr.mxu0 0.0
    %5524 = vmatpush1.msra.mxu0 0.0
    %5525 = vmatprep.subr.mxu0 0.0
    %5526 = vmatpush1.msra.mxu0 0.0
    %5527 = vmatprep.subr.mxu0 0.0
    %5528 = vmatpush1.msra.mxu0 0.0
    %5529 = vmatprep.subr.mxu0 0.0
    %5530 = vmatpush1.msra.mxu0 0.0
    %5531 = vmatprep.subr.mxu0 0.0
    %5532 = vmatpush1.msra.mxu0 0.0
    %5533 = vmatprep.subr.mxu0 0.0
    %5534 = vmatpush1.msra.mxu0 0.0
    %5535 = vmatprep.subr.mxu0 0.0
    %5536 = vmatpush1.msra.mxu0 0.0
    %5537 = vmatprep.subr.mxu0 0.0
    %5538 = vmatpush1.msra.mxu0 0.0
    %5539 = vmatprep.subr.mxu0 0.0
    %5540 = vmatpush1.msra.mxu0 0.0
    %5541 = vmatprep.subr.mxu0 0.0
    %5542 = vmatpush1.msra.mxu0 0.0
    %5543 = vmatprep.mubr.f32.mxu0 0.0
    %5544 = vmatmul.mubr.f32.gmra.mrb[0].mxu0 %v4885
    %v5545 = vpop.f32.mrb[0].mxu0
    %v5546 = vadd.f32 %v5467, %v5545
    %v5547 = vpop.f32.mrb[0].mxu0
    %5548 = vdwg.mxu0
    %5549 = vmatprep.subr.mxu0 0.0
    %5550 = vmatpush1.msra.mxu0 %v5441
    %5551 = vmatprep.subr.mxu0 0.0
    %5552 = vmatpush1.msra.mxu0 %v5442
    %5553 = vmatprep.subr.mxu0 0.0
    %5554 = vmatpush1.msra.mxu0 %v5443
    %5555 = vmatprep.subr.mxu0 0.0
    %5556 = vmatpush1.msra.mxu0 %v5444
    %5557 = vmatprep.subr.mxu0 0.0
    %5558 = vmatpush1.msra.mxu0 %v5445
    %5559 = vmatprep.subr.mxu0 0.0
    %5560 = vmatpush1.msra.mxu0 %v5446
    %5561 = vmatprep.subr.mxu0 0.0
    %5562 = vmatpush1.msra.mxu0 %v5447
    %5563 = vmatprep.subr.mxu0 0.0
    %5564 = vmatpush1.msra.mxu0 %v5448
    %5565 = vmatprep.subr.mxu0 0.0
    %5566 = vmatpush1.msra.mxu0 0.0
    %5567 = vmatprep.subr.mxu0 0.0
    %5568 = vmatpush1.msra.mxu0 0.0
    %5569 = vmatprep.subr.mxu0 0.0
    %5570 = vmatpush1.msra.mxu0 0.0
    %5571 = vmatprep.subr.mxu0 0.0
    %5572 = vmatpush1.msra.mxu0 0.0
    %5573 = vmatprep.subr.mxu0 0.0
    %5574 = vmatpush1.msra.mxu0 0.0
    %5575 = vmatprep.subr.mxu0 0.0
    %5576 = vmatpush1.msra.mxu0 0.0
    %5577 = vmatprep.subr.mxu0 0.0
    %5578 = vmatpush1.msra.mxu0 0.0
    %5579 = vmatprep.subr.mxu0 0.0
    %5580 = vmatpush1.msra.mxu0 0.0
    %5581 = vmatprep.subr.mxu0 0.0
    %5582 = vmatpush1.msra.mxu0 0.0
    %5583 = vmatprep.subr.mxu0 0.0
    %5584 = vmatpush1.msra.mxu0 0.0
    %5585 = vmatprep.subr.mxu0 0.0
    %5586 = vmatpush1.msra.mxu0 0.0
    %5587 = vmatprep.subr.mxu0 0.0
    %5588 = vmatpush1.msra.mxu0 0.0
    %5589 = vmatprep.subr.mxu0 0.0
    %5590 = vmatpush1.msra.mxu0 0.0
    %5591 = vmatprep.subr.mxu0 0.0
    %5592 = vmatpush1.msra.mxu0 0.0
    %5593 = vmatprep.subr.mxu0 0.0
    %5594 = vmatpush1.msra.mxu0 0.0
    %5595 = vmatprep.subr.mxu0 0.0
    %5596 = vmatpush1.msra.mxu0 0.0
    %5597 = vmatprep.subr.mxu0 0.0
    %5598 = vmatpush1.msra.mxu0 0.0
    %5599 = vmatprep.subr.mxu0 0.0
    %5600 = vmatpush1.msra.mxu0 0.0
    %5601 = vmatprep.subr.mxu0 0.0
    %5602 = vmatpush1.msra.mxu0 0.0
    %5603 = vmatprep.subr.mxu0 0.0
    %5604 = vmatpush1.msra.mxu0 0.0
    %5605 = vmatprep.subr.mxu0 0.0
    %5606 = vmatpush1.msra.mxu0 0.0
    %5607 = vmatprep.subr.mxu0 0.0
    %5608 = vmatpush1.msra.mxu0 0.0
    %5609 = vmatprep.subr.mxu0 0.0
    %5610 = vmatpush1.msra.mxu0 0.0
    %5611 = vmatprep.subr.mxu0 0.0
    %5612 = vmatpush1.msra.mxu0 0.0
    %5613 = vmatprep.mubr.f32.mxu0 0.0
    %5614 = vmatmul.mubr.f32.gmra.mrb[0].mxu0 %v4958
    %v5615 = vpop.f32.mrb[0].mxu0
    %v5616 = vadd.f32 %v5471, %v5615
    %v5617 = vpop.f32.mrb[0].mxu0
    %5618 = vdwg.mxu0
    %5619 = vmatprep.subr.mxu0 0.0
    %5620 = vmatpush1.msra.mxu0 %v5449
    %5621 = vmatprep.subr.mxu0 0.0
    %5622 = vmatpush1.msra.mxu0 %v5450
    %5623 = vmatprep.subr.mxu0 0.0
    %5624 = vmatpush1.msra.mxu0 %v5451
    %5625 = vmatprep.subr.mxu0 0.0
    %5626 = vmatpush1.msra.mxu0 %v5452
    %5627 = vmatprep.subr.mxu0 0.0
    %5628 = vmatpush1.msra.mxu0 %v5453
    %5629 = vmatprep.subr.mxu0 0.0
    %5630 = vmatpush1.msra.mxu0 %v5454
    %5631 = vmatprep.subr.mxu0 0.0
    %5632 = vmatpush1.msra.mxu0 %v5455
    %5633 = vmatprep.subr.mxu0 0.0
    %5634 = vmatpush1.msra.mxu0 %v5456
    %5635 = vmatprep.subr.mxu0 0.0
    %5636 = vmatpush1.msra.mxu0 0.0
    %5637 = vmatprep.subr.mxu0 0.0
    %5638 = vmatpush1.msra.mxu0 0.0
    %5639 = vmatprep.subr.mxu0 0.0
    %5640 = vmatpush1.msra.mxu0 0.0
    %5641 = vmatprep.subr.mxu0 0.0
    %5642 = vmatpush1.msra.mxu0 0.0
    %5643 = vmatprep.subr.mxu0 0.0
    %5644 = vmatpush1.msra.mxu0 0.0
    %5645 = vmatprep.subr.mxu0 0.0
    %5646 = vmatpush1.msra.mxu0 0.0
    %5647 = vmatprep.subr.mxu0 0.0
    %5648 = vmatpush1.msra.mxu0 0.0
    %5649 = vmatprep.subr.mxu0 0.0
    %5650 = vmatpush1.msra.mxu0 0.0
    %5651 = vmatprep.subr.mxu0 0.0
    %5652 = vmatpush1.msra.mxu0 0.0
    %5653 = vmatprep.subr.mxu0 0.0
    %5654 = vmatpush1.msra.mxu0 0.0
    %5655 = vmatprep.subr.mxu0 0.0
    %5656 = vmatpush1.msra.mxu0 0.0
    %5657 = vmatprep.subr.mxu0 0.0
    %5658 = vmatpush1.msra.mxu0 0.0
    %5659 = vmatprep.subr.mxu0 0.0
    %5660 = vmatpush1.msra.mxu0 0.0
    %5661 = vmatprep.subr.mxu0 0.0
    %5662 = vmatpush1.msra.mxu0 0.0
    %5663 = vmatprep.subr.mxu0 0.0
    %5664 = vmatpush1.msra.mxu0 0.0
    %5665 = vmatprep.subr.mxu0 0.0
    %5666 = vmatpush1.msra.mxu0 0.0
    %5667 = vmatprep.subr.mxu0 0.0
    %5668 = vmatpush1.msra.mxu0 0.0
    %5669 = vmatprep.subr.mxu0 0.0
    %5670 = vmatpush1.msra.mxu0 0.0
    %5671 = vmatprep.subr.mxu0 0.0
    %5672 = vmatpush1.msra.mxu0 0.0
    %5673 = vmatprep.subr.mxu0 0.0
    %5674 = vmatpush1.msra.mxu0 0.0
    %5675 = vmatprep.subr.mxu0 0.0
    %5676 = vmatpush1.msra.mxu0 0.0
    %5677 = vmatprep.subr.mxu0 0.0
    %5678 = vmatpush1.msra.mxu0 0.0
    %5679 = vmatprep.subr.mxu0 0.0
    %5680 = vmatpush1.msra.mxu0 0.0
    %5681 = vmatprep.subr.mxu0 0.0
    %5682 = vmatpush1.msra.mxu0 0.0
    %5683 = vmatprep.mubr.f32.mxu0 0.0
    %5684 = vmatmul.mubr.f32.gmra.mrb[0].mxu0 %v5031
    %v5685 = vpop.f32.mrb[0].mxu0
    %v5686 = vadd.f32 %v5475, %v5685
    %v5687 = vpop.f32.mrb[0].mxu0
    %5688 = vdwg.mxu0
    %s5689 = scalar_lea.vmem %s14, 672
    %v5690 = vld [vmem:[%s5689] sm:$0xff]
    %v5691 = vld [vmem:[%s5689 + $0x8] sm:$0xff]
    %v5692 = vld [vmem:[%s5689 + $0x10] sm:$0xff]
    %v5693 = vld [vmem:[%s5689 + $0x18] sm:$0xff]
    %v5694 = vld [vmem:[%s5689 + $0x20] sm:$0xff]
    %v5695 = vld [vmem:[%s5689 + $0x28] sm:$0xff]
    %v5696 = vld [vmem:[%s5689 + $0x30] sm:$0xff]
    %v5697 = vld [vmem:[%s5689 + $0x38] sm:$0xff]
    %v5698 = vld [vmem:[%s5689 + $0x40] sm:$0xff]
    %v5699 = vld [vmem:[%s5689 + $0x48] sm:$0xff]
    %v5700 = vld [vmem:[%s5689 + $0x50] sm:$0xff]
    %v5701 = vld [vmem:[%s5689 + $0x58] sm:$0xff]
    %s5702 = scalar_lea.vmem %s16, 21
    %v5703 = vld [vmem:[%s5702] sm:$0x1]
    %v5704 = vld [vmem:[%s5702 + $0x1] sm:$0x1]
    %v5705 = vld [vmem:[%s5702 + $0x2] sm:$0x1]
    %v5709 = vlaneseq
    %v5710 = vshrl.u32 %v5709, 7
    %v5711 = vsub.s32 0, %v5710
    %v5712 = vrot.slane %v5703, %v5711
    %v5713 = vlaneseq
    %v5714 = vshrl.u32 %v5713, 7
    %v5715 = vsub.s32 0, %v5714
    %v5716 = vrot.slane %v5704, %v5715
    %v5717 = vlaneseq
    %v5718 = vshrl.u32 %v5717, 7
    %v5719 = vsub.s32 0, %v5718
    %v5720 = vrot.slane %v5705, %v5719
    %5725 = vrot.lane.b32.xlu0 %v3456, 96
    %v5726 = vpop.permute.xlu0 %5725
    %v5727 = vsel %vm1380, %v5726, 0
    %5729 = vmatprep.subr.mxu0 0.0
    %5730 = vmatpush1.msra.mxu0 %v5690
    %5731 = vmatprep.subr.mxu0 0.0
    %5732 = vmatpush1.msra.mxu0 %v5691
    %5733 = vmatprep.subr.mxu0 0.0
    %5734 = vmatpush1.msra.mxu0 %v5692
    %5735 = vmatprep.subr.mxu0 0.0
    %5736 = vmatpush1.msra.mxu0 %v5693
    %5737 = vmatprep.subr.mxu0 0.0
    %5738 = vmatpush1.msra.mxu0 0.0
    %5739 = vmatprep.subr.mxu0 0.0
    %5740 = vmatpush1.msra.mxu0 0.0
    %5741 = vmatprep.subr.mxu0 0.0
    %5742 = vmatpush1.msra.mxu0 0.0
    %5743 = vmatprep.subr.mxu0 0.0
    %5744 = vmatpush1.msra.mxu0 0.0
    %5745 = vmatprep.subr.mxu0 0.0
    %5746 = vmatpush1.msra.mxu0 0.0
    %5747 = vmatprep.subr.mxu0 0.0
    %5748 = vmatpush1.msra.mxu0 0.0
    %5749 = vmatprep.subr.mxu0 0.0
    %5750 = vmatpush1.msra.mxu0 0.0
    %5751 = vmatprep.subr.mxu0 0.0
    %5752 = vmatpush1.msra.mxu0 0.0
    %5753 = vmatprep.subr.mxu0 0.0
    %5754 = vmatpush1.msra.mxu0 0.0
    %5755 = vmatprep.subr.mxu0 0.0
    %5756 = vmatpush1.msra.mxu0 0.0
    %5757 = vmatprep.subr.mxu0 0.0
    %5758 = vmatpush1.msra.mxu0 0.0
    %5759 = vmatprep.subr.mxu0 0.0
    %5760 = vmatpush1.msra.mxu0 0.0
    %5761 = vmatprep.subr.mxu0 0.0
    %5762 = vmatpush1.msra.mxu0 0.0
    %5763 = vmatprep.subr.mxu0 0.0
    %5764 = vmatpush1.msra.mxu0 0.0
    %5765 = vmatprep.subr.mxu0 0.0
    %5766 = vmatpush1.msra.mxu0 0.0
    %5767 = vmatprep.subr.mxu0 0.0
    %5768 = vmatpush1.msra.mxu0 0.0
    %5769 = vmatprep.subr.mxu0 0.0
    %5770 = vmatpush1.msra.mxu0 0.0
    %5771 = vmatprep.subr.mxu0 0.0
    %5772 = vmatpush1.msra.mxu0 0.0
    %5773 = vmatprep.subr.mxu0 0.0
    %5774 = vmatpush1.msra.mxu0 0.0
    %5775 = vmatprep.subr.mxu0 0.0
    %5776 = vmatpush1.msra.mxu0 0.0
    %5777 = vmatprep.subr.mxu0 0.0
    %5778 = vmatpush1.msra.mxu0 0.0
    %5779 = vmatprep.subr.mxu0 0.0
    %5780 = vmatpush1.msra.mxu0 0.0
    %5781 = vmatprep.subr.mxu0 0.0
    %5782 = vmatpush1.msra.mxu0 0.0
    %5783 = vmatprep.subr.mxu0 0.0
    %5784 = vmatpush1.msra.mxu0 0.0
    %5785 = vmatprep.subr.mxu0 0.0
    %5786 = vmatpush1.msra.mxu0 0.0
    %5787 = vmatprep.subr.mxu0 0.0
    %5788 = vmatpush1.msra.mxu0 0.0
    %5789 = vmatprep.subr.mxu0 0.0
    %5790 = vmatpush1.msra.mxu0 0.0
    %5791 = vmatprep.subr.mxu0 0.0
    %5792 = vmatpush1.msra.mxu0 0.0
    %5793 = vmatprep.mubr.f32.mxu0 0.0
    %5794 = vmatmul.mubr.f32.gmra.mrb[0].mxu0 %v5727
    %v5795 = vpop.f32.mrb[0].mxu0
    %v5796 = vadd.f32 %v5712, %v5795
    %v5797 = vpop.f32.mrb[0].mxu0
    %5798 = vdwg.mxu0
    %5800 = vrot.lane.b32.xlu0 %v3457, 96
    %v5801 = vpop.permute.xlu0 %5800
    %v5802 = vsel %vm1380, %v5801, 0
    %5804 = vmatprep.subr.mxu0 0.0
    %5805 = vmatpush1.msra.mxu0 %v5694
    %5806 = vmatprep.subr.mxu0 0.0
    %5807 = vmatpush1.msra.mxu0 %v5695
    %5808 = vmatprep.subr.mxu0 0.0
    %5809 = vmatpush1.msra.mxu0 %v5696
    %5810 = vmatprep.subr.mxu0 0.0
    %5811 = vmatpush1.msra.mxu0 %v5697
    %5812 = vmatprep.subr.mxu0 0.0
    %5813 = vmatpush1.msra.mxu0 0.0
    %5814 = vmatprep.subr.mxu0 0.0
    %5815 = vmatpush1.msra.mxu0 0.0
    %5816 = vmatprep.subr.mxu0 0.0
    %5817 = vmatpush1.msra.mxu0 0.0
    %5818 = vmatprep.subr.mxu0 0.0
    %5819 = vmatpush1.msra.mxu0 0.0
    %5820 = vmatprep.subr.mxu0 0.0
    %5821 = vmatpush1.msra.mxu0 0.0
    %5822 = vmatprep.subr.mxu0 0.0
    %5823 = vmatpush1.msra.mxu0 0.0
    %5824 = vmatprep.subr.mxu0 0.0
    %5825 = vmatpush1.msra.mxu0 0.0
    %5826 = vmatprep.subr.mxu0 0.0
    %5827 = vmatpush1.msra.mxu0 0.0
    %5828 = vmatprep.subr.mxu0 0.0
    %5829 = vmatpush1.msra.mxu0 0.0
    %5830 = vmatprep.subr.mxu0 0.0
    %5831 = vmatpush1.msra.mxu0 0.0
    %5832 = vmatprep.subr.mxu0 0.0
    %5833 = vmatpush1.msra.mxu0 0.0
    %5834 = vmatprep.subr.mxu0 0.0
    %5835 = vmatpush1.msra.mxu0 0.0
    %5836 = vmatprep.subr.mxu0 0.0
    %5837 = vmatpush1.msra.mxu0 0.0
    %5838 = vmatprep.subr.mxu0 0.0
    %5839 = vmatpush1.msra.mxu0 0.0
    %5840 = vmatprep.subr.mxu0 0.0
    %5841 = vmatpush1.msra.mxu0 0.0
    %5842 = vmatprep.subr.mxu0 0.0
    %5843 = vmatpush1.msra.mxu0 0.0
    %5844 = vmatprep.subr.mxu0 0.0
    %5845 = vmatpush1.msra.mxu0 0.0
    %5846 = vmatprep.subr.mxu0 0.0
    %5847 = vmatpush1.msra.mxu0 0.0
    %5848 = vmatprep.subr.mxu0 0.0
    %5849 = vmatpush1.msra.mxu0 0.0
    %5850 = vmatprep.subr.mxu0 0.0
    %5851 = vmatpush1.msra.mxu0 0.0
    %5852 = vmatprep.subr.mxu0 0.0
    %5853 = vmatpush1.msra.mxu0 0.0
    %5854 = vmatprep.subr.mxu0 0.0
    %5855 = vmatpush1.msra.mxu0 0.0
    %5856 = vmatprep.subr.mxu0 0.0
    %5857 = vmatpush1.msra.mxu0 0.0
    %5858 = vmatprep.subr.mxu0 0.0
    %5859 = vmatpush1.msra.mxu0 0.0
    %5860 = vmatprep.subr.mxu0 0.0
    %5861 = vmatpush1.msra.mxu0 0.0
    %5862 = vmatprep.subr.mxu0 0.0
    %5863 = vmatpush1.msra.mxu0 0.0
    %5864 = vmatprep.subr.mxu0 0.0
    %5865 = vmatpush1.msra.mxu0 0.0
    %5866 = vmatprep.subr.mxu0 0.0
    %5867 = vmatpush1.msra.mxu0 0.0
    %5868 = vmatprep.mubr.f32.mxu0 0.0
    %5869 = vmatmul.mubr.f32.gmra.mrb[0].mxu0 %v5802
    %v5870 = vpop.f32.mrb[0].mxu0
    %v5871 = vadd.f32 %v5716, %v5870
    %v5872 = vpop.f32.mrb[0].mxu0
    %5873 = vdwg.mxu0
    %5875 = vrot.lane.b32.xlu0 %v3458, 96
    %v5876 = vpop.permute.xlu0 %5875
    %v5877 = vsel %vm1380, %v5876, 0
    %5879 = vmatprep.subr.mxu0 0.0
    %5880 = vmatpush1.msra.mxu0 %v5698
    %5881 = vmatprep.subr.mxu0 0.0
    %5882 = vmatpush1.msra.mxu0 %v5699
    %5883 = vmatprep.subr.mxu0 0.0
    %5884 = vmatpush1.msra.mxu0 %v5700
    %5885 = vmatprep.subr.mxu0 0.0
    %5886 = vmatpush1.msra.mxu0 %v5701
    %5887 = vmatprep.subr.mxu0 0.0
    %5888 = vmatpush1.msra.mxu0 0.0
    %5889 = vmatprep.subr.mxu0 0.0
    %5890 = vmatpush1.msra.mxu0 0.0
    %5891 = vmatprep.subr.mxu0 0.0
    %5892 = vmatpush1.msra.mxu0 0.0
    %5893 = vmatprep.subr.mxu0 0.0
    %5894 = vmatpush1.msra.mxu0 0.0
    %5895 = vmatprep.subr.mxu0 0.0
    %5896 = vmatpush1.msra.mxu0 0.0
    %5897 = vmatprep.subr.mxu0 0.0
    %5898 = vmatpush1.msra.mxu0 0.0
    %5899 = vmatprep.subr.mxu0 0.0
    %5900 = vmatpush1.msra.mxu0 0.0
    %5901 = vmatprep.subr.mxu0 0.0
    %5902 = vmatpush1.msra.mxu0 0.0
    %5903 = vmatprep.subr.mxu0 0.0
    %5904 = vmatpush1.msra.mxu0 0.0
    %5905 = vmatprep.subr.mxu0 0.0
    %5906 = vmatpush1.msra.mxu0 0.0
    %5907 = vmatprep.subr.mxu0 0.0
    %5908 = vmatpush1.msra.mxu0 0.0
    %5909 = vmatprep.subr.mxu0 0.0
    %5910 = vmatpush1.msra.mxu0 0.0
    %5911 = vmatprep.subr.mxu0 0.0
    %5912 = vmatpush1.msra.mxu0 0.0
    %5913 = vmatprep.subr.mxu0 0.0
    %5914 = vmatpush1.msra.mxu0 0.0
    %5915 = vmatprep.subr.mxu0 0.0
    %5916 = vmatpush1.msra.mxu0 0.0
    %5917 = vmatprep.subr.mxu0 0.0
    %5918 = vmatpush1.msra.mxu0 0.0
    %5919 = vmatprep.subr.mxu0 0.0
    %5920 = vmatpush1.msra.mxu0 0.0
    %5921 = vmatprep.subr.mxu0 0.0
    %5922 = vmatpush1.msra.mxu0 0.0
    %5923 = vmatprep.subr.mxu0 0.0
    %5924 = vmatpush1.msra.mxu0 0.0
    %5925 = vmatprep.subr.mxu0 0.0
    %5926 = vmatpush1.msra.mxu0 0.0
    %5927 = vmatprep.subr.mxu0 0.0
    %5928 = vmatpush1.msra.mxu0 0.0
    %5929 = vmatprep.subr.mxu0 0.0
    %5930 = vmatpush1.msra.mxu0 0.0
    %5931 = vmatprep.subr.mxu0 0.0
    %5932 = vmatpush1.msra.mxu0 0.0
    %5933 = vmatprep.subr.mxu0 0.0
    %5934 = vmatpush1.msra.mxu0 0.0
    %5935 = vmatprep.subr.mxu0 0.0
    %5936 = vmatpush1.msra.mxu0 0.0
    %5937 = vmatprep.subr.mxu0 0.0
    %5938 = vmatpush1.msra.mxu0 0.0
    %5939 = vmatprep.subr.mxu0 0.0
    %5940 = vmatpush1.msra.mxu0 0.0
    %5941 = vmatprep.subr.mxu0 0.0
    %5942 = vmatpush1.msra.mxu0 0.0
    %5943 = vmatprep.mubr.f32.mxu0 0.0
    %5944 = vmatmul.mubr.f32.gmra.mrb[0].mxu0 %v5877
    %v5945 = vpop.f32.mrb[0].mxu0
    %v5946 = vadd.f32 %v5720, %v5945
    %v5947 = vpop.f32.mrb[0].mxu0
    %5948 = vdwg.mxu0
    %v5949 = vadd.f32 %v5546, %v5796
    %v5950 = vadd.f32 %v5616, %v5871
    %v5951 = vadd.f32 %v5686, %v5946
    %v5952 = vxor.u32 %v5949, 2147483648
    %v5953 = vxor.u32 %v5950, 2147483648
    %v5954 = vxor.u32 %v5951, 2147483648
    %v5955 = vmul.f32 %v5952, 1.442695
    %v5956 = vpow.pop %v5955
    %v5957 = vmul.f32 %v5953, 1.442695
    %v5958 = vpow.pop %v5957
    %v5959 = vmul.f32 %v5954, 1.442695
    %v5960 = vpow.pop %v5959
    %v5961 = vadd.f32 %v5956, 1.0
    %v5962 = vadd.f32 %v5958, 1.0
    %v5963 = vadd.f32 %v5960, 1.0
    %v5964 = vrcp.pop %v5961
    %v5965 = vmul.f32 1.0, %v5964
    %v5966 = vrcp.pop %v5962
    %v5967 = vmul.f32 1.0, %v5966
    %v5968 = vrcp.pop %v5963
    %v5969 = vmul.f32 1.0, %v5968
    %5973 = vrot.lane.b32.xlu0 %v5796, 64
    %v5974 = vpop.permute.xlu0 %5973
    %5975 = vrot.lane.b32.xlu0 %v5871, 64
    %v5976 = vpop.permute.xlu0 %5975
    %5977 = vrot.lane.b32.xlu0 %v5946, 64
    %v5978 = vpop.permute.xlu0 %5977
    %v5982 = vmul.f32 %v5965, %v5974
    %v5983 = vmul.f32 %v5967, %v5976
    %v5984 = vmul.f32 %v5969, %v5978
    %5988 = vrot.lane.b32.xlu0 %v5982, 64
    %v5989 = vpop.permute.xlu0 %5988
    %5990 = vrot.lane.b32.xlu0 %v5983, 64
    %v5991 = vpop.permute.xlu0 %5990
    %5992 = vrot.lane.b32.xlu0 %v5984, 64
    %v5993 = vpop.permute.xlu0 %5992
    %v5997 = vadd.f32 %v5546, %v5989
    %v5998 = vadd.f32 %v5616, %v5991
    %v5999 = vadd.f32 %v5686, %v5993
    %v6000 = vtanh.pop %v5997
    %v6001 = vtanh.pop %v5998
    %v6002 = vtanh.pop %v5999
    %v6003 = vsub.f32 1.0, %v5965
    %v6004 = vsub.f32 1.0, %v5967
    %v6005 = vsub.f32 1.0, %v5969
    %6009 = vrot.lane.b32.xlu0 %v6000, 96
    %v6010 = vpop.permute.xlu0 %6009
    %6011 = vrot.lane.b32.xlu0 %v6001, 96
    %v6012 = vpop.permute.xlu0 %6011
    %6013 = vrot.lane.b32.xlu0 %v6002, 96
    %v6014 = vpop.permute.xlu0 %6013
    %v6018 = vmul.f32 %v6003, %v6010
    %v6019 = vmul.f32 %v6004, %v6012
    %v6020 = vmul.f32 %v6005, %v6014
    %v6021 = vmul.f32 %v5965, %v3456
    %v6022 = vmul.f32 %v5967, %v3457
    %v6023 = vmul.f32 %v5969, %v3458
    %v6024 = vadd.f32 %v6018, %v6021
    %v6025 = vadd.f32 %v6019, %v6022
    %v6026 = vadd.f32 %v6020, %v6023
    %6030 = vrot.lane.b32.xlu0 %v5429, 96
    %v6031 = vpop.permute.xlu0 %6030
    %6032 = vrot.lane.b32.xlu0 %v5430, 96
    %v6033 = vpop.permute.xlu0 %6032
    %6034 = vrot.lane.b32.xlu0 %v5431, 96
    %v6035 = vpop.permute.xlu0 %6034
    %v6039 = vsel %vm1380, %v6031, %v6024
    %v6040 = vsel %vm1380, %v6033, %v6025
    %v6041 = vsel %vm1380, %v6035, %v6026
    %v6042 = vmul.f32 %v6039, 0.5
    %v6043 = vmul.f32 %v6040, 0.5
    %v6044 = vmul.f32 %v6041, 0.5
    %v6045 = vmul.f32 %v6039, 0.044715
    %v6046 = vmul.f32 %v6040, 0.044715
    %v6047 = vmul.f32 %v6041, 0.044715
    %v6048 = vmul.f32 %v6045, %v6039
    %v6049 = vmul.f32 %v6046, %v6040
    %v6050 = vmul.f32 %v6047, %v6041
    %v6051 = vmul.f32 %v6048, %v6039
    %v6052 = vmul.f32 %v6049, %v6040
    %v6053 = vmul.f32 %v6050, %v6041
    %v6054 = vadd.f32 %v6039, %v6051
    %v6055 = vadd.f32 %v6040, %v6052
    %v6056 = vadd.f32 %v6041, %v6053
    %v6057 = vmul.f32 %v6054, 0.7978846
    %v6058 = vmul.f32 %v6055, 0.7978846
    %v6059 = vmul.f32 %v6056, 0.7978846
    %v6060 = vtanh.pop %v6057
    %v6061 = vtanh.pop %v6058
    %v6062 = vtanh.pop %v6059
    %v6063 = vadd.f32 %v6060, 1.0
    %v6064 = vadd.f32 %v6061, 1.0
    %v6065 = vadd.f32 %v6062, 1.0
    %v6066 = vmul.f32 %v6042, %v6063
    %v6067 = vmul.f32 %v6043, %v6064
    %v6068 = vmul.f32 %v6044, %v6065
    %v6069 = vld [vmem:[%s17] sm:$0x1]
    %v6070 = vld [vmem:[%s17 + $0x1] sm:$0x1]
    %v6071 = vld [vmem:[%s17 + $0x2] sm:$0x1]
    %v6075 = vlaneseq
    %v6076 = vshrl.u32 %v6075, 7
    %v6077 = vsub.s32 0, %v6076
    %v6078 = vrot.slane %v6069, %v6077
    %v6079 = vlaneseq
    %v6080 = vshrl.u32 %v6079, 7
    %v6081 = vsub.s32 0, %v6080
    %v6082 = vrot.slane %v6070, %v6081
    %v6083 = vlaneseq
    %v6084 = vshrl.u32 %v6083, 7
    %v6085 = vsub.s32 0, %v6084
    %v6086 = vrot.slane %v6071, %v6085
    %v6090 = vmul.f32 %v824, %v6078
    %v6091 = vmul.f32 %v897, %v6082
    %v6092 = vmul.f32 %v970, %v6086
    %vm6093 = vcmask 517120
    %v6094 = vsel %vm6093, %v6090, 0.0
    %6095 = vadd.xlane.f32.xlu0 %v6094
    %v6096 = vpop.xlane.xlu0 %6095
    %v6097 = vsel %vm6093, %v6091, 0.0
    %6098 = vadd.xlane.f32.xlu0 %v6097
    %v6099 = vpop.xlane.xlu0 %6098
    %v6100 = vsel %vm6093, %v6092, 0.0
    %6101 = vadd.xlane.f32.xlu0 %v6100
    %v6102 = vpop.xlane.xlu0 %6101
    %v6103 = vld [vmem:[%s18] sm:$0x7]
    %6105 = vset.pattern.permute.xlu0 0
    %6106 = vperm.xlu0 %6105, %v6103
    %v6107 = vpop.permute.xlu0 %6106
    %v6108 = vlaneseq
    %v6109 = vshrl.u32 %v6108, 7
    %v6110 = vsub.s32 0, %v6109
    %v6111 = vrot.slane %v6107, %v6110
    %v6112 = vlaneseq
    %v6113 = vshrl.u32 %v6112, 7
    %v6114 = vsub.s32 1, %v6113
    %v6115 = vrot.slane %v6107, %v6114
    %v6116 = vlaneseq
    %v6117 = vshrl.u32 %v6116, 7
    %v6118 = vsub.s32 2, %v6117
    %v6119 = vrot.slane %v6107, %v6118
    %v6123 = vadd.f32 %v6096, %v6111
    %v6124 = vadd.f32 %v6099, %v6115
    %v6125 = vadd.f32 %v6102, %v6119
    %vm6126 = vcmp.gt.f32.partialorder %v6123, 0.0
    %vm6127 = vcmp.gt.f32.partialorder %v6124, 0.0
    %vm6128 = vcmp.gt.f32.partialorder %v6125, 0.0
    %v6129 = vmin.f32 %v6123, 0.0
    %v6130 = vmin.f32 %v6124, 0.0
    %v6131 = vmin.f32 %v6125, 0.0
    %v6132 = vmul.f32 %v6129, 1.442695
    %v6133 = vpow.pop %v6132
    %v6134 = vmul.f32 %v6130, 1.442695
    %v6135 = vpow.pop %v6134
    %v6136 = vmul.f32 %v6131, 1.442695
    %v6137 = vpow.pop %v6136
    %v6138 = vsub.f32 %v6133, 1.0
    %v6139 = vsub.f32 %v6135, 1.0
    %v6140 = vsub.f32 %v6137, 1.0
    %v6141 = vsel %vm6126, %v6123, %v6138
    %v6142 = vsel %vm6127, %v6124, %v6139
    %v6143 = vsel %vm6128, %v6125, %v6140
    %v6147 = vrot.slane %v6141, 1
    %v6148 = vrot.slane %v6142, 1
    %v6149 = vrot.slane %v6143, 1
    %v6153 = vsub.f32 %v6141, %v6147
    %v6154 = vsub.f32 %v6142, %v6148
    %v6155 = vsub.f32 %v6143, %v6149
    %v6156 = vmax.f32 %v6153, 0.0
    %v6157 = vmax.f32 %v6154, 0.0
    %v6158 = vmax.f32 %v6155, 0.0
    %s6159 = scalar_lea.vmem %s17, 3
    %v6160 = vld [vmem:[%s6159] sm:$0x1]
    %v6161 = vld [vmem:[%s6159 + $0x1] sm:$0x1]
    %v6162 = vld [vmem:[%s6159 + $0x2] sm:$0x1]
    %v6166 = vlaneseq
    %v6167 = vshrl.u32 %v6166, 7
    %v6168 = vsub.s32 0, %v6167
    %v6169 = vrot.slane %v6160, %v6168
    %v6170 = vlaneseq
    %v6171 = vshrl.u32 %v6170, 7
    %v6172 = vsub.s32 0, %v6171
    %v6173 = vrot.slane %v6161, %v6172
    %v6174 = vlaneseq
    %v6175 = vshrl.u32 %v6174, 7
    %v6176 = vsub.s32 0, %v6175
    %v6177 = vrot.slane %v6162, %v6176
    %v6181 = vmul.f32 %v3498, %v6169
    %v6182 = vmul.f32 %v3499, %v6173
    %v6183 = vmul.f32 %v3500, %v6177
    %v6184 = vsel %vm6093, %v6181, 0.0
    %6185 = vadd.xlane.f32.xlu0 %v6184
    %v6186 = vpop.xlane.xlu0 %6185
    %v6187 = vsel %vm6093, %v6182, 0.0
    %6188 = vadd.xlane.f32.xlu0 %v6187
    %v6189 = vpop.xlane.xlu0 %6188
    %v6190 = vsel %vm6093, %v6183, 0.0
    %6191 = vadd.xlane.f32.xlu0 %v6190
    %v6192 = vpop.xlane.xlu0 %6191
    %s6193 = scalar_lea.vmem %s18, 4
    %v6194 = vld [vmem:[%s6193] sm:$0x7]
    %6196 = vset.pattern.permute.xlu0 0
    %6197 = vperm.xlu0 %6196, %v6194
    %v6198 = vpop.permute.xlu0 %6197
    %v6199 = vlaneseq
    %v6200 = vshrl.u32 %v6199, 7
    %v6201 = vsub.s32 0, %v6200
    %v6202 = vrot.slane %v6198, %v6201
    %v6203 = vlaneseq
    %v6204 = vshrl.u32 %v6203, 7
    %v6205 = vsub.s32 1, %v6204
    %v6206 = vrot.slane %v6198, %v6205
    %v6207 = vlaneseq
    %v6208 = vshrl.u32 %v6207, 7
    %v6209 = vsub.s32 2, %v6208
    %v6210 = vrot.slane %v6198, %v6209
    %v6214 = vadd.f32 %v6186, %v6202
    %v6215 = vadd.f32 %v6189, %v6206
    %v6216 = vadd.f32 %v6192, %v6210
    %vm6217 = vcmp.gt.f32.partialorder %v6214, 0.0
    %vm6218 = vcmp.gt.f32.partialorder %v6215, 0.0
    %vm6219 = vcmp.gt.f32.partialorder %v6216, 0.0
    %v6220 = vmin.f32 %v6214, 0.0
    %v6221 = vmin.f32 %v6215, 0.0
    %v6222 = vmin.f32 %v6216, 0.0
    %v6223 = vmul.f32 %v6220, 1.442695
    %v6224 = vpow.pop %v6223
    %v6225 = vmul.f32 %v6221, 1.442695
    %v6226 = vpow.pop %v6225
    %v6227 = vmul.f32 %v6222, 1.442695
    %v6228 = vpow.pop %v6227
    %v6229 = vsub.f32 %v6224, 1.0
    %v6230 = vsub.f32 %v6226, 1.0
    %v6231 = vsub.f32 %v6228, 1.0
    %v6232 = vsel %vm6217, %v6214, %v6229
    %v6233 = vsel %vm6218, %v6215, %v6230
    %v6234 = vsel %vm6219, %v6216, %v6231
    %v6238 = vrot.slane %v6232, 1
    %v6239 = vrot.slane %v6233, 1
    %v6240 = vrot.slane %v6234, 1
    %v6244 = vsub.f32 %v6232, %v6238
    %v6245 = vsub.f32 %v6233, %v6239
    %v6246 = vsub.f32 %v6234, %v6240
    %v6247 = vmax.f32 %v6244, 0.0
    %v6248 = vmax.f32 %v6245, 0.0
    %v6249 = vmax.f32 %v6246, 0.0
    %s6250 = scalar_lea.vmem %s17, 6
    %v6251 = vld [vmem:[%s6250] sm:$0x1]
    %v6252 = vld [vmem:[%s6250 + $0x1] sm:$0x1]
    %v6253 = vld [vmem:[%s6250 + $0x2] sm:$0x1]
    %v6257 = vlaneseq
    %v6258 = vshrl.u32 %v6257, 7
    %v6259 = vsub.s32 0, %v6258
    %v6260 = vrot.slane %v6251, %v6259
    %v6261 = vlaneseq
    %v6262 = vshrl.u32 %v6261, 7
    %v6263 = vsub.s32 0, %v6262
    %v6264 = vrot.slane %v6252, %v6263
    %v6265 = vlaneseq
    %v6266 = vshrl.u32 %v6265, 7
    %v6267 = vsub.s32 0, %v6266
    %v6268 = vrot.slane %v6253, %v6267
    %v6272 = vmul.f32 %v6066, %v6260
    %v6273 = vmul.f32 %v6067, %v6264
    %v6274 = vmul.f32 %v6068, %v6268
    %v6275 = vsel %vm6093, %v6272, 0.0
    %6276 = vadd.xlane.f32.xlu0 %v6275
    %v6277 = vpop.xlane.xlu0 %6276
    %v6278 = vsel %vm6093, %v6273, 0.0
    %6279 = vadd.xlane.f32.xlu0 %v6278
    %v6280 = vpop.xlane.xlu0 %6279
    %v6281 = vsel %vm6093, %v6274, 0.0
    %6282 = vadd.xlane.f32.xlu0 %v6281
    %v6283 = vpop.xlane.xlu0 %6282
    %s6284 = scalar_lea.vmem %s18, 8
    %v6285 = vld [vmem:[%s6284] sm:$0x7]
    %6287 = vset.pattern.permute.xlu0 0
    %6288 = vperm.xlu0 %6287, %v6285
    %v6289 = vpop.permute.xlu0 %6288
    %v6290 = vlaneseq
    %v6291 = vshrl.u32 %v6290, 7
    %v6292 = vsub.s32 0, %v6291
    %v6293 = vrot.slane %v6289, %v6292
    %v6294 = vlaneseq
    %v6295 = vshrl.u32 %v6294, 7
    %v6296 = vsub.s32 1, %v6295
    %v6297 = vrot.slane %v6289, %v6296
    %v6298 = vlaneseq
    %v6299 = vshrl.u32 %v6298, 7
    %v6300 = vsub.s32 2, %v6299
    %v6301 = vrot.slane %v6289, %v6300
    %v6305 = vadd.f32 %v6277, %v6293
    %v6306 = vadd.f32 %v6280, %v6297
    %v6307 = vadd.f32 %v6283, %v6301
    %vm6308 = vcmp.gt.f32.partialorder %v6305, 0.0
    %vm6309 = vcmp.gt.f32.partialorder %v6306, 0.0
    %vm6310 = vcmp.gt.f32.partialorder %v6307, 0.0
    %v6311 = vmin.f32 %v6305, 0.0
    %v6312 = vmin.f32 %v6306, 0.0
    %v6313 = vmin.f32 %v6307, 0.0
    %v6314 = vmul.f32 %v6311, 1.442695
    %v6315 = vpow.pop %v6314
    %v6316 = vmul.f32 %v6312, 1.442695
    %v6317 = vpow.pop %v6316
    %v6318 = vmul.f32 %v6313, 1.442695
    %v6319 = vpow.pop %v6318
    %v6320 = vsub.f32 %v6315, 1.0
    %v6321 = vsub.f32 %v6317, 1.0
    %v6322 = vsub.f32 %v6319, 1.0
    %v6323 = vsel %vm6308, %v6305, %v6320
    %v6324 = vsel %vm6309, %v6306, %v6321
    %v6325 = vsel %vm6310, %v6307, %v6322
    %v6329 = vrot.slane %v6323, 1
    %v6330 = vrot.slane %v6324, 1
    %v6331 = vrot.slane %v6325, 1
    %v6335 = vsub.f32 %v6323, %v6329
    %v6336 = vsub.f32 %v6324, %v6330
    %v6337 = vsub.f32 %v6325, %v6331
    %v6338 = vmax.f32 %v6335, 0.0
    %v6339 = vmax.f32 %v6336, 0.0
    %v6340 = vmax.f32 %v6337, 0.0
    %v6344 = vrot.slane %v6157, 7
    %vm6345 = vcmask 1041409
    %v6346 = vsel %vm6345, %v6344, %v6156
    %v6347 = vrot.slane %v6158, 6
    %vm6348 = vcmask 1042434
    %v6349 = vsel %vm6348, %v6347, %v6346
    %v6354 = vrot.slane %v6248, 7
    %v6355 = vsel %vm6345, %v6354, %v6247
    %v6356 = vrot.slane %v6249, 6
    %v6357 = vsel %vm6348, %v6356, %v6355
    %6358 = vrot.lane.b32.xlu0 %v6357, 1
    %v6359 = vpop.permute.xlu0 %6358
    %v6364 = vrot.slane %v6339, 7
    %v6365 = vsel %vm6345, %v6364, %v6338
    %v6366 = vrot.slane %v6340, 6
    %v6367 = vsel %vm6348, %v6366, %v6365
    %6368 = vrot.lane.b32.xlu0 %v6367, 2
    %v6369 = vpop.permute.xlu0 %6368
    %vm6371 = vcmask 7168
    %v6372 = vsel %vm6371, %v6349, %v6359
    %vm6373 = vcmask 15360
    %v6374 = vsel %vm6373, %v6372, %v6369
    %vm6375 = vcmask 18432
    %6376 = vst.msk [vmem:[%s20] sm:$0x7] %vm6375, %v6374
    %v6377 = vsel %vm6375, %v6374, 0.0
    %6378 = vadd.xlane.f32.xlu0 %v6377
    %v6379 = vpop.xlane.xlu0 %6378
    %v6380 = vrot.slane %v6379, 4
    %v6381 = vadd.f32 %v6379, %v6380
    %v6382 = vrot.slane %v6381, 2
    %v6383 = vadd.f32 %v6381, %v6382
    %v6384 = vrot.slane %v6383, 1
    %v6385 = vadd.f32 %v6383, %v6384
    %s6386 = vtos %v6385
    %v6387 = vstv %s6386
    %v6388 = vsub.f32 0.0, %v6387
    %vm6389 = vcmask 0
    %6390 = vst.msk [vmem:[#allocation2] sm:$0x1] %vm6389, %v6388
    // Predicated region
    $region78: #{forward.1} parent=1 // pred_check
      _
    $region79: #{forward.1} parent=1 // pred_check_branch
      %6392 = sbr.rel (0) target = $region81
    $region80: #{forward.1} parent=1 // pred_region
      %s6394 = ssub.s32 16, 16
      %6395 = vsyncadd [#allocation3], %s6394
      %s6397 = sshll.u32 [#allocation2], 4
      %s6398 = int_to_ptr.vmem [resolvable:$true] %s6397
      %6400 = dma.vmem_to_hbm [thread:$0]  %s6398, 16, %s19, [#allocation3]
    $region81: #{forward.1} parent=1 // pred_fallthru
      _
    // Predicated region
    $region82: #{forward.1} parent=1 // pred_check
      _
    $region83: #{forward.1} parent=1 // pred_check_branch
      %6402 = sbr.rel (0) target = $region85
    $region84: #{forward.1} parent=1 // pred_region
      _
    $region85: #{forward.1} parent=1 // pred_fallthru
      _
    // Predicated region
    $region86: #{forward.1} parent=1 // pred_check
      _
    $region87: #{forward.1} parent=1 // pred_check_branch
      %6404 = sbr.rel (0) target = $region89
    $region88: #{forward.1} parent=1 // pred_region
      %6405 = dma.done [#allocation3], 16
    $region89: #{forward.1} parent=1 // pred_fallthru
      _
    // Predicated region
    $region90: #{forward.1} parent=1 // pred_check
      _
    $region91: #{forward.1} parent=1 // pred_check_branch
      %6407 = sbr.rel (0) target = $region93
    $region92: #{forward.1} parent=1 // pred_region
      _
    $region93: #{forward.1} parent=1 // pred_fallthru
      _
    %6408 = vsyncpa [#allocation3], 1

</llo_original>
